<compile_context>
chip_gen: v6e
topology: v6e:2x2x1
jax: 0.10.0
libtpu: 0.0.40
codegen_flags: <defaults>
</compile_context>

<pallas_src>
import jax
import jax.numpy as jnp
from jax.experimental import pallas as pl
from jax.experimental.pallas import tpu as pltpu


LANE = 128


def _round_up(n, m):
    return ((n + m - 1) // m) * m


def _pad2d(arr, rows, cols):
    """Zero-pad a 2-D array up to [rows, cols]."""
    r, c = arr.shape
    return jnp.pad(arr, ((0, rows - r), (0, cols - c)))


def mlp_head_kernel(x_ref,
                    w0_ref, b0_ref,   # base_model (synthetic): [Din_p, 1024] bf16, [1, 1024] f32
                    w1_ref, b1_ref,   # Layer1:        [1024, 1024] bf16, [1, 1024] f32
                    w2_ref, b2_ref,   # Layer2:        [1024,  512] bf16, [1,  512] f32
                    w3_ref, b3_ref,   # layer3:        [ 512,  512] bf16, [1,  512] f32
                    w4_ref, b4_ref,   # Layer_heatmap: [ 512, Npad] bf16, [1, Npad] f32
                    out_ref):
    # bf16 operands into the MXU, f32 accumulation throughout.
    x = x_ref[...].astype(jnp.bfloat16)

    # h = ReLU(base_model(x))
    h = jnp.dot(x, w0_ref[...], preferred_element_type=jnp.float32) + b0_ref[...]
    h = jnp.maximum(h, 0.0)

    # h = ReLU(Layer1(h))
    h = jnp.dot(h.astype(jnp.bfloat16), w1_ref[...],
                preferred_element_type=jnp.float32) + b1_ref[...]
    h = jnp.maximum(h, 0.0)

    # h = ReLU(Layer2(h))
    h = jnp.dot(h.astype(jnp.bfloat16), w2_ref[...],
                preferred_element_type=jnp.float32) + b2_ref[...]
    h = jnp.maximum(h, 0.0)

    # h = layer3(h)   (no ReLU, matching the PyTorch forward)
    h = jnp.dot(h.astype(jnp.bfloat16), w3_ref[...],
                preferred_element_type=jnp.float32) + b3_ref[...]

    # heatmap = Layer_heatmap(h)   (lane-padded; sliced in the wrapper)
    out = jnp.dot(h.astype(jnp.bfloat16), w4_ref[...],
                  preferred_element_type=jnp.float32) + b4_ref[...]
    out_ref[...] = out.astype(out_ref.dtype)


def light_angles_head_forward(x_nchw, params, a_bins, b_bins):
    """Runs the fused MLP head. x_nchw: [B, C, H, W] float32."""
    B = x_nchw.shape[0]
    x_flat = x_nchw.reshape(B, -1)          # row-major flatten, same as torch .view(B, -1)

    d_in_pad = params["w0"].shape[0]
    if x_flat.shape[1] != d_in_pad:         # pad input features with zeros if needed
        x_flat = _pad2d(x_flat, B, d_in_pad)

    n_out = a_bins * b_bins
    n_out_pad = params["w4"].shape[1]

    operands = (
        x_flat,
        params["w0"], params["b0"],
        params["w1"], params["b1"],
        params["w2"], params["b2"],
        params["w3"], params["b3"],
        params["w4"], params["b4"],
    )

    # Everything fits comfortably in VMEM at these sizes (~6 MiB of bf16 weights),
    # so use full-array blocks (no grid) and chain the five MXU matmuls in-kernel.
    vmem_spec = pl.BlockSpec(memory_space=pltpu.MemorySpace.VMEM)
    out_padded = pl.pallas_call(
        mlp_head_kernel,
        out_shape=jax.ShapeDtypeStruct((B, n_out_pad), jnp.float32),
        in_specs=[vmem_spec] * len(operands),
        out_specs=vmem_spec,
        compiler_params=pltpu.CompilerParams(vmem_limit_bytes=32 << 20),
    )(*operands)
    return out_padded[:, :n_out]


def init_params(key, d_in, a_bins, b_bins):
    """Deterministic synthetic parameter init (shapes follow the module __init__).

    Returns (kernel_params, fp32_params):
      kernel_params: zero-padded, weights cast to bf16 (what the kernel consumes).
      fp32_params:   original unpadded f32 weights (for a loose semantic reference).
    """
    ks = jax.random.split(key, 10)

    def lin(kw, kb, fan_in, fan_out):
        # store as [in, out] = W_pt.T ; small scale for numerical sanity
        w = jax.random.normal(kw, (fan_in, fan_out), jnp.float32) * (1.0 / jnp.sqrt(fan_in))
        b = jax.random.normal(kb, (1, fan_out), jnp.float32) * 0.01
        return w, b

    n_out = a_bins * b_bins
    w0, b0 = lin(ks[0], ks[1], d_in, 1000)        # synthetic base_model -> 1000 features
    w1, b1 = lin(ks[2], ks[3], 1000, 1000)        # Layer1
    w2, b2 = lin(ks[4], ks[5], 1000, 512)         # Layer2
    w3, b3 = lin(ks[6], ks[7], 512, 512)          # layer3
    w4, b4 = lin(ks[8], ks[9], 512, n_out)        # Layer_heatmap

    fp32 = dict(w0=w0, b0=b0, w1=w1, b1=b1, w2=w2, b2=b2,
                w3=w3, b3=b3, w4=w4, b4=b4)

    # Lane-dense padding: 1000 -> 1024, d_in -> multiple of 128, n_out -> multiple of 128.
    d_in_p = _round_up(d_in, LANE)
    f1_p = _round_up(1000, LANE)                  # 1024
    n_out_p = _round_up(n_out, LANE)

    kp = dict(
        w0=_pad2d(w0, d_in_p, f1_p).astype(jnp.bfloat16),
        b0=_pad2d(b0, 1, f1_p),
        w1=_pad2d(w1, f1_p, f1_p).astype(jnp.bfloat16),
        b1=_pad2d(b1, 1, f1_p),
        w2=_pad2d(w2, f1_p, 512).astype(jnp.bfloat16),
        b2=b2,
        w3=w3.astype(jnp.bfloat16),
        b3=b3,
        w4=_pad2d(w4, 512, n_out_p).astype(jnp.bfloat16),
        b4=_pad2d(b4, 1, n_out_p),
    )
    return kp, fp32


def reference_forward_bf16(x_nchw, kp, a_bins, b_bins):
    """Pure-JAX reference that mirrors the kernel's bf16-in / f32-accumulate math."""
    B = x_nchw.shape[0]
    h = x_nchw.reshape(B, -1)
    d_in_pad = kp["w0"].shape[0]
    if h.shape[1] != d_in_pad:
        h = _pad2d(h, B, d_in_pad)

    def mm(a, w):
        return jnp.dot(a.astype(jnp.bfloat16), w, preferred_element_type=jnp.float32)

    h = jnp.maximum(mm(h, kp["w0"]) + kp["b0"], 0.0)
    h = jnp.maximum(mm(h, kp["w1"]) + kp["b1"], 0.0)
    h = jnp.maximum(mm(h, kp["w2"]) + kp["b2"], 0.0)
    h = mm(h, kp["w3"]) + kp["b3"]
    out = mm(h, kp["w4"]) + kp["b4"]
    return out[:, :a_bins * b_bins]


def reference_forward_fp32(x_nchw, p):
    """Full-precision reference of the original module semantics (loose check)."""
    h = x_nchw.reshape(x_nchw.shape[0], -1)
    h = jnp.maximum(h @ p["w0"] + p["b0"], 0.0)
    h = jnp.maximum(h @ p["w1"] + p["b1"], 0.0)
    h = jnp.maximum(h @ p["w2"] + p["b2"], 0.0)
    h = h @ p["w3"] + p["b3"]
    return h @ p["w4"] + p["b4"]


if __name__ == "__main__":
    key = jax.random.PRNGKey(0)
    k_x, k_p = jax.random.split(key)

    B, C, H, W = 2, 4, 16, 16          # small NCHW image input (C*H*W = 1024)
    a_bins, b_bins = 8, 8

    x = jax.random.normal(k_x, (B, C, H, W), jnp.float32)
    kernel_params, fp32_params = init_params(k_p, C * H * W, a_bins, b_bins)

    heatmap = light_angles_head_forward(x, kernel_params, a_bins, b_bins)
    heatmap = jax.block_until_ready(heatmap)
    assert heatmap.shape == (B, a_bins * b_bins)

    # Tight check against a reference with matching bf16 matmul semantics.
    ref_bf16 = reference_forward_bf16(x, kernel_params, a_bins, b_bins)
    assert jnp.allclose(heatmap, ref_bf16, atol=2e-3, rtol=2e-3), \
        "mismatch vs bf16-matched reference"

    # Loose check against the full-precision f32 semantics of the original module.
    ref_f32 = reference_forward_fp32(x, fp32_params)
    assert jnp.allclose(heatmap, ref_f32, atol=7e-2, rtol=7e-2), \
        "mismatch vs fp32 reference"

    print("KERNEL_OK")
</pallas_src>

<mosaic_0001>
module attributes {stable_mosaic.version = 11 : i64} {
  func.func @mlp_head_kernel(%arg0: memref<2x1024xf32, #tpu.memory_space<vmem>>, %arg1: memref<1024x1024xbf16, #tpu.memory_space<vmem>>, %arg2: memref<1x1024xf32, #tpu.memory_space<vmem>>, %arg3: memref<1024x1024xbf16, #tpu.memory_space<vmem>>, %arg4: memref<1x1024xf32, #tpu.memory_space<vmem>>, %arg5: memref<1024x512xbf16, #tpu.memory_space<vmem>>, %arg6: memref<1x512xf32, #tpu.memory_space<vmem>>, %arg7: memref<512x512xbf16, #tpu.memory_space<vmem>>, %arg8: memref<1x512xf32, #tpu.memory_space<vmem>>, %arg9: memref<512x128xbf16, #tpu.memory_space<vmem>>, %arg10: memref<1x128xf32, #tpu.memory_space<vmem>>, %arg11: memref<2x128xf32, #tpu.memory_space<vmem>>) attributes {dimension_semantics = [], scalar_prefetch = 0 : i64, scratch_operands = 0 : i64, tpu.core_type = #tpu.core_type<tc>} {
    %c0 = arith.constant 0 : index
    %c0_0 = arith.constant 0 : index
    %0 = vector.load %arg0[%c0, %c0_0] : memref<2x1024xf32, #tpu.memory_space<vmem>>, vector<2x1024xf32>
    %1 = arith.truncf %0 : vector<2x1024xf32> to vector<2x1024xbf16>
    %c0_1 = arith.constant 0 : index
    %c0_2 = arith.constant 0 : index
    %2 = vector.load %arg1[%c0_1, %c0_2] : memref<1024x1024xbf16, #tpu.memory_space<vmem>>, vector<1024x1024xbf16>
    %cst = arith.constant dense<0.000000e+00> : vector<2x1024xf32>
    %3 = tpu.matmul %1, %2, %cst {dimension_numbers = #tpu.dot_dimension_numbers<[1], [0], [0], [1], [0, 0, 1, 1], [], []>} : vector<2x1024xbf16>, vector<1024x1024xbf16>, vector<2x1024xf32> -> vector<2x1024xf32>
    %c0_3 = arith.constant 0 : index
    %c0_4 = arith.constant 0 : index
    %4 = vector.load %arg2[%c0_3, %c0_4] : memref<1x1024xf32, #tpu.memory_space<vmem>>, vector<1x1024xf32>
    %5 = vector.broadcast %4 : vector<1x1024xf32> to vector<2x1024xf32>
    %6 = arith.addf %3, %5 : vector<2x1024xf32>
    %cst_5 = arith.constant 0.000000e+00 : f32
    %7 = vector.broadcast %cst_5 : f32 to vector<2x1024xf32>
    %8 = arith.maximumf %6, %7 : vector<2x1024xf32>
    %9 = arith.truncf %8 : vector<2x1024xf32> to vector<2x1024xbf16>
    %c0_6 = arith.constant 0 : index
    %c0_7 = arith.constant 0 : index
    %10 = vector.load %arg3[%c0_6, %c0_7] : memref<1024x1024xbf16, #tpu.memory_space<vmem>>, vector<1024x1024xbf16>
    %cst_8 = arith.constant dense<0.000000e+00> : vector<2x1024xf32>
    %11 = tpu.matmul %9, %10, %cst_8 {dimension_numbers = #tpu.dot_dimension_numbers<[1], [0], [0], [1], [0, 0, 1, 1], [], []>} : vector<2x1024xbf16>, vector<1024x1024xbf16>, vector<2x1024xf32> -> vector<2x1024xf32>
    %c0_9 = arith.constant 0 : index
    %c0_10 = arith.constant 0 : index
    %12 = vector.load %arg4[%c0_9, %c0_10] : memref<1x1024xf32, #tpu.memory_space<vmem>>, vector<1x1024xf32>
    %13 = vector.broadcast %12 : vector<1x1024xf32> to vector<2x1024xf32>
    %14 = arith.addf %11, %13 : vector<2x1024xf32>
    %cst_11 = arith.constant 0.000000e+00 : f32
    %15 = vector.broadcast %cst_11 : f32 to vector<2x1024xf32>
    %16 = arith.maximumf %14, %15 : vector<2x1024xf32>
    %17 = arith.truncf %16 : vector<2x1024xf32> to vector<2x1024xbf16>
    %c0_12 = arith.constant 0 : index
    %c0_13 = arith.constant 0 : index
    %18 = vector.load %arg5[%c0_12, %c0_13] : memref<1024x512xbf16, #tpu.memory_space<vmem>>, vector<1024x512xbf16>
    %cst_14 = arith.constant dense<0.000000e+00> : vector<2x512xf32>
    %19 = tpu.matmul %17, %18, %cst_14 {dimension_numbers = #tpu.dot_dimension_numbers<[1], [0], [0], [1], [0, 0, 1, 1], [], []>} : vector<2x1024xbf16>, vector<1024x512xbf16>, vector<2x512xf32> -> vector<2x512xf32>
    %c0_15 = arith.constant 0 : index
    %c0_16 = arith.constant 0 : index
    %20 = vector.load %arg6[%c0_15, %c0_16] : memref<1x512xf32, #tpu.memory_space<vmem>>, vector<1x512xf32>
    %21 = vector.broadcast %20 : vector<1x512xf32> to vector<2x512xf32>
    %22 = arith.addf %19, %21 : vector<2x512xf32>
    %cst_17 = arith.constant 0.000000e+00 : f32
    %23 = vector.broadcast %cst_17 : f32 to vector<2x512xf32>
    %24 = arith.maximumf %22, %23 : vector<2x512xf32>
    %25 = arith.truncf %24 : vector<2x512xf32> to vector<2x512xbf16>
    %c0_18 = arith.constant 0 : index
    %c0_19 = arith.constant 0 : index
    %26 = vector.load %arg7[%c0_18, %c0_19] : memref<512x512xbf16, #tpu.memory_space<vmem>>, vector<512x512xbf16>
    %cst_20 = arith.constant dense<0.000000e+00> : vector<2x512xf32>
    %27 = tpu.matmul %25, %26, %cst_20 {dimension_numbers = #tpu.dot_dimension_numbers<[1], [0], [0], [1], [0, 0, 1, 1], [], []>} : vector<2x512xbf16>, vector<512x512xbf16>, vector<2x512xf32> -> vector<2x512xf32>
    %c0_21 = arith.constant 0 : index
    %c0_22 = arith.constant 0 : index
    %28 = vector.load %arg8[%c0_21, %c0_22] : memref<1x512xf32, #tpu.memory_space<vmem>>, vector<1x512xf32>
    %29 = vector.broadcast %28 : vector<1x512xf32> to vector<2x512xf32>
    %30 = arith.addf %27, %29 : vector<2x512xf32>
    %31 = arith.truncf %30 : vector<2x512xf32> to vector<2x512xbf16>
    %c0_23 = arith.constant 0 : index
    %c0_24 = arith.constant 0 : index
    %32 = vector.load %arg9[%c0_23, %c0_24] : memref<512x128xbf16, #tpu.memory_space<vmem>>, vector<512x128xbf16>
    %cst_25 = arith.constant dense<0.000000e+00> : vector<2x128xf32>
    %33 = tpu.matmul %31, %32, %cst_25 {dimension_numbers = #tpu.dot_dimension_numbers<[1], [0], [0], [1], [0, 0, 1, 1], [], []>} : vector<2x512xbf16>, vector<512x128xbf16>, vector<2x128xf32> -> vector<2x128xf32>
    %c0_26 = arith.constant 0 : index
    %c0_27 = arith.constant 0 : index
    %34 = vector.load %arg10[%c0_26, %c0_27] : memref<1x128xf32, #tpu.memory_space<vmem>>, vector<1x128xf32>
    %35 = vector.broadcast %34 : vector<1x128xf32> to vector<2x128xf32>
    %36 = arith.addf %33, %35 : vector<2x128xf32>
    %c0_28 = arith.constant 0 : index
    %c0_29 = arith.constant 0 : index
    %37 = vector.load %arg11[%c0_28, %c0_29] : memref<2x128xf32, #tpu.memory_space<vmem>>, vector<2x128xf32>
    tpu.vector_store %arg11[%c0_28, %c0_29], %36 {strides = array<i32>} : memref<2x128xf32, #tpu.memory_space<vmem>>, vector<2x128xf32>,
    return
  }
}

</mosaic_0001>

<llo_original>
// kernel: tpu_custom_call.1
$region0: #{tpu_custom_call.1}
  #allocation0 [shape = 'u32[]', space=smem, size = 0x4, offset = 0x4, fixed_abs, tag = 'smem constant byte address 0x4 - core index']
  #allocation1 [shape = 'u32[144,128]{1,0:T(1,128)}', space=vmem, size = 0x12000, scoped, tag = 'internal scratch']
  %s0 = inlined_call_operand.hbm [shape: f32[2,1024], index: 0, kind: input, shape index: {}]
  %s1 = inlined_call_operand.hbm [shape: bf16[1024,1024], index: 1, kind: input, shape index: {}]
  %s2 = inlined_call_operand.hbm [shape: f32[1,1024], index: 2, kind: input, shape index: {}]
  %s3 = inlined_call_operand.hbm [shape: bf16[1024,1024], index: 3, kind: input, shape index: {}]
  %s4 = inlined_call_operand.hbm [shape: f32[1,1024], index: 4, kind: input, shape index: {}]
  %s5 = inlined_call_operand.hbm [shape: bf16[1024,512], index: 5, kind: input, shape index: {}]
  %s6 = inlined_call_operand.hbm [shape: f32[1,512], index: 6, kind: input, shape index: {}]
  %s7 = inlined_call_operand.hbm [shape: bf16[512,512], index: 7, kind: input, shape index: {}]
  %s8 = inlined_call_operand.hbm [shape: f32[1,512], index: 8, kind: input, shape index: {}]
  %s9 = inlined_call_operand.hbm [shape: bf16[512,128], index: 9, kind: input, shape index: {}]
  %s10 = inlined_call_operand.hbm [shape: f32[1,128], index: 10, kind: input, shape index: {}]
  %s11 = inlined_call_operand.hbm [shape: f32[2,128], index: 11, kind: output, shape index: {}]
  %s12 = sld [smem:[#allocation0]]
  $region98: #{tpu_custom_call.1} parent=0
    _
  %s14 = ssub.s32 1, %s12
  %s15 = scalar_select 0, %s14, %s12
  $region1: #{tpu_custom_call.1} parent=0
    #allocation2 [shape = 'u8[8192]{0}', space=vmem, size = 0x2000, scoped, tag = 'input window, operand 0, single buffered']
    #allocation3 [shape = 's32[1]{0}', space=sflag, size = 0x4, scoped, tag = 'scoped memory for tpu_custom_call.1']
    #allocation4 [shape = 's32[1]{0}', space=sflag, size = 0x4, scoped, tag = 'scoped memory for tpu_custom_call.1']
    #allocation5 [shape = 'u8[2097152]{0}', space=vmem, size = 0x200000, scoped, tag = 'input window, operand 1, single buffered']
    #allocation6 [shape = 's32[1]{0}', space=sflag, size = 0x4, scoped, tag = 'scoped memory for tpu_custom_call.1']
    #allocation7 [shape = 'u8[4096]{0}', space=vmem, size = 0x1000, scoped, tag = 'input window, operand 2, single buffered']
    #allocation8 [shape = 'u8[2097152]{0}', space=vmem, size = 0x200000, scoped, tag = 'input window, operand 3, single buffered']
    #allocation9 [shape = 's32[1]{0}', space=sflag, size = 0x4, scoped, tag = 'scoped memory for tpu_custom_call.1']
    #allocation10 [shape = 'u8[4096]{0}', space=vmem, size = 0x1000, scoped, tag = 'input window, operand 4, single buffered']
    #allocation11 [shape = 'u8[1048576]{0}', space=vmem, size = 0x100000, scoped, tag = 'input window, operand 5, single buffered']
    #allocation12 [shape = 's32[1]{0}', space=sflag, size = 0x4, scoped, tag = 'scoped memory for tpu_custom_call.1']
    #allocation13 [shape = 'u8[2048]{0}', space=vmem, size = 0x800, scoped, tag = 'input window, operand 6, single buffered']
    #allocation14 [shape = 'u8[524288]{0}', space=vmem, size = 0x80000, scoped, tag = 'input window, operand 7, single buffered']
    #allocation15 [shape = 's32[1]{0}', space=sflag, size = 0x4, scoped, tag = 'scoped memory for tpu_custom_call.1']
    #allocation16 [shape = 'u8[2048]{0}', space=vmem, size = 0x800, scoped, tag = 'input window, operand 8, single buffered']
    #allocation17 [shape = 'u8[131072]{0}', space=vmem, size = 0x20000, scoped, tag = 'input window, operand 9, single buffered']
    #allocation18 [shape = 's32[1]{0}', space=sflag, size = 0x4, scoped, tag = 'scoped memory for tpu_custom_call.1']
    #allocation19 [shape = 'u8[512]{0}', space=vmem, size = 0x400, scoped, tag = 'input window, operand 10, single buffered']
    #allocation20 [shape = 'u8[1024]{0}', space=vmem, size = 0x400, scoped, tag = 'output window, operand 0, single buffered']
    %16 = vsyncpa [#allocation3], 0
    %17 = vsyncpa [#allocation6], 0
    %18 = vsyncpa [#allocation9], 0
    %19 = vsyncpa [#allocation12], 0
    %20 = vsyncpa [#allocation15], 0
    %21 = vsyncpa [#allocation18], 0
    %22 = vsyncpa [#allocation4], 0
    // Predicated region
    $region2: #{tpu_custom_call.1} parent=1 // pred_check
      _
    $region3: #{tpu_custom_call.1} parent=1 // pred_check_branch
      %24 = sbr.rel (0) target = $region5
    $region4: #{tpu_custom_call.1} parent=1 // pred_region
      %s26 = ssub.s32 256, 256
      %27 = vsyncadd [#allocation3], %s26
      %s29 = sshll.u32 [#allocation2], 4
      %s30 = int_to_ptr.vmem [resolvable:$true] %s29
      %32 = dma.hbm_to_vmem [thread:$0]  %s0, 256, %s30, [#allocation3]
    $region5: #{tpu_custom_call.1} parent=1 // pred_fallthru
      _
    // Predicated region
    $region6: #{tpu_custom_call.1} parent=1 // pred_check
      _
    $region7: #{tpu_custom_call.1} parent=1 // pred_check_branch
      %34 = sbr.rel (0) target = $region9
    $region8: #{tpu_custom_call.1} parent=1 // pred_region
      %s36 = ssub.s32 65536, 65536
      %37 = vsyncadd [#allocation6], %s36
      %s38 = sshll.u32 [#allocation5], 4
      %s39 = int_to_ptr.vmem [resolvable:$true] %s38
      %44 = dma.hbm_to_vmem [thread:$0]  %s1, 65536, %s39, [#allocation6], 512, 512, 32
    $region9: #{tpu_custom_call.1} parent=1 // pred_fallthru
      _
    // Predicated region
    $region10: #{tpu_custom_call.1} parent=1 // pred_check
      _
    $region11: #{tpu_custom_call.1} parent=1 // pred_check_branch
      %46 = sbr.rel (0) target = $region13
    $region12: #{tpu_custom_call.1} parent=1 // pred_region
      %s48 = ssub.s32 128, 128
      %49 = vsyncadd [#allocation6], %s48
      %s51 = sshll.u32 [#allocation7], 4
      %s52 = int_to_ptr.vmem [resolvable:$true] %s51
      %54 = dma.hbm_to_vmem [thread:$0]  %s2, 128, %s52, [#allocation6]
    $region13: #{tpu_custom_call.1} parent=1 // pred_fallthru
      _
    // Predicated region
    $region14: #{tpu_custom_call.1} parent=1 // pred_check
      _
    $region15: #{tpu_custom_call.1} parent=1 // pred_check_branch
      %56 = sbr.rel (0) target = $region17
    $region16: #{tpu_custom_call.1} parent=1 // pred_region
      %s58 = ssub.s32 65536, 65536
      %59 = vsyncadd [#allocation9], %s58
      %s60 = sshll.u32 [#allocation8], 4
      %s61 = int_to_ptr.vmem [resolvable:$true] %s60
      %66 = dma.hbm_to_vmem [thread:$0]  %s3, 65536, %s61, [#allocation9], 512, 512, 32
    $region17: #{tpu_custom_call.1} parent=1 // pred_fallthru
      _
    // Predicated region
    $region18: #{tpu_custom_call.1} parent=1 // pred_check
      _
    $region19: #{tpu_custom_call.1} parent=1 // pred_check_branch
      %68 = sbr.rel (0) target = $region21
    $region20: #{tpu_custom_call.1} parent=1 // pred_region
      %s70 = ssub.s32 128, 128
      %71 = vsyncadd [#allocation9], %s70
      %s73 = sshll.u32 [#allocation10], 4
      %s74 = int_to_ptr.vmem [resolvable:$true] %s73
      %76 = dma.hbm_to_vmem [thread:$0]  %s4, 128, %s74, [#allocation9]
    $region21: #{tpu_custom_call.1} parent=1 // pred_fallthru
      _
    // Predicated region
    $region22: #{tpu_custom_call.1} parent=1 // pred_check
      _
    $region23: #{tpu_custom_call.1} parent=1 // pred_check_branch
      %78 = sbr.rel (0) target = $region25
    $region24: #{tpu_custom_call.1} parent=1 // pred_region
      %s80 = ssub.s32 32768, 32768
      %81 = vsyncadd [#allocation12], %s80
      %s82 = sshll.u32 [#allocation11], 4
      %s83 = int_to_ptr.vmem [resolvable:$true] %s82
      %88 = dma.hbm_to_vmem [thread:$0]  %s5, 32768, %s83, [#allocation12], 256, 256, 16
    $region25: #{tpu_custom_call.1} parent=1 // pred_fallthru
      _
    // Predicated region
    $region26: #{tpu_custom_call.1} parent=1 // pred_check
      _
    $region27: #{tpu_custom_call.1} parent=1 // pred_check_branch
      %90 = sbr.rel (0) target = $region29
    $region28: #{tpu_custom_call.1} parent=1 // pred_region
      %s92 = ssub.s32 64, 64
      %93 = vsyncadd [#allocation12], %s92
      %s95 = sshll.u32 [#allocation13], 4
      %s96 = int_to_ptr.vmem [resolvable:$true] %s95
      %98 = dma.hbm_to_vmem [thread:$0]  %s6, 64, %s96, [#allocation12]
    $region29: #{tpu_custom_call.1} parent=1 // pred_fallthru
      _
    // Predicated region
    $region30: #{tpu_custom_call.1} parent=1 // pred_check
      _
    $region31: #{tpu_custom_call.1} parent=1 // pred_check_branch
      %100 = sbr.rel (0) target = $region33
    $region32: #{tpu_custom_call.1} parent=1 // pred_region
      %s102 = ssub.s32 16384, 16384
      %103 = vsyncadd [#allocation15], %s102
      %s104 = sshll.u32 [#allocation14], 4
      %s105 = int_to_ptr.vmem [resolvable:$true] %s104
      %110 = dma.hbm_to_vmem [thread:$0]  %s7, 16384, %s105, [#allocation15], 256, 256, 16
    $region33: #{tpu_custom_call.1} parent=1 // pred_fallthru
      _
    // Predicated region
    $region34: #{tpu_custom_call.1} parent=1 // pred_check
      _
    $region35: #{tpu_custom_call.1} parent=1 // pred_check_branch
      %112 = sbr.rel (0) target = $region37
    $region36: #{tpu_custom_call.1} parent=1 // pred_region
      %s114 = ssub.s32 64, 64
      %115 = vsyncadd [#allocation15], %s114
      %s117 = sshll.u32 [#allocation16], 4
      %s118 = int_to_ptr.vmem [resolvable:$true] %s117
      %120 = dma.hbm_to_vmem [thread:$0]  %s8, 64, %s118, [#allocation15]
    $region37: #{tpu_custom_call.1} parent=1 // pred_fallthru
      _
    // Predicated region
    $region38: #{tpu_custom_call.1} parent=1 // pred_check
      _
    $region39: #{tpu_custom_call.1} parent=1 // pred_check_branch
      %122 = sbr.rel (0) target = $region41
    $region40: #{tpu_custom_call.1} parent=1 // pred_region
      %s124 = ssub.s32 4096, 4096
      %125 = vsyncadd [#allocation18], %s124
      %s126 = sshll.u32 [#allocation17], 4
      %s127 = int_to_ptr.vmem [resolvable:$true] %s126
      %132 = dma.hbm_to_vmem [thread:$0]  %s9, 4096, %s127, [#allocation18], 64, 64, 4
    $region41: #{tpu_custom_call.1} parent=1 // pred_fallthru
      _
    // Predicated region
    $region42: #{tpu_custom_call.1} parent=1 // pred_check
      _
    $region43: #{tpu_custom_call.1} parent=1 // pred_check_branch
      %134 = sbr.rel (0) target = $region45
    $region44: #{tpu_custom_call.1} parent=1 // pred_region
      %s136 = ssub.s32 16, 16
      %137 = vsyncadd [#allocation18], %s136
      %s139 = sshll.u32 [#allocation19], 4
      %s140 = int_to_ptr.vmem [resolvable:$true] %s139
      %142 = dma.hbm_to_vmem [thread:$0]  %s10, 16, %s140, [#allocation18]
    $region45: #{tpu_custom_call.1} parent=1 // pred_fallthru
      _
    // Predicated region
    $region46: #{tpu_custom_call.1} parent=1 // pred_check
      _
    $region47: #{tpu_custom_call.1} parent=1 // pred_check_branch
      %144 = sbr.rel (0) target = $region49
    $region48: #{tpu_custom_call.1} parent=1 // pred_region
      %145 = dma.done [#allocation3], 256
    $region49: #{tpu_custom_call.1} parent=1 // pred_fallthru
      _
    // Predicated region
    $region50: #{tpu_custom_call.1} parent=1 // pred_check
      _
    $region51: #{tpu_custom_call.1} parent=1 // pred_check_branch
      %147 = sbr.rel (0) target = $region53
    $region52: #{tpu_custom_call.1} parent=1 // pred_region
      %148 = dma.done [#allocation6], 65536
    $region53: #{tpu_custom_call.1} parent=1 // pred_fallthru
      _
    // Predicated region
    $region54: #{tpu_custom_call.1} parent=1 // pred_check
      _
    $region55: #{tpu_custom_call.1} parent=1 // pred_check_branch
      %150 = sbr.rel (0) target = $region57
    $region56: #{tpu_custom_call.1} parent=1 // pred_region
      %151 = dma.done [#allocation6], 128
    $region57: #{tpu_custom_call.1} parent=1 // pred_fallthru
      _
    // Predicated region
    $region58: #{tpu_custom_call.1} parent=1 // pred_check
      _
    $region59: #{tpu_custom_call.1} parent=1 // pred_check_branch
      %153 = sbr.rel (0) target = $region61
    $region60: #{tpu_custom_call.1} parent=1 // pred_region
      %154 = dma.done [#allocation9], 65536
    $region61: #{tpu_custom_call.1} parent=1 // pred_fallthru
      _
    // Predicated region
    $region62: #{tpu_custom_call.1} parent=1 // pred_check
      _
    $region63: #{tpu_custom_call.1} parent=1 // pred_check_branch
      %156 = sbr.rel (0) target = $region65
    $region64: #{tpu_custom_call.1} parent=1 // pred_region
      %157 = dma.done [#allocation9], 128
    $region65: #{tpu_custom_call.1} parent=1 // pred_fallthru
      _
    // Predicated region
    $region66: #{tpu_custom_call.1} parent=1 // pred_check
      _
    $region67: #{tpu_custom_call.1} parent=1 // pred_check_branch
      %159 = sbr.rel (0) target = $region69
    $region68: #{tpu_custom_call.1} parent=1 // pred_region
      %160 = dma.done [#allocation12], 32768
    $region69: #{tpu_custom_call.1} parent=1 // pred_fallthru
      _
    // Predicated region
    $region70: #{tpu_custom_call.1} parent=1 // pred_check
      _
    $region71: #{tpu_custom_call.1} parent=1 // pred_check_branch
      %162 = sbr.rel (0) target = $region73
    $region72: #{tpu_custom_call.1} parent=1 // pred_region
      %163 = dma.done [#allocation12], 64
    $region73: #{tpu_custom_call.1} parent=1 // pred_fallthru
      _
    // Predicated region
    $region74: #{tpu_custom_call.1} parent=1 // pred_check
      _
    $region75: #{tpu_custom_call.1} parent=1 // pred_check_branch
      %165 = sbr.rel (0) target = $region77
    $region76: #{tpu_custom_call.1} parent=1 // pred_region
      %166 = dma.done [#allocation15], 16384
    $region77: #{tpu_custom_call.1} parent=1 // pred_fallthru
      _
    // Predicated region
    $region78: #{tpu_custom_call.1} parent=1 // pred_check
      _
    $region79: #{tpu_custom_call.1} parent=1 // pred_check_branch
      %168 = sbr.rel (0) target = $region81
    $region80: #{tpu_custom_call.1} parent=1 // pred_region
      %169 = dma.done [#allocation15], 64
    $region81: #{tpu_custom_call.1} parent=1 // pred_fallthru
      _
    // Predicated region
    $region82: #{tpu_custom_call.1} parent=1 // pred_check
      _
    $region83: #{tpu_custom_call.1} parent=1 // pred_check_branch
      %171 = sbr.rel (0) target = $region85
    $region84: #{tpu_custom_call.1} parent=1 // pred_region
      %172 = dma.done [#allocation18], 4096
    $region85: #{tpu_custom_call.1} parent=1 // pred_fallthru
      _
    // Predicated region
    $region86: #{tpu_custom_call.1} parent=1 // pred_check
      _
    $region87: #{tpu_custom_call.1} parent=1 // pred_check_branch
      %174 = sbr.rel (0) target = $region89
    $region88: #{tpu_custom_call.1} parent=1 // pred_region
      %175 = dma.done [#allocation18], 16
    $region89: #{tpu_custom_call.1} parent=1 // pred_fallthru
      _
    %v177 = vld [vmem:[#allocation2] sm:$0xff]
    %v178 = vld [vmem:[#allocation2 + $0x8] sm:$0xff]
    %v181 = vcombine.high %v177, %v177
    %v183 = vunpack.c.l.s4 1983009808
    %v184 = vunpack.c.0.s8 %v183
    %v185 = vlaneseq
    %v186 = vshrl.u32 %v185, 7
    %v187 = vsub.s32 %v184, %v186
    %v188 = vrot.slane %v177, %v187
    %v190 = vunpack.c.l.s4 1983009808
    %v191 = vunpack.c.0.s8 %v190
    %v192 = vlaneseq
    %v193 = vshrl.u32 %v192, 7
    %v194 = vsub.s32 %v191, %v193
    %v195 = vrot.slane %v181, %v194
    %v196 = vcombine.high %v188, %v188
    %v197 = vcombine.high %v195, %v195
    %v198 = vcombine.high %v178, %v178
    %v200 = vunpack.c.l.s4 1983009808
    %v201 = vunpack.c.0.s8 %v200
    %v202 = vlaneseq
    %v203 = vshrl.u32 %v202, 7
    %v204 = vsub.s32 %v201, %v203
    %v205 = vrot.slane %v178, %v204
    %v207 = vunpack.c.l.s4 1983009808
    %v208 = vunpack.c.0.s8 %v207
    %v209 = vlaneseq
    %v210 = vshrl.u32 %v209, 7
    %v211 = vsub.s32 %v208, %v210
    %v212 = vrot.slane %v198, %v211
    %v213 = vcombine.high %v205, %v205
    %v214 = vcombine.high %v212, %v212
    %v223 = vpack.c.bf16 %v188, %v188
    %v224 = vpack.c.bf16 %v196, %v196
    %v225 = vpack.c.bf16 %v195, %v195
    %v226 = vpack.c.bf16 %v197, %v197
    %v227 = vpack.c.bf16 %v205, %v205
    %v228 = vpack.c.bf16 %v213, %v213
    %v229 = vpack.c.bf16 %v212, %v212
    %v230 = vpack.c.bf16 %v214, %v214
    %v231 = vld [vmem:[#allocation5] sm:$0xff]
    %v232 = vld [vmem:[#allocation5 + $0x8] sm:$0xff]
    %v233 = vld [vmem:[#allocation5 + $0x10] sm:$0xff]
    %v234 = vld [vmem:[#allocation5 + $0x18] sm:$0xff]
    %v235 = vld [vmem:[#allocation5 + $0x20] sm:$0xff]
    %v236 = vld [vmem:[#allocation5 + $0x28] sm:$0xff]
    %v237 = vld [vmem:[#allocation5 + $0x30] sm:$0xff]
    %v238 = vld [vmem:[#allocation5 + $0x38] sm:$0xff]
    %v239 = vld [vmem:[#allocation5 + $0x40] sm:$0xff]
    %v240 = vld [vmem:[#allocation5 + $0x48] sm:$0xff]
    %v241 = vld [vmem:[#allocation5 + $0x50] sm:$0xff]
    %v242 = vld [vmem:[#allocation5 + $0x58] sm:$0xff]
    %v243 = vld [vmem:[#allocation5 + $0x60] sm:$0xff]
    %v244 = vld [vmem:[#allocation5 + $0x68] sm:$0xff]
    %v245 = vld [vmem:[#allocation5 + $0x70] sm:$0xff]
    %v246 = vld [vmem:[#allocation5 + $0x78] sm:$0xff]
    %v247 = vld [vmem:[#allocation5 + $0x80] sm:$0xff]
    %v248 = vld [vmem:[#allocation5 + $0x88] sm:$0xff]
    %v249 = vld [vmem:[#allocation5 + $0x90] sm:$0xff]
    %v250 = vld [vmem:[#allocation5 + $0x98] sm:$0xff]
    %v251 = vld [vmem:[#allocation5 + $0xa0] sm:$0xff]
    %v252 = vld [vmem:[#allocation5 + $0xa8] sm:$0xff]
    %v253 = vld [vmem:[#allocation5 + $0xb0] sm:$0xff]
    %v254 = vld [vmem:[#allocation5 + $0xb8] sm:$0xff]
    %v255 = vld [vmem:[#allocation5 + $0xc0] sm:$0xff]
    %v256 = vld [vmem:[#allocation5 + $0xc8] sm:$0xff]
    %v257 = vld [vmem:[#allocation5 + $0xd0] sm:$0xff]
    %v258 = vld [vmem:[#allocation5 + $0xd8] sm:$0xff]
    %v259 = vld [vmem:[#allocation5 + $0xe0] sm:$0xff]
    %v260 = vld [vmem:[#allocation5 + $0xe8] sm:$0xff]
    %v261 = vld [vmem:[#allocation5 + $0xf0] sm:$0xff]
    %v262 = vld [vmem:[#allocation5 + $0xf8] sm:$0xff]
    %v263 = vld [vmem:[#allocation5 + $0x100] sm:$0xff]
    %v264 = vld [vmem:[#allocation5 + $0x108] sm:$0xff]
    %v265 = vld [vmem:[#allocation5 + $0x110] sm:$0xff]
    %v266 = vld [vmem:[#allocation5 + $0x118] sm:$0xff]
    %v267 = vld [vmem:[#allocation5 + $0x120] sm:$0xff]
    %v268 = vld [vmem:[#allocation5 + $0x128] sm:$0xff]
    %v269 = vld [vmem:[#allocation5 + $0x130] sm:$0xff]
    %v270 = vld [vmem:[#allocation5 + $0x138] sm:$0xff]
    %v271 = vld [vmem:[#allocation5 + $0x140] sm:$0xff]
    %v272 = vld [vmem:[#allocation5 + $0x148] sm:$0xff]
    %v273 = vld [vmem:[#allocation5 + $0x150] sm:$0xff]
    %v274 = vld [vmem:[#allocation5 + $0x158] sm:$0xff]
    %v275 = vld [vmem:[#allocation5 + $0x160] sm:$0xff]
    %v276 = vld [vmem:[#allocation5 + $0x168] sm:$0xff]
    %v277 = vld [vmem:[#allocation5 + $0x170] sm:$0xff]
    %v278 = vld [vmem:[#allocation5 + $0x178] sm:$0xff]
    %v279 = vld [vmem:[#allocation5 + $0x180] sm:$0xff]
    %v280 = vld [vmem:[#allocation5 + $0x188] sm:$0xff]
    %v281 = vld [vmem:[#allocation5 + $0x190] sm:$0xff]
    %v282 = vld [vmem:[#allocation5 + $0x198] sm:$0xff]
    %v283 = vld [vmem:[#allocation5 + $0x1a0] sm:$0xff]
    %v284 = vld [vmem:[#allocation5 + $0x1a8] sm:$0xff]
    %v285 = vld [vmem:[#allocation5 + $0x1b0] sm:$0xff]
    %v286 = vld [vmem:[#allocation5 + $0x1b8] sm:$0xff]
    %v287 = vld [vmem:[#allocation5 + $0x1c0] sm:$0xff]
    %v288 = vld [vmem:[#allocation5 + $0x1c8] sm:$0xff]
    %v289 = vld [vmem:[#allocation5 + $0x1d0] sm:$0xff]
    %v290 = vld [vmem:[#allocation5 + $0x1d8] sm:$0xff]
    %v291 = vld [vmem:[#allocation5 + $0x1e0] sm:$0xff]
    %v292 = vld [vmem:[#allocation5 + $0x1e8] sm:$0xff]
    %v293 = vld [vmem:[#allocation5 + $0x1f0] sm:$0xff]
    %v294 = vld [vmem:[#allocation5 + $0x1f8] sm:$0xff]
    %v295 = vld [vmem:[#allocation5 + $0x200] sm:$0xff]
    %v296 = vld [vmem:[#allocation5 + $0x208] sm:$0xff]
    %v297 = vld [vmem:[#allocation5 + $0x210] sm:$0xff]
    %v298 = vld [vmem:[#allocation5 + $0x218] sm:$0xff]
    %v299 = vld [vmem:[#allocation5 + $0x220] sm:$0xff]
    %v300 = vld [vmem:[#allocation5 + $0x228] sm:$0xff]
    %v301 = vld [vmem:[#allocation5 + $0x230] sm:$0xff]
    %v302 = vld [vmem:[#allocation5 + $0x238] sm:$0xff]
    %v303 = vld [vmem:[#allocation5 + $0x240] sm:$0xff]
    %v304 = vld [vmem:[#allocation5 + $0x248] sm:$0xff]
    %v305 = vld [vmem:[#allocation5 + $0x250] sm:$0xff]
    %v306 = vld [vmem:[#allocation5 + $0x258] sm:$0xff]
    %v307 = vld [vmem:[#allocation5 + $0x260] sm:$0xff]
    %v308 = vld [vmem:[#allocation5 + $0x268] sm:$0xff]
    %v309 = vld [vmem:[#allocation5 + $0x270] sm:$0xff]
    %v310 = vld [vmem:[#allocation5 + $0x278] sm:$0xff]
    %v311 = vld [vmem:[#allocation5 + $0x280] sm:$0xff]
    %v312 = vld [vmem:[#allocation5 + $0x288] sm:$0xff]
    %v313 = vld [vmem:[#allocation5 + $0x290] sm:$0xff]
    %v314 = vld [vmem:[#allocation5 + $0x298] sm:$0xff]
    %v315 = vld [vmem:[#allocation5 + $0x2a0] sm:$0xff]
    %v316 = vld [vmem:[#allocation5 + $0x2a8] sm:$0xff]
    %v317 = vld [vmem:[#allocation5 + $0x2b0] sm:$0xff]
    %v318 = vld [vmem:[#allocation5 + $0x2b8] sm:$0xff]
    %v319 = vld [vmem:[#allocation5 + $0x2c0] sm:$0xff]
    %v320 = vld [vmem:[#allocation5 + $0x2c8] sm:$0xff]
    %v321 = vld [vmem:[#allocation5 + $0x2d0] sm:$0xff]
    %v322 = vld [vmem:[#allocation5 + $0x2d8] sm:$0xff]
    %v323 = vld [vmem:[#allocation5 + $0x2e0] sm:$0xff]
    %v324 = vld [vmem:[#allocation5 + $0x2e8] sm:$0xff]
    %v325 = vld [vmem:[#allocation5 + $0x2f0] sm:$0xff]
    %v326 = vld [vmem:[#allocation5 + $0x2f8] sm:$0xff]
    %v327 = vld [vmem:[#allocation5 + $0x300] sm:$0xff]
    %v328 = vld [vmem:[#allocation5 + $0x308] sm:$0xff]
    %v329 = vld [vmem:[#allocation5 + $0x310] sm:$0xff]
    %v330 = vld [vmem:[#allocation5 + $0x318] sm:$0xff]
    %v331 = vld [vmem:[#allocation5 + $0x320] sm:$0xff]
    %v332 = vld [vmem:[#allocation5 + $0x328] sm:$0xff]
    %v333 = vld [vmem:[#allocation5 + $0x330] sm:$0xff]
    %v334 = vld [vmem:[#allocation5 + $0x338] sm:$0xff]
    %v335 = vld [vmem:[#allocation5 + $0x340] sm:$0xff]
    %v336 = vld [vmem:[#allocation5 + $0x348] sm:$0xff]
    %v337 = vld [vmem:[#allocation5 + $0x350] sm:$0xff]
    %v338 = vld [vmem:[#allocation5 + $0x358] sm:$0xff]
    %v339 = vld [vmem:[#allocation5 + $0x360] sm:$0xff]
    %v340 = vld [vmem:[#allocation5 + $0x368] sm:$0xff]
    %v341 = vld [vmem:[#allocation5 + $0x370] sm:$0xff]
    %v342 = vld [vmem:[#allocation5 + $0x378] sm:$0xff]
    %v343 = vld [vmem:[#allocation5 + $0x380] sm:$0xff]
    %v344 = vld [vmem:[#allocation5 + $0x388] sm:$0xff]
    %v345 = vld [vmem:[#allocation5 + $0x390] sm:$0xff]
    %v346 = vld [vmem:[#allocation5 + $0x398] sm:$0xff]
    %v347 = vld [vmem:[#allocation5 + $0x3a0] sm:$0xff]
    %v348 = vld [vmem:[#allocation5 + $0x3a8] sm:$0xff]
    %v349 = vld [vmem:[#allocation5 + $0x3b0] sm:$0xff]
    %v350 = vld [vmem:[#allocation5 + $0x3b8] sm:$0xff]
    %v351 = vld [vmem:[#allocation5 + $0x3c0] sm:$0xff]
    %v352 = vld [vmem:[#allocation5 + $0x3c8] sm:$0xff]
    %v353 = vld [vmem:[#allocation5 + $0x3d0] sm:$0xff]
    %v354 = vld [vmem:[#allocation5 + $0x3d8] sm:$0xff]
    %v355 = vld [vmem:[#allocation5 + $0x3e0] sm:$0xff]
    %v356 = vld [vmem:[#allocation5 + $0x3e8] sm:$0xff]
    %v357 = vld [vmem:[#allocation5 + $0x3f0] sm:$0xff]
    %v358 = vld [vmem:[#allocation5 + $0x3f8] sm:$0xff]
    %v359 = vld [vmem:[#allocation5 + $0x400] sm:$0xff]
    %v360 = vld [vmem:[#allocation5 + $0x408] sm:$0xff]
    %v361 = vld [vmem:[#allocation5 + $0x410] sm:$0xff]
    %v362 = vld [vmem:[#allocation5 + $0x418] sm:$0xff]
    %v363 = vld [vmem:[#allocation5 + $0x420] sm:$0xff]
    %v364 = vld [vmem:[#allocation5 + $0x428] sm:$0xff]
    %v365 = vld [vmem:[#allocation5 + $0x430] sm:$0xff]
    %v366 = vld [vmem:[#allocation5 + $0x438] sm:$0xff]
    %v367 = vld [vmem:[#allocation5 + $0x440] sm:$0xff]
    %v368 = vld [vmem:[#allocation5 + $0x448] sm:$0xff]
    %v369 = vld [vmem:[#allocation5 + $0x450] sm:$0xff]
    %v370 = vld [vmem:[#allocation5 + $0x458] sm:$0xff]
    %v371 = vld [vmem:[#allocation5 + $0x460] sm:$0xff]
    %v372 = vld [vmem:[#allocation5 + $0x468] sm:$0xff]
    %v373 = vld [vmem:[#allocation5 + $0x470] sm:$0xff]
    %v374 = vld [vmem:[#allocation5 + $0x478] sm:$0xff]
    %v375 = vld [vmem:[#allocation5 + $0x480] sm:$0xff]
    %v376 = vld [vmem:[#allocation5 + $0x488] sm:$0xff]
    %v377 = vld [vmem:[#allocation5 + $0x490] sm:$0xff]
    %v378 = vld [vmem:[#allocation5 + $0x498] sm:$0xff]
    %v379 = vld [vmem:[#allocation5 + $0x4a0] sm:$0xff]
    %v380 = vld [vmem:[#allocation5 + $0x4a8] sm:$0xff]
    %v381 = vld [vmem:[#allocation5 + $0x4b0] sm:$0xff]
    %v382 = vld [vmem:[#allocation5 + $0x4b8] sm:$0xff]
    %v383 = vld [vmem:[#allocation5 + $0x4c0] sm:$0xff]
    %v384 = vld [vmem:[#allocation5 + $0x4c8] sm:$0xff]
    %v385 = vld [vmem:[#allocation5 + $0x4d0] sm:$0xff]
    %v386 = vld [vmem:[#allocation5 + $0x4d8] sm:$0xff]
    %v387 = vld [vmem:[#allocation5 + $0x4e0] sm:$0xff]
    %v388 = vld [vmem:[#allocation5 + $0x4e8] sm:$0xff]
    %v389 = vld [vmem:[#allocation5 + $0x4f0] sm:$0xff]
    %v390 = vld [vmem:[#allocation5 + $0x4f8] sm:$0xff]
    %v391 = vld [vmem:[#allocation5 + $0x500] sm:$0xff]
    %v392 = vld [vmem:[#allocation5 + $0x508] sm:$0xff]
    %v393 = vld [vmem:[#allocation5 + $0x510] sm:$0xff]
    %v394 = vld [vmem:[#allocation5 + $0x518] sm:$0xff]
    %v395 = vld [vmem:[#allocation5 + $0x520] sm:$0xff]
    %v396 = vld [vmem:[#allocation5 + $0x528] sm:$0xff]
    %v397 = vld [vmem:[#allocation5 + $0x530] sm:$0xff]
    %v398 = vld [vmem:[#allocation5 + $0x538] sm:$0xff]
    %v399 = vld [vmem:[#allocation5 + $0x540] sm:$0xff]
    %v400 = vld [vmem:[#allocation5 + $0x548] sm:$0xff]
    %v401 = vld [vmem:[#allocation5 + $0x550] sm:$0xff]
    %v402 = vld [vmem:[#allocation5 + $0x558] sm:$0xff]
    %v403 = vld [vmem:[#allocation5 + $0x560] sm:$0xff]
    %v404 = vld [vmem:[#allocation5 + $0x568] sm:$0xff]
    %v405 = vld [vmem:[#allocation5 + $0x570] sm:$0xff]
    %v406 = vld [vmem:[#allocation5 + $0x578] sm:$0xff]
    %v407 = vld [vmem:[#allocation5 + $0x580] sm:$0xff]
    %v408 = vld [vmem:[#allocation5 + $0x588] sm:$0xff]
    %v409 = vld [vmem:[#allocation5 + $0x590] sm:$0xff]
    %v410 = vld [vmem:[#allocation5 + $0x598] sm:$0xff]
    %v411 = vld [vmem:[#allocation5 + $0x5a0] sm:$0xff]
    %v412 = vld [vmem:[#allocation5 + $0x5a8] sm:$0xff]
    %v413 = vld [vmem:[#allocation5 + $0x5b0] sm:$0xff]
    %v414 = vld [vmem:[#allocation5 + $0x5b8] sm:$0xff]
    %v415 = vld [vmem:[#allocation5 + $0x5c0] sm:$0xff]
    %v416 = vld [vmem:[#allocation5 + $0x5c8] sm:$0xff]
    %v417 = vld [vmem:[#allocation5 + $0x5d0] sm:$0xff]
    %v418 = vld [vmem:[#allocation5 + $0x5d8] sm:$0xff]
    %v419 = vld [vmem:[#allocation5 + $0x5e0] sm:$0xff]
    %v420 = vld [vmem:[#allocation5 + $0x5e8] sm:$0xff]
    %v421 = vld [vmem:[#allocation5 + $0x5f0] sm:$0xff]
    %v422 = vld [vmem:[#allocation5 + $0x5f8] sm:$0xff]
    %v423 = vld [vmem:[#allocation5 + $0x600] sm:$0xff]
    %v424 = vld [vmem:[#allocation5 + $0x608] sm:$0xff]
    %v425 = vld [vmem:[#allocation5 + $0x610] sm:$0xff]
    %v426 = vld [vmem:[#allocation5 + $0x618] sm:$0xff]
    %v427 = vld [vmem:[#allocation5 + $0x620] sm:$0xff]
    %v428 = vld [vmem:[#allocation5 + $0x628] sm:$0xff]
    %v429 = vld [vmem:[#allocation5 + $0x630] sm:$0xff]
    %v430 = vld [vmem:[#allocation5 + $0x638] sm:$0xff]
    %v431 = vld [vmem:[#allocation5 + $0x640] sm:$0xff]
    %v432 = vld [vmem:[#allocation5 + $0x648] sm:$0xff]
    %v433 = vld [vmem:[#allocation5 + $0x650] sm:$0xff]
    %v434 = vld [vmem:[#allocation5 + $0x658] sm:$0xff]
    %v435 = vld [vmem:[#allocation5 + $0x660] sm:$0xff]
    %v436 = vld [vmem:[#allocation5 + $0x668] sm:$0xff]
    %v437 = vld [vmem:[#allocation5 + $0x670] sm:$0xff]
    %v438 = vld [vmem:[#allocation5 + $0x678] sm:$0xff]
    %v439 = vld [vmem:[#allocation5 + $0x680] sm:$0xff]
    %v440 = vld [vmem:[#allocation5 + $0x688] sm:$0xff]
    %v441 = vld [vmem:[#allocation5 + $0x690] sm:$0xff]
    %v442 = vld [vmem:[#allocation5 + $0x698] sm:$0xff]
    %v443 = vld [vmem:[#allocation5 + $0x6a0] sm:$0xff]
    %v444 = vld [vmem:[#allocation5 + $0x6a8] sm:$0xff]
    %v445 = vld [vmem:[#allocation5 + $0x6b0] sm:$0xff]
    %v446 = vld [vmem:[#allocation5 + $0x6b8] sm:$0xff]
    %v447 = vld [vmem:[#allocation5 + $0x6c0] sm:$0xff]
    %v448 = vld [vmem:[#allocation5 + $0x6c8] sm:$0xff]
    %v449 = vld [vmem:[#allocation5 + $0x6d0] sm:$0xff]
    %v450 = vld [vmem:[#allocation5 + $0x6d8] sm:$0xff]
    %v451 = vld [vmem:[#allocation5 + $0x6e0] sm:$0xff]
    %v452 = vld [vmem:[#allocation5 + $0x6e8] sm:$0xff]
    %v453 = vld [vmem:[#allocation5 + $0x6f0] sm:$0xff]
    %v454 = vld [vmem:[#allocation5 + $0x6f8] sm:$0xff]
    %v455 = vld [vmem:[#allocation5 + $0x700] sm:$0xff]
    %v456 = vld [vmem:[#allocation5 + $0x708] sm:$0xff]
    %v457 = vld [vmem:[#allocation5 + $0x710] sm:$0xff]
    %v458 = vld [vmem:[#allocation5 + $0x718] sm:$0xff]
    %v459 = vld [vmem:[#allocation5 + $0x720] sm:$0xff]
    %v460 = vld [vmem:[#allocation5 + $0x728] sm:$0xff]
    %v461 = vld [vmem:[#allocation5 + $0x730] sm:$0xff]
    %v462 = vld [vmem:[#allocation5 + $0x738] sm:$0xff]
    %v463 = vld [vmem:[#allocation5 + $0x740] sm:$0xff]
    %v464 = vld [vmem:[#allocation5 + $0x748] sm:$0xff]
    %v465 = vld [vmem:[#allocation5 + $0x750] sm:$0xff]
    %v466 = vld [vmem:[#allocation5 + $0x758] sm:$0xff]
    %v467 = vld [vmem:[#allocation5 + $0x760] sm:$0xff]
    %v468 = vld [vmem:[#allocation5 + $0x768] sm:$0xff]
    %v469 = vld [vmem:[#allocation5 + $0x770] sm:$0xff]
    %v470 = vld [vmem:[#allocation5 + $0x778] sm:$0xff]
    %v471 = vld [vmem:[#allocation5 + $0x780] sm:$0xff]
    %v472 = vld [vmem:[#allocation5 + $0x788] sm:$0xff]
    %v473 = vld [vmem:[#allocation5 + $0x790] sm:$0xff]
    %v474 = vld [vmem:[#allocation5 + $0x798] sm:$0xff]
    %v475 = vld [vmem:[#allocation5 + $0x7a0] sm:$0xff]
    %v476 = vld [vmem:[#allocation5 + $0x7a8] sm:$0xff]
    %v477 = vld [vmem:[#allocation5 + $0x7b0] sm:$0xff]
    %v478 = vld [vmem:[#allocation5 + $0x7b8] sm:$0xff]
    %v479 = vld [vmem:[#allocation5 + $0x7c0] sm:$0xff]
    %v480 = vld [vmem:[#allocation5 + $0x7c8] sm:$0xff]
    %v481 = vld [vmem:[#allocation5 + $0x7d0] sm:$0xff]
    %v482 = vld [vmem:[#allocation5 + $0x7d8] sm:$0xff]
    %v483 = vld [vmem:[#allocation5 + $0x7e0] sm:$0xff]
    %v484 = vld [vmem:[#allocation5 + $0x7e8] sm:$0xff]
    %v485 = vld [vmem:[#allocation5 + $0x7f0] sm:$0xff]
    %v486 = vld [vmem:[#allocation5 + $0x7f8] sm:$0xff]
    %v487 = vld [vmem:[#allocation5 + $0x800] sm:$0xff]
    %v488 = vld [vmem:[#allocation5 + $0x808] sm:$0xff]
    %v489 = vld [vmem:[#allocation5 + $0x810] sm:$0xff]
    %v490 = vld [vmem:[#allocation5 + $0x818] sm:$0xff]
    %v491 = vld [vmem:[#allocation5 + $0x820] sm:$0xff]
    %v492 = vld [vmem:[#allocation5 + $0x828] sm:$0xff]
    %v493 = vld [vmem:[#allocation5 + $0x830] sm:$0xff]
    %v494 = vld [vmem:[#allocation5 + $0x838] sm:$0xff]
    %v495 = vld [vmem:[#allocation5 + $0x840] sm:$0xff]
    %v496 = vld [vmem:[#allocation5 + $0x848] sm:$0xff]
    %v497 = vld [vmem:[#allocation5 + $0x850] sm:$0xff]
    %v498 = vld [vmem:[#allocation5 + $0x858] sm:$0xff]
    %v499 = vld [vmem:[#allocation5 + $0x860] sm:$0xff]
    %v500 = vld [vmem:[#allocation5 + $0x868] sm:$0xff]
    %v501 = vld [vmem:[#allocation5 + $0x870] sm:$0xff]
    %v502 = vld [vmem:[#allocation5 + $0x878] sm:$0xff]
    %v503 = vld [vmem:[#allocation5 + $0x880] sm:$0xff]
    %v504 = vld [vmem:[#allocation5 + $0x888] sm:$0xff]
    %v505 = vld [vmem:[#allocation5 + $0x890] sm:$0xff]
    %v506 = vld [vmem:[#allocation5 + $0x898] sm:$0xff]
    %v507 = vld [vmem:[#allocation5 + $0x8a0] sm:$0xff]
    %v508 = vld [vmem:[#allocation5 + $0x8a8] sm:$0xff]
    %v509 = vld [vmem:[#allocation5 + $0x8b0] sm:$0xff]
    %v510 = vld [vmem:[#allocation5 + $0x8b8] sm:$0xff]
    %v511 = vld [vmem:[#allocation5 + $0x8c0] sm:$0xff]
    %v512 = vld [vmem:[#allocation5 + $0x8c8] sm:$0xff]
    %v513 = vld [vmem:[#allocation5 + $0x8d0] sm:$0xff]
    %v514 = vld [vmem:[#allocation5 + $0x8d8] sm:$0xff]
    %v515 = vld [vmem:[#allocation5 + $0x8e0] sm:$0xff]
    %v516 = vld [vmem:[#allocation5 + $0x8e8] sm:$0xff]
    %v517 = vld [vmem:[#allocation5 + $0x8f0] sm:$0xff]
    %v518 = vld [vmem:[#allocation5 + $0x8f8] sm:$0xff]
    %v519 = vld [vmem:[#allocation5 + $0x900] sm:$0xff]
    %v520 = vld [vmem:[#allocation5 + $0x908] sm:$0xff]
    %v521 = vld [vmem:[#allocation5 + $0x910] sm:$0xff]
    %v522 = vld [vmem:[#allocation5 + $0x918] sm:$0xff]
    %v523 = vld [vmem:[#allocation5 + $0x920] sm:$0xff]
    %v524 = vld [vmem:[#allocation5 + $0x928] sm:$0xff]
    %v525 = vld [vmem:[#allocation5 + $0x930] sm:$0xff]
    %v526 = vld [vmem:[#allocation5 + $0x938] sm:$0xff]
    %v527 = vld [vmem:[#allocation5 + $0x940] sm:$0xff]
    %v528 = vld [vmem:[#allocation5 + $0x948] sm:$0xff]
    %v529 = vld [vmem:[#allocation5 + $0x950] sm:$0xff]
    %v530 = vld [vmem:[#allocation5 + $0x958] sm:$0xff]
    %v531 = vld [vmem:[#allocation5 + $0x960] sm:$0xff]
    %v532 = vld [vmem:[#allocation5 + $0x968] sm:$0xff]
    %v533 = vld [vmem:[#allocation5 + $0x970] sm:$0xff]
    %v534 = vld [vmem:[#allocation5 + $0x978] sm:$0xff]
    %v535 = vld [vmem:[#allocation5 + $0x980] sm:$0xff]
    %v536 = vld [vmem:[#allocation5 + $0x988] sm:$0xff]
    %v537 = vld [vmem:[#allocation5 + $0x990] sm:$0xff]
    %v538 = vld [vmem:[#allocation5 + $0x998] sm:$0xff]
    %v539 = vld [vmem:[#allocation5 + $0x9a0] sm:$0xff]
    %v540 = vld [vmem:[#allocation5 + $0x9a8] sm:$0xff]
    %v541 = vld [vmem:[#allocation5 + $0x9b0] sm:$0xff]
    %v542 = vld [vmem:[#allocation5 + $0x9b8] sm:$0xff]
    %v543 = vld [vmem:[#allocation5 + $0x9c0] sm:$0xff]
    %v544 = vld [vmem:[#allocation5 + $0x9c8] sm:$0xff]
    %v545 = vld [vmem:[#allocation5 + $0x9d0] sm:$0xff]
    %v546 = vld [vmem:[#allocation5 + $0x9d8] sm:$0xff]
    %v547 = vld [vmem:[#allocation5 + $0x9e0] sm:$0xff]
    %v548 = vld [vmem:[#allocation5 + $0x9e8] sm:$0xff]
    %v549 = vld [vmem:[#allocation5 + $0x9f0] sm:$0xff]
    %v550 = vld [vmem:[#allocation5 + $0x9f8] sm:$0xff]
    %v551 = vld [vmem:[#allocation5 + $0xa00] sm:$0xff]
    %v552 = vld [vmem:[#allocation5 + $0xa08] sm:$0xff]
    %v553 = vld [vmem:[#allocation5 + $0xa10] sm:$0xff]
    %v554 = vld [vmem:[#allocation5 + $0xa18] sm:$0xff]
    %v555 = vld [vmem:[#allocation5 + $0xa20] sm:$0xff]
    %v556 = vld [vmem:[#allocation5 + $0xa28] sm:$0xff]
    %v557 = vld [vmem:[#allocation5 + $0xa30] sm:$0xff]
    %v558 = vld [vmem:[#allocation5 + $0xa38] sm:$0xff]
    %v559 = vld [vmem:[#allocation5 + $0xa40] sm:$0xff]
    %v560 = vld [vmem:[#allocation5 + $0xa48] sm:$0xff]
    %v561 = vld [vmem:[#allocation5 + $0xa50] sm:$0xff]
    %v562 = vld [vmem:[#allocation5 + $0xa58] sm:$0xff]
    %v563 = vld [vmem:[#allocation5 + $0xa60] sm:$0xff]
    %v564 = vld [vmem:[#allocation5 + $0xa68] sm:$0xff]
    %v565 = vld [vmem:[#allocation5 + $0xa70] sm:$0xff]
    %v566 = vld [vmem:[#allocation5 + $0xa78] sm:$0xff]
    %v567 = vld [vmem:[#allocation5 + $0xa80] sm:$0xff]
    %v568 = vld [vmem:[#allocation5 + $0xa88] sm:$0xff]
    %v569 = vld [vmem:[#allocation5 + $0xa90] sm:$0xff]
    %v570 = vld [vmem:[#allocation5 + $0xa98] sm:$0xff]
    %v571 = vld [vmem:[#allocation5 + $0xaa0] sm:$0xff]
    %v572 = vld [vmem:[#allocation5 + $0xaa8] sm:$0xff]
    %v573 = vld [vmem:[#allocation5 + $0xab0] sm:$0xff]
    %v574 = vld [vmem:[#allocation5 + $0xab8] sm:$0xff]
    %v575 = vld [vmem:[#allocation5 + $0xac0] sm:$0xff]
    %v576 = vld [vmem:[#allocation5 + $0xac8] sm:$0xff]
    %v577 = vld [vmem:[#allocation5 + $0xad0] sm:$0xff]
    %v578 = vld [vmem:[#allocation5 + $0xad8] sm:$0xff]
    %v579 = vld [vmem:[#allocation5 + $0xae0] sm:$0xff]
    %v580 = vld [vmem:[#allocation5 + $0xae8] sm:$0xff]
    %v581 = vld [vmem:[#allocation5 + $0xaf0] sm:$0xff]
    %v582 = vld [vmem:[#allocation5 + $0xaf8] sm:$0xff]
    %v583 = vld [vmem:[#allocation5 + $0xb00] sm:$0xff]
    %v584 = vld [vmem:[#allocation5 + $0xb08] sm:$0xff]
    %v585 = vld [vmem:[#allocation5 + $0xb10] sm:$0xff]
    %v586 = vld [vmem:[#allocation5 + $0xb18] sm:$0xff]
    %v587 = vld [vmem:[#allocation5 + $0xb20] sm:$0xff]
    %v588 = vld [vmem:[#allocation5 + $0xb28] sm:$0xff]
    %v589 = vld [vmem:[#allocation5 + $0xb30] sm:$0xff]
    %v590 = vld [vmem:[#allocation5 + $0xb38] sm:$0xff]
    %v591 = vld [vmem:[#allocation5 + $0xb40] sm:$0xff]
    %v592 = vld [vmem:[#allocation5 + $0xb48] sm:$0xff]
    %v593 = vld [vmem:[#allocation5 + $0xb50] sm:$0xff]
    %v594 = vld [vmem:[#allocation5 + $0xb58] sm:$0xff]
    %v595 = vld [vmem:[#allocation5 + $0xb60] sm:$0xff]
    %v596 = vld [vmem:[#allocation5 + $0xb68] sm:$0xff]
    %v597 = vld [vmem:[#allocation5 + $0xb70] sm:$0xff]
    %v598 = vld [vmem:[#allocation5 + $0xb78] sm:$0xff]
    %v599 = vld [vmem:[#allocation5 + $0xb80] sm:$0xff]
    %v600 = vld [vmem:[#allocation5 + $0xb88] sm:$0xff]
    %v601 = vld [vmem:[#allocation5 + $0xb90] sm:$0xff]
    %v602 = vld [vmem:[#allocation5 + $0xb98] sm:$0xff]
    %v603 = vld [vmem:[#allocation5 + $0xba0] sm:$0xff]
    %v604 = vld [vmem:[#allocation5 + $0xba8] sm:$0xff]
    %v605 = vld [vmem:[#allocation5 + $0xbb0] sm:$0xff]
    %v606 = vld [vmem:[#allocation5 + $0xbb8] sm:$0xff]
    %v607 = vld [vmem:[#allocation5 + $0xbc0] sm:$0xff]
    %v608 = vld [vmem:[#allocation5 + $0xbc8] sm:$0xff]
    %v609 = vld [vmem:[#allocation5 + $0xbd0] sm:$0xff]
    %v610 = vld [vmem:[#allocation5 + $0xbd8] sm:$0xff]
    %v611 = vld [vmem:[#allocation5 + $0xbe0] sm:$0xff]
    %v612 = vld [vmem:[#allocation5 + $0xbe8] sm:$0xff]
    %v613 = vld [vmem:[#allocation5 + $0xbf0] sm:$0xff]
    %v614 = vld [vmem:[#allocation5 + $0xbf8] sm:$0xff]
    %v615 = vld [vmem:[#allocation5 + $0xc00] sm:$0xff]
    %v616 = vld [vmem:[#allocation5 + $0xc08] sm:$0xff]
    %v617 = vld [vmem:[#allocation5 + $0xc10] sm:$0xff]
    %v618 = vld [vmem:[#allocation5 + $0xc18] sm:$0xff]
    %v619 = vld [vmem:[#allocation5 + $0xc20] sm:$0xff]
    %v620 = vld [vmem:[#allocation5 + $0xc28] sm:$0xff]
    %v621 = vld [vmem:[#allocation5 + $0xc30] sm:$0xff]
    %v622 = vld [vmem:[#allocation5 + $0xc38] sm:$0xff]
    %v623 = vld [vmem:[#allocation5 + $0xc40] sm:$0xff]
    %v624 = vld [vmem:[#allocation5 + $0xc48] sm:$0xff]
    %v625 = vld [vmem:[#allocation5 + $0xc50] sm:$0xff]
    %v626 = vld [vmem:[#allocation5 + $0xc58] sm:$0xff]
    %v627 = vld [vmem:[#allocation5 + $0xc60] sm:$0xff]
    %v628 = vld [vmem:[#allocation5 + $0xc68] sm:$0xff]
    %v629 = vld [vmem:[#allocation5 + $0xc70] sm:$0xff]
    %v630 = vld [vmem:[#allocation5 + $0xc78] sm:$0xff]
    %v631 = vld [vmem:[#allocation5 + $0xc80] sm:$0xff]
    %v632 = vld [vmem:[#allocation5 + $0xc88] sm:$0xff]
    %v633 = vld [vmem:[#allocation5 + $0xc90] sm:$0xff]
    %v634 = vld [vmem:[#allocation5 + $0xc98] sm:$0xff]
    %v635 = vld [vmem:[#allocation5 + $0xca0] sm:$0xff]
    %v636 = vld [vmem:[#allocation5 + $0xca8] sm:$0xff]
    %v637 = vld [vmem:[#allocation5 + $0xcb0] sm:$0xff]
    %v638 = vld [vmem:[#allocation5 + $0xcb8] sm:$0xff]
    %v639 = vld [vmem:[#allocation5 + $0xcc0] sm:$0xff]
    %v640 = vld [vmem:[#allocation5 + $0xcc8] sm:$0xff]
    %v641 = vld [vmem:[#allocation5 + $0xcd0] sm:$0xff]
    %v642 = vld [vmem:[#allocation5 + $0xcd8] sm:$0xff]
    %v643 = vld [vmem:[#allocation5 + $0xce0] sm:$0xff]
    %v644 = vld [vmem:[#allocation5 + $0xce8] sm:$0xff]
    %v645 = vld [vmem:[#allocation5 + $0xcf0] sm:$0xff]
    %v646 = vld [vmem:[#allocation5 + $0xcf8] sm:$0xff]
    %v647 = vld [vmem:[#allocation5 + $0xd00] sm:$0xff]
    %v648 = vld [vmem:[#allocation5 + $0xd08] sm:$0xff]
    %v649 = vld [vmem:[#allocation5 + $0xd10] sm:$0xff]
    %v650 = vld [vmem:[#allocation5 + $0xd18] sm:$0xff]
    %v651 = vld [vmem:[#allocation5 + $0xd20] sm:$0xff]
    %v652 = vld [vmem:[#allocation5 + $0xd28] sm:$0xff]
    %v653 = vld [vmem:[#allocation5 + $0xd30] sm:$0xff]
    %v654 = vld [vmem:[#allocation5 + $0xd38] sm:$0xff]
    %v655 = vld [vmem:[#allocation5 + $0xd40] sm:$0xff]
    %v656 = vld [vmem:[#allocation5 + $0xd48] sm:$0xff]
    %v657 = vld [vmem:[#allocation5 + $0xd50] sm:$0xff]
    %v658 = vld [vmem:[#allocation5 + $0xd58] sm:$0xff]
    %v659 = vld [vmem:[#allocation5 + $0xd60] sm:$0xff]
    %v660 = vld [vmem:[#allocation5 + $0xd68] sm:$0xff]
    %v661 = vld [vmem:[#allocation5 + $0xd70] sm:$0xff]
    %v662 = vld [vmem:[#allocation5 + $0xd78] sm:$0xff]
    %v663 = vld [vmem:[#allocation5 + $0xd80] sm:$0xff]
    %v664 = vld [vmem:[#allocation5 + $0xd88] sm:$0xff]
    %v665 = vld [vmem:[#allocation5 + $0xd90] sm:$0xff]
    %v666 = vld [vmem:[#allocation5 + $0xd98] sm:$0xff]
    %v667 = vld [vmem:[#allocation5 + $0xda0] sm:$0xff]
    %v668 = vld [vmem:[#allocation5 + $0xda8] sm:$0xff]
    %v669 = vld [vmem:[#allocation5 + $0xdb0] sm:$0xff]
    %v670 = vld [vmem:[#allocation5 + $0xdb8] sm:$0xff]
    %v671 = vld [vmem:[#allocation5 + $0xdc0] sm:$0xff]
    %v672 = vld [vmem:[#allocation5 + $0xdc8] sm:$0xff]
    %v673 = vld [vmem:[#allocation5 + $0xdd0] sm:$0xff]
    %v674 = vld [vmem:[#allocation5 + $0xdd8] sm:$0xff]
    %v675 = vld [vmem:[#allocation5 + $0xde0] sm:$0xff]
    %v676 = vld [vmem:[#allocation5 + $0xde8] sm:$0xff]
    %v677 = vld [vmem:[#allocation5 + $0xdf0] sm:$0xff]
    %v678 = vld [vmem:[#allocation5 + $0xdf8] sm:$0xff]
    %v679 = vld [vmem:[#allocation5 + $0xe00] sm:$0xff]
    %v680 = vld [vmem:[#allocation5 + $0xe08] sm:$0xff]
    %v681 = vld [vmem:[#allocation5 + $0xe10] sm:$0xff]
    %v682 = vld [vmem:[#allocation5 + $0xe18] sm:$0xff]
    %v683 = vld [vmem:[#allocation5 + $0xe20] sm:$0xff]
    %v684 = vld [vmem:[#allocation5 + $0xe28] sm:$0xff]
    %v685 = vld [vmem:[#allocation5 + $0xe30] sm:$0xff]
    %v686 = vld [vmem:[#allocation5 + $0xe38] sm:$0xff]
    %v687 = vld [vmem:[#allocation5 + $0xe40] sm:$0xff]
    %v688 = vld [vmem:[#allocation5 + $0xe48] sm:$0xff]
    %v689 = vld [vmem:[#allocation5 + $0xe50] sm:$0xff]
    %v690 = vld [vmem:[#allocation5 + $0xe58] sm:$0xff]
    %v691 = vld [vmem:[#allocation5 + $0xe60] sm:$0xff]
    %v692 = vld [vmem:[#allocation5 + $0xe68] sm:$0xff]
    %v693 = vld [vmem:[#allocation5 + $0xe70] sm:$0xff]
    %v694 = vld [vmem:[#allocation5 + $0xe78] sm:$0xff]
    %v695 = vld [vmem:[#allocation5 + $0xe80] sm:$0xff]
    %v696 = vld [vmem:[#allocation5 + $0xe88] sm:$0xff]
    %v697 = vld [vmem:[#allocation5 + $0xe90] sm:$0xff]
    %v698 = vld [vmem:[#allocation5 + $0xe98] sm:$0xff]
    %v699 = vld [vmem:[#allocation5 + $0xea0] sm:$0xff]
    %v700 = vld [vmem:[#allocation5 + $0xea8] sm:$0xff]
    %v701 = vld [vmem:[#allocation5 + $0xeb0] sm:$0xff]
    %v702 = vld [vmem:[#allocation5 + $0xeb8] sm:$0xff]
    %v703 = vld [vmem:[#allocation5 + $0xec0] sm:$0xff]
    %v704 = vld [vmem:[#allocation5 + $0xec8] sm:$0xff]
    %v705 = vld [vmem:[#allocation5 + $0xed0] sm:$0xff]
    %v706 = vld [vmem:[#allocation5 + $0xed8] sm:$0xff]
    %v707 = vld [vmem:[#allocation5 + $0xee0] sm:$0xff]
    %v708 = vld [vmem:[#allocation5 + $0xee8] sm:$0xff]
    %v709 = vld [vmem:[#allocation5 + $0xef0] sm:$0xff]
    %v710 = vld [vmem:[#allocation5 + $0xef8] sm:$0xff]
    %v711 = vld [vmem:[#allocation5 + $0xf00] sm:$0xff]
    %v712 = vld [vmem:[#allocation5 + $0xf08] sm:$0xff]
    %v713 = vld [vmem:[#allocation5 + $0xf10] sm:$0xff]
    %v714 = vld [vmem:[#allocation5 + $0xf18] sm:$0xff]
    %v715 = vld [vmem:[#allocation5 + $0xf20] sm:$0xff]
    %v716 = vld [vmem:[#allocation5 + $0xf28] sm:$0xff]
    %v717 = vld [vmem:[#allocation5 + $0xf30] sm:$0xff]
    %v718 = vld [vmem:[#allocation5 + $0xf38] sm:$0xff]
    %v719 = vld [vmem:[#allocation5 + $0xf40] sm:$0xff]
    %v720 = vld [vmem:[#allocation5 + $0xf48] sm:$0xff]
    %v721 = vld [vmem:[#allocation5 + $0xf50] sm:$0xff]
    %v722 = vld [vmem:[#allocation5 + $0xf58] sm:$0xff]
    %v723 = vld [vmem:[#allocation5 + $0xf60] sm:$0xff]
    %v724 = vld [vmem:[#allocation5 + $0xf68] sm:$0xff]
    %v725 = vld [vmem:[#allocation5 + $0xf70] sm:$0xff]
    %v726 = vld [vmem:[#allocation5 + $0xf78] sm:$0xff]
    %v727 = vld [vmem:[#allocation5 + $0xf80] sm:$0xff]
    %v728 = vld [vmem:[#allocation5 + $0xf88] sm:$0xff]
    %v729 = vld [vmem:[#allocation5 + $0xf90] sm:$0xff]
    %v730 = vld [vmem:[#allocation5 + $0xf98] sm:$0xff]
    %v731 = vld [vmem:[#allocation5 + $0xfa0] sm:$0xff]
    %v732 = vld [vmem:[#allocation5 + $0xfa8] sm:$0xff]
    %v733 = vld [vmem:[#allocation5 + $0xfb0] sm:$0xff]
    %v734 = vld [vmem:[#allocation5 + $0xfb8] sm:$0xff]
    %v735 = vld [vmem:[#allocation5 + $0xfc0] sm:$0xff]
    %v736 = vld [vmem:[#allocation5 + $0xfc8] sm:$0xff]
    %v737 = vld [vmem:[#allocation5 + $0xfd0] sm:$0xff]
    %v738 = vld [vmem:[#allocation5 + $0xfd8] sm:$0xff]
    %v739 = vld [vmem:[#allocation5 + $0xfe0] sm:$0xff]
    %v740 = vld [vmem:[#allocation5 + $0xfe8] sm:$0xff]
    %v741 = vld [vmem:[#allocation5 + $0xff0] sm:$0xff]
    %v742 = vld [vmem:[#allocation5 + $0xff8] sm:$0xff]
    %v743 = vld [vmem:[#allocation7] sm:$0xff]
    %v745 = vlaneseq
    %v746 = vshrl.u32 %v745, 7
    %v747 = vsub.s32 0, %v746
    %v748 = vrot.slane %v743, %v747
    %v749 = vlaneseq
    %v750 = vshrl.u32 %v749, 7
    %v751 = vsub.s32 1, %v750
    %v752 = vrot.slane %v743, %v751
    %v753 = vlaneseq
    %v754 = vshrl.u32 %v753, 7
    %v755 = vsub.s32 2, %v754
    %v756 = vrot.slane %v743, %v755
    %v757 = vlaneseq
    %v758 = vshrl.u32 %v757, 7
    %v759 = vsub.s32 3, %v758
    %v760 = vrot.slane %v743, %v759
    %v761 = vlaneseq
    %v762 = vshrl.u32 %v761, 7
    %v763 = vsub.s32 4, %v762
    %v764 = vrot.slane %v743, %v763
    %v765 = vlaneseq
    %v766 = vshrl.u32 %v765, 7
    %v767 = vsub.s32 5, %v766
    %v768 = vrot.slane %v743, %v767
    %v769 = vlaneseq
    %v770 = vshrl.u32 %v769, 7
    %v771 = vsub.s32 6, %v770
    %v772 = vrot.slane %v743, %v771
    %v773 = vlaneseq
    %v774 = vshrl.u32 %v773, 7
    %v775 = vsub.s32 7, %v774
    %v776 = vrot.slane %v743, %v775
    %v1297 = vunpack.c.l.b16 %v231
    %v1298 = vunpack.c.h.b16 %v231
    %v1299 = vunpack.c.l.b16 %v232
    %v1300 = vunpack.c.h.b16 %v232
    %v1301 = vunpack.c.l.b16 %v233
    %v1302 = vunpack.c.h.b16 %v233
    %v1303 = vunpack.c.l.b16 %v234
    %v1304 = vunpack.c.h.b16 %v234
    %v1305 = vunpack.c.l.b16 %v235
    %v1306 = vunpack.c.h.b16 %v235
    %v1307 = vunpack.c.l.b16 %v236
    %v1308 = vunpack.c.h.b16 %v236
    %v1309 = vunpack.c.l.b16 %v237
    %v1310 = vunpack.c.h.b16 %v237
    %v1311 = vunpack.c.l.b16 %v238
    %v1312 = vunpack.c.h.b16 %v238
    %v1313 = vunpack.c.l.b16 %v239
    %v1314 = vunpack.c.h.b16 %v239
    %v1315 = vunpack.c.l.b16 %v240
    %v1316 = vunpack.c.h.b16 %v240
    %v1317 = vunpack.c.l.b16 %v241
    %v1318 = vunpack.c.h.b16 %v241
    %v1319 = vunpack.c.l.b16 %v242
    %v1320 = vunpack.c.h.b16 %v242
    %v1321 = vunpack.c.l.b16 %v243
    %v1322 = vunpack.c.h.b16 %v243
    %v1323 = vunpack.c.l.b16 %v244
    %v1324 = vunpack.c.h.b16 %v244
    %v1325 = vunpack.c.l.b16 %v245
    %v1326 = vunpack.c.h.b16 %v245
    %v1327 = vunpack.c.l.b16 %v246
    %v1328 = vunpack.c.h.b16 %v246
    %v1329 = vunpack.c.l.b16 %v247
    %v1330 = vunpack.c.h.b16 %v247
    %v1331 = vunpack.c.l.b16 %v248
    %v1332 = vunpack.c.h.b16 %v248
    %v1333 = vunpack.c.l.b16 %v249
    %v1334 = vunpack.c.h.b16 %v249
    %v1335 = vunpack.c.l.b16 %v250
    %v1336 = vunpack.c.h.b16 %v250
    %v1337 = vunpack.c.l.b16 %v251
    %v1338 = vunpack.c.h.b16 %v251
    %v1339 = vunpack.c.l.b16 %v252
    %v1340 = vunpack.c.h.b16 %v252
    %v1341 = vunpack.c.l.b16 %v253
    %v1342 = vunpack.c.h.b16 %v253
    %v1343 = vunpack.c.l.b16 %v254
    %v1344 = vunpack.c.h.b16 %v254
    %v1345 = vunpack.c.l.b16 %v255
    %v1346 = vunpack.c.h.b16 %v255
    %v1347 = vunpack.c.l.b16 %v256
    %v1348 = vunpack.c.h.b16 %v256
    %v1349 = vunpack.c.l.b16 %v257
    %v1350 = vunpack.c.h.b16 %v257
    %v1351 = vunpack.c.l.b16 %v258
    %v1352 = vunpack.c.h.b16 %v258
    %v1353 = vunpack.c.l.b16 %v259
    %v1354 = vunpack.c.h.b16 %v259
    %v1355 = vunpack.c.l.b16 %v260
    %v1356 = vunpack.c.h.b16 %v260
    %v1357 = vunpack.c.l.b16 %v261
    %v1358 = vunpack.c.h.b16 %v261
    %v1359 = vunpack.c.l.b16 %v262
    %v1360 = vunpack.c.h.b16 %v262
    %v1361 = vunpack.c.l.b16 %v263
    %v1362 = vunpack.c.h.b16 %v263
    %v1363 = vunpack.c.l.b16 %v264
    %v1364 = vunpack.c.h.b16 %v264
    %v1365 = vunpack.c.l.b16 %v265
    %v1366 = vunpack.c.h.b16 %v265
    %v1367 = vunpack.c.l.b16 %v266
    %v1368 = vunpack.c.h.b16 %v266
    %v1369 = vunpack.c.l.b16 %v267
    %v1370 = vunpack.c.h.b16 %v267
    %v1371 = vunpack.c.l.b16 %v268
    %v1372 = vunpack.c.h.b16 %v268
    %v1373 = vunpack.c.l.b16 %v269
    %v1374 = vunpack.c.h.b16 %v269
    %v1375 = vunpack.c.l.b16 %v270
    %v1376 = vunpack.c.h.b16 %v270
    %v1377 = vunpack.c.l.b16 %v271
    %v1378 = vunpack.c.h.b16 %v271
    %v1379 = vunpack.c.l.b16 %v272
    %v1380 = vunpack.c.h.b16 %v272
    %v1381 = vunpack.c.l.b16 %v273
    %v1382 = vunpack.c.h.b16 %v273
    %v1383 = vunpack.c.l.b16 %v274
    %v1384 = vunpack.c.h.b16 %v274
    %v1385 = vunpack.c.l.b16 %v275
    %v1386 = vunpack.c.h.b16 %v275
    %v1387 = vunpack.c.l.b16 %v276
    %v1388 = vunpack.c.h.b16 %v276
    %v1389 = vunpack.c.l.b16 %v277
    %v1390 = vunpack.c.h.b16 %v277
    %v1391 = vunpack.c.l.b16 %v278
    %v1392 = vunpack.c.h.b16 %v278
    %v1393 = vunpack.c.l.b16 %v279
    %v1394 = vunpack.c.h.b16 %v279
    %v1395 = vunpack.c.l.b16 %v280
    %v1396 = vunpack.c.h.b16 %v280
    %v1397 = vunpack.c.l.b16 %v281
    %v1398 = vunpack.c.h.b16 %v281
    %v1399 = vunpack.c.l.b16 %v282
    %v1400 = vunpack.c.h.b16 %v282
    %v1401 = vunpack.c.l.b16 %v283
    %v1402 = vunpack.c.h.b16 %v283
    %v1403 = vunpack.c.l.b16 %v284
    %v1404 = vunpack.c.h.b16 %v284
    %v1405 = vunpack.c.l.b16 %v285
    %v1406 = vunpack.c.h.b16 %v285
    %v1407 = vunpack.c.l.b16 %v286
    %v1408 = vunpack.c.h.b16 %v286
    %v1409 = vunpack.c.l.b16 %v287
    %v1410 = vunpack.c.h.b16 %v287
    %v1411 = vunpack.c.l.b16 %v288
    %v1412 = vunpack.c.h.b16 %v288
    %v1413 = vunpack.c.l.b16 %v289
    %v1414 = vunpack.c.h.b16 %v289
    %v1415 = vunpack.c.l.b16 %v290
    %v1416 = vunpack.c.h.b16 %v290
    %v1417 = vunpack.c.l.b16 %v291
    %v1418 = vunpack.c.h.b16 %v291
    %v1419 = vunpack.c.l.b16 %v292
    %v1420 = vunpack.c.h.b16 %v292
    %v1421 = vunpack.c.l.b16 %v293
    %v1422 = vunpack.c.h.b16 %v293
    %v1423 = vunpack.c.l.b16 %v294
    %v1424 = vunpack.c.h.b16 %v294
    %v1425 = vunpack.c.l.b16 %v295
    %v1426 = vunpack.c.h.b16 %v295
    %v1427 = vunpack.c.l.b16 %v296
    %v1428 = vunpack.c.h.b16 %v296
    %v1429 = vunpack.c.l.b16 %v297
    %v1430 = vunpack.c.h.b16 %v297
    %v1431 = vunpack.c.l.b16 %v298
    %v1432 = vunpack.c.h.b16 %v298
    %v1433 = vunpack.c.l.b16 %v299
    %v1434 = vunpack.c.h.b16 %v299
    %v1435 = vunpack.c.l.b16 %v300
    %v1436 = vunpack.c.h.b16 %v300
    %v1437 = vunpack.c.l.b16 %v301
    %v1438 = vunpack.c.h.b16 %v301
    %v1439 = vunpack.c.l.b16 %v302
    %v1440 = vunpack.c.h.b16 %v302
    %v1441 = vunpack.c.l.b16 %v303
    %v1442 = vunpack.c.h.b16 %v303
    %v1443 = vunpack.c.l.b16 %v304
    %v1444 = vunpack.c.h.b16 %v304
    %v1445 = vunpack.c.l.b16 %v305
    %v1446 = vunpack.c.h.b16 %v305
    %v1447 = vunpack.c.l.b16 %v306
    %v1448 = vunpack.c.h.b16 %v306
    %v1449 = vunpack.c.l.b16 %v307
    %v1450 = vunpack.c.h.b16 %v307
    %v1451 = vunpack.c.l.b16 %v308
    %v1452 = vunpack.c.h.b16 %v308
    %v1453 = vunpack.c.l.b16 %v309
    %v1454 = vunpack.c.h.b16 %v309
    %v1455 = vunpack.c.l.b16 %v310
    %v1456 = vunpack.c.h.b16 %v310
    %v1457 = vunpack.c.l.b16 %v311
    %v1458 = vunpack.c.h.b16 %v311
    %v1459 = vunpack.c.l.b16 %v312
    %v1460 = vunpack.c.h.b16 %v312
    %v1461 = vunpack.c.l.b16 %v313
    %v1462 = vunpack.c.h.b16 %v313
    %v1463 = vunpack.c.l.b16 %v314
    %v1464 = vunpack.c.h.b16 %v314
    %v1465 = vunpack.c.l.b16 %v315
    %v1466 = vunpack.c.h.b16 %v315
    %v1467 = vunpack.c.l.b16 %v316
    %v1468 = vunpack.c.h.b16 %v316
    %v1469 = vunpack.c.l.b16 %v317
    %v1470 = vunpack.c.h.b16 %v317
    %v1471 = vunpack.c.l.b16 %v318
    %v1472 = vunpack.c.h.b16 %v318
    %v1473 = vunpack.c.l.b16 %v319
    %v1474 = vunpack.c.h.b16 %v319
    %v1475 = vunpack.c.l.b16 %v320
    %v1476 = vunpack.c.h.b16 %v320
    %v1477 = vunpack.c.l.b16 %v321
    %v1478 = vunpack.c.h.b16 %v321
    %v1479 = vunpack.c.l.b16 %v322
    %v1480 = vunpack.c.h.b16 %v322
    %v1481 = vunpack.c.l.b16 %v323
    %v1482 = vunpack.c.h.b16 %v323
    %v1483 = vunpack.c.l.b16 %v324
    %v1484 = vunpack.c.h.b16 %v324
    %v1485 = vunpack.c.l.b16 %v325
    %v1486 = vunpack.c.h.b16 %v325
    %v1487 = vunpack.c.l.b16 %v326
    %v1488 = vunpack.c.h.b16 %v326
    %v1489 = vunpack.c.l.b16 %v327
    %v1490 = vunpack.c.h.b16 %v327
    %v1491 = vunpack.c.l.b16 %v328
    %v1492 = vunpack.c.h.b16 %v328
    %v1493 = vunpack.c.l.b16 %v329
    %v1494 = vunpack.c.h.b16 %v329
    %v1495 = vunpack.c.l.b16 %v330
    %v1496 = vunpack.c.h.b16 %v330
    %v1497 = vunpack.c.l.b16 %v331
    %v1498 = vunpack.c.h.b16 %v331
    %v1499 = vunpack.c.l.b16 %v332
    %v1500 = vunpack.c.h.b16 %v332
    %v1501 = vunpack.c.l.b16 %v333
    %v1502 = vunpack.c.h.b16 %v333
    %v1503 = vunpack.c.l.b16 %v334
    %v1504 = vunpack.c.h.b16 %v334
    %v1505 = vunpack.c.l.b16 %v335
    %v1506 = vunpack.c.h.b16 %v335
    %v1507 = vunpack.c.l.b16 %v336
    %v1508 = vunpack.c.h.b16 %v336
    %v1509 = vunpack.c.l.b16 %v337
    %v1510 = vunpack.c.h.b16 %v337
    %v1511 = vunpack.c.l.b16 %v338
    %v1512 = vunpack.c.h.b16 %v338
    %v1513 = vunpack.c.l.b16 %v339
    %v1514 = vunpack.c.h.b16 %v339
    %v1515 = vunpack.c.l.b16 %v340
    %v1516 = vunpack.c.h.b16 %v340
    %v1517 = vunpack.c.l.b16 %v341
    %v1518 = vunpack.c.h.b16 %v341
    %v1519 = vunpack.c.l.b16 %v342
    %v1520 = vunpack.c.h.b16 %v342
    %v1521 = vunpack.c.l.b16 %v343
    %v1522 = vunpack.c.h.b16 %v343
    %v1523 = vunpack.c.l.b16 %v344
    %v1524 = vunpack.c.h.b16 %v344
    %v1525 = vunpack.c.l.b16 %v345
    %v1526 = vunpack.c.h.b16 %v345
    %v1527 = vunpack.c.l.b16 %v346
    %v1528 = vunpack.c.h.b16 %v346
    %v1529 = vunpack.c.l.b16 %v347
    %v1530 = vunpack.c.h.b16 %v347
    %v1531 = vunpack.c.l.b16 %v348
    %v1532 = vunpack.c.h.b16 %v348
    %v1533 = vunpack.c.l.b16 %v349
    %v1534 = vunpack.c.h.b16 %v349
    %v1535 = vunpack.c.l.b16 %v350
    %v1536 = vunpack.c.h.b16 %v350
    %v1537 = vunpack.c.l.b16 %v351
    %v1538 = vunpack.c.h.b16 %v351
    %v1539 = vunpack.c.l.b16 %v352
    %v1540 = vunpack.c.h.b16 %v352
    %v1541 = vunpack.c.l.b16 %v353
    %v1542 = vunpack.c.h.b16 %v353
    %v1543 = vunpack.c.l.b16 %v354
    %v1544 = vunpack.c.h.b16 %v354
    %v1545 = vunpack.c.l.b16 %v355
    %v1546 = vunpack.c.h.b16 %v355
    %v1547 = vunpack.c.l.b16 %v356
    %v1548 = vunpack.c.h.b16 %v356
    %v1549 = vunpack.c.l.b16 %v357
    %v1550 = vunpack.c.h.b16 %v357
    %v1551 = vunpack.c.l.b16 %v358
    %v1552 = vunpack.c.h.b16 %v358
    %v1553 = vunpack.c.l.b16 %v359
    %v1554 = vunpack.c.h.b16 %v359
    %v1555 = vunpack.c.l.b16 %v360
    %v1556 = vunpack.c.h.b16 %v360
    %v1557 = vunpack.c.l.b16 %v361
    %v1558 = vunpack.c.h.b16 %v361
    %v1559 = vunpack.c.l.b16 %v362
    %v1560 = vunpack.c.h.b16 %v362
    %v1561 = vunpack.c.l.b16 %v363
    %v1562 = vunpack.c.h.b16 %v363
    %v1563 = vunpack.c.l.b16 %v364
    %v1564 = vunpack.c.h.b16 %v364
    %v1565 = vunpack.c.l.b16 %v365
    %v1566 = vunpack.c.h.b16 %v365
    %v1567 = vunpack.c.l.b16 %v366
    %v1568 = vunpack.c.h.b16 %v366
    %v1569 = vunpack.c.l.b16 %v367
    %v1570 = vunpack.c.h.b16 %v367
    %v1571 = vunpack.c.l.b16 %v368
    %v1572 = vunpack.c.h.b16 %v368
    %v1573 = vunpack.c.l.b16 %v369
    %v1574 = vunpack.c.h.b16 %v369
    %v1575 = vunpack.c.l.b16 %v370
    %v1576 = vunpack.c.h.b16 %v370
    %v1577 = vunpack.c.l.b16 %v371
    %v1578 = vunpack.c.h.b16 %v371
    %v1579 = vunpack.c.l.b16 %v372
    %v1580 = vunpack.c.h.b16 %v372
    %v1581 = vunpack.c.l.b16 %v373
    %v1582 = vunpack.c.h.b16 %v373
    %v1583 = vunpack.c.l.b16 %v374
    %v1584 = vunpack.c.h.b16 %v374
    %v1585 = vunpack.c.l.b16 %v375
    %v1586 = vunpack.c.h.b16 %v375
    %v1587 = vunpack.c.l.b16 %v376
    %v1588 = vunpack.c.h.b16 %v376
    %v1589 = vunpack.c.l.b16 %v377
    %v1590 = vunpack.c.h.b16 %v377
    %v1591 = vunpack.c.l.b16 %v378
    %v1592 = vunpack.c.h.b16 %v378
    %v1593 = vunpack.c.l.b16 %v379
    %v1594 = vunpack.c.h.b16 %v379
    %v1595 = vunpack.c.l.b16 %v380
    %v1596 = vunpack.c.h.b16 %v380
    %v1597 = vunpack.c.l.b16 %v381
    %v1598 = vunpack.c.h.b16 %v381
    %v1599 = vunpack.c.l.b16 %v382
    %v1600 = vunpack.c.h.b16 %v382
    %v1601 = vunpack.c.l.b16 %v383
    %v1602 = vunpack.c.h.b16 %v383
    %v1603 = vunpack.c.l.b16 %v384
    %v1604 = vunpack.c.h.b16 %v384
    %v1605 = vunpack.c.l.b16 %v385
    %v1606 = vunpack.c.h.b16 %v385
    %v1607 = vunpack.c.l.b16 %v386
    %v1608 = vunpack.c.h.b16 %v386
    %v1609 = vunpack.c.l.b16 %v387
    %v1610 = vunpack.c.h.b16 %v387
    %v1611 = vunpack.c.l.b16 %v388
    %v1612 = vunpack.c.h.b16 %v388
    %v1613 = vunpack.c.l.b16 %v389
    %v1614 = vunpack.c.h.b16 %v389
    %v1615 = vunpack.c.l.b16 %v390
    %v1616 = vunpack.c.h.b16 %v390
    %v1617 = vunpack.c.l.b16 %v391
    %v1618 = vunpack.c.h.b16 %v391
    %v1619 = vunpack.c.l.b16 %v392
    %v1620 = vunpack.c.h.b16 %v392
    %v1621 = vunpack.c.l.b16 %v393
    %v1622 = vunpack.c.h.b16 %v393
    %v1623 = vunpack.c.l.b16 %v394
    %v1624 = vunpack.c.h.b16 %v394
    %v1625 = vunpack.c.l.b16 %v395
    %v1626 = vunpack.c.h.b16 %v395
    %v1627 = vunpack.c.l.b16 %v396
    %v1628 = vunpack.c.h.b16 %v396
    %v1629 = vunpack.c.l.b16 %v397
    %v1630 = vunpack.c.h.b16 %v397
    %v1631 = vunpack.c.l.b16 %v398
    %v1632 = vunpack.c.h.b16 %v398
    %v1633 = vunpack.c.l.b16 %v399
    %v1634 = vunpack.c.h.b16 %v399
    %v1635 = vunpack.c.l.b16 %v400
    %v1636 = vunpack.c.h.b16 %v400
    %v1637 = vunpack.c.l.b16 %v401
    %v1638 = vunpack.c.h.b16 %v401
    %v1639 = vunpack.c.l.b16 %v402
    %v1640 = vunpack.c.h.b16 %v402
    %v1641 = vunpack.c.l.b16 %v403
    %v1642 = vunpack.c.h.b16 %v403
    %v1643 = vunpack.c.l.b16 %v404
    %v1644 = vunpack.c.h.b16 %v404
    %v1645 = vunpack.c.l.b16 %v405
    %v1646 = vunpack.c.h.b16 %v405
    %v1647 = vunpack.c.l.b16 %v406
    %v1648 = vunpack.c.h.b16 %v406
    %v1649 = vunpack.c.l.b16 %v407
    %v1650 = vunpack.c.h.b16 %v407
    %v1651 = vunpack.c.l.b16 %v408
    %v1652 = vunpack.c.h.b16 %v408
    %v1653 = vunpack.c.l.b16 %v409
    %v1654 = vunpack.c.h.b16 %v409
    %v1655 = vunpack.c.l.b16 %v410
    %v1656 = vunpack.c.h.b16 %v410
    %v1657 = vunpack.c.l.b16 %v411
    %v1658 = vunpack.c.h.b16 %v411
    %v1659 = vunpack.c.l.b16 %v412
    %v1660 = vunpack.c.h.b16 %v412
    %v1661 = vunpack.c.l.b16 %v413
    %v1662 = vunpack.c.h.b16 %v413
    %v1663 = vunpack.c.l.b16 %v414
    %v1664 = vunpack.c.h.b16 %v414
    %v1665 = vunpack.c.l.b16 %v415
    %v1666 = vunpack.c.h.b16 %v415
    %v1667 = vunpack.c.l.b16 %v416
    %v1668 = vunpack.c.h.b16 %v416
    %v1669 = vunpack.c.l.b16 %v417
    %v1670 = vunpack.c.h.b16 %v417
    %v1671 = vunpack.c.l.b16 %v418
    %v1672 = vunpack.c.h.b16 %v418
    %v1673 = vunpack.c.l.b16 %v419
    %v1674 = vunpack.c.h.b16 %v419
    %v1675 = vunpack.c.l.b16 %v420
    %v1676 = vunpack.c.h.b16 %v420
    %v1677 = vunpack.c.l.b16 %v421
    %v1678 = vunpack.c.h.b16 %v421
    %v1679 = vunpack.c.l.b16 %v422
    %v1680 = vunpack.c.h.b16 %v422
    %v1681 = vunpack.c.l.b16 %v423
    %v1682 = vunpack.c.h.b16 %v423
    %v1683 = vunpack.c.l.b16 %v424
    %v1684 = vunpack.c.h.b16 %v424
    %v1685 = vunpack.c.l.b16 %v425
    %v1686 = vunpack.c.h.b16 %v425
    %v1687 = vunpack.c.l.b16 %v426
    %v1688 = vunpack.c.h.b16 %v426
    %v1689 = vunpack.c.l.b16 %v427
    %v1690 = vunpack.c.h.b16 %v427
    %v1691 = vunpack.c.l.b16 %v428
    %v1692 = vunpack.c.h.b16 %v428
    %v1693 = vunpack.c.l.b16 %v429
    %v1694 = vunpack.c.h.b16 %v429
    %v1695 = vunpack.c.l.b16 %v430
    %v1696 = vunpack.c.h.b16 %v430
    %v1697 = vunpack.c.l.b16 %v431
    %v1698 = vunpack.c.h.b16 %v431
    %v1699 = vunpack.c.l.b16 %v432
    %v1700 = vunpack.c.h.b16 %v432
    %v1701 = vunpack.c.l.b16 %v433
    %v1702 = vunpack.c.h.b16 %v433
    %v1703 = vunpack.c.l.b16 %v434
    %v1704 = vunpack.c.h.b16 %v434
    %v1705 = vunpack.c.l.b16 %v435
    %v1706 = vunpack.c.h.b16 %v435
    %v1707 = vunpack.c.l.b16 %v436
    %v1708 = vunpack.c.h.b16 %v436
    %v1709 = vunpack.c.l.b16 %v437
    %v1710 = vunpack.c.h.b16 %v437
    %v1711 = vunpack.c.l.b16 %v438
    %v1712 = vunpack.c.h.b16 %v438
    %v1713 = vunpack.c.l.b16 %v439
    %v1714 = vunpack.c.h.b16 %v439
    %v1715 = vunpack.c.l.b16 %v440
    %v1716 = vunpack.c.h.b16 %v440
    %v1717 = vunpack.c.l.b16 %v441
    %v1718 = vunpack.c.h.b16 %v441
    %v1719 = vunpack.c.l.b16 %v442
    %v1720 = vunpack.c.h.b16 %v442
    %v1721 = vunpack.c.l.b16 %v443
    %v1722 = vunpack.c.h.b16 %v443
    %v1723 = vunpack.c.l.b16 %v444
    %v1724 = vunpack.c.h.b16 %v444
    %v1725 = vunpack.c.l.b16 %v445
    %v1726 = vunpack.c.h.b16 %v445
    %v1727 = vunpack.c.l.b16 %v446
    %v1728 = vunpack.c.h.b16 %v446
    %v1729 = vunpack.c.l.b16 %v447
    %v1730 = vunpack.c.h.b16 %v447
    %v1731 = vunpack.c.l.b16 %v448
    %v1732 = vunpack.c.h.b16 %v448
    %v1733 = vunpack.c.l.b16 %v449
    %v1734 = vunpack.c.h.b16 %v449
    %v1735 = vunpack.c.l.b16 %v450
    %v1736 = vunpack.c.h.b16 %v450
    %v1737 = vunpack.c.l.b16 %v451
    %v1738 = vunpack.c.h.b16 %v451
    %v1739 = vunpack.c.l.b16 %v452
    %v1740 = vunpack.c.h.b16 %v452
    %v1741 = vunpack.c.l.b16 %v453
    %v1742 = vunpack.c.h.b16 %v453
    %v1743 = vunpack.c.l.b16 %v454
    %v1744 = vunpack.c.h.b16 %v454
    %v1745 = vunpack.c.l.b16 %v455
    %v1746 = vunpack.c.h.b16 %v455
    %v1747 = vunpack.c.l.b16 %v456
    %v1748 = vunpack.c.h.b16 %v456
    %v1749 = vunpack.c.l.b16 %v457
    %v1750 = vunpack.c.h.b16 %v457
    %v1751 = vunpack.c.l.b16 %v458
    %v1752 = vunpack.c.h.b16 %v458
    %v1753 = vunpack.c.l.b16 %v459
    %v1754 = vunpack.c.h.b16 %v459
    %v1755 = vunpack.c.l.b16 %v460
    %v1756 = vunpack.c.h.b16 %v460
    %v1757 = vunpack.c.l.b16 %v461
    %v1758 = vunpack.c.h.b16 %v461
    %v1759 = vunpack.c.l.b16 %v462
    %v1760 = vunpack.c.h.b16 %v462
    %v1761 = vunpack.c.l.b16 %v463
    %v1762 = vunpack.c.h.b16 %v463
    %v1763 = vunpack.c.l.b16 %v464
    %v1764 = vunpack.c.h.b16 %v464
    %v1765 = vunpack.c.l.b16 %v465
    %v1766 = vunpack.c.h.b16 %v465
    %v1767 = vunpack.c.l.b16 %v466
    %v1768 = vunpack.c.h.b16 %v466
    %v1769 = vunpack.c.l.b16 %v467
    %v1770 = vunpack.c.h.b16 %v467
    %v1771 = vunpack.c.l.b16 %v468
    %v1772 = vunpack.c.h.b16 %v468
    %v1773 = vunpack.c.l.b16 %v469
    %v1774 = vunpack.c.h.b16 %v469
    %v1775 = vunpack.c.l.b16 %v470
    %v1776 = vunpack.c.h.b16 %v470
    %v1777 = vunpack.c.l.b16 %v471
    %v1778 = vunpack.c.h.b16 %v471
    %v1779 = vunpack.c.l.b16 %v472
    %v1780 = vunpack.c.h.b16 %v472
    %v1781 = vunpack.c.l.b16 %v473
    %v1782 = vunpack.c.h.b16 %v473
    %v1783 = vunpack.c.l.b16 %v474
    %v1784 = vunpack.c.h.b16 %v474
    %v1785 = vunpack.c.l.b16 %v475
    %v1786 = vunpack.c.h.b16 %v475
    %v1787 = vunpack.c.l.b16 %v476
    %v1788 = vunpack.c.h.b16 %v476
    %v1789 = vunpack.c.l.b16 %v477
    %v1790 = vunpack.c.h.b16 %v477
    %v1791 = vunpack.c.l.b16 %v478
    %v1792 = vunpack.c.h.b16 %v478
    %v1793 = vunpack.c.l.b16 %v479
    %v1794 = vunpack.c.h.b16 %v479
    %v1795 = vunpack.c.l.b16 %v480
    %v1796 = vunpack.c.h.b16 %v480
    %v1797 = vunpack.c.l.b16 %v481
    %v1798 = vunpack.c.h.b16 %v481
    %v1799 = vunpack.c.l.b16 %v482
    %v1800 = vunpack.c.h.b16 %v482
    %v1801 = vunpack.c.l.b16 %v483
    %v1802 = vunpack.c.h.b16 %v483
    %v1803 = vunpack.c.l.b16 %v484
    %v1804 = vunpack.c.h.b16 %v484
    %v1805 = vunpack.c.l.b16 %v485
    %v1806 = vunpack.c.h.b16 %v485
    %v1807 = vunpack.c.l.b16 %v486
    %v1808 = vunpack.c.h.b16 %v486
    %v1809 = vunpack.c.l.b16 %v487
    %v1810 = vunpack.c.h.b16 %v487
    %v1811 = vunpack.c.l.b16 %v488
    %v1812 = vunpack.c.h.b16 %v488
    %v1813 = vunpack.c.l.b16 %v489
    %v1814 = vunpack.c.h.b16 %v489
    %v1815 = vunpack.c.l.b16 %v490
    %v1816 = vunpack.c.h.b16 %v490
    %v1817 = vunpack.c.l.b16 %v491
    %v1818 = vunpack.c.h.b16 %v491
    %v1819 = vunpack.c.l.b16 %v492
    %v1820 = vunpack.c.h.b16 %v492
    %v1821 = vunpack.c.l.b16 %v493
    %v1822 = vunpack.c.h.b16 %v493
    %v1823 = vunpack.c.l.b16 %v494
    %v1824 = vunpack.c.h.b16 %v494
    %v1825 = vunpack.c.l.b16 %v495
    %v1826 = vunpack.c.h.b16 %v495
    %v1827 = vunpack.c.l.b16 %v496
    %v1828 = vunpack.c.h.b16 %v496
    %v1829 = vunpack.c.l.b16 %v497
    %v1830 = vunpack.c.h.b16 %v497
    %v1831 = vunpack.c.l.b16 %v498
    %v1832 = vunpack.c.h.b16 %v498
    %v1833 = vunpack.c.l.b16 %v499
    %v1834 = vunpack.c.h.b16 %v499
    %v1835 = vunpack.c.l.b16 %v500
    %v1836 = vunpack.c.h.b16 %v500
    %v1837 = vunpack.c.l.b16 %v501
    %v1838 = vunpack.c.h.b16 %v501
    %v1839 = vunpack.c.l.b16 %v502
    %v1840 = vunpack.c.h.b16 %v502
    %v1841 = vunpack.c.l.b16 %v503
    %v1842 = vunpack.c.h.b16 %v503
    %v1843 = vunpack.c.l.b16 %v504
    %v1844 = vunpack.c.h.b16 %v504
    %v1845 = vunpack.c.l.b16 %v505
    %v1846 = vunpack.c.h.b16 %v505
    %v1847 = vunpack.c.l.b16 %v506
    %v1848 = vunpack.c.h.b16 %v506
    %v1849 = vunpack.c.l.b16 %v507
    %v1850 = vunpack.c.h.b16 %v507
    %v1851 = vunpack.c.l.b16 %v508
    %v1852 = vunpack.c.h.b16 %v508
    %v1853 = vunpack.c.l.b16 %v509
    %v1854 = vunpack.c.h.b16 %v509
    %v1855 = vunpack.c.l.b16 %v510
    %v1856 = vunpack.c.h.b16 %v510
    %v1857 = vunpack.c.l.b16 %v511
    %v1858 = vunpack.c.h.b16 %v511
    %v1859 = vunpack.c.l.b16 %v512
    %v1860 = vunpack.c.h.b16 %v512
    %v1861 = vunpack.c.l.b16 %v513
    %v1862 = vunpack.c.h.b16 %v513
    %v1863 = vunpack.c.l.b16 %v514
    %v1864 = vunpack.c.h.b16 %v514
    %v1865 = vunpack.c.l.b16 %v515
    %v1866 = vunpack.c.h.b16 %v515
    %v1867 = vunpack.c.l.b16 %v516
    %v1868 = vunpack.c.h.b16 %v516
    %v1869 = vunpack.c.l.b16 %v517
    %v1870 = vunpack.c.h.b16 %v517
    %v1871 = vunpack.c.l.b16 %v518
    %v1872 = vunpack.c.h.b16 %v518
    %v1873 = vunpack.c.l.b16 %v519
    %v1874 = vunpack.c.h.b16 %v519
    %v1875 = vunpack.c.l.b16 %v520
    %v1876 = vunpack.c.h.b16 %v520
    %v1877 = vunpack.c.l.b16 %v521
    %v1878 = vunpack.c.h.b16 %v521
    %v1879 = vunpack.c.l.b16 %v522
    %v1880 = vunpack.c.h.b16 %v522
    %v1881 = vunpack.c.l.b16 %v523
    %v1882 = vunpack.c.h.b16 %v523
    %v1883 = vunpack.c.l.b16 %v524
    %v1884 = vunpack.c.h.b16 %v524
    %v1885 = vunpack.c.l.b16 %v525
    %v1886 = vunpack.c.h.b16 %v525
    %v1887 = vunpack.c.l.b16 %v526
    %v1888 = vunpack.c.h.b16 %v526
    %v1889 = vunpack.c.l.b16 %v527
    %v1890 = vunpack.c.h.b16 %v527
    %v1891 = vunpack.c.l.b16 %v528
    %v1892 = vunpack.c.h.b16 %v528
    %v1893 = vunpack.c.l.b16 %v529
    %v1894 = vunpack.c.h.b16 %v529
    %v1895 = vunpack.c.l.b16 %v530
    %v1896 = vunpack.c.h.b16 %v530
    %v1897 = vunpack.c.l.b16 %v531
    %v1898 = vunpack.c.h.b16 %v531
    %v1899 = vunpack.c.l.b16 %v532
    %v1900 = vunpack.c.h.b16 %v532
    %v1901 = vunpack.c.l.b16 %v533
    %v1902 = vunpack.c.h.b16 %v533
    %v1903 = vunpack.c.l.b16 %v534
    %v1904 = vunpack.c.h.b16 %v534
    %v1905 = vunpack.c.l.b16 %v535
    %v1906 = vunpack.c.h.b16 %v535
    %v1907 = vunpack.c.l.b16 %v536
    %v1908 = vunpack.c.h.b16 %v536
    %v1909 = vunpack.c.l.b16 %v537
    %v1910 = vunpack.c.h.b16 %v537
    %v1911 = vunpack.c.l.b16 %v538
    %v1912 = vunpack.c.h.b16 %v538
    %v1913 = vunpack.c.l.b16 %v539
    %v1914 = vunpack.c.h.b16 %v539
    %v1915 = vunpack.c.l.b16 %v540
    %v1916 = vunpack.c.h.b16 %v540
    %v1917 = vunpack.c.l.b16 %v541
    %v1918 = vunpack.c.h.b16 %v541
    %v1919 = vunpack.c.l.b16 %v542
    %v1920 = vunpack.c.h.b16 %v542
    %v1921 = vunpack.c.l.b16 %v543
    %v1922 = vunpack.c.h.b16 %v543
    %v1923 = vunpack.c.l.b16 %v544
    %v1924 = vunpack.c.h.b16 %v544
    %v1925 = vunpack.c.l.b16 %v545
    %v1926 = vunpack.c.h.b16 %v545
    %v1927 = vunpack.c.l.b16 %v546
    %v1928 = vunpack.c.h.b16 %v546
    %v1929 = vunpack.c.l.b16 %v547
    %v1930 = vunpack.c.h.b16 %v547
    %v1931 = vunpack.c.l.b16 %v548
    %v1932 = vunpack.c.h.b16 %v548
    %v1933 = vunpack.c.l.b16 %v549
    %v1934 = vunpack.c.h.b16 %v549
    %v1935 = vunpack.c.l.b16 %v550
    %v1936 = vunpack.c.h.b16 %v550
    %v1937 = vunpack.c.l.b16 %v551
    %v1938 = vunpack.c.h.b16 %v551
    %v1939 = vunpack.c.l.b16 %v552
    %v1940 = vunpack.c.h.b16 %v552
    %v1941 = vunpack.c.l.b16 %v553
    %v1942 = vunpack.c.h.b16 %v553
    %v1943 = vunpack.c.l.b16 %v554
    %v1944 = vunpack.c.h.b16 %v554
    %v1945 = vunpack.c.l.b16 %v555
    %v1946 = vunpack.c.h.b16 %v555
    %v1947 = vunpack.c.l.b16 %v556
    %v1948 = vunpack.c.h.b16 %v556
    %v1949 = vunpack.c.l.b16 %v557
    %v1950 = vunpack.c.h.b16 %v557
    %v1951 = vunpack.c.l.b16 %v558
    %v1952 = vunpack.c.h.b16 %v558
    %v1953 = vunpack.c.l.b16 %v559
    %v1954 = vunpack.c.h.b16 %v559
    %v1955 = vunpack.c.l.b16 %v560
    %v1956 = vunpack.c.h.b16 %v560
    %v1957 = vunpack.c.l.b16 %v561
    %v1958 = vunpack.c.h.b16 %v561
    %v1959 = vunpack.c.l.b16 %v562
    %v1960 = vunpack.c.h.b16 %v562
    %v1961 = vunpack.c.l.b16 %v563
    %v1962 = vunpack.c.h.b16 %v563
    %v1963 = vunpack.c.l.b16 %v564
    %v1964 = vunpack.c.h.b16 %v564
    %v1965 = vunpack.c.l.b16 %v565
    %v1966 = vunpack.c.h.b16 %v565
    %v1967 = vunpack.c.l.b16 %v566
    %v1968 = vunpack.c.h.b16 %v566
    %v1969 = vunpack.c.l.b16 %v567
    %v1970 = vunpack.c.h.b16 %v567
    %v1971 = vunpack.c.l.b16 %v568
    %v1972 = vunpack.c.h.b16 %v568
    %v1973 = vunpack.c.l.b16 %v569
    %v1974 = vunpack.c.h.b16 %v569
    %v1975 = vunpack.c.l.b16 %v570
    %v1976 = vunpack.c.h.b16 %v570
    %v1977 = vunpack.c.l.b16 %v571
    %v1978 = vunpack.c.h.b16 %v571
    %v1979 = vunpack.c.l.b16 %v572
    %v1980 = vunpack.c.h.b16 %v572
    %v1981 = vunpack.c.l.b16 %v573
    %v1982 = vunpack.c.h.b16 %v573
    %v1983 = vunpack.c.l.b16 %v574
    %v1984 = vunpack.c.h.b16 %v574
    %v1985 = vunpack.c.l.b16 %v575
    %v1986 = vunpack.c.h.b16 %v575
    %v1987 = vunpack.c.l.b16 %v576
    %v1988 = vunpack.c.h.b16 %v576
    %v1989 = vunpack.c.l.b16 %v577
    %v1990 = vunpack.c.h.b16 %v577
    %v1991 = vunpack.c.l.b16 %v578
    %v1992 = vunpack.c.h.b16 %v578
    %v1993 = vunpack.c.l.b16 %v579
    %v1994 = vunpack.c.h.b16 %v579
    %v1995 = vunpack.c.l.b16 %v580
    %v1996 = vunpack.c.h.b16 %v580
    %v1997 = vunpack.c.l.b16 %v581
    %v1998 = vunpack.c.h.b16 %v581
    %v1999 = vunpack.c.l.b16 %v582
    %v2000 = vunpack.c.h.b16 %v582
    %v2001 = vunpack.c.l.b16 %v583
    %v2002 = vunpack.c.h.b16 %v583
    %v2003 = vunpack.c.l.b16 %v584
    %v2004 = vunpack.c.h.b16 %v584
    %v2005 = vunpack.c.l.b16 %v585
    %v2006 = vunpack.c.h.b16 %v585
    %v2007 = vunpack.c.l.b16 %v586
    %v2008 = vunpack.c.h.b16 %v586
    %v2009 = vunpack.c.l.b16 %v587
    %v2010 = vunpack.c.h.b16 %v587
    %v2011 = vunpack.c.l.b16 %v588
    %v2012 = vunpack.c.h.b16 %v588
    %v2013 = vunpack.c.l.b16 %v589
    %v2014 = vunpack.c.h.b16 %v589
    %v2015 = vunpack.c.l.b16 %v590
    %v2016 = vunpack.c.h.b16 %v590
    %v2017 = vunpack.c.l.b16 %v591
    %v2018 = vunpack.c.h.b16 %v591
    %v2019 = vunpack.c.l.b16 %v592
    %v2020 = vunpack.c.h.b16 %v592
    %v2021 = vunpack.c.l.b16 %v593
    %v2022 = vunpack.c.h.b16 %v593
    %v2023 = vunpack.c.l.b16 %v594
    %v2024 = vunpack.c.h.b16 %v594
    %v2025 = vunpack.c.l.b16 %v595
    %v2026 = vunpack.c.h.b16 %v595
    %v2027 = vunpack.c.l.b16 %v596
    %v2028 = vunpack.c.h.b16 %v596
    %v2029 = vunpack.c.l.b16 %v597
    %v2030 = vunpack.c.h.b16 %v597
    %v2031 = vunpack.c.l.b16 %v598
    %v2032 = vunpack.c.h.b16 %v598
    %v2033 = vunpack.c.l.b16 %v599
    %v2034 = vunpack.c.h.b16 %v599
    %v2035 = vunpack.c.l.b16 %v600
    %v2036 = vunpack.c.h.b16 %v600
    %v2037 = vunpack.c.l.b16 %v601
    %v2038 = vunpack.c.h.b16 %v601
    %v2039 = vunpack.c.l.b16 %v602
    %v2040 = vunpack.c.h.b16 %v602
    %v2041 = vunpack.c.l.b16 %v603
    %v2042 = vunpack.c.h.b16 %v603
    %v2043 = vunpack.c.l.b16 %v604
    %v2044 = vunpack.c.h.b16 %v604
    %v2045 = vunpack.c.l.b16 %v605
    %v2046 = vunpack.c.h.b16 %v605
    %v2047 = vunpack.c.l.b16 %v606
    %v2048 = vunpack.c.h.b16 %v606
    %v2049 = vunpack.c.l.b16 %v607
    %v2050 = vunpack.c.h.b16 %v607
    %v2051 = vunpack.c.l.b16 %v608
    %v2052 = vunpack.c.h.b16 %v608
    %v2053 = vunpack.c.l.b16 %v609
    %v2054 = vunpack.c.h.b16 %v609
    %v2055 = vunpack.c.l.b16 %v610
    %v2056 = vunpack.c.h.b16 %v610
    %v2057 = vunpack.c.l.b16 %v611
    %v2058 = vunpack.c.h.b16 %v611
    %v2059 = vunpack.c.l.b16 %v612
    %v2060 = vunpack.c.h.b16 %v612
    %v2061 = vunpack.c.l.b16 %v613
    %v2062 = vunpack.c.h.b16 %v613
    %v2063 = vunpack.c.l.b16 %v614
    %v2064 = vunpack.c.h.b16 %v614
    %v2065 = vunpack.c.l.b16 %v615
    %v2066 = vunpack.c.h.b16 %v615
    %v2067 = vunpack.c.l.b16 %v616
    %v2068 = vunpack.c.h.b16 %v616
    %v2069 = vunpack.c.l.b16 %v617
    %v2070 = vunpack.c.h.b16 %v617
    %v2071 = vunpack.c.l.b16 %v618
    %v2072 = vunpack.c.h.b16 %v618
    %v2073 = vunpack.c.l.b16 %v619
    %v2074 = vunpack.c.h.b16 %v619
    %v2075 = vunpack.c.l.b16 %v620
    %v2076 = vunpack.c.h.b16 %v620
    %v2077 = vunpack.c.l.b16 %v621
    %v2078 = vunpack.c.h.b16 %v621
    %v2079 = vunpack.c.l.b16 %v622
    %v2080 = vunpack.c.h.b16 %v622
    %v2081 = vunpack.c.l.b16 %v623
    %v2082 = vunpack.c.h.b16 %v623
    %v2083 = vunpack.c.l.b16 %v624
    %v2084 = vunpack.c.h.b16 %v624
    %v2085 = vunpack.c.l.b16 %v625
    %v2086 = vunpack.c.h.b16 %v625
    %v2087 = vunpack.c.l.b16 %v626
    %v2088 = vunpack.c.h.b16 %v626
    %v2089 = vunpack.c.l.b16 %v627
    %v2090 = vunpack.c.h.b16 %v627
    %v2091 = vunpack.c.l.b16 %v628
    %v2092 = vunpack.c.h.b16 %v628
    %v2093 = vunpack.c.l.b16 %v629
    %v2094 = vunpack.c.h.b16 %v629
    %v2095 = vunpack.c.l.b16 %v630
    %v2096 = vunpack.c.h.b16 %v630
    %v2097 = vunpack.c.l.b16 %v631
    %v2098 = vunpack.c.h.b16 %v631
    %v2099 = vunpack.c.l.b16 %v632
    %v2100 = vunpack.c.h.b16 %v632
    %v2101 = vunpack.c.l.b16 %v633
    %v2102 = vunpack.c.h.b16 %v633
    %v2103 = vunpack.c.l.b16 %v634
    %v2104 = vunpack.c.h.b16 %v634
    %v2105 = vunpack.c.l.b16 %v635
    %v2106 = vunpack.c.h.b16 %v635
    %v2107 = vunpack.c.l.b16 %v636
    %v2108 = vunpack.c.h.b16 %v636
    %v2109 = vunpack.c.l.b16 %v637
    %v2110 = vunpack.c.h.b16 %v637
    %v2111 = vunpack.c.l.b16 %v638
    %v2112 = vunpack.c.h.b16 %v638
    %v2113 = vunpack.c.l.b16 %v639
    %v2114 = vunpack.c.h.b16 %v639
    %v2115 = vunpack.c.l.b16 %v640
    %v2116 = vunpack.c.h.b16 %v640
    %v2117 = vunpack.c.l.b16 %v641
    %v2118 = vunpack.c.h.b16 %v641
    %v2119 = vunpack.c.l.b16 %v642
    %v2120 = vunpack.c.h.b16 %v642
    %v2121 = vunpack.c.l.b16 %v643
    %v2122 = vunpack.c.h.b16 %v643
    %v2123 = vunpack.c.l.b16 %v644
    %v2124 = vunpack.c.h.b16 %v644
    %v2125 = vunpack.c.l.b16 %v645
    %v2126 = vunpack.c.h.b16 %v645
    %v2127 = vunpack.c.l.b16 %v646
    %v2128 = vunpack.c.h.b16 %v646
    %v2129 = vunpack.c.l.b16 %v647
    %v2130 = vunpack.c.h.b16 %v647
    %v2131 = vunpack.c.l.b16 %v648
    %v2132 = vunpack.c.h.b16 %v648
    %v2133 = vunpack.c.l.b16 %v649
    %v2134 = vunpack.c.h.b16 %v649
    %v2135 = vunpack.c.l.b16 %v650
    %v2136 = vunpack.c.h.b16 %v650
    %v2137 = vunpack.c.l.b16 %v651
    %v2138 = vunpack.c.h.b16 %v651
    %v2139 = vunpack.c.l.b16 %v652
    %v2140 = vunpack.c.h.b16 %v652
    %v2141 = vunpack.c.l.b16 %v653
    %v2142 = vunpack.c.h.b16 %v653
    %v2143 = vunpack.c.l.b16 %v654
    %v2144 = vunpack.c.h.b16 %v654
    %v2145 = vunpack.c.l.b16 %v655
    %v2146 = vunpack.c.h.b16 %v655
    %v2147 = vunpack.c.l.b16 %v656
    %v2148 = vunpack.c.h.b16 %v656
    %v2149 = vunpack.c.l.b16 %v657
    %v2150 = vunpack.c.h.b16 %v657
    %v2151 = vunpack.c.l.b16 %v658
    %v2152 = vunpack.c.h.b16 %v658
    %v2153 = vunpack.c.l.b16 %v659
    %v2154 = vunpack.c.h.b16 %v659
    %v2155 = vunpack.c.l.b16 %v660
    %v2156 = vunpack.c.h.b16 %v660
    %v2157 = vunpack.c.l.b16 %v661
    %v2158 = vunpack.c.h.b16 %v661
    %v2159 = vunpack.c.l.b16 %v662
    %v2160 = vunpack.c.h.b16 %v662
    %v2161 = vunpack.c.l.b16 %v663
    %v2162 = vunpack.c.h.b16 %v663
    %v2163 = vunpack.c.l.b16 %v664
    %v2164 = vunpack.c.h.b16 %v664
    %v2165 = vunpack.c.l.b16 %v665
    %v2166 = vunpack.c.h.b16 %v665
    %v2167 = vunpack.c.l.b16 %v666
    %v2168 = vunpack.c.h.b16 %v666
    %v2169 = vunpack.c.l.b16 %v667
    %v2170 = vunpack.c.h.b16 %v667
    %v2171 = vunpack.c.l.b16 %v668
    %v2172 = vunpack.c.h.b16 %v668
    %v2173 = vunpack.c.l.b16 %v669
    %v2174 = vunpack.c.h.b16 %v669
    %v2175 = vunpack.c.l.b16 %v670
    %v2176 = vunpack.c.h.b16 %v670
    %v2177 = vunpack.c.l.b16 %v671
    %v2178 = vunpack.c.h.b16 %v671
    %v2179 = vunpack.c.l.b16 %v672
    %v2180 = vunpack.c.h.b16 %v672
    %v2181 = vunpack.c.l.b16 %v673
    %v2182 = vunpack.c.h.b16 %v673
    %v2183 = vunpack.c.l.b16 %v674
    %v2184 = vunpack.c.h.b16 %v674
    %v2185 = vunpack.c.l.b16 %v675
    %v2186 = vunpack.c.h.b16 %v675
    %v2187 = vunpack.c.l.b16 %v676
    %v2188 = vunpack.c.h.b16 %v676
    %v2189 = vunpack.c.l.b16 %v677
    %v2190 = vunpack.c.h.b16 %v677
    %v2191 = vunpack.c.l.b16 %v678
    %v2192 = vunpack.c.h.b16 %v678
    %v2193 = vunpack.c.l.b16 %v679
    %v2194 = vunpack.c.h.b16 %v679
    %v2195 = vunpack.c.l.b16 %v680
    %v2196 = vunpack.c.h.b16 %v680
    %v2197 = vunpack.c.l.b16 %v681
    %v2198 = vunpack.c.h.b16 %v681
    %v2199 = vunpack.c.l.b16 %v682
    %v2200 = vunpack.c.h.b16 %v682
    %v2201 = vunpack.c.l.b16 %v683
    %v2202 = vunpack.c.h.b16 %v683
    %v2203 = vunpack.c.l.b16 %v684
    %v2204 = vunpack.c.h.b16 %v684
    %v2205 = vunpack.c.l.b16 %v685
    %v2206 = vunpack.c.h.b16 %v685
    %v2207 = vunpack.c.l.b16 %v686
    %v2208 = vunpack.c.h.b16 %v686
    %v2209 = vunpack.c.l.b16 %v687
    %v2210 = vunpack.c.h.b16 %v687
    %v2211 = vunpack.c.l.b16 %v688
    %v2212 = vunpack.c.h.b16 %v688
    %v2213 = vunpack.c.l.b16 %v689
    %v2214 = vunpack.c.h.b16 %v689
    %v2215 = vunpack.c.l.b16 %v690
    %v2216 = vunpack.c.h.b16 %v690
    %v2217 = vunpack.c.l.b16 %v691
    %v2218 = vunpack.c.h.b16 %v691
    %v2219 = vunpack.c.l.b16 %v692
    %v2220 = vunpack.c.h.b16 %v692
    %v2221 = vunpack.c.l.b16 %v693
    %v2222 = vunpack.c.h.b16 %v693
    %v2223 = vunpack.c.l.b16 %v694
    %v2224 = vunpack.c.h.b16 %v694
    %v2225 = vunpack.c.l.b16 %v695
    %v2226 = vunpack.c.h.b16 %v695
    %v2227 = vunpack.c.l.b16 %v696
    %v2228 = vunpack.c.h.b16 %v696
    %v2229 = vunpack.c.l.b16 %v697
    %v2230 = vunpack.c.h.b16 %v697
    %v2231 = vunpack.c.l.b16 %v698
    %v2232 = vunpack.c.h.b16 %v698
    %v2233 = vunpack.c.l.b16 %v699
    %v2234 = vunpack.c.h.b16 %v699
    %v2235 = vunpack.c.l.b16 %v700
    %v2236 = vunpack.c.h.b16 %v700
    %v2237 = vunpack.c.l.b16 %v701
    %v2238 = vunpack.c.h.b16 %v701
    %v2239 = vunpack.c.l.b16 %v702
    %v2240 = vunpack.c.h.b16 %v702
    %v2241 = vunpack.c.l.b16 %v703
    %v2242 = vunpack.c.h.b16 %v703
    %v2243 = vunpack.c.l.b16 %v704
    %v2244 = vunpack.c.h.b16 %v704
    %v2245 = vunpack.c.l.b16 %v705
    %v2246 = vunpack.c.h.b16 %v705
    %v2247 = vunpack.c.l.b16 %v706
    %v2248 = vunpack.c.h.b16 %v706
    %v2249 = vunpack.c.l.b16 %v707
    %v2250 = vunpack.c.h.b16 %v707
    %v2251 = vunpack.c.l.b16 %v708
    %v2252 = vunpack.c.h.b16 %v708
    %v2253 = vunpack.c.l.b16 %v709
    %v2254 = vunpack.c.h.b16 %v709
    %v2255 = vunpack.c.l.b16 %v710
    %v2256 = vunpack.c.h.b16 %v710
    %v2257 = vunpack.c.l.b16 %v711
    %v2258 = vunpack.c.h.b16 %v711
    %v2259 = vunpack.c.l.b16 %v712
    %v2260 = vunpack.c.h.b16 %v712
    %v2261 = vunpack.c.l.b16 %v713
    %v2262 = vunpack.c.h.b16 %v713
    %v2263 = vunpack.c.l.b16 %v714
    %v2264 = vunpack.c.h.b16 %v714
    %v2265 = vunpack.c.l.b16 %v715
    %v2266 = vunpack.c.h.b16 %v715
    %v2267 = vunpack.c.l.b16 %v716
    %v2268 = vunpack.c.h.b16 %v716
    %v2269 = vunpack.c.l.b16 %v717
    %v2270 = vunpack.c.h.b16 %v717
    %v2271 = vunpack.c.l.b16 %v718
    %v2272 = vunpack.c.h.b16 %v718
    %v2273 = vunpack.c.l.b16 %v719
    %v2274 = vunpack.c.h.b16 %v719
    %v2275 = vunpack.c.l.b16 %v720
    %v2276 = vunpack.c.h.b16 %v720
    %v2277 = vunpack.c.l.b16 %v721
    %v2278 = vunpack.c.h.b16 %v721
    %v2279 = vunpack.c.l.b16 %v722
    %v2280 = vunpack.c.h.b16 %v722
    %v2281 = vunpack.c.l.b16 %v723
    %v2282 = vunpack.c.h.b16 %v723
    %v2283 = vunpack.c.l.b16 %v724
    %v2284 = vunpack.c.h.b16 %v724
    %v2285 = vunpack.c.l.b16 %v725
    %v2286 = vunpack.c.h.b16 %v725
    %v2287 = vunpack.c.l.b16 %v726
    %v2288 = vunpack.c.h.b16 %v726
    %v2289 = vunpack.c.l.b16 %v727
    %v2290 = vunpack.c.h.b16 %v727
    %v2291 = vunpack.c.l.b16 %v728
    %v2292 = vunpack.c.h.b16 %v728
    %v2293 = vunpack.c.l.b16 %v729
    %v2294 = vunpack.c.h.b16 %v729
    %v2295 = vunpack.c.l.b16 %v730
    %v2296 = vunpack.c.h.b16 %v730
    %v2297 = vunpack.c.l.b16 %v731
    %v2298 = vunpack.c.h.b16 %v731
    %v2299 = vunpack.c.l.b16 %v732
    %v2300 = vunpack.c.h.b16 %v732
    %v2301 = vunpack.c.l.b16 %v733
    %v2302 = vunpack.c.h.b16 %v733
    %v2303 = vunpack.c.l.b16 %v734
    %v2304 = vunpack.c.h.b16 %v734
    %v2305 = vunpack.c.l.b16 %v735
    %v2306 = vunpack.c.h.b16 %v735
    %v2307 = vunpack.c.l.b16 %v736
    %v2308 = vunpack.c.h.b16 %v736
    %v2309 = vunpack.c.l.b16 %v737
    %v2310 = vunpack.c.h.b16 %v737
    %v2311 = vunpack.c.l.b16 %v738
    %v2312 = vunpack.c.h.b16 %v738
    %v2313 = vunpack.c.l.b16 %v739
    %v2314 = vunpack.c.h.b16 %v739
    %v2315 = vunpack.c.l.b16 %v740
    %v2316 = vunpack.c.h.b16 %v740
    %v2317 = vunpack.c.l.b16 %v741
    %v2318 = vunpack.c.h.b16 %v741
    %v2319 = vunpack.c.l.b16 %v742
    %v2320 = vunpack.c.h.b16 %v742
    %v2321 = vpack.c.b16 %v1305, %v1297
    %v2322 = vpack.c.b16 %v1306, %v1298
    %v2323 = vpack.c.b16 %v1307, %v1299
    %v2324 = vpack.c.b16 %v1308, %v1300
    %v2325 = vpack.c.b16 %v1309, %v1301
    %v2326 = vpack.c.b16 %v1310, %v1302
    %v2327 = vpack.c.b16 %v1311, %v1303
    %v2328 = vpack.c.b16 %v1312, %v1304
    %v2329 = vpack.c.b16 %v1321, %v1313
    %v2330 = vpack.c.b16 %v1322, %v1314
    %v2331 = vpack.c.b16 %v1323, %v1315
    %v2332 = vpack.c.b16 %v1324, %v1316
    %v2333 = vpack.c.b16 %v1325, %v1317
    %v2334 = vpack.c.b16 %v1326, %v1318
    %v2335 = vpack.c.b16 %v1327, %v1319
    %v2336 = vpack.c.b16 %v1328, %v1320
    %v2337 = vpack.c.b16 %v1337, %v1329
    %v2338 = vpack.c.b16 %v1338, %v1330
    %v2339 = vpack.c.b16 %v1339, %v1331
    %v2340 = vpack.c.b16 %v1340, %v1332
    %v2341 = vpack.c.b16 %v1341, %v1333
    %v2342 = vpack.c.b16 %v1342, %v1334
    %v2343 = vpack.c.b16 %v1343, %v1335
    %v2344 = vpack.c.b16 %v1344, %v1336
    %v2345 = vpack.c.b16 %v1353, %v1345
    %v2346 = vpack.c.b16 %v1354, %v1346
    %v2347 = vpack.c.b16 %v1355, %v1347
    %v2348 = vpack.c.b16 %v1356, %v1348
    %v2349 = vpack.c.b16 %v1357, %v1349
    %v2350 = vpack.c.b16 %v1358, %v1350
    %v2351 = vpack.c.b16 %v1359, %v1351
    %v2352 = vpack.c.b16 %v1360, %v1352
    %v2353 = vpack.c.b16 %v1369, %v1361
    %v2354 = vpack.c.b16 %v1370, %v1362
    %v2355 = vpack.c.b16 %v1371, %v1363
    %v2356 = vpack.c.b16 %v1372, %v1364
    %v2357 = vpack.c.b16 %v1373, %v1365
    %v2358 = vpack.c.b16 %v1374, %v1366
    %v2359 = vpack.c.b16 %v1375, %v1367
    %v2360 = vpack.c.b16 %v1376, %v1368
    %v2361 = vpack.c.b16 %v1385, %v1377
    %v2362 = vpack.c.b16 %v1386, %v1378
    %v2363 = vpack.c.b16 %v1387, %v1379
    %v2364 = vpack.c.b16 %v1388, %v1380
    %v2365 = vpack.c.b16 %v1389, %v1381
    %v2366 = vpack.c.b16 %v1390, %v1382
    %v2367 = vpack.c.b16 %v1391, %v1383
    %v2368 = vpack.c.b16 %v1392, %v1384
    %v2369 = vpack.c.b16 %v1401, %v1393
    %v2370 = vpack.c.b16 %v1402, %v1394
    %v2371 = vpack.c.b16 %v1403, %v1395
    %v2372 = vpack.c.b16 %v1404, %v1396
    %v2373 = vpack.c.b16 %v1405, %v1397
    %v2374 = vpack.c.b16 %v1406, %v1398
    %v2375 = vpack.c.b16 %v1407, %v1399
    %v2376 = vpack.c.b16 %v1408, %v1400
    %v2377 = vpack.c.b16 %v1417, %v1409
    %v2378 = vpack.c.b16 %v1418, %v1410
    %v2379 = vpack.c.b16 %v1419, %v1411
    %v2380 = vpack.c.b16 %v1420, %v1412
    %v2381 = vpack.c.b16 %v1421, %v1413
    %v2382 = vpack.c.b16 %v1422, %v1414
    %v2383 = vpack.c.b16 %v1423, %v1415
    %v2384 = vpack.c.b16 %v1424, %v1416
    %v2385 = vpack.c.b16 %v1433, %v1425
    %v2386 = vpack.c.b16 %v1434, %v1426
    %v2387 = vpack.c.b16 %v1435, %v1427
    %v2388 = vpack.c.b16 %v1436, %v1428
    %v2389 = vpack.c.b16 %v1437, %v1429
    %v2390 = vpack.c.b16 %v1438, %v1430
    %v2391 = vpack.c.b16 %v1439, %v1431
    %v2392 = vpack.c.b16 %v1440, %v1432
    %v2393 = vpack.c.b16 %v1449, %v1441
    %v2394 = vpack.c.b16 %v1450, %v1442
    %v2395 = vpack.c.b16 %v1451, %v1443
    %v2396 = vpack.c.b16 %v1452, %v1444
    %v2397 = vpack.c.b16 %v1453, %v1445
    %v2398 = vpack.c.b16 %v1454, %v1446
    %v2399 = vpack.c.b16 %v1455, %v1447
    %v2400 = vpack.c.b16 %v1456, %v1448
    %v2401 = vpack.c.b16 %v1465, %v1457
    %v2402 = vpack.c.b16 %v1466, %v1458
    %v2403 = vpack.c.b16 %v1467, %v1459
    %v2404 = vpack.c.b16 %v1468, %v1460
    %v2405 = vpack.c.b16 %v1469, %v1461
    %v2406 = vpack.c.b16 %v1470, %v1462
    %v2407 = vpack.c.b16 %v1471, %v1463
    %v2408 = vpack.c.b16 %v1472, %v1464
    %v2409 = vpack.c.b16 %v1481, %v1473
    %v2410 = vpack.c.b16 %v1482, %v1474
    %v2411 = vpack.c.b16 %v1483, %v1475
    %v2412 = vpack.c.b16 %v1484, %v1476
    %v2413 = vpack.c.b16 %v1485, %v1477
    %v2414 = vpack.c.b16 %v1486, %v1478
    %v2415 = vpack.c.b16 %v1487, %v1479
    %v2416 = vpack.c.b16 %v1488, %v1480
    %v2417 = vpack.c.b16 %v1497, %v1489
    %v2418 = vpack.c.b16 %v1498, %v1490
    %v2419 = vpack.c.b16 %v1499, %v1491
    %v2420 = vpack.c.b16 %v1500, %v1492
    %v2421 = vpack.c.b16 %v1501, %v1493
    %v2422 = vpack.c.b16 %v1502, %v1494
    %v2423 = vpack.c.b16 %v1503, %v1495
    %v2424 = vpack.c.b16 %v1504, %v1496
    %v2425 = vpack.c.b16 %v1513, %v1505
    %v2426 = vpack.c.b16 %v1514, %v1506
    %v2427 = vpack.c.b16 %v1515, %v1507
    %v2428 = vpack.c.b16 %v1516, %v1508
    %v2429 = vpack.c.b16 %v1517, %v1509
    %v2430 = vpack.c.b16 %v1518, %v1510
    %v2431 = vpack.c.b16 %v1519, %v1511
    %v2432 = vpack.c.b16 %v1520, %v1512
    %v2433 = vpack.c.b16 %v1529, %v1521
    %v2434 = vpack.c.b16 %v1530, %v1522
    %v2435 = vpack.c.b16 %v1531, %v1523
    %v2436 = vpack.c.b16 %v1532, %v1524
    %v2437 = vpack.c.b16 %v1533, %v1525
    %v2438 = vpack.c.b16 %v1534, %v1526
    %v2439 = vpack.c.b16 %v1535, %v1527
    %v2440 = vpack.c.b16 %v1536, %v1528
    %v2441 = vpack.c.b16 %v1545, %v1537
    %v2442 = vpack.c.b16 %v1546, %v1538
    %v2443 = vpack.c.b16 %v1547, %v1539
    %v2444 = vpack.c.b16 %v1548, %v1540
    %v2445 = vpack.c.b16 %v1549, %v1541
    %v2446 = vpack.c.b16 %v1550, %v1542
    %v2447 = vpack.c.b16 %v1551, %v1543
    %v2448 = vpack.c.b16 %v1552, %v1544
    %v2449 = vpack.c.b16 %v1561, %v1553
    %v2450 = vpack.c.b16 %v1562, %v1554
    %v2451 = vpack.c.b16 %v1563, %v1555
    %v2452 = vpack.c.b16 %v1564, %v1556
    %v2453 = vpack.c.b16 %v1565, %v1557
    %v2454 = vpack.c.b16 %v1566, %v1558
    %v2455 = vpack.c.b16 %v1567, %v1559
    %v2456 = vpack.c.b16 %v1568, %v1560
    %v2457 = vpack.c.b16 %v1577, %v1569
    %v2458 = vpack.c.b16 %v1578, %v1570
    %v2459 = vpack.c.b16 %v1579, %v1571
    %v2460 = vpack.c.b16 %v1580, %v1572
    %v2461 = vpack.c.b16 %v1581, %v1573
    %v2462 = vpack.c.b16 %v1582, %v1574
    %v2463 = vpack.c.b16 %v1583, %v1575
    %v2464 = vpack.c.b16 %v1584, %v1576
    %v2465 = vpack.c.b16 %v1593, %v1585
    %v2466 = vpack.c.b16 %v1594, %v1586
    %v2467 = vpack.c.b16 %v1595, %v1587
    %v2468 = vpack.c.b16 %v1596, %v1588
    %v2469 = vpack.c.b16 %v1597, %v1589
    %v2470 = vpack.c.b16 %v1598, %v1590
    %v2471 = vpack.c.b16 %v1599, %v1591
    %v2472 = vpack.c.b16 %v1600, %v1592
    %v2473 = vpack.c.b16 %v1609, %v1601
    %v2474 = vpack.c.b16 %v1610, %v1602
    %v2475 = vpack.c.b16 %v1611, %v1603
    %v2476 = vpack.c.b16 %v1612, %v1604
    %v2477 = vpack.c.b16 %v1613, %v1605
    %v2478 = vpack.c.b16 %v1614, %v1606
    %v2479 = vpack.c.b16 %v1615, %v1607
    %v2480 = vpack.c.b16 %v1616, %v1608
    %v2481 = vpack.c.b16 %v1625, %v1617
    %v2482 = vpack.c.b16 %v1626, %v1618
    %v2483 = vpack.c.b16 %v1627, %v1619
    %v2484 = vpack.c.b16 %v1628, %v1620
    %v2485 = vpack.c.b16 %v1629, %v1621
    %v2486 = vpack.c.b16 %v1630, %v1622
    %v2487 = vpack.c.b16 %v1631, %v1623
    %v2488 = vpack.c.b16 %v1632, %v1624
    %v2489 = vpack.c.b16 %v1641, %v1633
    %v2490 = vpack.c.b16 %v1642, %v1634
    %v2491 = vpack.c.b16 %v1643, %v1635
    %v2492 = vpack.c.b16 %v1644, %v1636
    %v2493 = vpack.c.b16 %v1645, %v1637
    %v2494 = vpack.c.b16 %v1646, %v1638
    %v2495 = vpack.c.b16 %v1647, %v1639
    %v2496 = vpack.c.b16 %v1648, %v1640
    %v2497 = vpack.c.b16 %v1657, %v1649
    %v2498 = vpack.c.b16 %v1658, %v1650
    %v2499 = vpack.c.b16 %v1659, %v1651
    %v2500 = vpack.c.b16 %v1660, %v1652
    %v2501 = vpack.c.b16 %v1661, %v1653
    %v2502 = vpack.c.b16 %v1662, %v1654
    %v2503 = vpack.c.b16 %v1663, %v1655
    %v2504 = vpack.c.b16 %v1664, %v1656
    %v2505 = vpack.c.b16 %v1673, %v1665
    %v2506 = vpack.c.b16 %v1674, %v1666
    %v2507 = vpack.c.b16 %v1675, %v1667
    %v2508 = vpack.c.b16 %v1676, %v1668
    %v2509 = vpack.c.b16 %v1677, %v1669
    %v2510 = vpack.c.b16 %v1678, %v1670
    %v2511 = vpack.c.b16 %v1679, %v1671
    %v2512 = vpack.c.b16 %v1680, %v1672
    %v2513 = vpack.c.b16 %v1689, %v1681
    %v2514 = vpack.c.b16 %v1690, %v1682
    %v2515 = vpack.c.b16 %v1691, %v1683
    %v2516 = vpack.c.b16 %v1692, %v1684
    %v2517 = vpack.c.b16 %v1693, %v1685
    %v2518 = vpack.c.b16 %v1694, %v1686
    %v2519 = vpack.c.b16 %v1695, %v1687
    %v2520 = vpack.c.b16 %v1696, %v1688
    %v2521 = vpack.c.b16 %v1705, %v1697
    %v2522 = vpack.c.b16 %v1706, %v1698
    %v2523 = vpack.c.b16 %v1707, %v1699
    %v2524 = vpack.c.b16 %v1708, %v1700
    %v2525 = vpack.c.b16 %v1709, %v1701
    %v2526 = vpack.c.b16 %v1710, %v1702
    %v2527 = vpack.c.b16 %v1711, %v1703
    %v2528 = vpack.c.b16 %v1712, %v1704
    %v2529 = vpack.c.b16 %v1721, %v1713
    %v2530 = vpack.c.b16 %v1722, %v1714
    %v2531 = vpack.c.b16 %v1723, %v1715
    %v2532 = vpack.c.b16 %v1724, %v1716
    %v2533 = vpack.c.b16 %v1725, %v1717
    %v2534 = vpack.c.b16 %v1726, %v1718
    %v2535 = vpack.c.b16 %v1727, %v1719
    %v2536 = vpack.c.b16 %v1728, %v1720
    %v2537 = vpack.c.b16 %v1737, %v1729
    %v2538 = vpack.c.b16 %v1738, %v1730
    %v2539 = vpack.c.b16 %v1739, %v1731
    %v2540 = vpack.c.b16 %v1740, %v1732
    %v2541 = vpack.c.b16 %v1741, %v1733
    %v2542 = vpack.c.b16 %v1742, %v1734
    %v2543 = vpack.c.b16 %v1743, %v1735
    %v2544 = vpack.c.b16 %v1744, %v1736
    %v2545 = vpack.c.b16 %v1753, %v1745
    %v2546 = vpack.c.b16 %v1754, %v1746
    %v2547 = vpack.c.b16 %v1755, %v1747
    %v2548 = vpack.c.b16 %v1756, %v1748
    %v2549 = vpack.c.b16 %v1757, %v1749
    %v2550 = vpack.c.b16 %v1758, %v1750
    %v2551 = vpack.c.b16 %v1759, %v1751
    %v2552 = vpack.c.b16 %v1760, %v1752
    %v2553 = vpack.c.b16 %v1769, %v1761
    %v2554 = vpack.c.b16 %v1770, %v1762
    %v2555 = vpack.c.b16 %v1771, %v1763
    %v2556 = vpack.c.b16 %v1772, %v1764
    %v2557 = vpack.c.b16 %v1773, %v1765
    %v2558 = vpack.c.b16 %v1774, %v1766
    %v2559 = vpack.c.b16 %v1775, %v1767
    %v2560 = vpack.c.b16 %v1776, %v1768
    %v2561 = vpack.c.b16 %v1785, %v1777
    %v2562 = vpack.c.b16 %v1786, %v1778
    %v2563 = vpack.c.b16 %v1787, %v1779
    %v2564 = vpack.c.b16 %v1788, %v1780
    %v2565 = vpack.c.b16 %v1789, %v1781
    %v2566 = vpack.c.b16 %v1790, %v1782
    %v2567 = vpack.c.b16 %v1791, %v1783
    %v2568 = vpack.c.b16 %v1792, %v1784
    %v2569 = vpack.c.b16 %v1801, %v1793
    %v2570 = vpack.c.b16 %v1802, %v1794
    %v2571 = vpack.c.b16 %v1803, %v1795
    %v2572 = vpack.c.b16 %v1804, %v1796
    %v2573 = vpack.c.b16 %v1805, %v1797
    %v2574 = vpack.c.b16 %v1806, %v1798
    %v2575 = vpack.c.b16 %v1807, %v1799
    %v2576 = vpack.c.b16 %v1808, %v1800
    %v2577 = vpack.c.b16 %v1817, %v1809
    %v2578 = vpack.c.b16 %v1818, %v1810
    %v2579 = vpack.c.b16 %v1819, %v1811
    %v2580 = vpack.c.b16 %v1820, %v1812
    %v2581 = vpack.c.b16 %v1821, %v1813
    %v2582 = vpack.c.b16 %v1822, %v1814
    %v2583 = vpack.c.b16 %v1823, %v1815
    %v2584 = vpack.c.b16 %v1824, %v1816
    %v2585 = vpack.c.b16 %v1833, %v1825
    %v2586 = vpack.c.b16 %v1834, %v1826
    %v2587 = vpack.c.b16 %v1835, %v1827
    %v2588 = vpack.c.b16 %v1836, %v1828
    %v2589 = vpack.c.b16 %v1837, %v1829
    %v2590 = vpack.c.b16 %v1838, %v1830
    %v2591 = vpack.c.b16 %v1839, %v1831
    %v2592 = vpack.c.b16 %v1840, %v1832
    %v2593 = vpack.c.b16 %v1849, %v1841
    %v2594 = vpack.c.b16 %v1850, %v1842
    %v2595 = vpack.c.b16 %v1851, %v1843
    %v2596 = vpack.c.b16 %v1852, %v1844
    %v2597 = vpack.c.b16 %v1853, %v1845
    %v2598 = vpack.c.b16 %v1854, %v1846
    %v2599 = vpack.c.b16 %v1855, %v1847
    %v2600 = vpack.c.b16 %v1856, %v1848
    %v2601 = vpack.c.b16 %v1865, %v1857
    %v2602 = vpack.c.b16 %v1866, %v1858
    %v2603 = vpack.c.b16 %v1867, %v1859
    %v2604 = vpack.c.b16 %v1868, %v1860
    %v2605 = vpack.c.b16 %v1869, %v1861
    %v2606 = vpack.c.b16 %v1870, %v1862
    %v2607 = vpack.c.b16 %v1871, %v1863
    %v2608 = vpack.c.b16 %v1872, %v1864
    %v2609 = vpack.c.b16 %v1881, %v1873
    %v2610 = vpack.c.b16 %v1882, %v1874
    %v2611 = vpack.c.b16 %v1883, %v1875
    %v2612 = vpack.c.b16 %v1884, %v1876
    %v2613 = vpack.c.b16 %v1885, %v1877
    %v2614 = vpack.c.b16 %v1886, %v1878
    %v2615 = vpack.c.b16 %v1887, %v1879
    %v2616 = vpack.c.b16 %v1888, %v1880
    %v2617 = vpack.c.b16 %v1897, %v1889
    %v2618 = vpack.c.b16 %v1898, %v1890
    %v2619 = vpack.c.b16 %v1899, %v1891
    %v2620 = vpack.c.b16 %v1900, %v1892
    %v2621 = vpack.c.b16 %v1901, %v1893
    %v2622 = vpack.c.b16 %v1902, %v1894
    %v2623 = vpack.c.b16 %v1903, %v1895
    %v2624 = vpack.c.b16 %v1904, %v1896
    %v2625 = vpack.c.b16 %v1913, %v1905
    %v2626 = vpack.c.b16 %v1914, %v1906
    %v2627 = vpack.c.b16 %v1915, %v1907
    %v2628 = vpack.c.b16 %v1916, %v1908
    %v2629 = vpack.c.b16 %v1917, %v1909
    %v2630 = vpack.c.b16 %v1918, %v1910
    %v2631 = vpack.c.b16 %v1919, %v1911
    %v2632 = vpack.c.b16 %v1920, %v1912
    %v2633 = vpack.c.b16 %v1929, %v1921
    %v2634 = vpack.c.b16 %v1930, %v1922
    %v2635 = vpack.c.b16 %v1931, %v1923
    %v2636 = vpack.c.b16 %v1932, %v1924
    %v2637 = vpack.c.b16 %v1933, %v1925
    %v2638 = vpack.c.b16 %v1934, %v1926
    %v2639 = vpack.c.b16 %v1935, %v1927
    %v2640 = vpack.c.b16 %v1936, %v1928
    %v2641 = vpack.c.b16 %v1945, %v1937
    %v2642 = vpack.c.b16 %v1946, %v1938
    %v2643 = vpack.c.b16 %v1947, %v1939
    %v2644 = vpack.c.b16 %v1948, %v1940
    %v2645 = vpack.c.b16 %v1949, %v1941
    %v2646 = vpack.c.b16 %v1950, %v1942
    %v2647 = vpack.c.b16 %v1951, %v1943
    %v2648 = vpack.c.b16 %v1952, %v1944
    %v2649 = vpack.c.b16 %v1961, %v1953
    %v2650 = vpack.c.b16 %v1962, %v1954
    %v2651 = vpack.c.b16 %v1963, %v1955
    %v2652 = vpack.c.b16 %v1964, %v1956
    %v2653 = vpack.c.b16 %v1965, %v1957
    %v2654 = vpack.c.b16 %v1966, %v1958
    %v2655 = vpack.c.b16 %v1967, %v1959
    %v2656 = vpack.c.b16 %v1968, %v1960
    %v2657 = vpack.c.b16 %v1977, %v1969
    %v2658 = vpack.c.b16 %v1978, %v1970
    %v2659 = vpack.c.b16 %v1979, %v1971
    %v2660 = vpack.c.b16 %v1980, %v1972
    %v2661 = vpack.c.b16 %v1981, %v1973
    %v2662 = vpack.c.b16 %v1982, %v1974
    %v2663 = vpack.c.b16 %v1983, %v1975
    %v2664 = vpack.c.b16 %v1984, %v1976
    %v2665 = vpack.c.b16 %v1993, %v1985
    %v2666 = vpack.c.b16 %v1994, %v1986
    %v2667 = vpack.c.b16 %v1995, %v1987
    %v2668 = vpack.c.b16 %v1996, %v1988
    %v2669 = vpack.c.b16 %v1997, %v1989
    %v2670 = vpack.c.b16 %v1998, %v1990
    %v2671 = vpack.c.b16 %v1999, %v1991
    %v2672 = vpack.c.b16 %v2000, %v1992
    %v2673 = vpack.c.b16 %v2009, %v2001
    %v2674 = vpack.c.b16 %v2010, %v2002
    %v2675 = vpack.c.b16 %v2011, %v2003
    %v2676 = vpack.c.b16 %v2012, %v2004
    %v2677 = vpack.c.b16 %v2013, %v2005
    %v2678 = vpack.c.b16 %v2014, %v2006
    %v2679 = vpack.c.b16 %v2015, %v2007
    %v2680 = vpack.c.b16 %v2016, %v2008
    %v2681 = vpack.c.b16 %v2025, %v2017
    %v2682 = vpack.c.b16 %v2026, %v2018
    %v2683 = vpack.c.b16 %v2027, %v2019
    %v2684 = vpack.c.b16 %v2028, %v2020
    %v2685 = vpack.c.b16 %v2029, %v2021
    %v2686 = vpack.c.b16 %v2030, %v2022
    %v2687 = vpack.c.b16 %v2031, %v2023
    %v2688 = vpack.c.b16 %v2032, %v2024
    %v2689 = vpack.c.b16 %v2041, %v2033
    %v2690 = vpack.c.b16 %v2042, %v2034
    %v2691 = vpack.c.b16 %v2043, %v2035
    %v2692 = vpack.c.b16 %v2044, %v2036
    %v2693 = vpack.c.b16 %v2045, %v2037
    %v2694 = vpack.c.b16 %v2046, %v2038
    %v2695 = vpack.c.b16 %v2047, %v2039
    %v2696 = vpack.c.b16 %v2048, %v2040
    %v2697 = vpack.c.b16 %v2057, %v2049
    %v2698 = vpack.c.b16 %v2058, %v2050
    %v2699 = vpack.c.b16 %v2059, %v2051
    %v2700 = vpack.c.b16 %v2060, %v2052
    %v2701 = vpack.c.b16 %v2061, %v2053
    %v2702 = vpack.c.b16 %v2062, %v2054
    %v2703 = vpack.c.b16 %v2063, %v2055
    %v2704 = vpack.c.b16 %v2064, %v2056
    %v2705 = vpack.c.b16 %v2073, %v2065
    %v2706 = vpack.c.b16 %v2074, %v2066
    %v2707 = vpack.c.b16 %v2075, %v2067
    %v2708 = vpack.c.b16 %v2076, %v2068
    %v2709 = vpack.c.b16 %v2077, %v2069
    %v2710 = vpack.c.b16 %v2078, %v2070
    %v2711 = vpack.c.b16 %v2079, %v2071
    %v2712 = vpack.c.b16 %v2080, %v2072
    %v2713 = vpack.c.b16 %v2089, %v2081
    %v2714 = vpack.c.b16 %v2090, %v2082
    %v2715 = vpack.c.b16 %v2091, %v2083
    %v2716 = vpack.c.b16 %v2092, %v2084
    %v2717 = vpack.c.b16 %v2093, %v2085
    %v2718 = vpack.c.b16 %v2094, %v2086
    %v2719 = vpack.c.b16 %v2095, %v2087
    %v2720 = vpack.c.b16 %v2096, %v2088
    %v2721 = vpack.c.b16 %v2105, %v2097
    %v2722 = vpack.c.b16 %v2106, %v2098
    %v2723 = vpack.c.b16 %v2107, %v2099
    %v2724 = vpack.c.b16 %v2108, %v2100
    %v2725 = vpack.c.b16 %v2109, %v2101
    %v2726 = vpack.c.b16 %v2110, %v2102
    %v2727 = vpack.c.b16 %v2111, %v2103
    %v2728 = vpack.c.b16 %v2112, %v2104
    %v2729 = vpack.c.b16 %v2121, %v2113
    %v2730 = vpack.c.b16 %v2122, %v2114
    %v2731 = vpack.c.b16 %v2123, %v2115
    %v2732 = vpack.c.b16 %v2124, %v2116
    %v2733 = vpack.c.b16 %v2125, %v2117
    %v2734 = vpack.c.b16 %v2126, %v2118
    %v2735 = vpack.c.b16 %v2127, %v2119
    %v2736 = vpack.c.b16 %v2128, %v2120
    %v2737 = vpack.c.b16 %v2137, %v2129
    %v2738 = vpack.c.b16 %v2138, %v2130
    %v2739 = vpack.c.b16 %v2139, %v2131
    %v2740 = vpack.c.b16 %v2140, %v2132
    %v2741 = vpack.c.b16 %v2141, %v2133
    %v2742 = vpack.c.b16 %v2142, %v2134
    %v2743 = vpack.c.b16 %v2143, %v2135
    %v2744 = vpack.c.b16 %v2144, %v2136
    %v2745 = vpack.c.b16 %v2153, %v2145
    %v2746 = vpack.c.b16 %v2154, %v2146
    %v2747 = vpack.c.b16 %v2155, %v2147
    %v2748 = vpack.c.b16 %v2156, %v2148
    %v2749 = vpack.c.b16 %v2157, %v2149
    %v2750 = vpack.c.b16 %v2158, %v2150
    %v2751 = vpack.c.b16 %v2159, %v2151
    %v2752 = vpack.c.b16 %v2160, %v2152
    %v2753 = vpack.c.b16 %v2169, %v2161
    %v2754 = vpack.c.b16 %v2170, %v2162
    %v2755 = vpack.c.b16 %v2171, %v2163
    %v2756 = vpack.c.b16 %v2172, %v2164
    %v2757 = vpack.c.b16 %v2173, %v2165
    %v2758 = vpack.c.b16 %v2174, %v2166
    %v2759 = vpack.c.b16 %v2175, %v2167
    %v2760 = vpack.c.b16 %v2176, %v2168
    %v2761 = vpack.c.b16 %v2185, %v2177
    %v2762 = vpack.c.b16 %v2186, %v2178
    %v2763 = vpack.c.b16 %v2187, %v2179
    %v2764 = vpack.c.b16 %v2188, %v2180
    %v2765 = vpack.c.b16 %v2189, %v2181
    %v2766 = vpack.c.b16 %v2190, %v2182
    %v2767 = vpack.c.b16 %v2191, %v2183
    %v2768 = vpack.c.b16 %v2192, %v2184
    %v2769 = vpack.c.b16 %v2201, %v2193
    %v2770 = vpack.c.b16 %v2202, %v2194
    %v2771 = vpack.c.b16 %v2203, %v2195
    %v2772 = vpack.c.b16 %v2204, %v2196
    %v2773 = vpack.c.b16 %v2205, %v2197
    %v2774 = vpack.c.b16 %v2206, %v2198
    %v2775 = vpack.c.b16 %v2207, %v2199
    %v2776 = vpack.c.b16 %v2208, %v2200
    %v2777 = vpack.c.b16 %v2217, %v2209
    %v2778 = vpack.c.b16 %v2218, %v2210
    %v2779 = vpack.c.b16 %v2219, %v2211
    %v2780 = vpack.c.b16 %v2220, %v2212
    %v2781 = vpack.c.b16 %v2221, %v2213
    %v2782 = vpack.c.b16 %v2222, %v2214
    %v2783 = vpack.c.b16 %v2223, %v2215
    %v2784 = vpack.c.b16 %v2224, %v2216
    %v2785 = vpack.c.b16 %v2233, %v2225
    %v2786 = vpack.c.b16 %v2234, %v2226
    %v2787 = vpack.c.b16 %v2235, %v2227
    %v2788 = vpack.c.b16 %v2236, %v2228
    %v2789 = vpack.c.b16 %v2237, %v2229
    %v2790 = vpack.c.b16 %v2238, %v2230
    %v2791 = vpack.c.b16 %v2239, %v2231
    %v2792 = vpack.c.b16 %v2240, %v2232
    %v2793 = vpack.c.b16 %v2249, %v2241
    %v2794 = vpack.c.b16 %v2250, %v2242
    %v2795 = vpack.c.b16 %v2251, %v2243
    %v2796 = vpack.c.b16 %v2252, %v2244
    %v2797 = vpack.c.b16 %v2253, %v2245
    %v2798 = vpack.c.b16 %v2254, %v2246
    %v2799 = vpack.c.b16 %v2255, %v2247
    %v2800 = vpack.c.b16 %v2256, %v2248
    %v2801 = vpack.c.b16 %v2265, %v2257
    %v2802 = vpack.c.b16 %v2266, %v2258
    %v2803 = vpack.c.b16 %v2267, %v2259
    %v2804 = vpack.c.b16 %v2268, %v2260
    %v2805 = vpack.c.b16 %v2269, %v2261
    %v2806 = vpack.c.b16 %v2270, %v2262
    %v2807 = vpack.c.b16 %v2271, %v2263
    %v2808 = vpack.c.b16 %v2272, %v2264
    %v2809 = vpack.c.b16 %v2281, %v2273
    %v2810 = vpack.c.b16 %v2282, %v2274
    %v2811 = vpack.c.b16 %v2283, %v2275
    %v2812 = vpack.c.b16 %v2284, %v2276
    %v2813 = vpack.c.b16 %v2285, %v2277
    %v2814 = vpack.c.b16 %v2286, %v2278
    %v2815 = vpack.c.b16 %v2287, %v2279
    %v2816 = vpack.c.b16 %v2288, %v2280
    %v2817 = vpack.c.b16 %v2297, %v2289
    %v2818 = vpack.c.b16 %v2298, %v2290
    %v2819 = vpack.c.b16 %v2299, %v2291
    %v2820 = vpack.c.b16 %v2300, %v2292
    %v2821 = vpack.c.b16 %v2301, %v2293
    %v2822 = vpack.c.b16 %v2302, %v2294
    %v2823 = vpack.c.b16 %v2303, %v2295
    %v2824 = vpack.c.b16 %v2304, %v2296
    %v2825 = vpack.c.b16 %v2313, %v2305
    %v2826 = vpack.c.b16 %v2314, %v2306
    %v2827 = vpack.c.b16 %v2315, %v2307
    %v2828 = vpack.c.b16 %v2316, %v2308
    %v2829 = vpack.c.b16 %v2317, %v2309
    %v2830 = vpack.c.b16 %v2318, %v2310
    %v2831 = vpack.c.b16 %v2319, %v2311
    %v2832 = vpack.c.b16 %v2320, %v2312
    %3345 = vmatprep.subr.bf16.mxu0 %v2378
    %3346 = vmatpush1.bf16.msra.mxu0 %v2377
    %3347 = vmatprep.subr.bf16.mxu0 %v2370
    %3348 = vmatpush1.bf16.msra.mxu0 %v2369
    %3349 = vmatprep.subr.bf16.mxu0 %v2362
    %3350 = vmatpush1.bf16.msra.mxu0 %v2361
    %3351 = vmatprep.subr.bf16.mxu0 %v2354
    %3352 = vmatpush1.bf16.msra.mxu0 %v2353
    %3353 = vmatprep.subr.bf16.mxu0 %v2346
    %3354 = vmatpush1.bf16.msra.mxu0 %v2345
    %3355 = vmatprep.subr.bf16.mxu0 %v2338
    %3356 = vmatpush1.bf16.msra.mxu0 %v2337
    %3357 = vmatprep.subr.bf16.mxu0 %v2330
    %3358 = vmatpush1.bf16.msra.mxu0 %v2329
    %3359 = vmatprep.subr.bf16.mxu0 %v2322
    %3360 = vmatpush1.bf16.msra.mxu0 %v2321
    %3361 = vmatprep.subr.bf16.mxu0 %v2442
    %3362 = vmatpush2.bf16.msra.mxu0 %v2441
    %3363 = vmatprep.subr.bf16.mxu0 %v2434
    %3364 = vmatpush2.bf16.msra.mxu0 %v2433
    %3365 = vmatprep.subr.bf16.mxu0 %v2426
    %3366 = vmatpush2.bf16.msra.mxu0 %v2425
    %3367 = vmatprep.subr.bf16.mxu0 %v2418
    %3368 = vmatpush2.bf16.msra.mxu0 %v2417
    %3369 = vmatprep.subr.bf16.mxu0 %v2410
    %3370 = vmatpush2.bf16.msra.mxu0 %v2409
    %3371 = vmatprep.subr.bf16.mxu0 %v2402
    %3372 = vmatpush2.bf16.msra.mxu0 %v2401
    %3373 = vmatprep.subr.bf16.mxu0 %v2394
    %3374 = vmatpush2.bf16.msra.mxu0 %v2393
    %3375 = vmatprep.subr.bf16.mxu0 %v2386
    %3376 = vmatpush2.bf16.msra.mxu0 %v2385
    %3377 = vmatprep.mubr.bf16.mxu0 %v224
    %3378 = vmatmul.mubr.bf16.gmra.mxu0 %v223
    %v3379 = vpop.f32.mrf.mxu0
    %v3380 = vadd.f32 %v748, %v3379
    %v3381 = vpop.f32.mrf.mxu0
    %v3382 = vadd.f32 %v752, %v3381
    %v3383 = vpop.f32.mrf.mxu0
    %v3384 = vpop.f32.mrf.mxu0
    %3385 = vdwg.mxu0
    %3386 = vmatprep.subr.bf16.mxu0 %v2506
    %3387 = vmatpush1.bf16.msra.mxu0 %v2505
    %3388 = vmatprep.subr.bf16.mxu0 %v2498
    %3389 = vmatpush1.bf16.msra.mxu0 %v2497
    %3390 = vmatprep.subr.bf16.mxu0 %v2490
    %3391 = vmatpush1.bf16.msra.mxu0 %v2489
    %3392 = vmatprep.subr.bf16.mxu0 %v2482
    %3393 = vmatpush1.bf16.msra.mxu0 %v2481
    %3394 = vmatprep.subr.bf16.mxu0 %v2474
    %3395 = vmatpush1.bf16.msra.mxu0 %v2473
    %3396 = vmatprep.subr.bf16.mxu0 %v2466
    %3397 = vmatpush1.bf16.msra.mxu0 %v2465
    %3398 = vmatprep.subr.bf16.mxu0 %v2458
    %3399 = vmatpush1.bf16.msra.mxu0 %v2457
    %3400 = vmatprep.subr.bf16.mxu0 %v2450
    %3401 = vmatpush1.bf16.msra.mxu0 %v2449
    %3402 = vmatprep.subr.bf16.mxu0 %v2570
    %3403 = vmatpush2.bf16.msra.mxu0 %v2569
    %3404 = vmatprep.subr.bf16.mxu0 %v2562
    %3405 = vmatpush2.bf16.msra.mxu0 %v2561
    %3406 = vmatprep.subr.bf16.mxu0 %v2554
    %3407 = vmatpush2.bf16.msra.mxu0 %v2553
    %3408 = vmatprep.subr.bf16.mxu0 %v2546
    %3409 = vmatpush2.bf16.msra.mxu0 %v2545
    %3410 = vmatprep.subr.bf16.mxu0 %v2538
    %3411 = vmatpush2.bf16.msra.mxu0 %v2537
    %3412 = vmatprep.subr.bf16.mxu0 %v2530
    %3413 = vmatpush2.bf16.msra.mxu0 %v2529
    %3414 = vmatprep.subr.bf16.mxu0 %v2522
    %3415 = vmatpush2.bf16.msra.mxu0 %v2521
    %3416 = vmatprep.subr.bf16.mxu0 %v2514
    %3417 = vmatpush2.bf16.msra.mxu0 %v2513
    %3418 = vmatprep.mubr.bf16.mxu0 %v226
    %3419 = vmatmul.mubr.bf16.gmra.mxu0 %v225
    %v3420 = vpop.f32.mrf.mxu0
    %v3421 = vadd.f32 %v3380, %v3420
    %v3422 = vpop.f32.mrf.mxu0
    %v3423 = vadd.f32 %v3382, %v3422
    %v3424 = vpop.f32.mrf.mxu0
    %v3425 = vpop.f32.mrf.mxu0
    %3426 = vdwg.mxu0
    %3427 = vmatprep.subr.bf16.mxu0 %v2634
    %3428 = vmatpush1.bf16.msra.mxu0 %v2633
    %3429 = vmatprep.subr.bf16.mxu0 %v2626
    %3430 = vmatpush1.bf16.msra.mxu0 %v2625
    %3431 = vmatprep.subr.bf16.mxu0 %v2618
    %3432 = vmatpush1.bf16.msra.mxu0 %v2617
    %3433 = vmatprep.subr.bf16.mxu0 %v2610
    %3434 = vmatpush1.bf16.msra.mxu0 %v2609
    %3435 = vmatprep.subr.bf16.mxu0 %v2602
    %3436 = vmatpush1.bf16.msra.mxu0 %v2601
    %3437 = vmatprep.subr.bf16.mxu0 %v2594
    %3438 = vmatpush1.bf16.msra.mxu0 %v2593
    %3439 = vmatprep.subr.bf16.mxu0 %v2586
    %3440 = vmatpush1.bf16.msra.mxu0 %v2585
    %3441 = vmatprep.subr.bf16.mxu0 %v2578
    %3442 = vmatpush1.bf16.msra.mxu0 %v2577
    %3443 = vmatprep.subr.bf16.mxu0 %v2698
    %3444 = vmatpush2.bf16.msra.mxu0 %v2697
    %3445 = vmatprep.subr.bf16.mxu0 %v2690
    %3446 = vmatpush2.bf16.msra.mxu0 %v2689
    %3447 = vmatprep.subr.bf16.mxu0 %v2682
    %3448 = vmatpush2.bf16.msra.mxu0 %v2681
    %3449 = vmatprep.subr.bf16.mxu0 %v2674
    %3450 = vmatpush2.bf16.msra.mxu0 %v2673
    %3451 = vmatprep.subr.bf16.mxu0 %v2666
    %3452 = vmatpush2.bf16.msra.mxu0 %v2665
    %3453 = vmatprep.subr.bf16.mxu0 %v2658
    %3454 = vmatpush2.bf16.msra.mxu0 %v2657
    %3455 = vmatprep.subr.bf16.mxu0 %v2650
    %3456 = vmatpush2.bf16.msra.mxu0 %v2649
    %3457 = vmatprep.subr.bf16.mxu0 %v2642
    %3458 = vmatpush2.bf16.msra.mxu0 %v2641
    %3459 = vmatprep.mubr.bf16.mxu0 %v228
    %3460 = vmatmul.mubr.bf16.gmra.mxu0 %v227
    %v3461 = vpop.f32.mrf.mxu0
    %v3462 = vadd.f32 %v3421, %v3461
    %v3463 = vpop.f32.mrf.mxu0
    %v3464 = vadd.f32 %v3423, %v3463
    %v3465 = vpop.f32.mrf.mxu0
    %v3466 = vpop.f32.mrf.mxu0
    %3467 = vdwg.mxu0
    %3468 = vmatprep.subr.bf16.mxu0 %v2762
    %3469 = vmatpush1.bf16.msra.mxu0 %v2761
    %3470 = vmatprep.subr.bf16.mxu0 %v2754
    %3471 = vmatpush1.bf16.msra.mxu0 %v2753
    %3472 = vmatprep.subr.bf16.mxu0 %v2746
    %3473 = vmatpush1.bf16.msra.mxu0 %v2745
    %3474 = vmatprep.subr.bf16.mxu0 %v2738
    %3475 = vmatpush1.bf16.msra.mxu0 %v2737
    %3476 = vmatprep.subr.bf16.mxu0 %v2730
    %3477 = vmatpush1.bf16.msra.mxu0 %v2729
    %3478 = vmatprep.subr.bf16.mxu0 %v2722
    %3479 = vmatpush1.bf16.msra.mxu0 %v2721
    %3480 = vmatprep.subr.bf16.mxu0 %v2714
    %3481 = vmatpush1.bf16.msra.mxu0 %v2713
    %3482 = vmatprep.subr.bf16.mxu0 %v2706
    %3483 = vmatpush1.bf16.msra.mxu0 %v2705
    %3484 = vmatprep.subr.bf16.mxu0 %v2826
    %3485 = vmatpush2.bf16.msra.mxu0 %v2825
    %3486 = vmatprep.subr.bf16.mxu0 %v2818
    %3487 = vmatpush2.bf16.msra.mxu0 %v2817
    %3488 = vmatprep.subr.bf16.mxu0 %v2810
    %3489 = vmatpush2.bf16.msra.mxu0 %v2809
    %3490 = vmatprep.subr.bf16.mxu0 %v2802
    %3491 = vmatpush2.bf16.msra.mxu0 %v2801
    %3492 = vmatprep.subr.bf16.mxu0 %v2794
    %3493 = vmatpush2.bf16.msra.mxu0 %v2793
    %3494 = vmatprep.subr.bf16.mxu0 %v2786
    %3495 = vmatpush2.bf16.msra.mxu0 %v2785
    %3496 = vmatprep.subr.bf16.mxu0 %v2778
    %3497 = vmatpush2.bf16.msra.mxu0 %v2777
    %3498 = vmatprep.subr.bf16.mxu0 %v2770
    %3499 = vmatpush2.bf16.msra.mxu0 %v2769
    %3500 = vmatprep.mubr.bf16.mxu0 %v230
    %3501 = vmatmul.mubr.bf16.gmra.mxu0 %v229
    %v3502 = vpop.f32.mrf.mxu0
    %v3503 = vadd.f32 %v3462, %v3502
    %v3504 = vpop.f32.mrf.mxu0
    %v3505 = vadd.f32 %v3464, %v3504
    %v3506 = vpop.f32.mrf.mxu0
    %v3507 = vpop.f32.mrf.mxu0
    %3508 = vdwg.mxu0
    %3509 = vmatprep.subr.bf16.mxu0 %v2380
    %3510 = vmatpush1.bf16.msra.mxu0 %v2379
    %3511 = vmatprep.subr.bf16.mxu0 %v2372
    %3512 = vmatpush1.bf16.msra.mxu0 %v2371
    %3513 = vmatprep.subr.bf16.mxu0 %v2364
    %3514 = vmatpush1.bf16.msra.mxu0 %v2363
    %3515 = vmatprep.subr.bf16.mxu0 %v2356
    %3516 = vmatpush1.bf16.msra.mxu0 %v2355
    %3517 = vmatprep.subr.bf16.mxu0 %v2348
    %3518 = vmatpush1.bf16.msra.mxu0 %v2347
    %3519 = vmatprep.subr.bf16.mxu0 %v2340
    %3520 = vmatpush1.bf16.msra.mxu0 %v2339
    %3521 = vmatprep.subr.bf16.mxu0 %v2332
    %3522 = vmatpush1.bf16.msra.mxu0 %v2331
    %3523 = vmatprep.subr.bf16.mxu0 %v2324
    %3524 = vmatpush1.bf16.msra.mxu0 %v2323
    %3525 = vmatprep.subr.bf16.mxu0 %v2444
    %3526 = vmatpush2.bf16.msra.mxu0 %v2443
    %3527 = vmatprep.subr.bf16.mxu0 %v2436
    %3528 = vmatpush2.bf16.msra.mxu0 %v2435
    %3529 = vmatprep.subr.bf16.mxu0 %v2428
    %3530 = vmatpush2.bf16.msra.mxu0 %v2427
    %3531 = vmatprep.subr.bf16.mxu0 %v2420
    %3532 = vmatpush2.bf16.msra.mxu0 %v2419
    %3533 = vmatprep.subr.bf16.mxu0 %v2412
    %3534 = vmatpush2.bf16.msra.mxu0 %v2411
    %3535 = vmatprep.subr.bf16.mxu0 %v2404
    %3536 = vmatpush2.bf16.msra.mxu0 %v2403
    %3537 = vmatprep.subr.bf16.mxu0 %v2396
    %3538 = vmatpush2.bf16.msra.mxu0 %v2395
    %3539 = vmatprep.subr.bf16.mxu0 %v2388
    %3540 = vmatpush2.bf16.msra.mxu0 %v2387
    %3541 = vmatprep.mubr.bf16.mxu0 %v224
    %3542 = vmatmul.mubr.bf16.gmra.mxu0 %v223
    %v3543 = vpop.f32.mrf.mxu0
    %v3544 = vadd.f32 %v756, %v3543
    %v3545 = vpop.f32.mrf.mxu0
    %v3546 = vadd.f32 %v760, %v3545
    %v3547 = vpop.f32.mrf.mxu0
    %v3548 = vpop.f32.mrf.mxu0
    %3549 = vdwg.mxu0
    %3550 = vmatprep.subr.bf16.mxu0 %v2508
    %3551 = vmatpush1.bf16.msra.mxu0 %v2507
    %3552 = vmatprep.subr.bf16.mxu0 %v2500
    %3553 = vmatpush1.bf16.msra.mxu0 %v2499
    %3554 = vmatprep.subr.bf16.mxu0 %v2492
    %3555 = vmatpush1.bf16.msra.mxu0 %v2491
    %3556 = vmatprep.subr.bf16.mxu0 %v2484
    %3557 = vmatpush1.bf16.msra.mxu0 %v2483
    %3558 = vmatprep.subr.bf16.mxu0 %v2476
    %3559 = vmatpush1.bf16.msra.mxu0 %v2475
    %3560 = vmatprep.subr.bf16.mxu0 %v2468
    %3561 = vmatpush1.bf16.msra.mxu0 %v2467
    %3562 = vmatprep.subr.bf16.mxu0 %v2460
    %3563 = vmatpush1.bf16.msra.mxu0 %v2459
    %3564 = vmatprep.subr.bf16.mxu0 %v2452
    %3565 = vmatpush1.bf16.msra.mxu0 %v2451
    %3566 = vmatprep.subr.bf16.mxu0 %v2572
    %3567 = vmatpush2.bf16.msra.mxu0 %v2571
    %3568 = vmatprep.subr.bf16.mxu0 %v2564
    %3569 = vmatpush2.bf16.msra.mxu0 %v2563
    %3570 = vmatprep.subr.bf16.mxu0 %v2556
    %3571 = vmatpush2.bf16.msra.mxu0 %v2555
    %3572 = vmatprep.subr.bf16.mxu0 %v2548
    %3573 = vmatpush2.bf16.msra.mxu0 %v2547
    %3574 = vmatprep.subr.bf16.mxu0 %v2540
    %3575 = vmatpush2.bf16.msra.mxu0 %v2539
    %3576 = vmatprep.subr.bf16.mxu0 %v2532
    %3577 = vmatpush2.bf16.msra.mxu0 %v2531
    %3578 = vmatprep.subr.bf16.mxu0 %v2524
    %3579 = vmatpush2.bf16.msra.mxu0 %v2523
    %3580 = vmatprep.subr.bf16.mxu0 %v2516
    %3581 = vmatpush2.bf16.msra.mxu0 %v2515
    %3582 = vmatprep.mubr.bf16.mxu0 %v226
    %3583 = vmatmul.mubr.bf16.gmra.mxu0 %v225
    %v3584 = vpop.f32.mrf.mxu0
    %v3585 = vadd.f32 %v3544, %v3584
    %v3586 = vpop.f32.mrf.mxu0
    %v3587 = vadd.f32 %v3546, %v3586
    %v3588 = vpop.f32.mrf.mxu0
    %v3589 = vpop.f32.mrf.mxu0
    %3590 = vdwg.mxu0
    %3591 = vmatprep.subr.bf16.mxu0 %v2636
    %3592 = vmatpush1.bf16.msra.mxu0 %v2635
    %3593 = vmatprep.subr.bf16.mxu0 %v2628
    %3594 = vmatpush1.bf16.msra.mxu0 %v2627
    %3595 = vmatprep.subr.bf16.mxu0 %v2620
    %3596 = vmatpush1.bf16.msra.mxu0 %v2619
    %3597 = vmatprep.subr.bf16.mxu0 %v2612
    %3598 = vmatpush1.bf16.msra.mxu0 %v2611
    %3599 = vmatprep.subr.bf16.mxu0 %v2604
    %3600 = vmatpush1.bf16.msra.mxu0 %v2603
    %3601 = vmatprep.subr.bf16.mxu0 %v2596
    %3602 = vmatpush1.bf16.msra.mxu0 %v2595
    %3603 = vmatprep.subr.bf16.mxu0 %v2588
    %3604 = vmatpush1.bf16.msra.mxu0 %v2587
    %3605 = vmatprep.subr.bf16.mxu0 %v2580
    %3606 = vmatpush1.bf16.msra.mxu0 %v2579
    %3607 = vmatprep.subr.bf16.mxu0 %v2700
    %3608 = vmatpush2.bf16.msra.mxu0 %v2699
    %3609 = vmatprep.subr.bf16.mxu0 %v2692
    %3610 = vmatpush2.bf16.msra.mxu0 %v2691
    %3611 = vmatprep.subr.bf16.mxu0 %v2684
    %3612 = vmatpush2.bf16.msra.mxu0 %v2683
    %3613 = vmatprep.subr.bf16.mxu0 %v2676
    %3614 = vmatpush2.bf16.msra.mxu0 %v2675
    %3615 = vmatprep.subr.bf16.mxu0 %v2668
    %3616 = vmatpush2.bf16.msra.mxu0 %v2667
    %3617 = vmatprep.subr.bf16.mxu0 %v2660
    %3618 = vmatpush2.bf16.msra.mxu0 %v2659
    %3619 = vmatprep.subr.bf16.mxu0 %v2652
    %3620 = vmatpush2.bf16.msra.mxu0 %v2651
    %3621 = vmatprep.subr.bf16.mxu0 %v2644
    %3622 = vmatpush2.bf16.msra.mxu0 %v2643
    %3623 = vmatprep.mubr.bf16.mxu0 %v228
    %3624 = vmatmul.mubr.bf16.gmra.mxu0 %v227
    %v3625 = vpop.f32.mrf.mxu0
    %v3626 = vadd.f32 %v3585, %v3625
    %v3627 = vpop.f32.mrf.mxu0
    %v3628 = vadd.f32 %v3587, %v3627
    %v3629 = vpop.f32.mrf.mxu0
    %v3630 = vpop.f32.mrf.mxu0
    %3631 = vdwg.mxu0
    %3632 = vmatprep.subr.bf16.mxu0 %v2764
    %3633 = vmatpush1.bf16.msra.mxu0 %v2763
    %3634 = vmatprep.subr.bf16.mxu0 %v2756
    %3635 = vmatpush1.bf16.msra.mxu0 %v2755
    %3636 = vmatprep.subr.bf16.mxu0 %v2748
    %3637 = vmatpush1.bf16.msra.mxu0 %v2747
    %3638 = vmatprep.subr.bf16.mxu0 %v2740
    %3639 = vmatpush1.bf16.msra.mxu0 %v2739
    %3640 = vmatprep.subr.bf16.mxu0 %v2732
    %3641 = vmatpush1.bf16.msra.mxu0 %v2731
    %3642 = vmatprep.subr.bf16.mxu0 %v2724
    %3643 = vmatpush1.bf16.msra.mxu0 %v2723
    %3644 = vmatprep.subr.bf16.mxu0 %v2716
    %3645 = vmatpush1.bf16.msra.mxu0 %v2715
    %3646 = vmatprep.subr.bf16.mxu0 %v2708
    %3647 = vmatpush1.bf16.msra.mxu0 %v2707
    %3648 = vmatprep.subr.bf16.mxu0 %v2828
    %3649 = vmatpush2.bf16.msra.mxu0 %v2827
    %3650 = vmatprep.subr.bf16.mxu0 %v2820
    %3651 = vmatpush2.bf16.msra.mxu0 %v2819
    %3652 = vmatprep.subr.bf16.mxu0 %v2812
    %3653 = vmatpush2.bf16.msra.mxu0 %v2811
    %3654 = vmatprep.subr.bf16.mxu0 %v2804
    %3655 = vmatpush2.bf16.msra.mxu0 %v2803
    %3656 = vmatprep.subr.bf16.mxu0 %v2796
    %3657 = vmatpush2.bf16.msra.mxu0 %v2795
    %3658 = vmatprep.subr.bf16.mxu0 %v2788
    %3659 = vmatpush2.bf16.msra.mxu0 %v2787
    %3660 = vmatprep.subr.bf16.mxu0 %v2780
    %3661 = vmatpush2.bf16.msra.mxu0 %v2779
    %3662 = vmatprep.subr.bf16.mxu0 %v2772
    %3663 = vmatpush2.bf16.msra.mxu0 %v2771
    %3664 = vmatprep.mubr.bf16.mxu0 %v230
    %3665 = vmatmul.mubr.bf16.gmra.mxu0 %v229
    %v3666 = vpop.f32.mrf.mxu0
    %v3667 = vadd.f32 %v3626, %v3666
    %v3668 = vpop.f32.mrf.mxu0
    %v3669 = vadd.f32 %v3628, %v3668
    %v3670 = vpop.f32.mrf.mxu0
    %v3671 = vpop.f32.mrf.mxu0
    %3672 = vdwg.mxu0
    %3673 = vmatprep.subr.bf16.mxu0 %v2382
    %3674 = vmatpush1.bf16.msra.mxu0 %v2381
    %3675 = vmatprep.subr.bf16.mxu0 %v2374
    %3676 = vmatpush1.bf16.msra.mxu0 %v2373
    %3677 = vmatprep.subr.bf16.mxu0 %v2366
    %3678 = vmatpush1.bf16.msra.mxu0 %v2365
    %3679 = vmatprep.subr.bf16.mxu0 %v2358
    %3680 = vmatpush1.bf16.msra.mxu0 %v2357
    %3681 = vmatprep.subr.bf16.mxu0 %v2350
    %3682 = vmatpush1.bf16.msra.mxu0 %v2349
    %3683 = vmatprep.subr.bf16.mxu0 %v2342
    %3684 = vmatpush1.bf16.msra.mxu0 %v2341
    %3685 = vmatprep.subr.bf16.mxu0 %v2334
    %3686 = vmatpush1.bf16.msra.mxu0 %v2333
    %3687 = vmatprep.subr.bf16.mxu0 %v2326
    %3688 = vmatpush1.bf16.msra.mxu0 %v2325
    %3689 = vmatprep.subr.bf16.mxu0 %v2446
    %3690 = vmatpush2.bf16.msra.mxu0 %v2445
    %3691 = vmatprep.subr.bf16.mxu0 %v2438
    %3692 = vmatpush2.bf16.msra.mxu0 %v2437
    %3693 = vmatprep.subr.bf16.mxu0 %v2430
    %3694 = vmatpush2.bf16.msra.mxu0 %v2429
    %3695 = vmatprep.subr.bf16.mxu0 %v2422
    %3696 = vmatpush2.bf16.msra.mxu0 %v2421
    %3697 = vmatprep.subr.bf16.mxu0 %v2414
    %3698 = vmatpush2.bf16.msra.mxu0 %v2413
    %3699 = vmatprep.subr.bf16.mxu0 %v2406
    %3700 = vmatpush2.bf16.msra.mxu0 %v2405
    %3701 = vmatprep.subr.bf16.mxu0 %v2398
    %3702 = vmatpush2.bf16.msra.mxu0 %v2397
    %3703 = vmatprep.subr.bf16.mxu0 %v2390
    %3704 = vmatpush2.bf16.msra.mxu0 %v2389
    %3705 = vmatprep.mubr.bf16.mxu0 %v224
    %3706 = vmatmul.mubr.bf16.gmra.mxu0 %v223
    %v3707 = vpop.f32.mrf.mxu0
    %v3708 = vadd.f32 %v764, %v3707
    %v3709 = vpop.f32.mrf.mxu0
    %v3710 = vadd.f32 %v768, %v3709
    %v3711 = vpop.f32.mrf.mxu0
    %v3712 = vpop.f32.mrf.mxu0
    %3713 = vdwg.mxu0
    %3714 = vmatprep.subr.bf16.mxu0 %v2510
    %3715 = vmatpush1.bf16.msra.mxu0 %v2509
    %3716 = vmatprep.subr.bf16.mxu0 %v2502
    %3717 = vmatpush1.bf16.msra.mxu0 %v2501
    %3718 = vmatprep.subr.bf16.mxu0 %v2494
    %3719 = vmatpush1.bf16.msra.mxu0 %v2493
    %3720 = vmatprep.subr.bf16.mxu0 %v2486
    %3721 = vmatpush1.bf16.msra.mxu0 %v2485
    %3722 = vmatprep.subr.bf16.mxu0 %v2478
    %3723 = vmatpush1.bf16.msra.mxu0 %v2477
    %3724 = vmatprep.subr.bf16.mxu0 %v2470
    %3725 = vmatpush1.bf16.msra.mxu0 %v2469
    %3726 = vmatprep.subr.bf16.mxu0 %v2462
    %3727 = vmatpush1.bf16.msra.mxu0 %v2461
    %3728 = vmatprep.subr.bf16.mxu0 %v2454
    %3729 = vmatpush1.bf16.msra.mxu0 %v2453
    %3730 = vmatprep.subr.bf16.mxu0 %v2574
    %3731 = vmatpush2.bf16.msra.mxu0 %v2573
    %3732 = vmatprep.subr.bf16.mxu0 %v2566
    %3733 = vmatpush2.bf16.msra.mxu0 %v2565
    %3734 = vmatprep.subr.bf16.mxu0 %v2558
    %3735 = vmatpush2.bf16.msra.mxu0 %v2557
    %3736 = vmatprep.subr.bf16.mxu0 %v2550
    %3737 = vmatpush2.bf16.msra.mxu0 %v2549
    %3738 = vmatprep.subr.bf16.mxu0 %v2542
    %3739 = vmatpush2.bf16.msra.mxu0 %v2541
    %3740 = vmatprep.subr.bf16.mxu0 %v2534
    %3741 = vmatpush2.bf16.msra.mxu0 %v2533
    %3742 = vmatprep.subr.bf16.mxu0 %v2526
    %3743 = vmatpush2.bf16.msra.mxu0 %v2525
    %3744 = vmatprep.subr.bf16.mxu0 %v2518
    %3745 = vmatpush2.bf16.msra.mxu0 %v2517
    %3746 = vmatprep.mubr.bf16.mxu0 %v226
    %3747 = vmatmul.mubr.bf16.gmra.mxu0 %v225
    %v3748 = vpop.f32.mrf.mxu0
    %v3749 = vadd.f32 %v3708, %v3748
    %v3750 = vpop.f32.mrf.mxu0
    %v3751 = vadd.f32 %v3710, %v3750
    %v3752 = vpop.f32.mrf.mxu0
    %v3753 = vpop.f32.mrf.mxu0
    %3754 = vdwg.mxu0
    %3755 = vmatprep.subr.bf16.mxu0 %v2638
    %3756 = vmatpush1.bf16.msra.mxu0 %v2637
    %3757 = vmatprep.subr.bf16.mxu0 %v2630
    %3758 = vmatpush1.bf16.msra.mxu0 %v2629
    %3759 = vmatprep.subr.bf16.mxu0 %v2622
    %3760 = vmatpush1.bf16.msra.mxu0 %v2621
    %3761 = vmatprep.subr.bf16.mxu0 %v2614
    %3762 = vmatpush1.bf16.msra.mxu0 %v2613
    %3763 = vmatprep.subr.bf16.mxu0 %v2606
    %3764 = vmatpush1.bf16.msra.mxu0 %v2605
    %3765 = vmatprep.subr.bf16.mxu0 %v2598
    %3766 = vmatpush1.bf16.msra.mxu0 %v2597
    %3767 = vmatprep.subr.bf16.mxu0 %v2590
    %3768 = vmatpush1.bf16.msra.mxu0 %v2589
    %3769 = vmatprep.subr.bf16.mxu0 %v2582
    %3770 = vmatpush1.bf16.msra.mxu0 %v2581
    %3771 = vmatprep.subr.bf16.mxu0 %v2702
    %3772 = vmatpush2.bf16.msra.mxu0 %v2701
    %3773 = vmatprep.subr.bf16.mxu0 %v2694
    %3774 = vmatpush2.bf16.msra.mxu0 %v2693
    %3775 = vmatprep.subr.bf16.mxu0 %v2686
    %3776 = vmatpush2.bf16.msra.mxu0 %v2685
    %3777 = vmatprep.subr.bf16.mxu0 %v2678
    %3778 = vmatpush2.bf16.msra.mxu0 %v2677
    %3779 = vmatprep.subr.bf16.mxu0 %v2670
    %3780 = vmatpush2.bf16.msra.mxu0 %v2669
    %3781 = vmatprep.subr.bf16.mxu0 %v2662
    %3782 = vmatpush2.bf16.msra.mxu0 %v2661
    %3783 = vmatprep.subr.bf16.mxu0 %v2654
    %3784 = vmatpush2.bf16.msra.mxu0 %v2653
    %3785 = vmatprep.subr.bf16.mxu0 %v2646
    %3786 = vmatpush2.bf16.msra.mxu0 %v2645
    %3787 = vmatprep.mubr.bf16.mxu0 %v228
    %3788 = vmatmul.mubr.bf16.gmra.mxu0 %v227
    %v3789 = vpop.f32.mrf.mxu0
    %v3790 = vadd.f32 %v3749, %v3789
    %v3791 = vpop.f32.mrf.mxu0
    %v3792 = vadd.f32 %v3751, %v3791
    %v3793 = vpop.f32.mrf.mxu0
    %v3794 = vpop.f32.mrf.mxu0
    %3795 = vdwg.mxu0
    %3796 = vmatprep.subr.bf16.mxu0 %v2766
    %3797 = vmatpush1.bf16.msra.mxu0 %v2765
    %3798 = vmatprep.subr.bf16.mxu0 %v2758
    %3799 = vmatpush1.bf16.msra.mxu0 %v2757
    %3800 = vmatprep.subr.bf16.mxu0 %v2750
    %3801 = vmatpush1.bf16.msra.mxu0 %v2749
    %3802 = vmatprep.subr.bf16.mxu0 %v2742
    %3803 = vmatpush1.bf16.msra.mxu0 %v2741
    %3804 = vmatprep.subr.bf16.mxu0 %v2734
    %3805 = vmatpush1.bf16.msra.mxu0 %v2733
    %3806 = vmatprep.subr.bf16.mxu0 %v2726
    %3807 = vmatpush1.bf16.msra.mxu0 %v2725
    %3808 = vmatprep.subr.bf16.mxu0 %v2718
    %3809 = vmatpush1.bf16.msra.mxu0 %v2717
    %3810 = vmatprep.subr.bf16.mxu0 %v2710
    %3811 = vmatpush1.bf16.msra.mxu0 %v2709
    %3812 = vmatprep.subr.bf16.mxu0 %v2830
    %3813 = vmatpush2.bf16.msra.mxu0 %v2829
    %3814 = vmatprep.subr.bf16.mxu0 %v2822
    %3815 = vmatpush2.bf16.msra.mxu0 %v2821
    %3816 = vmatprep.subr.bf16.mxu0 %v2814
    %3817 = vmatpush2.bf16.msra.mxu0 %v2813
    %3818 = vmatprep.subr.bf16.mxu0 %v2806
    %3819 = vmatpush2.bf16.msra.mxu0 %v2805
    %3820 = vmatprep.subr.bf16.mxu0 %v2798
    %3821 = vmatpush2.bf16.msra.mxu0 %v2797
    %3822 = vmatprep.subr.bf16.mxu0 %v2790
    %3823 = vmatpush2.bf16.msra.mxu0 %v2789
    %3824 = vmatprep.subr.bf16.mxu0 %v2782
    %3825 = vmatpush2.bf16.msra.mxu0 %v2781
    %3826 = vmatprep.subr.bf16.mxu0 %v2774
    %3827 = vmatpush2.bf16.msra.mxu0 %v2773
    %3828 = vmatprep.mubr.bf16.mxu0 %v230
    %3829 = vmatmul.mubr.bf16.gmra.mxu0 %v229
    %v3830 = vpop.f32.mrf.mxu0
    %v3831 = vadd.f32 %v3790, %v3830
    %v3832 = vpop.f32.mrf.mxu0
    %v3833 = vadd.f32 %v3792, %v3832
    %v3834 = vpop.f32.mrf.mxu0
    %v3835 = vpop.f32.mrf.mxu0
    %3836 = vdwg.mxu0
    %3837 = vmatprep.subr.bf16.mxu0 %v2384
    %3838 = vmatpush1.bf16.msra.mxu0 %v2383
    %3839 = vmatprep.subr.bf16.mxu0 %v2376
    %3840 = vmatpush1.bf16.msra.mxu0 %v2375
    %3841 = vmatprep.subr.bf16.mxu0 %v2368
    %3842 = vmatpush1.bf16.msra.mxu0 %v2367
    %3843 = vmatprep.subr.bf16.mxu0 %v2360
    %3844 = vmatpush1.bf16.msra.mxu0 %v2359
    %3845 = vmatprep.subr.bf16.mxu0 %v2352
    %3846 = vmatpush1.bf16.msra.mxu0 %v2351
    %3847 = vmatprep.subr.bf16.mxu0 %v2344
    %3848 = vmatpush1.bf16.msra.mxu0 %v2343
    %3849 = vmatprep.subr.bf16.mxu0 %v2336
    %3850 = vmatpush1.bf16.msra.mxu0 %v2335
    %3851 = vmatprep.subr.bf16.mxu0 %v2328
    %3852 = vmatpush1.bf16.msra.mxu0 %v2327
    %3853 = vmatprep.subr.bf16.mxu0 %v2448
    %3854 = vmatpush2.bf16.msra.mxu0 %v2447
    %3855 = vmatprep.subr.bf16.mxu0 %v2440
    %3856 = vmatpush2.bf16.msra.mxu0 %v2439
    %3857 = vmatprep.subr.bf16.mxu0 %v2432
    %3858 = vmatpush2.bf16.msra.mxu0 %v2431
    %3859 = vmatprep.subr.bf16.mxu0 %v2424
    %3860 = vmatpush2.bf16.msra.mxu0 %v2423
    %3861 = vmatprep.subr.bf16.mxu0 %v2416
    %3862 = vmatpush2.bf16.msra.mxu0 %v2415
    %3863 = vmatprep.subr.bf16.mxu0 %v2408
    %3864 = vmatpush2.bf16.msra.mxu0 %v2407
    %3865 = vmatprep.subr.bf16.mxu0 %v2400
    %3866 = vmatpush2.bf16.msra.mxu0 %v2399
    %3867 = vmatprep.subr.bf16.mxu0 %v2392
    %3868 = vmatpush2.bf16.msra.mxu0 %v2391
    %3869 = vmatprep.mubr.bf16.mxu0 %v224
    %3870 = vmatmul.mubr.bf16.gmra.mxu0 %v223
    %v3871 = vpop.f32.mrf.mxu0
    %v3872 = vadd.f32 %v772, %v3871
    %v3873 = vpop.f32.mrf.mxu0
    %v3874 = vadd.f32 %v776, %v3873
    %v3875 = vpop.f32.mrf.mxu0
    %v3876 = vpop.f32.mrf.mxu0
    %3877 = vdwg.mxu0
    %3878 = vmatprep.subr.bf16.mxu0 %v2512
    %3879 = vmatpush1.bf16.msra.mxu0 %v2511
    %3880 = vmatprep.subr.bf16.mxu0 %v2504
    %3881 = vmatpush1.bf16.msra.mxu0 %v2503
    %3882 = vmatprep.subr.bf16.mxu0 %v2496
    %3883 = vmatpush1.bf16.msra.mxu0 %v2495
    %3884 = vmatprep.subr.bf16.mxu0 %v2488
    %3885 = vmatpush1.bf16.msra.mxu0 %v2487
    %3886 = vmatprep.subr.bf16.mxu0 %v2480
    %3887 = vmatpush1.bf16.msra.mxu0 %v2479
    %3888 = vmatprep.subr.bf16.mxu0 %v2472
    %3889 = vmatpush1.bf16.msra.mxu0 %v2471
    %3890 = vmatprep.subr.bf16.mxu0 %v2464
    %3891 = vmatpush1.bf16.msra.mxu0 %v2463
    %3892 = vmatprep.subr.bf16.mxu0 %v2456
    %3893 = vmatpush1.bf16.msra.mxu0 %v2455
    %3894 = vmatprep.subr.bf16.mxu0 %v2576
    %3895 = vmatpush2.bf16.msra.mxu0 %v2575
    %3896 = vmatprep.subr.bf16.mxu0 %v2568
    %3897 = vmatpush2.bf16.msra.mxu0 %v2567
    %3898 = vmatprep.subr.bf16.mxu0 %v2560
    %3899 = vmatpush2.bf16.msra.mxu0 %v2559
    %3900 = vmatprep.subr.bf16.mxu0 %v2552
    %3901 = vmatpush2.bf16.msra.mxu0 %v2551
    %3902 = vmatprep.subr.bf16.mxu0 %v2544
    %3903 = vmatpush2.bf16.msra.mxu0 %v2543
    %3904 = vmatprep.subr.bf16.mxu0 %v2536
    %3905 = vmatpush2.bf16.msra.mxu0 %v2535
    %3906 = vmatprep.subr.bf16.mxu0 %v2528
    %3907 = vmatpush2.bf16.msra.mxu0 %v2527
    %3908 = vmatprep.subr.bf16.mxu0 %v2520
    %3909 = vmatpush2.bf16.msra.mxu0 %v2519
    %3910 = vmatprep.mubr.bf16.mxu0 %v226
    %3911 = vmatmul.mubr.bf16.gmra.mxu0 %v225
    %v3912 = vpop.f32.mrf.mxu0
    %v3913 = vadd.f32 %v3872, %v3912
    %v3914 = vpop.f32.mrf.mxu0
    %v3915 = vadd.f32 %v3874, %v3914
    %v3916 = vpop.f32.mrf.mxu0
    %v3917 = vpop.f32.mrf.mxu0
    %3918 = vdwg.mxu0
    %3919 = vmatprep.subr.bf16.mxu0 %v2640
    %3920 = vmatpush1.bf16.msra.mxu0 %v2639
    %3921 = vmatprep.subr.bf16.mxu0 %v2632
    %3922 = vmatpush1.bf16.msra.mxu0 %v2631
    %3923 = vmatprep.subr.bf16.mxu0 %v2624
    %3924 = vmatpush1.bf16.msra.mxu0 %v2623
    %3925 = vmatprep.subr.bf16.mxu0 %v2616
    %3926 = vmatpush1.bf16.msra.mxu0 %v2615
    %3927 = vmatprep.subr.bf16.mxu0 %v2608
    %3928 = vmatpush1.bf16.msra.mxu0 %v2607
    %3929 = vmatprep.subr.bf16.mxu0 %v2600
    %3930 = vmatpush1.bf16.msra.mxu0 %v2599
    %3931 = vmatprep.subr.bf16.mxu0 %v2592
    %3932 = vmatpush1.bf16.msra.mxu0 %v2591
    %3933 = vmatprep.subr.bf16.mxu0 %v2584
    %3934 = vmatpush1.bf16.msra.mxu0 %v2583
    %3935 = vmatprep.subr.bf16.mxu0 %v2704
    %3936 = vmatpush2.bf16.msra.mxu0 %v2703
    %3937 = vmatprep.subr.bf16.mxu0 %v2696
    %3938 = vmatpush2.bf16.msra.mxu0 %v2695
    %3939 = vmatprep.subr.bf16.mxu0 %v2688
    %3940 = vmatpush2.bf16.msra.mxu0 %v2687
    %3941 = vmatprep.subr.bf16.mxu0 %v2680
    %3942 = vmatpush2.bf16.msra.mxu0 %v2679
    %3943 = vmatprep.subr.bf16.mxu0 %v2672
    %3944 = vmatpush2.bf16.msra.mxu0 %v2671
    %3945 = vmatprep.subr.bf16.mxu0 %v2664
    %3946 = vmatpush2.bf16.msra.mxu0 %v2663
    %3947 = vmatprep.subr.bf16.mxu0 %v2656
    %3948 = vmatpush2.bf16.msra.mxu0 %v2655
    %3949 = vmatprep.subr.bf16.mxu0 %v2648
    %3950 = vmatpush2.bf16.msra.mxu0 %v2647
    %3951 = vmatprep.mubr.bf16.mxu0 %v228
    %3952 = vmatmul.mubr.bf16.gmra.mxu0 %v227
    %v3953 = vpop.f32.mrf.mxu0
    %v3954 = vadd.f32 %v3913, %v3953
    %v3955 = vpop.f32.mrf.mxu0
    %v3956 = vadd.f32 %v3915, %v3955
    %v3957 = vpop.f32.mrf.mxu0
    %v3958 = vpop.f32.mrf.mxu0
    %3959 = vdwg.mxu0
    %3960 = vmatprep.subr.bf16.mxu0 %v2768
    %3961 = vmatpush1.bf16.msra.mxu0 %v2767
    %3962 = vmatprep.subr.bf16.mxu0 %v2760
    %3963 = vmatpush1.bf16.msra.mxu0 %v2759
    %3964 = vmatprep.subr.bf16.mxu0 %v2752
    %3965 = vmatpush1.bf16.msra.mxu0 %v2751
    %3966 = vmatprep.subr.bf16.mxu0 %v2744
    %3967 = vmatpush1.bf16.msra.mxu0 %v2743
    %3968 = vmatprep.subr.bf16.mxu0 %v2736
    %3969 = vmatpush1.bf16.msra.mxu0 %v2735
    %3970 = vmatprep.subr.bf16.mxu0 %v2728
    %3971 = vmatpush1.bf16.msra.mxu0 %v2727
    %3972 = vmatprep.subr.bf16.mxu0 %v2720
    %3973 = vmatpush1.bf16.msra.mxu0 %v2719
    %3974 = vmatprep.subr.bf16.mxu0 %v2712
    %3975 = vmatpush1.bf16.msra.mxu0 %v2711
    %3976 = vmatprep.subr.bf16.mxu0 %v2832
    %3977 = vmatpush2.bf16.msra.mxu0 %v2831
    %3978 = vmatprep.subr.bf16.mxu0 %v2824
    %3979 = vmatpush2.bf16.msra.mxu0 %v2823
    %3980 = vmatprep.subr.bf16.mxu0 %v2816
    %3981 = vmatpush2.bf16.msra.mxu0 %v2815
    %3982 = vmatprep.subr.bf16.mxu0 %v2808
    %3983 = vmatpush2.bf16.msra.mxu0 %v2807
    %3984 = vmatprep.subr.bf16.mxu0 %v2800
    %3985 = vmatpush2.bf16.msra.mxu0 %v2799
    %3986 = vmatprep.subr.bf16.mxu0 %v2792
    %3987 = vmatpush2.bf16.msra.mxu0 %v2791
    %3988 = vmatprep.subr.bf16.mxu0 %v2784
    %3989 = vmatpush2.bf16.msra.mxu0 %v2783
    %3990 = vmatprep.subr.bf16.mxu0 %v2776
    %3991 = vmatpush2.bf16.msra.mxu0 %v2775
    %3992 = vmatprep.mubr.bf16.mxu0 %v230
    %3993 = vmatmul.mubr.bf16.gmra.mxu0 %v229
    %v3994 = vpop.f32.mrf.mxu0
    %v3995 = vadd.f32 %v3954, %v3994
    %v3996 = vpop.f32.mrf.mxu0
    %v3997 = vadd.f32 %v3956, %v3996
    %v3998 = vpop.f32.mrf.mxu0
    %v3999 = vpop.f32.mrf.mxu0
    %4000 = vdwg.mxu0
    %v4001 = vmax.f32 %v3503, 0.0
    %v4002 = vmax.f32 %v3505, 0.0
    %v4003 = vmax.f32 %v3667, 0.0
    %v4004 = vmax.f32 %v3669, 0.0
    %v4005 = vmax.f32 %v3831, 0.0
    %v4006 = vmax.f32 %v3833, 0.0
    %v4007 = vmax.f32 %v3995, 0.0
    %v4008 = vmax.f32 %v3997, 0.0
    %v4009 = vpack.c.bf16 %v4001, %v4001
    %v4010 = vpack.c.bf16 %v4002, %v4002
    %v4011 = vpack.c.bf16 %v4003, %v4003
    %v4012 = vpack.c.bf16 %v4004, %v4004
    %v4013 = vpack.c.bf16 %v4005, %v4005
    %v4014 = vpack.c.bf16 %v4006, %v4006
    %v4015 = vpack.c.bf16 %v4007, %v4007
    %v4016 = vpack.c.bf16 %v4008, %v4008
    %v4017 = vld [vmem:[#allocation8] sm:$0xff]
    %v4018 = vld [vmem:[#allocation8 + $0x8] sm:$0xff]
    %v4019 = vld [vmem:[#allocation8 + $0x10] sm:$0xff]
    %v4020 = vld [vmem:[#allocation8 + $0x18] sm:$0xff]
    %v4021 = vld [vmem:[#allocation8 + $0x20] sm:$0xff]
    %v4022 = vld [vmem:[#allocation8 + $0x28] sm:$0xff]
    %v4023 = vld [vmem:[#allocation8 + $0x30] sm:$0xff]
    %v4024 = vld [vmem:[#allocation8 + $0x38] sm:$0xff]
    %v4025 = vld [vmem:[#allocation8 + $0x40] sm:$0xff]
    %v4026 = vld [vmem:[#allocation8 + $0x48] sm:$0xff]
    %v4027 = vld [vmem:[#allocation8 + $0x50] sm:$0xff]
    %v4028 = vld [vmem:[#allocation8 + $0x58] sm:$0xff]
    %v4029 = vld [vmem:[#allocation8 + $0x60] sm:$0xff]
    %v4030 = vld [vmem:[#allocation8 + $0x68] sm:$0xff]
    %v4031 = vld [vmem:[#allocation8 + $0x70] sm:$0xff]
    %v4032 = vld [vmem:[#allocation8 + $0x78] sm:$0xff]
    %v4033 = vld [vmem:[#allocation8 + $0x80] sm:$0xff]
    %v4034 = vld [vmem:[#allocation8 + $0x88] sm:$0xff]
    %v4035 = vld [vmem:[#allocation8 + $0x90] sm:$0xff]
    %v4036 = vld [vmem:[#allocation8 + $0x98] sm:$0xff]
    %v4037 = vld [vmem:[#allocation8 + $0xa0] sm:$0xff]
    %v4038 = vld [vmem:[#allocation8 + $0xa8] sm:$0xff]
    %v4039 = vld [vmem:[#allocation8 + $0xb0] sm:$0xff]
    %v4040 = vld [vmem:[#allocation8 + $0xb8] sm:$0xff]
    %v4041 = vld [vmem:[#allocation8 + $0xc0] sm:$0xff]
    %v4042 = vld [vmem:[#allocation8 + $0xc8] sm:$0xff]
    %v4043 = vld [vmem:[#allocation8 + $0xd0] sm:$0xff]
    %v4044 = vld [vmem:[#allocation8 + $0xd8] sm:$0xff]
    %v4045 = vld [vmem:[#allocation8 + $0xe0] sm:$0xff]
    %v4046 = vld [vmem:[#allocation8 + $0xe8] sm:$0xff]
    %v4047 = vld [vmem:[#allocation8 + $0xf0] sm:$0xff]
    %v4048 = vld [vmem:[#allocation8 + $0xf8] sm:$0xff]
    %v4049 = vld [vmem:[#allocation8 + $0x100] sm:$0xff]
    %v4050 = vld [vmem:[#allocation8 + $0x108] sm:$0xff]
    %v4051 = vld [vmem:[#allocation8 + $0x110] sm:$0xff]
    %v4052 = vld [vmem:[#allocation8 + $0x118] sm:$0xff]
    %v4053 = vld [vmem:[#allocation8 + $0x120] sm:$0xff]
    %v4054 = vld [vmem:[#allocation8 + $0x128] sm:$0xff]
    %v4055 = vld [vmem:[#allocation8 + $0x130] sm:$0xff]
    %v4056 = vld [vmem:[#allocation8 + $0x138] sm:$0xff]
    %v4057 = vld [vmem:[#allocation8 + $0x140] sm:$0xff]
    %v4058 = vld [vmem:[#allocation8 + $0x148] sm:$0xff]
    %v4059 = vld [vmem:[#allocation8 + $0x150] sm:$0xff]
    %v4060 = vld [vmem:[#allocation8 + $0x158] sm:$0xff]
    %v4061 = vld [vmem:[#allocation8 + $0x160] sm:$0xff]
    %v4062 = vld [vmem:[#allocation8 + $0x168] sm:$0xff]
    %v4063 = vld [vmem:[#allocation8 + $0x170] sm:$0xff]
    %v4064 = vld [vmem:[#allocation8 + $0x178] sm:$0xff]
    %v4065 = vld [vmem:[#allocation8 + $0x180] sm:$0xff]
    %v4066 = vld [vmem:[#allocation8 + $0x188] sm:$0xff]
    %v4067 = vld [vmem:[#allocation8 + $0x190] sm:$0xff]
    %v4068 = vld [vmem:[#allocation8 + $0x198] sm:$0xff]
    %v4069 = vld [vmem:[#allocation8 + $0x1a0] sm:$0xff]
    %v4070 = vld [vmem:[#allocation8 + $0x1a8] sm:$0xff]
    %v4071 = vld [vmem:[#allocation8 + $0x1b0] sm:$0xff]
    %v4072 = vld [vmem:[#allocation8 + $0x1b8] sm:$0xff]
    %v4073 = vld [vmem:[#allocation8 + $0x1c0] sm:$0xff]
    %v4074 = vld [vmem:[#allocation8 + $0x1c8] sm:$0xff]
    %v4075 = vld [vmem:[#allocation8 + $0x1d0] sm:$0xff]
    %v4076 = vld [vmem:[#allocation8 + $0x1d8] sm:$0xff]
    %v4077 = vld [vmem:[#allocation8 + $0x1e0] sm:$0xff]
    %v4078 = vld [vmem:[#allocation8 + $0x1e8] sm:$0xff]
    %v4079 = vld [vmem:[#allocation8 + $0x1f0] sm:$0xff]
    %v4080 = vld [vmem:[#allocation8 + $0x1f8] sm:$0xff]
    %v4081 = vld [vmem:[#allocation8 + $0x200] sm:$0xff]
    %v4082 = vld [vmem:[#allocation8 + $0x208] sm:$0xff]
    %v4083 = vld [vmem:[#allocation8 + $0x210] sm:$0xff]
    %v4084 = vld [vmem:[#allocation8 + $0x218] sm:$0xff]
    %v4085 = vld [vmem:[#allocation8 + $0x220] sm:$0xff]
    %v4086 = vld [vmem:[#allocation8 + $0x228] sm:$0xff]
    %v4087 = vld [vmem:[#allocation8 + $0x230] sm:$0xff]
    %v4088 = vld [vmem:[#allocation8 + $0x238] sm:$0xff]
    %v4089 = vld [vmem:[#allocation8 + $0x240] sm:$0xff]
    %v4090 = vld [vmem:[#allocation8 + $0x248] sm:$0xff]
    %v4091 = vld [vmem:[#allocation8 + $0x250] sm:$0xff]
    %v4092 = vld [vmem:[#allocation8 + $0x258] sm:$0xff]
    %v4093 = vld [vmem:[#allocation8 + $0x260] sm:$0xff]
    %v4094 = vld [vmem:[#allocation8 + $0x268] sm:$0xff]
    %v4095 = vld [vmem:[#allocation8 + $0x270] sm:$0xff]
    %v4096 = vld [vmem:[#allocation8 + $0x278] sm:$0xff]
    %v4097 = vld [vmem:[#allocation8 + $0x280] sm:$0xff]
    %v4098 = vld [vmem:[#allocation8 + $0x288] sm:$0xff]
    %v4099 = vld [vmem:[#allocation8 + $0x290] sm:$0xff]
    %v4100 = vld [vmem:[#allocation8 + $0x298] sm:$0xff]
    %v4101 = vld [vmem:[#allocation8 + $0x2a0] sm:$0xff]
    %v4102 = vld [vmem:[#allocation8 + $0x2a8] sm:$0xff]
    %v4103 = vld [vmem:[#allocation8 + $0x2b0] sm:$0xff]
    %v4104 = vld [vmem:[#allocation8 + $0x2b8] sm:$0xff]
    %v4105 = vld [vmem:[#allocation8 + $0x2c0] sm:$0xff]
    %v4106 = vld [vmem:[#allocation8 + $0x2c8] sm:$0xff]
    %v4107 = vld [vmem:[#allocation8 + $0x2d0] sm:$0xff]
    %v4108 = vld [vmem:[#allocation8 + $0x2d8] sm:$0xff]
    %v4109 = vld [vmem:[#allocation8 + $0x2e0] sm:$0xff]
    %v4110 = vld [vmem:[#allocation8 + $0x2e8] sm:$0xff]
    %v4111 = vld [vmem:[#allocation8 + $0x2f0] sm:$0xff]
    %v4112 = vld [vmem:[#allocation8 + $0x2f8] sm:$0xff]
    %v4113 = vld [vmem:[#allocation8 + $0x300] sm:$0xff]
    %v4114 = vld [vmem:[#allocation8 + $0x308] sm:$0xff]
    %v4115 = vld [vmem:[#allocation8 + $0x310] sm:$0xff]
    %v4116 = vld [vmem:[#allocation8 + $0x318] sm:$0xff]
    %v4117 = vld [vmem:[#allocation8 + $0x320] sm:$0xff]
    %v4118 = vld [vmem:[#allocation8 + $0x328] sm:$0xff]
    %v4119 = vld [vmem:[#allocation8 + $0x330] sm:$0xff]
    %v4120 = vld [vmem:[#allocation8 + $0x338] sm:$0xff]
    %v4121 = vld [vmem:[#allocation8 + $0x340] sm:$0xff]
    %v4122 = vld [vmem:[#allocation8 + $0x348] sm:$0xff]
    %v4123 = vld [vmem:[#allocation8 + $0x350] sm:$0xff]
    %v4124 = vld [vmem:[#allocation8 + $0x358] sm:$0xff]
    %v4125 = vld [vmem:[#allocation8 + $0x360] sm:$0xff]
    %v4126 = vld [vmem:[#allocation8 + $0x368] sm:$0xff]
    %v4127 = vld [vmem:[#allocation8 + $0x370] sm:$0xff]
    %v4128 = vld [vmem:[#allocation8 + $0x378] sm:$0xff]
    %v4129 = vld [vmem:[#allocation8 + $0x380] sm:$0xff]
    %v4130 = vld [vmem:[#allocation8 + $0x388] sm:$0xff]
    %v4131 = vld [vmem:[#allocation8 + $0x390] sm:$0xff]
    %v4132 = vld [vmem:[#allocation8 + $0x398] sm:$0xff]
    %v4133 = vld [vmem:[#allocation8 + $0x3a0] sm:$0xff]
    %v4134 = vld [vmem:[#allocation8 + $0x3a8] sm:$0xff]
    %v4135 = vld [vmem:[#allocation8 + $0x3b0] sm:$0xff]
    %v4136 = vld [vmem:[#allocation8 + $0x3b8] sm:$0xff]
    %v4137 = vld [vmem:[#allocation8 + $0x3c0] sm:$0xff]
    %v4138 = vld [vmem:[#allocation8 + $0x3c8] sm:$0xff]
    %v4139 = vld [vmem:[#allocation8 + $0x3d0] sm:$0xff]
    %v4140 = vld [vmem:[#allocation8 + $0x3d8] sm:$0xff]
    %v4141 = vld [vmem:[#allocation8 + $0x3e0] sm:$0xff]
    %v4142 = vld [vmem:[#allocation8 + $0x3e8] sm:$0xff]
    %v4143 = vld [vmem:[#allocation8 + $0x3f0] sm:$0xff]
    %v4144 = vld [vmem:[#allocation8 + $0x3f8] sm:$0xff]
    %v4145 = vld [vmem:[#allocation8 + $0x400] sm:$0xff]
    %v4146 = vld [vmem:[#allocation8 + $0x408] sm:$0xff]
    %v4147 = vld [vmem:[#allocation8 + $0x410] sm:$0xff]
    %v4148 = vld [vmem:[#allocation8 + $0x418] sm:$0xff]
    %v4149 = vld [vmem:[#allocation8 + $0x420] sm:$0xff]
    %v4150 = vld [vmem:[#allocation8 + $0x428] sm:$0xff]
    %v4151 = vld [vmem:[#allocation8 + $0x430] sm:$0xff]
    %v4152 = vld [vmem:[#allocation8 + $0x438] sm:$0xff]
    %v4153 = vld [vmem:[#allocation8 + $0x440] sm:$0xff]
    %v4154 = vld [vmem:[#allocation8 + $0x448] sm:$0xff]
    %v4155 = vld [vmem:[#allocation8 + $0x450] sm:$0xff]
    %v4156 = vld [vmem:[#allocation8 + $0x458] sm:$0xff]
    %v4157 = vld [vmem:[#allocation8 + $0x460] sm:$0xff]
    %v4158 = vld [vmem:[#allocation8 + $0x468] sm:$0xff]
    %v4159 = vld [vmem:[#allocation8 + $0x470] sm:$0xff]
    %v4160 = vld [vmem:[#allocation8 + $0x478] sm:$0xff]
    %v4161 = vld [vmem:[#allocation8 + $0x480] sm:$0xff]
    %v4162 = vld [vmem:[#allocation8 + $0x488] sm:$0xff]
    %v4163 = vld [vmem:[#allocation8 + $0x490] sm:$0xff]
    %v4164 = vld [vmem:[#allocation8 + $0x498] sm:$0xff]
    %v4165 = vld [vmem:[#allocation8 + $0x4a0] sm:$0xff]
    %v4166 = vld [vmem:[#allocation8 + $0x4a8] sm:$0xff]
    %v4167 = vld [vmem:[#allocation8 + $0x4b0] sm:$0xff]
    %v4168 = vld [vmem:[#allocation8 + $0x4b8] sm:$0xff]
    %v4169 = vld [vmem:[#allocation8 + $0x4c0] sm:$0xff]
    %v4170 = vld [vmem:[#allocation8 + $0x4c8] sm:$0xff]
    %v4171 = vld [vmem:[#allocation8 + $0x4d0] sm:$0xff]
    %v4172 = vld [vmem:[#allocation8 + $0x4d8] sm:$0xff]
    %v4173 = vld [vmem:[#allocation8 + $0x4e0] sm:$0xff]
    %v4174 = vld [vmem:[#allocation8 + $0x4e8] sm:$0xff]
    %v4175 = vld [vmem:[#allocation8 + $0x4f0] sm:$0xff]
    %v4176 = vld [vmem:[#allocation8 + $0x4f8] sm:$0xff]
    %v4177 = vld [vmem:[#allocation8 + $0x500] sm:$0xff]
    %v4178 = vld [vmem:[#allocation8 + $0x508] sm:$0xff]
    %v4179 = vld [vmem:[#allocation8 + $0x510] sm:$0xff]
    %v4180 = vld [vmem:[#allocation8 + $0x518] sm:$0xff]
    %v4181 = vld [vmem:[#allocation8 + $0x520] sm:$0xff]
    %v4182 = vld [vmem:[#allocation8 + $0x528] sm:$0xff]
    %v4183 = vld [vmem:[#allocation8 + $0x530] sm:$0xff]
    %v4184 = vld [vmem:[#allocation8 + $0x538] sm:$0xff]
    %v4185 = vld [vmem:[#allocation8 + $0x540] sm:$0xff]
    %v4186 = vld [vmem:[#allocation8 + $0x548] sm:$0xff]
    %v4187 = vld [vmem:[#allocation8 + $0x550] sm:$0xff]
    %v4188 = vld [vmem:[#allocation8 + $0x558] sm:$0xff]
    %v4189 = vld [vmem:[#allocation8 + $0x560] sm:$0xff]
    %v4190 = vld [vmem:[#allocation8 + $0x568] sm:$0xff]
    %v4191 = vld [vmem:[#allocation8 + $0x570] sm:$0xff]
    %v4192 = vld [vmem:[#allocation8 + $0x578] sm:$0xff]
    %v4193 = vld [vmem:[#allocation8 + $0x580] sm:$0xff]
    %v4194 = vld [vmem:[#allocation8 + $0x588] sm:$0xff]
    %v4195 = vld [vmem:[#allocation8 + $0x590] sm:$0xff]
    %v4196 = vld [vmem:[#allocation8 + $0x598] sm:$0xff]
    %v4197 = vld [vmem:[#allocation8 + $0x5a0] sm:$0xff]
    %v4198 = vld [vmem:[#allocation8 + $0x5a8] sm:$0xff]
    %v4199 = vld [vmem:[#allocation8 + $0x5b0] sm:$0xff]
    %v4200 = vld [vmem:[#allocation8 + $0x5b8] sm:$0xff]
    %v4201 = vld [vmem:[#allocation8 + $0x5c0] sm:$0xff]
    %v4202 = vld [vmem:[#allocation8 + $0x5c8] sm:$0xff]
    %v4203 = vld [vmem:[#allocation8 + $0x5d0] sm:$0xff]
    %v4204 = vld [vmem:[#allocation8 + $0x5d8] sm:$0xff]
    %v4205 = vld [vmem:[#allocation8 + $0x5e0] sm:$0xff]
    %v4206 = vld [vmem:[#allocation8 + $0x5e8] sm:$0xff]
    %v4207 = vld [vmem:[#allocation8 + $0x5f0] sm:$0xff]
    %v4208 = vld [vmem:[#allocation8 + $0x5f8] sm:$0xff]
    %v4209 = vld [vmem:[#allocation8 + $0x600] sm:$0xff]
    %v4210 = vld [vmem:[#allocation8 + $0x608] sm:$0xff]
    %v4211 = vld [vmem:[#allocation8 + $0x610] sm:$0xff]
    %v4212 = vld [vmem:[#allocation8 + $0x618] sm:$0xff]
    %v4213 = vld [vmem:[#allocation8 + $0x620] sm:$0xff]
    %v4214 = vld [vmem:[#allocation8 + $0x628] sm:$0xff]
    %v4215 = vld [vmem:[#allocation8 + $0x630] sm:$0xff]
    %v4216 = vld [vmem:[#allocation8 + $0x638] sm:$0xff]
    %v4217 = vld [vmem:[#allocation8 + $0x640] sm:$0xff]
    %v4218 = vld [vmem:[#allocation8 + $0x648] sm:$0xff]
    %v4219 = vld [vmem:[#allocation8 + $0x650] sm:$0xff]
    %v4220 = vld [vmem:[#allocation8 + $0x658] sm:$0xff]
    %v4221 = vld [vmem:[#allocation8 + $0x660] sm:$0xff]
    %v4222 = vld [vmem:[#allocation8 + $0x668] sm:$0xff]
    %v4223 = vld [vmem:[#allocation8 + $0x670] sm:$0xff]
    %v4224 = vld [vmem:[#allocation8 + $0x678] sm:$0xff]
    %v4225 = vld [vmem:[#allocation8 + $0x680] sm:$0xff]
    %v4226 = vld [vmem:[#allocation8 + $0x688] sm:$0xff]
    %v4227 = vld [vmem:[#allocation8 + $0x690] sm:$0xff]
    %v4228 = vld [vmem:[#allocation8 + $0x698] sm:$0xff]
    %v4229 = vld [vmem:[#allocation8 + $0x6a0] sm:$0xff]
    %v4230 = vld [vmem:[#allocation8 + $0x6a8] sm:$0xff]
    %v4231 = vld [vmem:[#allocation8 + $0x6b0] sm:$0xff]
    %v4232 = vld [vmem:[#allocation8 + $0x6b8] sm:$0xff]
    %v4233 = vld [vmem:[#allocation8 + $0x6c0] sm:$0xff]
    %v4234 = vld [vmem:[#allocation8 + $0x6c8] sm:$0xff]
    %v4235 = vld [vmem:[#allocation8 + $0x6d0] sm:$0xff]
    %v4236 = vld [vmem:[#allocation8 + $0x6d8] sm:$0xff]
    %v4237 = vld [vmem:[#allocation8 + $0x6e0] sm:$0xff]
    %v4238 = vld [vmem:[#allocation8 + $0x6e8] sm:$0xff]
    %v4239 = vld [vmem:[#allocation8 + $0x6f0] sm:$0xff]
    %v4240 = vld [vmem:[#allocation8 + $0x6f8] sm:$0xff]
    %v4241 = vld [vmem:[#allocation8 + $0x700] sm:$0xff]
    %v4242 = vld [vmem:[#allocation8 + $0x708] sm:$0xff]
    %v4243 = vld [vmem:[#allocation8 + $0x710] sm:$0xff]
    %v4244 = vld [vmem:[#allocation8 + $0x718] sm:$0xff]
    %v4245 = vld [vmem:[#allocation8 + $0x720] sm:$0xff]
    %v4246 = vld [vmem:[#allocation8 + $0x728] sm:$0xff]
    %v4247 = vld [vmem:[#allocation8 + $0x730] sm:$0xff]
    %v4248 = vld [vmem:[#allocation8 + $0x738] sm:$0xff]
    %v4249 = vld [vmem:[#allocation8 + $0x740] sm:$0xff]
    %v4250 = vld [vmem:[#allocation8 + $0x748] sm:$0xff]
    %v4251 = vld [vmem:[#allocation8 + $0x750] sm:$0xff]
    %v4252 = vld [vmem:[#allocation8 + $0x758] sm:$0xff]
    %v4253 = vld [vmem:[#allocation8 + $0x760] sm:$0xff]
    %v4254 = vld [vmem:[#allocation8 + $0x768] sm:$0xff]
    %v4255 = vld [vmem:[#allocation8 + $0x770] sm:$0xff]
    %v4256 = vld [vmem:[#allocation8 + $0x778] sm:$0xff]
    %v4257 = vld [vmem:[#allocation8 + $0x780] sm:$0xff]
    %v4258 = vld [vmem:[#allocation8 + $0x788] sm:$0xff]
    %v4259 = vld [vmem:[#allocation8 + $0x790] sm:$0xff]
    %v4260 = vld [vmem:[#allocation8 + $0x798] sm:$0xff]
    %v4261 = vld [vmem:[#allocation8 + $0x7a0] sm:$0xff]
    %v4262 = vld [vmem:[#allocation8 + $0x7a8] sm:$0xff]
    %v4263 = vld [vmem:[#allocation8 + $0x7b0] sm:$0xff]
    %v4264 = vld [vmem:[#allocation8 + $0x7b8] sm:$0xff]
    %v4265 = vld [vmem:[#allocation8 + $0x7c0] sm:$0xff]
    %v4266 = vld [vmem:[#allocation8 + $0x7c8] sm:$0xff]
    %v4267 = vld [vmem:[#allocation8 + $0x7d0] sm:$0xff]
    %v4268 = vld [vmem:[#allocation8 + $0x7d8] sm:$0xff]
    %v4269 = vld [vmem:[#allocation8 + $0x7e0] sm:$0xff]
    %v4270 = vld [vmem:[#allocation8 + $0x7e8] sm:$0xff]
    %v4271 = vld [vmem:[#allocation8 + $0x7f0] sm:$0xff]
    %v4272 = vld [vmem:[#allocation8 + $0x7f8] sm:$0xff]
    %v4273 = vld [vmem:[#allocation8 + $0x800] sm:$0xff]
    %v4274 = vld [vmem:[#allocation8 + $0x808] sm:$0xff]
    %v4275 = vld [vmem:[#allocation8 + $0x810] sm:$0xff]
    %v4276 = vld [vmem:[#allocation8 + $0x818] sm:$0xff]
    %v4277 = vld [vmem:[#allocation8 + $0x820] sm:$0xff]
    %v4278 = vld [vmem:[#allocation8 + $0x828] sm:$0xff]
    %v4279 = vld [vmem:[#allocation8 + $0x830] sm:$0xff]
    %v4280 = vld [vmem:[#allocation8 + $0x838] sm:$0xff]
    %v4281 = vld [vmem:[#allocation8 + $0x840] sm:$0xff]
    %v4282 = vld [vmem:[#allocation8 + $0x848] sm:$0xff]
    %v4283 = vld [vmem:[#allocation8 + $0x850] sm:$0xff]
    %v4284 = vld [vmem:[#allocation8 + $0x858] sm:$0xff]
    %v4285 = vld [vmem:[#allocation8 + $0x860] sm:$0xff]
    %v4286 = vld [vmem:[#allocation8 + $0x868] sm:$0xff]
    %v4287 = vld [vmem:[#allocation8 + $0x870] sm:$0xff]
    %v4288 = vld [vmem:[#allocation8 + $0x878] sm:$0xff]
    %v4289 = vld [vmem:[#allocation8 + $0x880] sm:$0xff]
    %v4290 = vld [vmem:[#allocation8 + $0x888] sm:$0xff]
    %v4291 = vld [vmem:[#allocation8 + $0x890] sm:$0xff]
    %v4292 = vld [vmem:[#allocation8 + $0x898] sm:$0xff]
    %v4293 = vld [vmem:[#allocation8 + $0x8a0] sm:$0xff]
    %v4294 = vld [vmem:[#allocation8 + $0x8a8] sm:$0xff]
    %v4295 = vld [vmem:[#allocation8 + $0x8b0] sm:$0xff]
    %v4296 = vld [vmem:[#allocation8 + $0x8b8] sm:$0xff]
    %v4297 = vld [vmem:[#allocation8 + $0x8c0] sm:$0xff]
    %v4298 = vld [vmem:[#allocation8 + $0x8c8] sm:$0xff]
    %v4299 = vld [vmem:[#allocation8 + $0x8d0] sm:$0xff]
    %v4300 = vld [vmem:[#allocation8 + $0x8d8] sm:$0xff]
    %v4301 = vld [vmem:[#allocation8 + $0x8e0] sm:$0xff]
    %v4302 = vld [vmem:[#allocation8 + $0x8e8] sm:$0xff]
    %v4303 = vld [vmem:[#allocation8 + $0x8f0] sm:$0xff]
    %v4304 = vld [vmem:[#allocation8 + $0x8f8] sm:$0xff]
    %v4305 = vld [vmem:[#allocation8 + $0x900] sm:$0xff]
    %v4306 = vld [vmem:[#allocation8 + $0x908] sm:$0xff]
    %v4307 = vld [vmem:[#allocation8 + $0x910] sm:$0xff]
    %v4308 = vld [vmem:[#allocation8 + $0x918] sm:$0xff]
    %v4309 = vld [vmem:[#allocation8 + $0x920] sm:$0xff]
    %v4310 = vld [vmem:[#allocation8 + $0x928] sm:$0xff]
    %v4311 = vld [vmem:[#allocation8 + $0x930] sm:$0xff]
    %v4312 = vld [vmem:[#allocation8 + $0x938] sm:$0xff]
    %v4313 = vld [vmem:[#allocation8 + $0x940] sm:$0xff]
    %v4314 = vld [vmem:[#allocation8 + $0x948] sm:$0xff]
    %v4315 = vld [vmem:[#allocation8 + $0x950] sm:$0xff]
    %v4316 = vld [vmem:[#allocation8 + $0x958] sm:$0xff]
    %v4317 = vld [vmem:[#allocation8 + $0x960] sm:$0xff]
    %v4318 = vld [vmem:[#allocation8 + $0x968] sm:$0xff]
    %v4319 = vld [vmem:[#allocation8 + $0x970] sm:$0xff]
    %v4320 = vld [vmem:[#allocation8 + $0x978] sm:$0xff]
    %v4321 = vld [vmem:[#allocation8 + $0x980] sm:$0xff]
    %v4322 = vld [vmem:[#allocation8 + $0x988] sm:$0xff]
    %v4323 = vld [vmem:[#allocation8 + $0x990] sm:$0xff]
    %v4324 = vld [vmem:[#allocation8 + $0x998] sm:$0xff]
    %v4325 = vld [vmem:[#allocation8 + $0x9a0] sm:$0xff]
    %v4326 = vld [vmem:[#allocation8 + $0x9a8] sm:$0xff]
    %v4327 = vld [vmem:[#allocation8 + $0x9b0] sm:$0xff]
    %v4328 = vld [vmem:[#allocation8 + $0x9b8] sm:$0xff]
    %v4329 = vld [vmem:[#allocation8 + $0x9c0] sm:$0xff]
    %v4330 = vld [vmem:[#allocation8 + $0x9c8] sm:$0xff]
    %v4331 = vld [vmem:[#allocation8 + $0x9d0] sm:$0xff]
    %v4332 = vld [vmem:[#allocation8 + $0x9d8] sm:$0xff]
    %v4333 = vld [vmem:[#allocation8 + $0x9e0] sm:$0xff]
    %v4334 = vld [vmem:[#allocation8 + $0x9e8] sm:$0xff]
    %v4335 = vld [vmem:[#allocation8 + $0x9f0] sm:$0xff]
    %v4336 = vld [vmem:[#allocation8 + $0x9f8] sm:$0xff]
    %v4337 = vld [vmem:[#allocation8 + $0xa00] sm:$0xff]
    %v4338 = vld [vmem:[#allocation8 + $0xa08] sm:$0xff]
    %v4339 = vld [vmem:[#allocation8 + $0xa10] sm:$0xff]
    %v4340 = vld [vmem:[#allocation8 + $0xa18] sm:$0xff]
    %v4341 = vld [vmem:[#allocation8 + $0xa20] sm:$0xff]
    %v4342 = vld [vmem:[#allocation8 + $0xa28] sm:$0xff]
    %v4343 = vld [vmem:[#allocation8 + $0xa30] sm:$0xff]
    %v4344 = vld [vmem:[#allocation8 + $0xa38] sm:$0xff]
    %v4345 = vld [vmem:[#allocation8 + $0xa40] sm:$0xff]
    %v4346 = vld [vmem:[#allocation8 + $0xa48] sm:$0xff]
    %v4347 = vld [vmem:[#allocation8 + $0xa50] sm:$0xff]
    %v4348 = vld [vmem:[#allocation8 + $0xa58] sm:$0xff]
    %v4349 = vld [vmem:[#allocation8 + $0xa60] sm:$0xff]
    %v4350 = vld [vmem:[#allocation8 + $0xa68] sm:$0xff]
    %v4351 = vld [vmem:[#allocation8 + $0xa70] sm:$0xff]
    %v4352 = vld [vmem:[#allocation8 + $0xa78] sm:$0xff]
    %v4353 = vld [vmem:[#allocation8 + $0xa80] sm:$0xff]
    %v4354 = vld [vmem:[#allocation8 + $0xa88] sm:$0xff]
    %v4355 = vld [vmem:[#allocation8 + $0xa90] sm:$0xff]
    %v4356 = vld [vmem:[#allocation8 + $0xa98] sm:$0xff]
    %v4357 = vld [vmem:[#allocation8 + $0xaa0] sm:$0xff]
    %v4358 = vld [vmem:[#allocation8 + $0xaa8] sm:$0xff]
    %v4359 = vld [vmem:[#allocation8 + $0xab0] sm:$0xff]
    %v4360 = vld [vmem:[#allocation8 + $0xab8] sm:$0xff]
    %v4361 = vld [vmem:[#allocation8 + $0xac0] sm:$0xff]
    %v4362 = vld [vmem:[#allocation8 + $0xac8] sm:$0xff]
    %v4363 = vld [vmem:[#allocation8 + $0xad0] sm:$0xff]
    %v4364 = vld [vmem:[#allocation8 + $0xad8] sm:$0xff]
    %v4365 = vld [vmem:[#allocation8 + $0xae0] sm:$0xff]
    %v4366 = vld [vmem:[#allocation8 + $0xae8] sm:$0xff]
    %v4367 = vld [vmem:[#allocation8 + $0xaf0] sm:$0xff]
    %v4368 = vld [vmem:[#allocation8 + $0xaf8] sm:$0xff]
    %v4369 = vld [vmem:[#allocation8 + $0xb00] sm:$0xff]
    %v4370 = vld [vmem:[#allocation8 + $0xb08] sm:$0xff]
    %v4371 = vld [vmem:[#allocation8 + $0xb10] sm:$0xff]
    %v4372 = vld [vmem:[#allocation8 + $0xb18] sm:$0xff]
    %v4373 = vld [vmem:[#allocation8 + $0xb20] sm:$0xff]
    %v4374 = vld [vmem:[#allocation8 + $0xb28] sm:$0xff]
    %v4375 = vld [vmem:[#allocation8 + $0xb30] sm:$0xff]
    %v4376 = vld [vmem:[#allocation8 + $0xb38] sm:$0xff]
    %v4377 = vld [vmem:[#allocation8 + $0xb40] sm:$0xff]
    %v4378 = vld [vmem:[#allocation8 + $0xb48] sm:$0xff]
    %v4379 = vld [vmem:[#allocation8 + $0xb50] sm:$0xff]
    %v4380 = vld [vmem:[#allocation8 + $0xb58] sm:$0xff]
    %v4381 = vld [vmem:[#allocation8 + $0xb60] sm:$0xff]
    %v4382 = vld [vmem:[#allocation8 + $0xb68] sm:$0xff]
    %v4383 = vld [vmem:[#allocation8 + $0xb70] sm:$0xff]
    %v4384 = vld [vmem:[#allocation8 + $0xb78] sm:$0xff]
    %v4385 = vld [vmem:[#allocation8 + $0xb80] sm:$0xff]
    %v4386 = vld [vmem:[#allocation8 + $0xb88] sm:$0xff]
    %v4387 = vld [vmem:[#allocation8 + $0xb90] sm:$0xff]
    %v4388 = vld [vmem:[#allocation8 + $0xb98] sm:$0xff]
    %v4389 = vld [vmem:[#allocation8 + $0xba0] sm:$0xff]
    %v4390 = vld [vmem:[#allocation8 + $0xba8] sm:$0xff]
    %v4391 = vld [vmem:[#allocation8 + $0xbb0] sm:$0xff]
    %v4392 = vld [vmem:[#allocation8 + $0xbb8] sm:$0xff]
    %v4393 = vld [vmem:[#allocation8 + $0xbc0] sm:$0xff]
    %v4394 = vld [vmem:[#allocation8 + $0xbc8] sm:$0xff]
    %v4395 = vld [vmem:[#allocation8 + $0xbd0] sm:$0xff]
    %v4396 = vld [vmem:[#allocation8 + $0xbd8] sm:$0xff]
    %v4397 = vld [vmem:[#allocation8 + $0xbe0] sm:$0xff]
    %v4398 = vld [vmem:[#allocation8 + $0xbe8] sm:$0xff]
    %v4399 = vld [vmem:[#allocation8 + $0xbf0] sm:$0xff]
    %v4400 = vld [vmem:[#allocation8 + $0xbf8] sm:$0xff]
    %v4401 = vld [vmem:[#allocation8 + $0xc00] sm:$0xff]
    %v4402 = vld [vmem:[#allocation8 + $0xc08] sm:$0xff]
    %v4403 = vld [vmem:[#allocation8 + $0xc10] sm:$0xff]
    %v4404 = vld [vmem:[#allocation8 + $0xc18] sm:$0xff]
    %v4405 = vld [vmem:[#allocation8 + $0xc20] sm:$0xff]
    %v4406 = vld [vmem:[#allocation8 + $0xc28] sm:$0xff]
    %v4407 = vld [vmem:[#allocation8 + $0xc30] sm:$0xff]
    %v4408 = vld [vmem:[#allocation8 + $0xc38] sm:$0xff]
    %v4409 = vld [vmem:[#allocation8 + $0xc40] sm:$0xff]
    %v4410 = vld [vmem:[#allocation8 + $0xc48] sm:$0xff]
    %v4411 = vld [vmem:[#allocation8 + $0xc50] sm:$0xff]
    %v4412 = vld [vmem:[#allocation8 + $0xc58] sm:$0xff]
    %v4413 = vld [vmem:[#allocation8 + $0xc60] sm:$0xff]
    %v4414 = vld [vmem:[#allocation8 + $0xc68] sm:$0xff]
    %v4415 = vld [vmem:[#allocation8 + $0xc70] sm:$0xff]
    %v4416 = vld [vmem:[#allocation8 + $0xc78] sm:$0xff]
    %v4417 = vld [vmem:[#allocation8 + $0xc80] sm:$0xff]
    %v4418 = vld [vmem:[#allocation8 + $0xc88] sm:$0xff]
    %v4419 = vld [vmem:[#allocation8 + $0xc90] sm:$0xff]
    %v4420 = vld [vmem:[#allocation8 + $0xc98] sm:$0xff]
    %v4421 = vld [vmem:[#allocation8 + $0xca0] sm:$0xff]
    %v4422 = vld [vmem:[#allocation8 + $0xca8] sm:$0xff]
    %v4423 = vld [vmem:[#allocation8 + $0xcb0] sm:$0xff]
    %v4424 = vld [vmem:[#allocation8 + $0xcb8] sm:$0xff]
    %v4425 = vld [vmem:[#allocation8 + $0xcc0] sm:$0xff]
    %v4426 = vld [vmem:[#allocation8 + $0xcc8] sm:$0xff]
    %v4427 = vld [vmem:[#allocation8 + $0xcd0] sm:$0xff]
    %v4428 = vld [vmem:[#allocation8 + $0xcd8] sm:$0xff]
    %v4429 = vld [vmem:[#allocation8 + $0xce0] sm:$0xff]
    %v4430 = vld [vmem:[#allocation8 + $0xce8] sm:$0xff]
    %v4431 = vld [vmem:[#allocation8 + $0xcf0] sm:$0xff]
    %v4432 = vld [vmem:[#allocation8 + $0xcf8] sm:$0xff]
    %v4433 = vld [vmem:[#allocation8 + $0xd00] sm:$0xff]
    %v4434 = vld [vmem:[#allocation8 + $0xd08] sm:$0xff]
    %v4435 = vld [vmem:[#allocation8 + $0xd10] sm:$0xff]
    %v4436 = vld [vmem:[#allocation8 + $0xd18] sm:$0xff]
    %v4437 = vld [vmem:[#allocation8 + $0xd20] sm:$0xff]
    %v4438 = vld [vmem:[#allocation8 + $0xd28] sm:$0xff]
    %v4439 = vld [vmem:[#allocation8 + $0xd30] sm:$0xff]
    %v4440 = vld [vmem:[#allocation8 + $0xd38] sm:$0xff]
    %v4441 = vld [vmem:[#allocation8 + $0xd40] sm:$0xff]
    %v4442 = vld [vmem:[#allocation8 + $0xd48] sm:$0xff]
    %v4443 = vld [vmem:[#allocation8 + $0xd50] sm:$0xff]
    %v4444 = vld [vmem:[#allocation8 + $0xd58] sm:$0xff]
    %v4445 = vld [vmem:[#allocation8 + $0xd60] sm:$0xff]
    %v4446 = vld [vmem:[#allocation8 + $0xd68] sm:$0xff]
    %v4447 = vld [vmem:[#allocation8 + $0xd70] sm:$0xff]
    %v4448 = vld [vmem:[#allocation8 + $0xd78] sm:$0xff]
    %v4449 = vld [vmem:[#allocation8 + $0xd80] sm:$0xff]
    %v4450 = vld [vmem:[#allocation8 + $0xd88] sm:$0xff]
    %v4451 = vld [vmem:[#allocation8 + $0xd90] sm:$0xff]
    %v4452 = vld [vmem:[#allocation8 + $0xd98] sm:$0xff]
    %v4453 = vld [vmem:[#allocation8 + $0xda0] sm:$0xff]
    %v4454 = vld [vmem:[#allocation8 + $0xda8] sm:$0xff]
    %v4455 = vld [vmem:[#allocation8 + $0xdb0] sm:$0xff]
    %v4456 = vld [vmem:[#allocation8 + $0xdb8] sm:$0xff]
    %v4457 = vld [vmem:[#allocation8 + $0xdc0] sm:$0xff]
    %v4458 = vld [vmem:[#allocation8 + $0xdc8] sm:$0xff]
    %v4459 = vld [vmem:[#allocation8 + $0xdd0] sm:$0xff]
    %v4460 = vld [vmem:[#allocation8 + $0xdd8] sm:$0xff]
    %v4461 = vld [vmem:[#allocation8 + $0xde0] sm:$0xff]
    %v4462 = vld [vmem:[#allocation8 + $0xde8] sm:$0xff]
    %v4463 = vld [vmem:[#allocation8 + $0xdf0] sm:$0xff]
    %v4464 = vld [vmem:[#allocation8 + $0xdf8] sm:$0xff]
    %v4465 = vld [vmem:[#allocation8 + $0xe00] sm:$0xff]
    %v4466 = vld [vmem:[#allocation8 + $0xe08] sm:$0xff]
    %v4467 = vld [vmem:[#allocation8 + $0xe10] sm:$0xff]
    %v4468 = vld [vmem:[#allocation8 + $0xe18] sm:$0xff]
    %v4469 = vld [vmem:[#allocation8 + $0xe20] sm:$0xff]
    %v4470 = vld [vmem:[#allocation8 + $0xe28] sm:$0xff]
    %v4471 = vld [vmem:[#allocation8 + $0xe30] sm:$0xff]
    %v4472 = vld [vmem:[#allocation8 + $0xe38] sm:$0xff]
    %v4473 = vld [vmem:[#allocation8 + $0xe40] sm:$0xff]
    %v4474 = vld [vmem:[#allocation8 + $0xe48] sm:$0xff]
    %v4475 = vld [vmem:[#allocation8 + $0xe50] sm:$0xff]
    %v4476 = vld [vmem:[#allocation8 + $0xe58] sm:$0xff]
    %v4477 = vld [vmem:[#allocation8 + $0xe60] sm:$0xff]
    %v4478 = vld [vmem:[#allocation8 + $0xe68] sm:$0xff]
    %v4479 = vld [vmem:[#allocation8 + $0xe70] sm:$0xff]
    %v4480 = vld [vmem:[#allocation8 + $0xe78] sm:$0xff]
    %v4481 = vld [vmem:[#allocation8 + $0xe80] sm:$0xff]
    %v4482 = vld [vmem:[#allocation8 + $0xe88] sm:$0xff]
    %v4483 = vld [vmem:[#allocation8 + $0xe90] sm:$0xff]
    %v4484 = vld [vmem:[#allocation8 + $0xe98] sm:$0xff]
    %v4485 = vld [vmem:[#allocation8 + $0xea0] sm:$0xff]
    %v4486 = vld [vmem:[#allocation8 + $0xea8] sm:$0xff]
    %v4487 = vld [vmem:[#allocation8 + $0xeb0] sm:$0xff]
    %v4488 = vld [vmem:[#allocation8 + $0xeb8] sm:$0xff]
    %v4489 = vld [vmem:[#allocation8 + $0xec0] sm:$0xff]
    %v4490 = vld [vmem:[#allocation8 + $0xec8] sm:$0xff]
    %v4491 = vld [vmem:[#allocation8 + $0xed0] sm:$0xff]
    %v4492 = vld [vmem:[#allocation8 + $0xed8] sm:$0xff]
    %v4493 = vld [vmem:[#allocation8 + $0xee0] sm:$0xff]
    %v4494 = vld [vmem:[#allocation8 + $0xee8] sm:$0xff]
    %v4495 = vld [vmem:[#allocation8 + $0xef0] sm:$0xff]
    %v4496 = vld [vmem:[#allocation8 + $0xef8] sm:$0xff]
    %v4497 = vld [vmem:[#allocation8 + $0xf00] sm:$0xff]
    %v4498 = vld [vmem:[#allocation8 + $0xf08] sm:$0xff]
    %v4499 = vld [vmem:[#allocation8 + $0xf10] sm:$0xff]
    %v4500 = vld [vmem:[#allocation8 + $0xf18] sm:$0xff]
    %v4501 = vld [vmem:[#allocation8 + $0xf20] sm:$0xff]
    %v4502 = vld [vmem:[#allocation8 + $0xf28] sm:$0xff]
    %v4503 = vld [vmem:[#allocation8 + $0xf30] sm:$0xff]
    %v4504 = vld [vmem:[#allocation8 + $0xf38] sm:$0xff]
    %v4505 = vld [vmem:[#allocation8 + $0xf40] sm:$0xff]
    %v4506 = vld [vmem:[#allocation8 + $0xf48] sm:$0xff]
    %v4507 = vld [vmem:[#allocation8 + $0xf50] sm:$0xff]
    %v4508 = vld [vmem:[#allocation8 + $0xf58] sm:$0xff]
    %v4509 = vld [vmem:[#allocation8 + $0xf60] sm:$0xff]
    %v4510 = vld [vmem:[#allocation8 + $0xf68] sm:$0xff]
    %v4511 = vld [vmem:[#allocation8 + $0xf70] sm:$0xff]
    %v4512 = vld [vmem:[#allocation8 + $0xf78] sm:$0xff]
    %v4513 = vld [vmem:[#allocation8 + $0xf80] sm:$0xff]
    %v4514 = vld [vmem:[#allocation8 + $0xf88] sm:$0xff]
    %v4515 = vld [vmem:[#allocation8 + $0xf90] sm:$0xff]
    %v4516 = vld [vmem:[#allocation8 + $0xf98] sm:$0xff]
    %v4517 = vld [vmem:[#allocation8 + $0xfa0] sm:$0xff]
    %v4518 = vld [vmem:[#allocation8 + $0xfa8] sm:$0xff]
    %v4519 = vld [vmem:[#allocation8 + $0xfb0] sm:$0xff]
    %v4520 = vld [vmem:[#allocation8 + $0xfb8] sm:$0xff]
    %v4521 = vld [vmem:[#allocation8 + $0xfc0] sm:$0xff]
    %v4522 = vld [vmem:[#allocation8 + $0xfc8] sm:$0xff]
    %v4523 = vld [vmem:[#allocation8 + $0xfd0] sm:$0xff]
    %v4524 = vld [vmem:[#allocation8 + $0xfd8] sm:$0xff]
    %v4525 = vld [vmem:[#allocation8 + $0xfe0] sm:$0xff]
    %v4526 = vld [vmem:[#allocation8 + $0xfe8] sm:$0xff]
    %v4527 = vld [vmem:[#allocation8 + $0xff0] sm:$0xff]
    %v4528 = vld [vmem:[#allocation8 + $0xff8] sm:$0xff]
    %v4529 = vld [vmem:[#allocation10] sm:$0xff]
    %v4531 = vlaneseq
    %v4532 = vshrl.u32 %v4531, 7
    %v4533 = vsub.s32 0, %v4532
    %v4534 = vrot.slane %v4529, %v4533
    %v4535 = vlaneseq
    %v4536 = vshrl.u32 %v4535, 7
    %v4537 = vsub.s32 1, %v4536
    %v4538 = vrot.slane %v4529, %v4537
    %v4539 = vlaneseq
    %v4540 = vshrl.u32 %v4539, 7
    %v4541 = vsub.s32 2, %v4540
    %v4542 = vrot.slane %v4529, %v4541
    %v4543 = vlaneseq
    %v4544 = vshrl.u32 %v4543, 7
    %v4545 = vsub.s32 3, %v4544
    %v4546 = vrot.slane %v4529, %v4545
    %v4547 = vlaneseq
    %v4548 = vshrl.u32 %v4547, 7
    %v4549 = vsub.s32 4, %v4548
    %v4550 = vrot.slane %v4529, %v4549
    %v4551 = vlaneseq
    %v4552 = vshrl.u32 %v4551, 7
    %v4553 = vsub.s32 5, %v4552
    %v4554 = vrot.slane %v4529, %v4553
    %v4555 = vlaneseq
    %v4556 = vshrl.u32 %v4555, 7
    %v4557 = vsub.s32 6, %v4556
    %v4558 = vrot.slane %v4529, %v4557
    %v4559 = vlaneseq
    %v4560 = vshrl.u32 %v4559, 7
    %v4561 = vsub.s32 7, %v4560
    %v4562 = vrot.slane %v4529, %v4561
    %v5083 = vunpack.c.l.b16 %v4017
    %v5084 = vunpack.c.h.b16 %v4017
    %v5085 = vunpack.c.l.b16 %v4018
    %v5086 = vunpack.c.h.b16 %v4018
    %v5087 = vunpack.c.l.b16 %v4019
    %v5088 = vunpack.c.h.b16 %v4019
    %v5089 = vunpack.c.l.b16 %v4020
    %v5090 = vunpack.c.h.b16 %v4020
    %v5091 = vunpack.c.l.b16 %v4021
    %v5092 = vunpack.c.h.b16 %v4021
    %v5093 = vunpack.c.l.b16 %v4022
    %v5094 = vunpack.c.h.b16 %v4022
    %v5095 = vunpack.c.l.b16 %v4023
    %v5096 = vunpack.c.h.b16 %v4023
    %v5097 = vunpack.c.l.b16 %v4024
    %v5098 = vunpack.c.h.b16 %v4024
    %v5099 = vunpack.c.l.b16 %v4025
    %v5100 = vunpack.c.h.b16 %v4025
    %v5101 = vunpack.c.l.b16 %v4026
    %v5102 = vunpack.c.h.b16 %v4026
    %v5103 = vunpack.c.l.b16 %v4027
    %v5104 = vunpack.c.h.b16 %v4027
    %v5105 = vunpack.c.l.b16 %v4028
    %v5106 = vunpack.c.h.b16 %v4028
    %v5107 = vunpack.c.l.b16 %v4029
    %v5108 = vunpack.c.h.b16 %v4029
    %v5109 = vunpack.c.l.b16 %v4030
    %v5110 = vunpack.c.h.b16 %v4030
    %v5111 = vunpack.c.l.b16 %v4031
    %v5112 = vunpack.c.h.b16 %v4031
    %v5113 = vunpack.c.l.b16 %v4032
    %v5114 = vunpack.c.h.b16 %v4032
    %v5115 = vunpack.c.l.b16 %v4033
    %v5116 = vunpack.c.h.b16 %v4033
    %v5117 = vunpack.c.l.b16 %v4034
    %v5118 = vunpack.c.h.b16 %v4034
    %v5119 = vunpack.c.l.b16 %v4035
    %v5120 = vunpack.c.h.b16 %v4035
    %v5121 = vunpack.c.l.b16 %v4036
    %v5122 = vunpack.c.h.b16 %v4036
    %v5123 = vunpack.c.l.b16 %v4037
    %v5124 = vunpack.c.h.b16 %v4037
    %v5125 = vunpack.c.l.b16 %v4038
    %v5126 = vunpack.c.h.b16 %v4038
    %v5127 = vunpack.c.l.b16 %v4039
    %v5128 = vunpack.c.h.b16 %v4039
    %v5129 = vunpack.c.l.b16 %v4040
    %v5130 = vunpack.c.h.b16 %v4040
    %v5131 = vunpack.c.l.b16 %v4041
    %v5132 = vunpack.c.h.b16 %v4041
    %v5133 = vunpack.c.l.b16 %v4042
    %v5134 = vunpack.c.h.b16 %v4042
    %v5135 = vunpack.c.l.b16 %v4043
    %v5136 = vunpack.c.h.b16 %v4043
    %v5137 = vunpack.c.l.b16 %v4044
    %v5138 = vunpack.c.h.b16 %v4044
    %v5139 = vunpack.c.l.b16 %v4045
    %v5140 = vunpack.c.h.b16 %v4045
    %v5141 = vunpack.c.l.b16 %v4046
    %v5142 = vunpack.c.h.b16 %v4046
    %v5143 = vunpack.c.l.b16 %v4047
    %v5144 = vunpack.c.h.b16 %v4047
    %v5145 = vunpack.c.l.b16 %v4048
    %v5146 = vunpack.c.h.b16 %v4048
    %v5147 = vunpack.c.l.b16 %v4049
    %v5148 = vunpack.c.h.b16 %v4049
    %v5149 = vunpack.c.l.b16 %v4050
    %v5150 = vunpack.c.h.b16 %v4050
    %v5151 = vunpack.c.l.b16 %v4051
    %v5152 = vunpack.c.h.b16 %v4051
    %v5153 = vunpack.c.l.b16 %v4052
    %v5154 = vunpack.c.h.b16 %v4052
    %v5155 = vunpack.c.l.b16 %v4053
    %v5156 = vunpack.c.h.b16 %v4053
    %v5157 = vunpack.c.l.b16 %v4054
    %v5158 = vunpack.c.h.b16 %v4054
    %v5159 = vunpack.c.l.b16 %v4055
    %v5160 = vunpack.c.h.b16 %v4055
    %v5161 = vunpack.c.l.b16 %v4056
    %v5162 = vunpack.c.h.b16 %v4056
    %v5163 = vunpack.c.l.b16 %v4057
    %v5164 = vunpack.c.h.b16 %v4057
    %v5165 = vunpack.c.l.b16 %v4058
    %v5166 = vunpack.c.h.b16 %v4058
    %v5167 = vunpack.c.l.b16 %v4059
    %v5168 = vunpack.c.h.b16 %v4059
    %v5169 = vunpack.c.l.b16 %v4060
    %v5170 = vunpack.c.h.b16 %v4060
    %v5171 = vunpack.c.l.b16 %v4061
    %v5172 = vunpack.c.h.b16 %v4061
    %v5173 = vunpack.c.l.b16 %v4062
    %v5174 = vunpack.c.h.b16 %v4062
    %v5175 = vunpack.c.l.b16 %v4063
    %v5176 = vunpack.c.h.b16 %v4063
    %v5177 = vunpack.c.l.b16 %v4064
    %v5178 = vunpack.c.h.b16 %v4064
    %v5179 = vunpack.c.l.b16 %v4065
    %v5180 = vunpack.c.h.b16 %v4065
    %v5181 = vunpack.c.l.b16 %v4066
    %v5182 = vunpack.c.h.b16 %v4066
    %v5183 = vunpack.c.l.b16 %v4067
    %v5184 = vunpack.c.h.b16 %v4067
    %v5185 = vunpack.c.l.b16 %v4068
    %v5186 = vunpack.c.h.b16 %v4068
    %v5187 = vunpack.c.l.b16 %v4069
    %v5188 = vunpack.c.h.b16 %v4069
    %v5189 = vunpack.c.l.b16 %v4070
    %v5190 = vunpack.c.h.b16 %v4070
    %v5191 = vunpack.c.l.b16 %v4071
    %v5192 = vunpack.c.h.b16 %v4071
    %v5193 = vunpack.c.l.b16 %v4072
    %v5194 = vunpack.c.h.b16 %v4072
    %v5195 = vunpack.c.l.b16 %v4073
    %v5196 = vunpack.c.h.b16 %v4073
    %v5197 = vunpack.c.l.b16 %v4074
    %v5198 = vunpack.c.h.b16 %v4074
    %v5199 = vunpack.c.l.b16 %v4075
    %v5200 = vunpack.c.h.b16 %v4075
    %v5201 = vunpack.c.l.b16 %v4076
    %v5202 = vunpack.c.h.b16 %v4076
    %v5203 = vunpack.c.l.b16 %v4077
    %v5204 = vunpack.c.h.b16 %v4077
    %v5205 = vunpack.c.l.b16 %v4078
    %v5206 = vunpack.c.h.b16 %v4078
    %v5207 = vunpack.c.l.b16 %v4079
    %v5208 = vunpack.c.h.b16 %v4079
    %v5209 = vunpack.c.l.b16 %v4080
    %v5210 = vunpack.c.h.b16 %v4080
    %v5211 = vunpack.c.l.b16 %v4081
    %v5212 = vunpack.c.h.b16 %v4081
    %v5213 = vunpack.c.l.b16 %v4082
    %v5214 = vunpack.c.h.b16 %v4082
    %v5215 = vunpack.c.l.b16 %v4083
    %v5216 = vunpack.c.h.b16 %v4083
    %v5217 = vunpack.c.l.b16 %v4084
    %v5218 = vunpack.c.h.b16 %v4084
    %v5219 = vunpack.c.l.b16 %v4085
    %v5220 = vunpack.c.h.b16 %v4085
    %v5221 = vunpack.c.l.b16 %v4086
    %v5222 = vunpack.c.h.b16 %v4086
    %v5223 = vunpack.c.l.b16 %v4087
    %v5224 = vunpack.c.h.b16 %v4087
    %v5225 = vunpack.c.l.b16 %v4088
    %v5226 = vunpack.c.h.b16 %v4088
    %v5227 = vunpack.c.l.b16 %v4089
    %v5228 = vunpack.c.h.b16 %v4089
    %v5229 = vunpack.c.l.b16 %v4090
    %v5230 = vunpack.c.h.b16 %v4090
    %v5231 = vunpack.c.l.b16 %v4091
    %v5232 = vunpack.c.h.b16 %v4091
    %v5233 = vunpack.c.l.b16 %v4092
    %v5234 = vunpack.c.h.b16 %v4092
    %v5235 = vunpack.c.l.b16 %v4093
    %v5236 = vunpack.c.h.b16 %v4093
    %v5237 = vunpack.c.l.b16 %v4094
    %v5238 = vunpack.c.h.b16 %v4094
    %v5239 = vunpack.c.l.b16 %v4095
    %v5240 = vunpack.c.h.b16 %v4095
    %v5241 = vunpack.c.l.b16 %v4096
    %v5242 = vunpack.c.h.b16 %v4096
    %v5243 = vunpack.c.l.b16 %v4097
    %v5244 = vunpack.c.h.b16 %v4097
    %v5245 = vunpack.c.l.b16 %v4098
    %v5246 = vunpack.c.h.b16 %v4098
    %v5247 = vunpack.c.l.b16 %v4099
    %v5248 = vunpack.c.h.b16 %v4099
    %v5249 = vunpack.c.l.b16 %v4100
    %v5250 = vunpack.c.h.b16 %v4100
    %v5251 = vunpack.c.l.b16 %v4101
    %v5252 = vunpack.c.h.b16 %v4101
    %v5253 = vunpack.c.l.b16 %v4102
    %v5254 = vunpack.c.h.b16 %v4102
    %v5255 = vunpack.c.l.b16 %v4103
    %v5256 = vunpack.c.h.b16 %v4103
    %v5257 = vunpack.c.l.b16 %v4104
    %v5258 = vunpack.c.h.b16 %v4104
    %v5259 = vunpack.c.l.b16 %v4105
    %v5260 = vunpack.c.h.b16 %v4105
    %v5261 = vunpack.c.l.b16 %v4106
    %v5262 = vunpack.c.h.b16 %v4106
    %v5263 = vunpack.c.l.b16 %v4107
    %v5264 = vunpack.c.h.b16 %v4107
    %v5265 = vunpack.c.l.b16 %v4108
    %v5266 = vunpack.c.h.b16 %v4108
    %v5267 = vunpack.c.l.b16 %v4109
    %v5268 = vunpack.c.h.b16 %v4109
    %v5269 = vunpack.c.l.b16 %v4110
    %v5270 = vunpack.c.h.b16 %v4110
    %v5271 = vunpack.c.l.b16 %v4111
    %v5272 = vunpack.c.h.b16 %v4111
    %v5273 = vunpack.c.l.b16 %v4112
    %v5274 = vunpack.c.h.b16 %v4112
    %v5275 = vunpack.c.l.b16 %v4113
    %v5276 = vunpack.c.h.b16 %v4113
    %v5277 = vunpack.c.l.b16 %v4114
    %v5278 = vunpack.c.h.b16 %v4114
    %v5279 = vunpack.c.l.b16 %v4115
    %v5280 = vunpack.c.h.b16 %v4115
    %v5281 = vunpack.c.l.b16 %v4116
    %v5282 = vunpack.c.h.b16 %v4116
    %v5283 = vunpack.c.l.b16 %v4117
    %v5284 = vunpack.c.h.b16 %v4117
    %v5285 = vunpack.c.l.b16 %v4118
    %v5286 = vunpack.c.h.b16 %v4118
    %v5287 = vunpack.c.l.b16 %v4119
    %v5288 = vunpack.c.h.b16 %v4119
    %v5289 = vunpack.c.l.b16 %v4120
    %v5290 = vunpack.c.h.b16 %v4120
    %v5291 = vunpack.c.l.b16 %v4121
    %v5292 = vunpack.c.h.b16 %v4121
    %v5293 = vunpack.c.l.b16 %v4122
    %v5294 = vunpack.c.h.b16 %v4122
    %v5295 = vunpack.c.l.b16 %v4123
    %v5296 = vunpack.c.h.b16 %v4123
    %v5297 = vunpack.c.l.b16 %v4124
    %v5298 = vunpack.c.h.b16 %v4124
    %v5299 = vunpack.c.l.b16 %v4125
    %v5300 = vunpack.c.h.b16 %v4125
    %v5301 = vunpack.c.l.b16 %v4126
    %v5302 = vunpack.c.h.b16 %v4126
    %v5303 = vunpack.c.l.b16 %v4127
    %v5304 = vunpack.c.h.b16 %v4127
    %v5305 = vunpack.c.l.b16 %v4128
    %v5306 = vunpack.c.h.b16 %v4128
    %v5307 = vunpack.c.l.b16 %v4129
    %v5308 = vunpack.c.h.b16 %v4129
    %v5309 = vunpack.c.l.b16 %v4130
    %v5310 = vunpack.c.h.b16 %v4130
    %v5311 = vunpack.c.l.b16 %v4131
    %v5312 = vunpack.c.h.b16 %v4131
    %v5313 = vunpack.c.l.b16 %v4132
    %v5314 = vunpack.c.h.b16 %v4132
    %v5315 = vunpack.c.l.b16 %v4133
    %v5316 = vunpack.c.h.b16 %v4133
    %v5317 = vunpack.c.l.b16 %v4134
    %v5318 = vunpack.c.h.b16 %v4134
    %v5319 = vunpack.c.l.b16 %v4135
    %v5320 = vunpack.c.h.b16 %v4135
    %v5321 = vunpack.c.l.b16 %v4136
    %v5322 = vunpack.c.h.b16 %v4136
    %v5323 = vunpack.c.l.b16 %v4137
    %v5324 = vunpack.c.h.b16 %v4137
    %v5325 = vunpack.c.l.b16 %v4138
    %v5326 = vunpack.c.h.b16 %v4138
    %v5327 = vunpack.c.l.b16 %v4139
    %v5328 = vunpack.c.h.b16 %v4139
    %v5329 = vunpack.c.l.b16 %v4140
    %v5330 = vunpack.c.h.b16 %v4140
    %v5331 = vunpack.c.l.b16 %v4141
    %v5332 = vunpack.c.h.b16 %v4141
    %v5333 = vunpack.c.l.b16 %v4142
    %v5334 = vunpack.c.h.b16 %v4142
    %v5335 = vunpack.c.l.b16 %v4143
    %v5336 = vunpack.c.h.b16 %v4143
    %v5337 = vunpack.c.l.b16 %v4144
    %v5338 = vunpack.c.h.b16 %v4144
    %v5339 = vunpack.c.l.b16 %v4145
    %v5340 = vunpack.c.h.b16 %v4145
    %v5341 = vunpack.c.l.b16 %v4146
    %v5342 = vunpack.c.h.b16 %v4146
    %v5343 = vunpack.c.l.b16 %v4147
    %v5344 = vunpack.c.h.b16 %v4147
    %v5345 = vunpack.c.l.b16 %v4148
    %v5346 = vunpack.c.h.b16 %v4148
    %v5347 = vunpack.c.l.b16 %v4149
    %v5348 = vunpack.c.h.b16 %v4149
    %v5349 = vunpack.c.l.b16 %v4150
    %v5350 = vunpack.c.h.b16 %v4150
    %v5351 = vunpack.c.l.b16 %v4151
    %v5352 = vunpack.c.h.b16 %v4151
    %v5353 = vunpack.c.l.b16 %v4152
    %v5354 = vunpack.c.h.b16 %v4152
    %v5355 = vunpack.c.l.b16 %v4153
    %v5356 = vunpack.c.h.b16 %v4153
    %v5357 = vunpack.c.l.b16 %v4154
    %v5358 = vunpack.c.h.b16 %v4154
    %v5359 = vunpack.c.l.b16 %v4155
    %v5360 = vunpack.c.h.b16 %v4155
    %v5361 = vunpack.c.l.b16 %v4156
    %v5362 = vunpack.c.h.b16 %v4156
    %v5363 = vunpack.c.l.b16 %v4157
    %v5364 = vunpack.c.h.b16 %v4157
    %v5365 = vunpack.c.l.b16 %v4158
    %v5366 = vunpack.c.h.b16 %v4158
    %v5367 = vunpack.c.l.b16 %v4159
    %v5368 = vunpack.c.h.b16 %v4159
    %v5369 = vunpack.c.l.b16 %v4160
    %v5370 = vunpack.c.h.b16 %v4160
    %v5371 = vunpack.c.l.b16 %v4161
    %v5372 = vunpack.c.h.b16 %v4161
    %v5373 = vunpack.c.l.b16 %v4162
    %v5374 = vunpack.c.h.b16 %v4162
    %v5375 = vunpack.c.l.b16 %v4163
    %v5376 = vunpack.c.h.b16 %v4163
    %v5377 = vunpack.c.l.b16 %v4164
    %v5378 = vunpack.c.h.b16 %v4164
    %v5379 = vunpack.c.l.b16 %v4165
    %v5380 = vunpack.c.h.b16 %v4165
    %v5381 = vunpack.c.l.b16 %v4166
    %v5382 = vunpack.c.h.b16 %v4166
    %v5383 = vunpack.c.l.b16 %v4167
    %v5384 = vunpack.c.h.b16 %v4167
    %v5385 = vunpack.c.l.b16 %v4168
    %v5386 = vunpack.c.h.b16 %v4168
    %v5387 = vunpack.c.l.b16 %v4169
    %v5388 = vunpack.c.h.b16 %v4169
    %v5389 = vunpack.c.l.b16 %v4170
    %v5390 = vunpack.c.h.b16 %v4170
    %v5391 = vunpack.c.l.b16 %v4171
    %v5392 = vunpack.c.h.b16 %v4171
    %v5393 = vunpack.c.l.b16 %v4172
    %v5394 = vunpack.c.h.b16 %v4172
    %v5395 = vunpack.c.l.b16 %v4173
    %v5396 = vunpack.c.h.b16 %v4173
    %v5397 = vunpack.c.l.b16 %v4174
    %v5398 = vunpack.c.h.b16 %v4174
    %v5399 = vunpack.c.l.b16 %v4175
    %v5400 = vunpack.c.h.b16 %v4175
    %v5401 = vunpack.c.l.b16 %v4176
    %v5402 = vunpack.c.h.b16 %v4176
    %v5403 = vunpack.c.l.b16 %v4177
    %v5404 = vunpack.c.h.b16 %v4177
    %v5405 = vunpack.c.l.b16 %v4178
    %v5406 = vunpack.c.h.b16 %v4178
    %v5407 = vunpack.c.l.b16 %v4179
    %v5408 = vunpack.c.h.b16 %v4179
    %v5409 = vunpack.c.l.b16 %v4180
    %v5410 = vunpack.c.h.b16 %v4180
    %v5411 = vunpack.c.l.b16 %v4181
    %v5412 = vunpack.c.h.b16 %v4181
    %v5413 = vunpack.c.l.b16 %v4182
    %v5414 = vunpack.c.h.b16 %v4182
    %v5415 = vunpack.c.l.b16 %v4183
    %v5416 = vunpack.c.h.b16 %v4183
    %v5417 = vunpack.c.l.b16 %v4184
    %v5418 = vunpack.c.h.b16 %v4184
    %v5419 = vunpack.c.l.b16 %v4185
    %v5420 = vunpack.c.h.b16 %v4185
    %v5421 = vunpack.c.l.b16 %v4186
    %v5422 = vunpack.c.h.b16 %v4186
    %v5423 = vunpack.c.l.b16 %v4187
    %v5424 = vunpack.c.h.b16 %v4187
    %v5425 = vunpack.c.l.b16 %v4188
    %v5426 = vunpack.c.h.b16 %v4188
    %v5427 = vunpack.c.l.b16 %v4189
    %v5428 = vunpack.c.h.b16 %v4189
    %v5429 = vunpack.c.l.b16 %v4190
    %v5430 = vunpack.c.h.b16 %v4190
    %v5431 = vunpack.c.l.b16 %v4191
    %v5432 = vunpack.c.h.b16 %v4191
    %v5433 = vunpack.c.l.b16 %v4192
    %v5434 = vunpack.c.h.b16 %v4192
    %v5435 = vunpack.c.l.b16 %v4193
    %v5436 = vunpack.c.h.b16 %v4193
    %v5437 = vunpack.c.l.b16 %v4194
    %v5438 = vunpack.c.h.b16 %v4194
    %v5439 = vunpack.c.l.b16 %v4195
    %v5440 = vunpack.c.h.b16 %v4195
    %v5441 = vunpack.c.l.b16 %v4196
    %v5442 = vunpack.c.h.b16 %v4196
    %v5443 = vunpack.c.l.b16 %v4197
    %v5444 = vunpack.c.h.b16 %v4197
    %v5445 = vunpack.c.l.b16 %v4198
    %v5446 = vunpack.c.h.b16 %v4198
    %v5447 = vunpack.c.l.b16 %v4199
    %v5448 = vunpack.c.h.b16 %v4199
    %v5449 = vunpack.c.l.b16 %v4200
    %v5450 = vunpack.c.h.b16 %v4200
    %v5451 = vunpack.c.l.b16 %v4201
    %v5452 = vunpack.c.h.b16 %v4201
    %v5453 = vunpack.c.l.b16 %v4202
    %v5454 = vunpack.c.h.b16 %v4202
    %v5455 = vunpack.c.l.b16 %v4203
    %v5456 = vunpack.c.h.b16 %v4203
    %v5457 = vunpack.c.l.b16 %v4204
    %v5458 = vunpack.c.h.b16 %v4204
    %v5459 = vunpack.c.l.b16 %v4205
    %v5460 = vunpack.c.h.b16 %v4205
    %v5461 = vunpack.c.l.b16 %v4206
    %v5462 = vunpack.c.h.b16 %v4206
    %v5463 = vunpack.c.l.b16 %v4207
    %v5464 = vunpack.c.h.b16 %v4207
    %v5465 = vunpack.c.l.b16 %v4208
    %v5466 = vunpack.c.h.b16 %v4208
    %v5467 = vunpack.c.l.b16 %v4209
    %v5468 = vunpack.c.h.b16 %v4209
    %v5469 = vunpack.c.l.b16 %v4210
    %v5470 = vunpack.c.h.b16 %v4210
    %v5471 = vunpack.c.l.b16 %v4211
    %v5472 = vunpack.c.h.b16 %v4211
    %v5473 = vunpack.c.l.b16 %v4212
    %v5474 = vunpack.c.h.b16 %v4212
    %v5475 = vunpack.c.l.b16 %v4213
    %v5476 = vunpack.c.h.b16 %v4213
    %v5477 = vunpack.c.l.b16 %v4214
    %v5478 = vunpack.c.h.b16 %v4214
    %v5479 = vunpack.c.l.b16 %v4215
    %v5480 = vunpack.c.h.b16 %v4215
    %v5481 = vunpack.c.l.b16 %v4216
    %v5482 = vunpack.c.h.b16 %v4216
    %v5483 = vunpack.c.l.b16 %v4217
    %v5484 = vunpack.c.h.b16 %v4217
    %v5485 = vunpack.c.l.b16 %v4218
    %v5486 = vunpack.c.h.b16 %v4218
    %v5487 = vunpack.c.l.b16 %v4219
    %v5488 = vunpack.c.h.b16 %v4219
    %v5489 = vunpack.c.l.b16 %v4220
    %v5490 = vunpack.c.h.b16 %v4220
    %v5491 = vunpack.c.l.b16 %v4221
    %v5492 = vunpack.c.h.b16 %v4221
    %v5493 = vunpack.c.l.b16 %v4222
    %v5494 = vunpack.c.h.b16 %v4222
    %v5495 = vunpack.c.l.b16 %v4223
    %v5496 = vunpack.c.h.b16 %v4223
    %v5497 = vunpack.c.l.b16 %v4224
    %v5498 = vunpack.c.h.b16 %v4224
    %v5499 = vunpack.c.l.b16 %v4225
    %v5500 = vunpack.c.h.b16 %v4225
    %v5501 = vunpack.c.l.b16 %v4226
    %v5502 = vunpack.c.h.b16 %v4226
    %v5503 = vunpack.c.l.b16 %v4227
    %v5504 = vunpack.c.h.b16 %v4227
    %v5505 = vunpack.c.l.b16 %v4228
    %v5506 = vunpack.c.h.b16 %v4228
    %v5507 = vunpack.c.l.b16 %v4229
    %v5508 = vunpack.c.h.b16 %v4229
    %v5509 = vunpack.c.l.b16 %v4230
    %v5510 = vunpack.c.h.b16 %v4230
    %v5511 = vunpack.c.l.b16 %v4231
    %v5512 = vunpack.c.h.b16 %v4231
    %v5513 = vunpack.c.l.b16 %v4232
    %v5514 = vunpack.c.h.b16 %v4232
    %v5515 = vunpack.c.l.b16 %v4233
    %v5516 = vunpack.c.h.b16 %v4233
    %v5517 = vunpack.c.l.b16 %v4234
    %v5518 = vunpack.c.h.b16 %v4234
    %v5519 = vunpack.c.l.b16 %v4235
    %v5520 = vunpack.c.h.b16 %v4235
    %v5521 = vunpack.c.l.b16 %v4236
    %v5522 = vunpack.c.h.b16 %v4236
    %v5523 = vunpack.c.l.b16 %v4237
    %v5524 = vunpack.c.h.b16 %v4237
    %v5525 = vunpack.c.l.b16 %v4238
    %v5526 = vunpack.c.h.b16 %v4238
    %v5527 = vunpack.c.l.b16 %v4239
    %v5528 = vunpack.c.h.b16 %v4239
    %v5529 = vunpack.c.l.b16 %v4240
    %v5530 = vunpack.c.h.b16 %v4240
    %v5531 = vunpack.c.l.b16 %v4241
    %v5532 = vunpack.c.h.b16 %v4241
    %v5533 = vunpack.c.l.b16 %v4242
    %v5534 = vunpack.c.h.b16 %v4242
    %v5535 = vunpack.c.l.b16 %v4243
    %v5536 = vunpack.c.h.b16 %v4243
    %v5537 = vunpack.c.l.b16 %v4244
    %v5538 = vunpack.c.h.b16 %v4244
    %v5539 = vunpack.c.l.b16 %v4245
    %v5540 = vunpack.c.h.b16 %v4245
    %v5541 = vunpack.c.l.b16 %v4246
    %v5542 = vunpack.c.h.b16 %v4246
    %v5543 = vunpack.c.l.b16 %v4247
    %v5544 = vunpack.c.h.b16 %v4247
    %v5545 = vunpack.c.l.b16 %v4248
    %v5546 = vunpack.c.h.b16 %v4248
    %v5547 = vunpack.c.l.b16 %v4249
    %v5548 = vunpack.c.h.b16 %v4249
    %v5549 = vunpack.c.l.b16 %v4250
    %v5550 = vunpack.c.h.b16 %v4250
    %v5551 = vunpack.c.l.b16 %v4251
    %v5552 = vunpack.c.h.b16 %v4251
    %v5553 = vunpack.c.l.b16 %v4252
    %v5554 = vunpack.c.h.b16 %v4252
    %v5555 = vunpack.c.l.b16 %v4253
    %v5556 = vunpack.c.h.b16 %v4253
    %v5557 = vunpack.c.l.b16 %v4254
    %v5558 = vunpack.c.h.b16 %v4254
    %v5559 = vunpack.c.l.b16 %v4255
    %v5560 = vunpack.c.h.b16 %v4255
    %v5561 = vunpack.c.l.b16 %v4256
    %v5562 = vunpack.c.h.b16 %v4256
    %v5563 = vunpack.c.l.b16 %v4257
    %v5564 = vunpack.c.h.b16 %v4257
    %v5565 = vunpack.c.l.b16 %v4258
    %v5566 = vunpack.c.h.b16 %v4258
    %v5567 = vunpack.c.l.b16 %v4259
    %v5568 = vunpack.c.h.b16 %v4259
    %v5569 = vunpack.c.l.b16 %v4260
    %v5570 = vunpack.c.h.b16 %v4260
    %v5571 = vunpack.c.l.b16 %v4261
    %v5572 = vunpack.c.h.b16 %v4261
    %v5573 = vunpack.c.l.b16 %v4262
    %v5574 = vunpack.c.h.b16 %v4262
    %v5575 = vunpack.c.l.b16 %v4263
    %v5576 = vunpack.c.h.b16 %v4263
    %v5577 = vunpack.c.l.b16 %v4264
    %v5578 = vunpack.c.h.b16 %v4264
    %v5579 = vunpack.c.l.b16 %v4265
    %v5580 = vunpack.c.h.b16 %v4265
    %v5581 = vunpack.c.l.b16 %v4266
    %v5582 = vunpack.c.h.b16 %v4266
    %v5583 = vunpack.c.l.b16 %v4267
    %v5584 = vunpack.c.h.b16 %v4267
    %v5585 = vunpack.c.l.b16 %v4268
    %v5586 = vunpack.c.h.b16 %v4268
    %v5587 = vunpack.c.l.b16 %v4269
    %v5588 = vunpack.c.h.b16 %v4269
    %v5589 = vunpack.c.l.b16 %v4270
    %v5590 = vunpack.c.h.b16 %v4270
    %v5591 = vunpack.c.l.b16 %v4271
    %v5592 = vunpack.c.h.b16 %v4271
    %v5593 = vunpack.c.l.b16 %v4272
    %v5594 = vunpack.c.h.b16 %v4272
    %v5595 = vunpack.c.l.b16 %v4273
    %v5596 = vunpack.c.h.b16 %v4273
    %v5597 = vunpack.c.l.b16 %v4274
    %v5598 = vunpack.c.h.b16 %v4274
    %v5599 = vunpack.c.l.b16 %v4275
    %v5600 = vunpack.c.h.b16 %v4275
    %v5601 = vunpack.c.l.b16 %v4276
    %v5602 = vunpack.c.h.b16 %v4276
    %v5603 = vunpack.c.l.b16 %v4277
    %v5604 = vunpack.c.h.b16 %v4277
    %v5605 = vunpack.c.l.b16 %v4278
    %v5606 = vunpack.c.h.b16 %v4278
    %v5607 = vunpack.c.l.b16 %v4279
    %v5608 = vunpack.c.h.b16 %v4279
    %v5609 = vunpack.c.l.b16 %v4280
    %v5610 = vunpack.c.h.b16 %v4280
    %v5611 = vunpack.c.l.b16 %v4281
    %v5612 = vunpack.c.h.b16 %v4281
    %v5613 = vunpack.c.l.b16 %v4282
    %v5614 = vunpack.c.h.b16 %v4282
    %v5615 = vunpack.c.l.b16 %v4283
    %v5616 = vunpack.c.h.b16 %v4283
    %v5617 = vunpack.c.l.b16 %v4284
    %v5618 = vunpack.c.h.b16 %v4284
    %v5619 = vunpack.c.l.b16 %v4285
    %v5620 = vunpack.c.h.b16 %v4285
    %v5621 = vunpack.c.l.b16 %v4286
    %v5622 = vunpack.c.h.b16 %v4286
    %v5623 = vunpack.c.l.b16 %v4287
    %v5624 = vunpack.c.h.b16 %v4287
    %v5625 = vunpack.c.l.b16 %v4288
    %v5626 = vunpack.c.h.b16 %v4288
    %v5627 = vunpack.c.l.b16 %v4289
    %v5628 = vunpack.c.h.b16 %v4289
    %v5629 = vunpack.c.l.b16 %v4290
    %v5630 = vunpack.c.h.b16 %v4290
    %v5631 = vunpack.c.l.b16 %v4291
    %v5632 = vunpack.c.h.b16 %v4291
    %v5633 = vunpack.c.l.b16 %v4292
    %v5634 = vunpack.c.h.b16 %v4292
    %v5635 = vunpack.c.l.b16 %v4293
    %v5636 = vunpack.c.h.b16 %v4293
    %v5637 = vunpack.c.l.b16 %v4294
    %v5638 = vunpack.c.h.b16 %v4294
    %v5639 = vunpack.c.l.b16 %v4295
    %v5640 = vunpack.c.h.b16 %v4295
    %v5641 = vunpack.c.l.b16 %v4296
    %v5642 = vunpack.c.h.b16 %v4296
    %v5643 = vunpack.c.l.b16 %v4297
    %v5644 = vunpack.c.h.b16 %v4297
    %v5645 = vunpack.c.l.b16 %v4298
    %v5646 = vunpack.c.h.b16 %v4298
    %v5647 = vunpack.c.l.b16 %v4299
    %v5648 = vunpack.c.h.b16 %v4299
    %v5649 = vunpack.c.l.b16 %v4300
    %v5650 = vunpack.c.h.b16 %v4300
    %v5651 = vunpack.c.l.b16 %v4301
    %v5652 = vunpack.c.h.b16 %v4301
    %v5653 = vunpack.c.l.b16 %v4302
    %v5654 = vunpack.c.h.b16 %v4302
    %v5655 = vunpack.c.l.b16 %v4303
    %v5656 = vunpack.c.h.b16 %v4303
    %v5657 = vunpack.c.l.b16 %v4304
    %v5658 = vunpack.c.h.b16 %v4304
    %v5659 = vunpack.c.l.b16 %v4305
    %v5660 = vunpack.c.h.b16 %v4305
    %v5661 = vunpack.c.l.b16 %v4306
    %v5662 = vunpack.c.h.b16 %v4306
    %v5663 = vunpack.c.l.b16 %v4307
    %v5664 = vunpack.c.h.b16 %v4307
    %v5665 = vunpack.c.l.b16 %v4308
    %v5666 = vunpack.c.h.b16 %v4308
    %v5667 = vunpack.c.l.b16 %v4309
    %v5668 = vunpack.c.h.b16 %v4309
    %v5669 = vunpack.c.l.b16 %v4310
    %v5670 = vunpack.c.h.b16 %v4310
    %v5671 = vunpack.c.l.b16 %v4311
    %v5672 = vunpack.c.h.b16 %v4311
    %v5673 = vunpack.c.l.b16 %v4312
    %v5674 = vunpack.c.h.b16 %v4312
    %v5675 = vunpack.c.l.b16 %v4313
    %v5676 = vunpack.c.h.b16 %v4313
    %v5677 = vunpack.c.l.b16 %v4314
    %v5678 = vunpack.c.h.b16 %v4314
    %v5679 = vunpack.c.l.b16 %v4315
    %v5680 = vunpack.c.h.b16 %v4315
    %v5681 = vunpack.c.l.b16 %v4316
    %v5682 = vunpack.c.h.b16 %v4316
    %v5683 = vunpack.c.l.b16 %v4317
    %v5684 = vunpack.c.h.b16 %v4317
    %v5685 = vunpack.c.l.b16 %v4318
    %v5686 = vunpack.c.h.b16 %v4318
    %v5687 = vunpack.c.l.b16 %v4319
    %v5688 = vunpack.c.h.b16 %v4319
    %v5689 = vunpack.c.l.b16 %v4320
    %v5690 = vunpack.c.h.b16 %v4320
    %v5691 = vunpack.c.l.b16 %v4321
    %v5692 = vunpack.c.h.b16 %v4321
    %v5693 = vunpack.c.l.b16 %v4322
    %v5694 = vunpack.c.h.b16 %v4322
    %v5695 = vunpack.c.l.b16 %v4323
    %v5696 = vunpack.c.h.b16 %v4323
    %v5697 = vunpack.c.l.b16 %v4324
    %v5698 = vunpack.c.h.b16 %v4324
    %v5699 = vunpack.c.l.b16 %v4325
    %v5700 = vunpack.c.h.b16 %v4325
    %v5701 = vunpack.c.l.b16 %v4326
    %v5702 = vunpack.c.h.b16 %v4326
    %v5703 = vunpack.c.l.b16 %v4327
    %v5704 = vunpack.c.h.b16 %v4327
    %v5705 = vunpack.c.l.b16 %v4328
    %v5706 = vunpack.c.h.b16 %v4328
    %v5707 = vunpack.c.l.b16 %v4329
    %v5708 = vunpack.c.h.b16 %v4329
    %v5709 = vunpack.c.l.b16 %v4330
    %v5710 = vunpack.c.h.b16 %v4330
    %v5711 = vunpack.c.l.b16 %v4331
    %v5712 = vunpack.c.h.b16 %v4331
    %v5713 = vunpack.c.l.b16 %v4332
    %v5714 = vunpack.c.h.b16 %v4332
    %v5715 = vunpack.c.l.b16 %v4333
    %v5716 = vunpack.c.h.b16 %v4333
    %v5717 = vunpack.c.l.b16 %v4334
    %v5718 = vunpack.c.h.b16 %v4334
    %v5719 = vunpack.c.l.b16 %v4335
    %v5720 = vunpack.c.h.b16 %v4335
    %v5721 = vunpack.c.l.b16 %v4336
    %v5722 = vunpack.c.h.b16 %v4336
    %v5723 = vunpack.c.l.b16 %v4337
    %v5724 = vunpack.c.h.b16 %v4337
    %v5725 = vunpack.c.l.b16 %v4338
    %v5726 = vunpack.c.h.b16 %v4338
    %v5727 = vunpack.c.l.b16 %v4339
    %v5728 = vunpack.c.h.b16 %v4339
    %v5729 = vunpack.c.l.b16 %v4340
    %v5730 = vunpack.c.h.b16 %v4340
    %v5731 = vunpack.c.l.b16 %v4341
    %v5732 = vunpack.c.h.b16 %v4341
    %v5733 = vunpack.c.l.b16 %v4342
    %v5734 = vunpack.c.h.b16 %v4342
    %v5735 = vunpack.c.l.b16 %v4343
    %v5736 = vunpack.c.h.b16 %v4343
    %v5737 = vunpack.c.l.b16 %v4344
    %v5738 = vunpack.c.h.b16 %v4344
    %v5739 = vunpack.c.l.b16 %v4345
    %v5740 = vunpack.c.h.b16 %v4345
    %v5741 = vunpack.c.l.b16 %v4346
    %v5742 = vunpack.c.h.b16 %v4346
    %v5743 = vunpack.c.l.b16 %v4347
    %v5744 = vunpack.c.h.b16 %v4347
    %v5745 = vunpack.c.l.b16 %v4348
    %v5746 = vunpack.c.h.b16 %v4348
    %v5747 = vunpack.c.l.b16 %v4349
    %v5748 = vunpack.c.h.b16 %v4349
    %v5749 = vunpack.c.l.b16 %v4350
    %v5750 = vunpack.c.h.b16 %v4350
    %v5751 = vunpack.c.l.b16 %v4351
    %v5752 = vunpack.c.h.b16 %v4351
    %v5753 = vunpack.c.l.b16 %v4352
    %v5754 = vunpack.c.h.b16 %v4352
    %v5755 = vunpack.c.l.b16 %v4353
    %v5756 = vunpack.c.h.b16 %v4353
    %v5757 = vunpack.c.l.b16 %v4354
    %v5758 = vunpack.c.h.b16 %v4354
    %v5759 = vunpack.c.l.b16 %v4355
    %v5760 = vunpack.c.h.b16 %v4355
    %v5761 = vunpack.c.l.b16 %v4356
    %v5762 = vunpack.c.h.b16 %v4356
    %v5763 = vunpack.c.l.b16 %v4357
    %v5764 = vunpack.c.h.b16 %v4357
    %v5765 = vunpack.c.l.b16 %v4358
    %v5766 = vunpack.c.h.b16 %v4358
    %v5767 = vunpack.c.l.b16 %v4359
    %v5768 = vunpack.c.h.b16 %v4359
    %v5769 = vunpack.c.l.b16 %v4360
    %v5770 = vunpack.c.h.b16 %v4360
    %v5771 = vunpack.c.l.b16 %v4361
    %v5772 = vunpack.c.h.b16 %v4361
    %v5773 = vunpack.c.l.b16 %v4362
    %v5774 = vunpack.c.h.b16 %v4362
    %v5775 = vunpack.c.l.b16 %v4363
    %v5776 = vunpack.c.h.b16 %v4363
    %v5777 = vunpack.c.l.b16 %v4364
    %v5778 = vunpack.c.h.b16 %v4364
    %v5779 = vunpack.c.l.b16 %v4365
    %v5780 = vunpack.c.h.b16 %v4365
    %v5781 = vunpack.c.l.b16 %v4366
    %v5782 = vunpack.c.h.b16 %v4366
    %v5783 = vunpack.c.l.b16 %v4367
    %v5784 = vunpack.c.h.b16 %v4367
    %v5785 = vunpack.c.l.b16 %v4368
    %v5786 = vunpack.c.h.b16 %v4368
    %v5787 = vunpack.c.l.b16 %v4369
    %v5788 = vunpack.c.h.b16 %v4369
    %v5789 = vunpack.c.l.b16 %v4370
    %v5790 = vunpack.c.h.b16 %v4370
    %v5791 = vunpack.c.l.b16 %v4371
    %v5792 = vunpack.c.h.b16 %v4371
    %v5793 = vunpack.c.l.b16 %v4372
    %v5794 = vunpack.c.h.b16 %v4372
    %v5795 = vunpack.c.l.b16 %v4373
    %v5796 = vunpack.c.h.b16 %v4373
    %v5797 = vunpack.c.l.b16 %v4374
    %v5798 = vunpack.c.h.b16 %v4374
    %v5799 = vunpack.c.l.b16 %v4375
    %v5800 = vunpack.c.h.b16 %v4375
    %v5801 = vunpack.c.l.b16 %v4376
    %v5802 = vunpack.c.h.b16 %v4376
    %v5803 = vunpack.c.l.b16 %v4377
    %v5804 = vunpack.c.h.b16 %v4377
    %v5805 = vunpack.c.l.b16 %v4378
    %v5806 = vunpack.c.h.b16 %v4378
    %v5807 = vunpack.c.l.b16 %v4379
    %v5808 = vunpack.c.h.b16 %v4379
    %v5809 = vunpack.c.l.b16 %v4380
    %v5810 = vunpack.c.h.b16 %v4380
    %v5811 = vunpack.c.l.b16 %v4381
    %v5812 = vunpack.c.h.b16 %v4381
    %v5813 = vunpack.c.l.b16 %v4382
    %v5814 = vunpack.c.h.b16 %v4382
    %v5815 = vunpack.c.l.b16 %v4383
    %v5816 = vunpack.c.h.b16 %v4383
    %v5817 = vunpack.c.l.b16 %v4384
    %v5818 = vunpack.c.h.b16 %v4384
    %v5819 = vunpack.c.l.b16 %v4385
    %v5820 = vunpack.c.h.b16 %v4385
    %v5821 = vunpack.c.l.b16 %v4386
    %v5822 = vunpack.c.h.b16 %v4386
    %v5823 = vunpack.c.l.b16 %v4387
    %v5824 = vunpack.c.h.b16 %v4387
    %v5825 = vunpack.c.l.b16 %v4388
    %v5826 = vunpack.c.h.b16 %v4388
    %v5827 = vunpack.c.l.b16 %v4389
    %v5828 = vunpack.c.h.b16 %v4389
    %v5829 = vunpack.c.l.b16 %v4390
    %v5830 = vunpack.c.h.b16 %v4390
    %v5831 = vunpack.c.l.b16 %v4391
    %v5832 = vunpack.c.h.b16 %v4391
    %v5833 = vunpack.c.l.b16 %v4392
    %v5834 = vunpack.c.h.b16 %v4392
    %v5835 = vunpack.c.l.b16 %v4393
    %v5836 = vunpack.c.h.b16 %v4393
    %v5837 = vunpack.c.l.b16 %v4394
    %v5838 = vunpack.c.h.b16 %v4394
    %v5839 = vunpack.c.l.b16 %v4395
    %v5840 = vunpack.c.h.b16 %v4395
    %v5841 = vunpack.c.l.b16 %v4396
    %v5842 = vunpack.c.h.b16 %v4396
    %v5843 = vunpack.c.l.b16 %v4397
    %v5844 = vunpack.c.h.b16 %v4397
    %v5845 = vunpack.c.l.b16 %v4398
    %v5846 = vunpack.c.h.b16 %v4398
    %v5847 = vunpack.c.l.b16 %v4399
    %v5848 = vunpack.c.h.b16 %v4399
    %v5849 = vunpack.c.l.b16 %v4400
    %v5850 = vunpack.c.h.b16 %v4400
    %v5851 = vunpack.c.l.b16 %v4401
    %v5852 = vunpack.c.h.b16 %v4401
    %v5853 = vunpack.c.l.b16 %v4402
    %v5854 = vunpack.c.h.b16 %v4402
    %v5855 = vunpack.c.l.b16 %v4403
    %v5856 = vunpack.c.h.b16 %v4403
    %v5857 = vunpack.c.l.b16 %v4404
    %v5858 = vunpack.c.h.b16 %v4404
    %v5859 = vunpack.c.l.b16 %v4405
    %v5860 = vunpack.c.h.b16 %v4405
    %v5861 = vunpack.c.l.b16 %v4406
    %v5862 = vunpack.c.h.b16 %v4406
    %v5863 = vunpack.c.l.b16 %v4407
    %v5864 = vunpack.c.h.b16 %v4407
    %v5865 = vunpack.c.l.b16 %v4408
    %v5866 = vunpack.c.h.b16 %v4408
    %v5867 = vunpack.c.l.b16 %v4409
    %v5868 = vunpack.c.h.b16 %v4409
    %v5869 = vunpack.c.l.b16 %v4410
    %v5870 = vunpack.c.h.b16 %v4410
    %v5871 = vunpack.c.l.b16 %v4411
    %v5872 = vunpack.c.h.b16 %v4411
    %v5873 = vunpack.c.l.b16 %v4412
    %v5874 = vunpack.c.h.b16 %v4412
    %v5875 = vunpack.c.l.b16 %v4413
    %v5876 = vunpack.c.h.b16 %v4413
    %v5877 = vunpack.c.l.b16 %v4414
    %v5878 = vunpack.c.h.b16 %v4414
    %v5879 = vunpack.c.l.b16 %v4415
    %v5880 = vunpack.c.h.b16 %v4415
    %v5881 = vunpack.c.l.b16 %v4416
    %v5882 = vunpack.c.h.b16 %v4416
    %v5883 = vunpack.c.l.b16 %v4417
    %v5884 = vunpack.c.h.b16 %v4417
    %v5885 = vunpack.c.l.b16 %v4418
    %v5886 = vunpack.c.h.b16 %v4418
    %v5887 = vunpack.c.l.b16 %v4419
    %v5888 = vunpack.c.h.b16 %v4419
    %v5889 = vunpack.c.l.b16 %v4420
    %v5890 = vunpack.c.h.b16 %v4420
    %v5891 = vunpack.c.l.b16 %v4421
    %v5892 = vunpack.c.h.b16 %v4421
    %v5893 = vunpack.c.l.b16 %v4422
    %v5894 = vunpack.c.h.b16 %v4422
    %v5895 = vunpack.c.l.b16 %v4423
    %v5896 = vunpack.c.h.b16 %v4423
    %v5897 = vunpack.c.l.b16 %v4424
    %v5898 = vunpack.c.h.b16 %v4424
    %v5899 = vunpack.c.l.b16 %v4425
    %v5900 = vunpack.c.h.b16 %v4425
    %v5901 = vunpack.c.l.b16 %v4426
    %v5902 = vunpack.c.h.b16 %v4426
    %v5903 = vunpack.c.l.b16 %v4427
    %v5904 = vunpack.c.h.b16 %v4427
    %v5905 = vunpack.c.l.b16 %v4428
    %v5906 = vunpack.c.h.b16 %v4428
    %v5907 = vunpack.c.l.b16 %v4429
    %v5908 = vunpack.c.h.b16 %v4429
    %v5909 = vunpack.c.l.b16 %v4430
    %v5910 = vunpack.c.h.b16 %v4430
    %v5911 = vunpack.c.l.b16 %v4431
    %v5912 = vunpack.c.h.b16 %v4431
    %v5913 = vunpack.c.l.b16 %v4432
    %v5914 = vunpack.c.h.b16 %v4432
    %v5915 = vunpack.c.l.b16 %v4433
    %v5916 = vunpack.c.h.b16 %v4433
    %v5917 = vunpack.c.l.b16 %v4434
    %v5918 = vunpack.c.h.b16 %v4434
    %v5919 = vunpack.c.l.b16 %v4435
    %v5920 = vunpack.c.h.b16 %v4435
    %v5921 = vunpack.c.l.b16 %v4436
    %v5922 = vunpack.c.h.b16 %v4436
    %v5923 = vunpack.c.l.b16 %v4437
    %v5924 = vunpack.c.h.b16 %v4437
    %v5925 = vunpack.c.l.b16 %v4438
    %v5926 = vunpack.c.h.b16 %v4438
    %v5927 = vunpack.c.l.b16 %v4439
    %v5928 = vunpack.c.h.b16 %v4439
    %v5929 = vunpack.c.l.b16 %v4440
    %v5930 = vunpack.c.h.b16 %v4440
    %v5931 = vunpack.c.l.b16 %v4441
    %v5932 = vunpack.c.h.b16 %v4441
    %v5933 = vunpack.c.l.b16 %v4442
    %v5934 = vunpack.c.h.b16 %v4442
    %v5935 = vunpack.c.l.b16 %v4443
    %v5936 = vunpack.c.h.b16 %v4443
    %v5937 = vunpack.c.l.b16 %v4444
    %v5938 = vunpack.c.h.b16 %v4444
    %v5939 = vunpack.c.l.b16 %v4445
    %v5940 = vunpack.c.h.b16 %v4445
    %v5941 = vunpack.c.l.b16 %v4446
    %v5942 = vunpack.c.h.b16 %v4446
    %v5943 = vunpack.c.l.b16 %v4447
    %v5944 = vunpack.c.h.b16 %v4447
    %v5945 = vunpack.c.l.b16 %v4448
    %v5946 = vunpack.c.h.b16 %v4448
    %v5947 = vunpack.c.l.b16 %v4449
    %v5948 = vunpack.c.h.b16 %v4449
    %v5949 = vunpack.c.l.b16 %v4450
    %v5950 = vunpack.c.h.b16 %v4450
    %v5951 = vunpack.c.l.b16 %v4451
    %v5952 = vunpack.c.h.b16 %v4451
    %v5953 = vunpack.c.l.b16 %v4452
    %v5954 = vunpack.c.h.b16 %v4452
    %v5955 = vunpack.c.l.b16 %v4453
    %v5956 = vunpack.c.h.b16 %v4453
    %v5957 = vunpack.c.l.b16 %v4454
    %v5958 = vunpack.c.h.b16 %v4454
    %v5959 = vunpack.c.l.b16 %v4455
    %v5960 = vunpack.c.h.b16 %v4455
    %v5961 = vunpack.c.l.b16 %v4456
    %v5962 = vunpack.c.h.b16 %v4456
    %v5963 = vunpack.c.l.b16 %v4457
    %v5964 = vunpack.c.h.b16 %v4457
    %v5965 = vunpack.c.l.b16 %v4458
    %v5966 = vunpack.c.h.b16 %v4458
    %v5967 = vunpack.c.l.b16 %v4459
    %v5968 = vunpack.c.h.b16 %v4459
    %v5969 = vunpack.c.l.b16 %v4460
    %v5970 = vunpack.c.h.b16 %v4460
    %v5971 = vunpack.c.l.b16 %v4461
    %v5972 = vunpack.c.h.b16 %v4461
    %v5973 = vunpack.c.l.b16 %v4462
    %v5974 = vunpack.c.h.b16 %v4462
    %v5975 = vunpack.c.l.b16 %v4463
    %v5976 = vunpack.c.h.b16 %v4463
    %v5977 = vunpack.c.l.b16 %v4464
    %v5978 = vunpack.c.h.b16 %v4464
    %v5979 = vunpack.c.l.b16 %v4465
    %v5980 = vunpack.c.h.b16 %v4465
    %v5981 = vunpack.c.l.b16 %v4466
    %v5982 = vunpack.c.h.b16 %v4466
    %v5983 = vunpack.c.l.b16 %v4467
    %v5984 = vunpack.c.h.b16 %v4467
    %v5985 = vunpack.c.l.b16 %v4468
    %v5986 = vunpack.c.h.b16 %v4468
    %v5987 = vunpack.c.l.b16 %v4469
    %v5988 = vunpack.c.h.b16 %v4469
    %v5989 = vunpack.c.l.b16 %v4470
    %v5990 = vunpack.c.h.b16 %v4470
    %v5991 = vunpack.c.l.b16 %v4471
    %v5992 = vunpack.c.h.b16 %v4471
    %v5993 = vunpack.c.l.b16 %v4472
    %v5994 = vunpack.c.h.b16 %v4472
    %v5995 = vunpack.c.l.b16 %v4473
    %v5996 = vunpack.c.h.b16 %v4473
    %v5997 = vunpack.c.l.b16 %v4474
    %v5998 = vunpack.c.h.b16 %v4474
    %v5999 = vunpack.c.l.b16 %v4475
    %v6000 = vunpack.c.h.b16 %v4475
    %v6001 = vunpack.c.l.b16 %v4476
    %v6002 = vunpack.c.h.b16 %v4476
    %v6003 = vunpack.c.l.b16 %v4477
    %v6004 = vunpack.c.h.b16 %v4477
    %v6005 = vunpack.c.l.b16 %v4478
    %v6006 = vunpack.c.h.b16 %v4478
    %v6007 = vunpack.c.l.b16 %v4479
    %v6008 = vunpack.c.h.b16 %v4479
    %v6009 = vunpack.c.l.b16 %v4480
    %v6010 = vunpack.c.h.b16 %v4480
    %v6011 = vunpack.c.l.b16 %v4481
    %v6012 = vunpack.c.h.b16 %v4481
    %v6013 = vunpack.c.l.b16 %v4482
    %v6014 = vunpack.c.h.b16 %v4482
    %v6015 = vunpack.c.l.b16 %v4483
    %v6016 = vunpack.c.h.b16 %v4483
    %v6017 = vunpack.c.l.b16 %v4484
    %v6018 = vunpack.c.h.b16 %v4484
    %v6019 = vunpack.c.l.b16 %v4485
    %v6020 = vunpack.c.h.b16 %v4485
    %v6021 = vunpack.c.l.b16 %v4486
    %v6022 = vunpack.c.h.b16 %v4486
    %v6023 = vunpack.c.l.b16 %v4487
    %v6024 = vunpack.c.h.b16 %v4487
    %v6025 = vunpack.c.l.b16 %v4488
    %v6026 = vunpack.c.h.b16 %v4488
    %v6027 = vunpack.c.l.b16 %v4489
    %v6028 = vunpack.c.h.b16 %v4489
    %v6029 = vunpack.c.l.b16 %v4490
    %v6030 = vunpack.c.h.b16 %v4490
    %v6031 = vunpack.c.l.b16 %v4491
    %v6032 = vunpack.c.h.b16 %v4491
    %v6033 = vunpack.c.l.b16 %v4492
    %v6034 = vunpack.c.h.b16 %v4492
    %v6035 = vunpack.c.l.b16 %v4493
    %v6036 = vunpack.c.h.b16 %v4493
    %v6037 = vunpack.c.l.b16 %v4494
    %v6038 = vunpack.c.h.b16 %v4494
    %v6039 = vunpack.c.l.b16 %v4495
    %v6040 = vunpack.c.h.b16 %v4495
    %v6041 = vunpack.c.l.b16 %v4496
    %v6042 = vunpack.c.h.b16 %v4496
    %v6043 = vunpack.c.l.b16 %v4497
    %v6044 = vunpack.c.h.b16 %v4497
    %v6045 = vunpack.c.l.b16 %v4498
    %v6046 = vunpack.c.h.b16 %v4498
    %v6047 = vunpack.c.l.b16 %v4499
    %v6048 = vunpack.c.h.b16 %v4499
    %v6049 = vunpack.c.l.b16 %v4500
    %v6050 = vunpack.c.h.b16 %v4500
    %v6051 = vunpack.c.l.b16 %v4501
    %v6052 = vunpack.c.h.b16 %v4501
    %v6053 = vunpack.c.l.b16 %v4502
    %v6054 = vunpack.c.h.b16 %v4502
    %v6055 = vunpack.c.l.b16 %v4503
    %v6056 = vunpack.c.h.b16 %v4503
    %v6057 = vunpack.c.l.b16 %v4504
    %v6058 = vunpack.c.h.b16 %v4504
    %v6059 = vunpack.c.l.b16 %v4505
    %v6060 = vunpack.c.h.b16 %v4505
    %v6061 = vunpack.c.l.b16 %v4506
    %v6062 = vunpack.c.h.b16 %v4506
    %v6063 = vunpack.c.l.b16 %v4507
    %v6064 = vunpack.c.h.b16 %v4507
    %v6065 = vunpack.c.l.b16 %v4508
    %v6066 = vunpack.c.h.b16 %v4508
    %v6067 = vunpack.c.l.b16 %v4509
    %v6068 = vunpack.c.h.b16 %v4509
    %v6069 = vunpack.c.l.b16 %v4510
    %v6070 = vunpack.c.h.b16 %v4510
    %v6071 = vunpack.c.l.b16 %v4511
    %v6072 = vunpack.c.h.b16 %v4511
    %v6073 = vunpack.c.l.b16 %v4512
    %v6074 = vunpack.c.h.b16 %v4512
    %v6075 = vunpack.c.l.b16 %v4513
    %v6076 = vunpack.c.h.b16 %v4513
    %v6077 = vunpack.c.l.b16 %v4514
    %v6078 = vunpack.c.h.b16 %v4514
    %v6079 = vunpack.c.l.b16 %v4515
    %v6080 = vunpack.c.h.b16 %v4515
    %v6081 = vunpack.c.l.b16 %v4516
    %v6082 = vunpack.c.h.b16 %v4516
    %v6083 = vunpack.c.l.b16 %v4517
    %v6084 = vunpack.c.h.b16 %v4517
    %v6085 = vunpack.c.l.b16 %v4518
    %v6086 = vunpack.c.h.b16 %v4518
    %v6087 = vunpack.c.l.b16 %v4519
    %v6088 = vunpack.c.h.b16 %v4519
    %v6089 = vunpack.c.l.b16 %v4520
    %v6090 = vunpack.c.h.b16 %v4520
    %v6091 = vunpack.c.l.b16 %v4521
    %v6092 = vunpack.c.h.b16 %v4521
    %v6093 = vunpack.c.l.b16 %v4522
    %v6094 = vunpack.c.h.b16 %v4522
    %v6095 = vunpack.c.l.b16 %v4523
    %v6096 = vunpack.c.h.b16 %v4523
    %v6097 = vunpack.c.l.b16 %v4524
    %v6098 = vunpack.c.h.b16 %v4524
    %v6099 = vunpack.c.l.b16 %v4525
    %v6100 = vunpack.c.h.b16 %v4525
    %v6101 = vunpack.c.l.b16 %v4526
    %v6102 = vunpack.c.h.b16 %v4526
    %v6103 = vunpack.c.l.b16 %v4527
    %v6104 = vunpack.c.h.b16 %v4527
    %v6105 = vunpack.c.l.b16 %v4528
    %v6106 = vunpack.c.h.b16 %v4528
    %v6107 = vpack.c.b16 %v5091, %v5083
    %v6108 = vpack.c.b16 %v5092, %v5084
    %v6109 = vpack.c.b16 %v5093, %v5085
    %v6110 = vpack.c.b16 %v5094, %v5086
    %v6111 = vpack.c.b16 %v5095, %v5087
    %v6112 = vpack.c.b16 %v5096, %v5088
    %v6113 = vpack.c.b16 %v5097, %v5089
    %v6114 = vpack.c.b16 %v5098, %v5090
    %v6115 = vpack.c.b16 %v5107, %v5099
    %v6116 = vpack.c.b16 %v5108, %v5100
    %v6117 = vpack.c.b16 %v5109, %v5101
    %v6118 = vpack.c.b16 %v5110, %v5102
    %v6119 = vpack.c.b16 %v5111, %v5103
    %v6120 = vpack.c.b16 %v5112, %v5104
    %v6121 = vpack.c.b16 %v5113, %v5105
    %v6122 = vpack.c.b16 %v5114, %v5106
    %v6123 = vpack.c.b16 %v5123, %v5115
    %v6124 = vpack.c.b16 %v5124, %v5116
    %v6125 = vpack.c.b16 %v5125, %v5117
    %v6126 = vpack.c.b16 %v5126, %v5118
    %v6127 = vpack.c.b16 %v5127, %v5119
    %v6128 = vpack.c.b16 %v5128, %v5120
    %v6129 = vpack.c.b16 %v5129, %v5121
    %v6130 = vpack.c.b16 %v5130, %v5122
    %v6131 = vpack.c.b16 %v5139, %v5131
    %v6132 = vpack.c.b16 %v5140, %v5132
    %v6133 = vpack.c.b16 %v5141, %v5133
    %v6134 = vpack.c.b16 %v5142, %v5134
    %v6135 = vpack.c.b16 %v5143, %v5135
    %v6136 = vpack.c.b16 %v5144, %v5136
    %v6137 = vpack.c.b16 %v5145, %v5137
    %v6138 = vpack.c.b16 %v5146, %v5138
    %v6139 = vpack.c.b16 %v5155, %v5147
    %v6140 = vpack.c.b16 %v5156, %v5148
    %v6141 = vpack.c.b16 %v5157, %v5149
    %v6142 = vpack.c.b16 %v5158, %v5150
    %v6143 = vpack.c.b16 %v5159, %v5151
    %v6144 = vpack.c.b16 %v5160, %v5152
    %v6145 = vpack.c.b16 %v5161, %v5153
    %v6146 = vpack.c.b16 %v5162, %v5154
    %v6147 = vpack.c.b16 %v5171, %v5163
    %v6148 = vpack.c.b16 %v5172, %v5164
    %v6149 = vpack.c.b16 %v5173, %v5165
    %v6150 = vpack.c.b16 %v5174, %v5166
    %v6151 = vpack.c.b16 %v5175, %v5167
    %v6152 = vpack.c.b16 %v5176, %v5168
    %v6153 = vpack.c.b16 %v5177, %v5169
    %v6154 = vpack.c.b16 %v5178, %v5170
    %v6155 = vpack.c.b16 %v5187, %v5179
    %v6156 = vpack.c.b16 %v5188, %v5180
    %v6157 = vpack.c.b16 %v5189, %v5181
    %v6158 = vpack.c.b16 %v5190, %v5182
    %v6159 = vpack.c.b16 %v5191, %v5183
    %v6160 = vpack.c.b16 %v5192, %v5184
    %v6161 = vpack.c.b16 %v5193, %v5185
    %v6162 = vpack.c.b16 %v5194, %v5186
    %v6163 = vpack.c.b16 %v5203, %v5195
    %v6164 = vpack.c.b16 %v5204, %v5196
    %v6165 = vpack.c.b16 %v5205, %v5197
    %v6166 = vpack.c.b16 %v5206, %v5198
    %v6167 = vpack.c.b16 %v5207, %v5199
    %v6168 = vpack.c.b16 %v5208, %v5200
    %v6169 = vpack.c.b16 %v5209, %v5201
    %v6170 = vpack.c.b16 %v5210, %v5202
    %v6171 = vpack.c.b16 %v5219, %v5211
    %v6172 = vpack.c.b16 %v5220, %v5212
    %v6173 = vpack.c.b16 %v5221, %v5213
    %v6174 = vpack.c.b16 %v5222, %v5214
    %v6175 = vpack.c.b16 %v5223, %v5215
    %v6176 = vpack.c.b16 %v5224, %v5216
    %v6177 = vpack.c.b16 %v5225, %v5217
    %v6178 = vpack.c.b16 %v5226, %v5218
    %v6179 = vpack.c.b16 %v5235, %v5227
    %v6180 = vpack.c.b16 %v5236, %v5228
    %v6181 = vpack.c.b16 %v5237, %v5229
    %v6182 = vpack.c.b16 %v5238, %v5230
    %v6183 = vpack.c.b16 %v5239, %v5231
    %v6184 = vpack.c.b16 %v5240, %v5232
    %v6185 = vpack.c.b16 %v5241, %v5233
    %v6186 = vpack.c.b16 %v5242, %v5234
    %v6187 = vpack.c.b16 %v5251, %v5243
    %v6188 = vpack.c.b16 %v5252, %v5244
    %v6189 = vpack.c.b16 %v5253, %v5245
    %v6190 = vpack.c.b16 %v5254, %v5246
    %v6191 = vpack.c.b16 %v5255, %v5247
    %v6192 = vpack.c.b16 %v5256, %v5248
    %v6193 = vpack.c.b16 %v5257, %v5249
    %v6194 = vpack.c.b16 %v5258, %v5250
    %v6195 = vpack.c.b16 %v5267, %v5259
    %v6196 = vpack.c.b16 %v5268, %v5260
    %v6197 = vpack.c.b16 %v5269, %v5261
    %v6198 = vpack.c.b16 %v5270, %v5262
    %v6199 = vpack.c.b16 %v5271, %v5263
    %v6200 = vpack.c.b16 %v5272, %v5264
    %v6201 = vpack.c.b16 %v5273, %v5265
    %v6202 = vpack.c.b16 %v5274, %v5266
    %v6203 = vpack.c.b16 %v5283, %v5275
    %v6204 = vpack.c.b16 %v5284, %v5276
    %v6205 = vpack.c.b16 %v5285, %v5277
    %v6206 = vpack.c.b16 %v5286, %v5278
    %v6207 = vpack.c.b16 %v5287, %v5279
    %v6208 = vpack.c.b16 %v5288, %v5280
    %v6209 = vpack.c.b16 %v5289, %v5281
    %v6210 = vpack.c.b16 %v5290, %v5282
    %v6211 = vpack.c.b16 %v5299, %v5291
    %v6212 = vpack.c.b16 %v5300, %v5292
    %v6213 = vpack.c.b16 %v5301, %v5293
    %v6214 = vpack.c.b16 %v5302, %v5294
    %v6215 = vpack.c.b16 %v5303, %v5295
    %v6216 = vpack.c.b16 %v5304, %v5296
    %v6217 = vpack.c.b16 %v5305, %v5297
    %v6218 = vpack.c.b16 %v5306, %v5298
    %v6219 = vpack.c.b16 %v5315, %v5307
    %v6220 = vpack.c.b16 %v5316, %v5308
    %v6221 = vpack.c.b16 %v5317, %v5309
    %v6222 = vpack.c.b16 %v5318, %v5310
    %v6223 = vpack.c.b16 %v5319, %v5311
    %v6224 = vpack.c.b16 %v5320, %v5312
    %v6225 = vpack.c.b16 %v5321, %v5313
    %v6226 = vpack.c.b16 %v5322, %v5314
    %v6227 = vpack.c.b16 %v5331, %v5323
    %v6228 = vpack.c.b16 %v5332, %v5324
    %v6229 = vpack.c.b16 %v5333, %v5325
    %v6230 = vpack.c.b16 %v5334, %v5326
    %v6231 = vpack.c.b16 %v5335, %v5327
    %v6232 = vpack.c.b16 %v5336, %v5328
    %v6233 = vpack.c.b16 %v5337, %v5329
    %v6234 = vpack.c.b16 %v5338, %v5330
    %v6235 = vpack.c.b16 %v5347, %v5339
    %v6236 = vpack.c.b16 %v5348, %v5340
    %v6237 = vpack.c.b16 %v5349, %v5341
    %v6238 = vpack.c.b16 %v5350, %v5342
    %v6239 = vpack.c.b16 %v5351, %v5343
    %v6240 = vpack.c.b16 %v5352, %v5344
    %v6241 = vpack.c.b16 %v5353, %v5345
    %v6242 = vpack.c.b16 %v5354, %v5346
    %v6243 = vpack.c.b16 %v5363, %v5355
    %v6244 = vpack.c.b16 %v5364, %v5356
    %v6245 = vpack.c.b16 %v5365, %v5357
    %v6246 = vpack.c.b16 %v5366, %v5358
    %v6247 = vpack.c.b16 %v5367, %v5359
    %v6248 = vpack.c.b16 %v5368, %v5360
    %v6249 = vpack.c.b16 %v5369, %v5361
    %v6250 = vpack.c.b16 %v5370, %v5362
    %v6251 = vpack.c.b16 %v5379, %v5371
    %v6252 = vpack.c.b16 %v5380, %v5372
    %v6253 = vpack.c.b16 %v5381, %v5373
    %v6254 = vpack.c.b16 %v5382, %v5374
    %v6255 = vpack.c.b16 %v5383, %v5375
    %v6256 = vpack.c.b16 %v5384, %v5376
    %v6257 = vpack.c.b16 %v5385, %v5377
    %v6258 = vpack.c.b16 %v5386, %v5378
    %v6259 = vpack.c.b16 %v5395, %v5387
    %v6260 = vpack.c.b16 %v5396, %v5388
    %v6261 = vpack.c.b16 %v5397, %v5389
    %v6262 = vpack.c.b16 %v5398, %v5390
    %v6263 = vpack.c.b16 %v5399, %v5391
    %v6264 = vpack.c.b16 %v5400, %v5392
    %v6265 = vpack.c.b16 %v5401, %v5393
    %v6266 = vpack.c.b16 %v5402, %v5394
    %v6267 = vpack.c.b16 %v5411, %v5403
    %v6268 = vpack.c.b16 %v5412, %v5404
    %v6269 = vpack.c.b16 %v5413, %v5405
    %v6270 = vpack.c.b16 %v5414, %v5406
    %v6271 = vpack.c.b16 %v5415, %v5407
    %v6272 = vpack.c.b16 %v5416, %v5408
    %v6273 = vpack.c.b16 %v5417, %v5409
    %v6274 = vpack.c.b16 %v5418, %v5410
    %v6275 = vpack.c.b16 %v5427, %v5419
    %v6276 = vpack.c.b16 %v5428, %v5420
    %v6277 = vpack.c.b16 %v5429, %v5421
    %v6278 = vpack.c.b16 %v5430, %v5422
    %v6279 = vpack.c.b16 %v5431, %v5423
    %v6280 = vpack.c.b16 %v5432, %v5424
    %v6281 = vpack.c.b16 %v5433, %v5425
    %v6282 = vpack.c.b16 %v5434, %v5426
    %v6283 = vpack.c.b16 %v5443, %v5435
    %v6284 = vpack.c.b16 %v5444, %v5436
    %v6285 = vpack.c.b16 %v5445, %v5437
    %v6286 = vpack.c.b16 %v5446, %v5438
    %v6287 = vpack.c.b16 %v5447, %v5439
    %v6288 = vpack.c.b16 %v5448, %v5440
    %v6289 = vpack.c.b16 %v5449, %v5441
    %v6290 = vpack.c.b16 %v5450, %v5442
    %v6291 = vpack.c.b16 %v5459, %v5451
    %v6292 = vpack.c.b16 %v5460, %v5452
    %v6293 = vpack.c.b16 %v5461, %v5453
    %v6294 = vpack.c.b16 %v5462, %v5454
    %v6295 = vpack.c.b16 %v5463, %v5455
    %v6296 = vpack.c.b16 %v5464, %v5456
    %v6297 = vpack.c.b16 %v5465, %v5457
    %v6298 = vpack.c.b16 %v5466, %v5458
    %v6299 = vpack.c.b16 %v5475, %v5467
    %v6300 = vpack.c.b16 %v5476, %v5468
    %v6301 = vpack.c.b16 %v5477, %v5469
    %v6302 = vpack.c.b16 %v5478, %v5470
    %v6303 = vpack.c.b16 %v5479, %v5471
    %v6304 = vpack.c.b16 %v5480, %v5472
    %v6305 = vpack.c.b16 %v5481, %v5473
    %v6306 = vpack.c.b16 %v5482, %v5474
    %v6307 = vpack.c.b16 %v5491, %v5483
    %v6308 = vpack.c.b16 %v5492, %v5484
    %v6309 = vpack.c.b16 %v5493, %v5485
    %v6310 = vpack.c.b16 %v5494, %v5486
    %v6311 = vpack.c.b16 %v5495, %v5487
    %v6312 = vpack.c.b16 %v5496, %v5488
    %v6313 = vpack.c.b16 %v5497, %v5489
    %v6314 = vpack.c.b16 %v5498, %v5490
    %v6315 = vpack.c.b16 %v5507, %v5499
    %v6316 = vpack.c.b16 %v5508, %v5500
    %v6317 = vpack.c.b16 %v5509, %v5501
    %v6318 = vpack.c.b16 %v5510, %v5502
    %v6319 = vpack.c.b16 %v5511, %v5503
    %v6320 = vpack.c.b16 %v5512, %v5504
    %v6321 = vpack.c.b16 %v5513, %v5505
    %v6322 = vpack.c.b16 %v5514, %v5506
    %v6323 = vpack.c.b16 %v5523, %v5515
    %v6324 = vpack.c.b16 %v5524, %v5516
    %v6325 = vpack.c.b16 %v5525, %v5517
    %v6326 = vpack.c.b16 %v5526, %v5518
    %v6327 = vpack.c.b16 %v5527, %v5519
    %v6328 = vpack.c.b16 %v5528, %v5520
    %v6329 = vpack.c.b16 %v5529, %v5521
    %v6330 = vpack.c.b16 %v5530, %v5522
    %v6331 = vpack.c.b16 %v5539, %v5531
    %v6332 = vpack.c.b16 %v5540, %v5532
    %v6333 = vpack.c.b16 %v5541, %v5533
    %v6334 = vpack.c.b16 %v5542, %v5534
    %v6335 = vpack.c.b16 %v5543, %v5535
    %v6336 = vpack.c.b16 %v5544, %v5536
    %v6337 = vpack.c.b16 %v5545, %v5537
    %v6338 = vpack.c.b16 %v5546, %v5538
    %v6339 = vpack.c.b16 %v5555, %v5547
    %v6340 = vpack.c.b16 %v5556, %v5548
    %v6341 = vpack.c.b16 %v5557, %v5549
    %v6342 = vpack.c.b16 %v5558, %v5550
    %v6343 = vpack.c.b16 %v5559, %v5551
    %v6344 = vpack.c.b16 %v5560, %v5552
    %v6345 = vpack.c.b16 %v5561, %v5553
    %v6346 = vpack.c.b16 %v5562, %v5554
    %v6347 = vpack.c.b16 %v5571, %v5563
    %v6348 = vpack.c.b16 %v5572, %v5564
    %v6349 = vpack.c.b16 %v5573, %v5565
    %v6350 = vpack.c.b16 %v5574, %v5566
    %v6351 = vpack.c.b16 %v5575, %v5567
    %v6352 = vpack.c.b16 %v5576, %v5568
    %v6353 = vpack.c.b16 %v5577, %v5569
    %v6354 = vpack.c.b16 %v5578, %v5570
    %v6355 = vpack.c.b16 %v5587, %v5579
    %v6356 = vpack.c.b16 %v5588, %v5580
    %v6357 = vpack.c.b16 %v5589, %v5581
    %v6358 = vpack.c.b16 %v5590, %v5582
    %v6359 = vpack.c.b16 %v5591, %v5583
    %v6360 = vpack.c.b16 %v5592, %v5584
    %v6361 = vpack.c.b16 %v5593, %v5585
    %v6362 = vpack.c.b16 %v5594, %v5586
    %v6363 = vpack.c.b16 %v5603, %v5595
    %v6364 = vpack.c.b16 %v5604, %v5596
    %v6365 = vpack.c.b16 %v5605, %v5597
    %v6366 = vpack.c.b16 %v5606, %v5598
    %v6367 = vpack.c.b16 %v5607, %v5599
    %v6368 = vpack.c.b16 %v5608, %v5600
    %v6369 = vpack.c.b16 %v5609, %v5601
    %v6370 = vpack.c.b16 %v5610, %v5602
    %v6371 = vpack.c.b16 %v5619, %v5611
    %v6372 = vpack.c.b16 %v5620, %v5612
    %v6373 = vpack.c.b16 %v5621, %v5613
    %v6374 = vpack.c.b16 %v5622, %v5614
    %v6375 = vpack.c.b16 %v5623, %v5615
    %v6376 = vpack.c.b16 %v5624, %v5616
    %v6377 = vpack.c.b16 %v5625, %v5617
    %v6378 = vpack.c.b16 %v5626, %v5618
    %v6379 = vpack.c.b16 %v5635, %v5627
    %v6380 = vpack.c.b16 %v5636, %v5628
    %v6381 = vpack.c.b16 %v5637, %v5629
    %v6382 = vpack.c.b16 %v5638, %v5630
    %v6383 = vpack.c.b16 %v5639, %v5631
    %v6384 = vpack.c.b16 %v5640, %v5632
    %v6385 = vpack.c.b16 %v5641, %v5633
    %v6386 = vpack.c.b16 %v5642, %v5634
    %v6387 = vpack.c.b16 %v5651, %v5643
    %v6388 = vpack.c.b16 %v5652, %v5644
    %v6389 = vpack.c.b16 %v5653, %v5645
    %v6390 = vpack.c.b16 %v5654, %v5646
    %v6391 = vpack.c.b16 %v5655, %v5647
    %v6392 = vpack.c.b16 %v5656, %v5648
    %v6393 = vpack.c.b16 %v5657, %v5649
    %v6394 = vpack.c.b16 %v5658, %v5650
    %v6395 = vpack.c.b16 %v5667, %v5659
    %v6396 = vpack.c.b16 %v5668, %v5660
    %v6397 = vpack.c.b16 %v5669, %v5661
    %v6398 = vpack.c.b16 %v5670, %v5662
    %v6399 = vpack.c.b16 %v5671, %v5663
    %v6400 = vpack.c.b16 %v5672, %v5664
    %v6401 = vpack.c.b16 %v5673, %v5665
    %v6402 = vpack.c.b16 %v5674, %v5666
    %v6403 = vpack.c.b16 %v5683, %v5675
    %v6404 = vpack.c.b16 %v5684, %v5676
    %v6405 = vpack.c.b16 %v5685, %v5677
    %v6406 = vpack.c.b16 %v5686, %v5678
    %v6407 = vpack.c.b16 %v5687, %v5679
    %v6408 = vpack.c.b16 %v5688, %v5680
    %v6409 = vpack.c.b16 %v5689, %v5681
    %v6410 = vpack.c.b16 %v5690, %v5682
    %v6411 = vpack.c.b16 %v5699, %v5691
    %v6412 = vpack.c.b16 %v5700, %v5692
    %v6413 = vpack.c.b16 %v5701, %v5693
    %v6414 = vpack.c.b16 %v5702, %v5694
    %v6415 = vpack.c.b16 %v5703, %v5695
    %v6416 = vpack.c.b16 %v5704, %v5696
    %v6417 = vpack.c.b16 %v5705, %v5697
    %v6418 = vpack.c.b16 %v5706, %v5698
    %v6419 = vpack.c.b16 %v5715, %v5707
    %v6420 = vpack.c.b16 %v5716, %v5708
    %v6421 = vpack.c.b16 %v5717, %v5709
    %v6422 = vpack.c.b16 %v5718, %v5710
    %v6423 = vpack.c.b16 %v5719, %v5711
    %v6424 = vpack.c.b16 %v5720, %v5712
    %v6425 = vpack.c.b16 %v5721, %v5713
    %v6426 = vpack.c.b16 %v5722, %v5714
    %v6427 = vpack.c.b16 %v5731, %v5723
    %v6428 = vpack.c.b16 %v5732, %v5724
    %v6429 = vpack.c.b16 %v5733, %v5725
    %v6430 = vpack.c.b16 %v5734, %v5726
    %v6431 = vpack.c.b16 %v5735, %v5727
    %v6432 = vpack.c.b16 %v5736, %v5728
    %v6433 = vpack.c.b16 %v5737, %v5729
    %v6434 = vpack.c.b16 %v5738, %v5730
    %v6435 = vpack.c.b16 %v5747, %v5739
    %v6436 = vpack.c.b16 %v5748, %v5740
    %v6437 = vpack.c.b16 %v5749, %v5741
    %v6438 = vpack.c.b16 %v5750, %v5742
    %v6439 = vpack.c.b16 %v5751, %v5743
    %v6440 = vpack.c.b16 %v5752, %v5744
    %v6441 = vpack.c.b16 %v5753, %v5745
    %v6442 = vpack.c.b16 %v5754, %v5746
    %v6443 = vpack.c.b16 %v5763, %v5755
    %v6444 = vpack.c.b16 %v5764, %v5756
    %v6445 = vpack.c.b16 %v5765, %v5757
    %v6446 = vpack.c.b16 %v5766, %v5758
    %v6447 = vpack.c.b16 %v5767, %v5759
    %v6448 = vpack.c.b16 %v5768, %v5760
    %v6449 = vpack.c.b16 %v5769, %v5761
    %v6450 = vpack.c.b16 %v5770, %v5762
    %v6451 = vpack.c.b16 %v5779, %v5771
    %v6452 = vpack.c.b16 %v5780, %v5772
    %v6453 = vpack.c.b16 %v5781, %v5773
    %v6454 = vpack.c.b16 %v5782, %v5774
    %v6455 = vpack.c.b16 %v5783, %v5775
    %v6456 = vpack.c.b16 %v5784, %v5776
    %v6457 = vpack.c.b16 %v5785, %v5777
    %v6458 = vpack.c.b16 %v5786, %v5778
    %v6459 = vpack.c.b16 %v5795, %v5787
    %v6460 = vpack.c.b16 %v5796, %v5788
    %v6461 = vpack.c.b16 %v5797, %v5789
    %v6462 = vpack.c.b16 %v5798, %v5790
    %v6463 = vpack.c.b16 %v5799, %v5791
    %v6464 = vpack.c.b16 %v5800, %v5792
    %v6465 = vpack.c.b16 %v5801, %v5793
    %v6466 = vpack.c.b16 %v5802, %v5794
    %v6467 = vpack.c.b16 %v5811, %v5803
    %v6468 = vpack.c.b16 %v5812, %v5804
    %v6469 = vpack.c.b16 %v5813, %v5805
    %v6470 = vpack.c.b16 %v5814, %v5806
    %v6471 = vpack.c.b16 %v5815, %v5807
    %v6472 = vpack.c.b16 %v5816, %v5808
    %v6473 = vpack.c.b16 %v5817, %v5809
    %v6474 = vpack.c.b16 %v5818, %v5810
    %v6475 = vpack.c.b16 %v5827, %v5819
    %v6476 = vpack.c.b16 %v5828, %v5820
    %v6477 = vpack.c.b16 %v5829, %v5821
    %v6478 = vpack.c.b16 %v5830, %v5822
    %v6479 = vpack.c.b16 %v5831, %v5823
    %v6480 = vpack.c.b16 %v5832, %v5824
    %v6481 = vpack.c.b16 %v5833, %v5825
    %v6482 = vpack.c.b16 %v5834, %v5826
    %v6483 = vpack.c.b16 %v5843, %v5835
    %v6484 = vpack.c.b16 %v5844, %v5836
    %v6485 = vpack.c.b16 %v5845, %v5837
    %v6486 = vpack.c.b16 %v5846, %v5838
    %v6487 = vpack.c.b16 %v5847, %v5839
    %v6488 = vpack.c.b16 %v5848, %v5840
    %v6489 = vpack.c.b16 %v5849, %v5841
    %v6490 = vpack.c.b16 %v5850, %v5842
    %v6491 = vpack.c.b16 %v5859, %v5851
    %v6492 = vpack.c.b16 %v5860, %v5852
    %v6493 = vpack.c.b16 %v5861, %v5853
    %v6494 = vpack.c.b16 %v5862, %v5854
    %v6495 = vpack.c.b16 %v5863, %v5855
    %v6496 = vpack.c.b16 %v5864, %v5856
    %v6497 = vpack.c.b16 %v5865, %v5857
    %v6498 = vpack.c.b16 %v5866, %v5858
    %v6499 = vpack.c.b16 %v5875, %v5867
    %v6500 = vpack.c.b16 %v5876, %v5868
    %v6501 = vpack.c.b16 %v5877, %v5869
    %v6502 = vpack.c.b16 %v5878, %v5870
    %v6503 = vpack.c.b16 %v5879, %v5871
    %v6504 = vpack.c.b16 %v5880, %v5872
    %v6505 = vpack.c.b16 %v5881, %v5873
    %v6506 = vpack.c.b16 %v5882, %v5874
    %v6507 = vpack.c.b16 %v5891, %v5883
    %v6508 = vpack.c.b16 %v5892, %v5884
    %v6509 = vpack.c.b16 %v5893, %v5885
    %v6510 = vpack.c.b16 %v5894, %v5886
    %v6511 = vpack.c.b16 %v5895, %v5887
    %v6512 = vpack.c.b16 %v5896, %v5888
    %v6513 = vpack.c.b16 %v5897, %v5889
    %v6514 = vpack.c.b16 %v5898, %v5890
    %v6515 = vpack.c.b16 %v5907, %v5899
    %v6516 = vpack.c.b16 %v5908, %v5900
    %v6517 = vpack.c.b16 %v5909, %v5901
    %v6518 = vpack.c.b16 %v5910, %v5902
    %v6519 = vpack.c.b16 %v5911, %v5903
    %v6520 = vpack.c.b16 %v5912, %v5904
    %v6521 = vpack.c.b16 %v5913, %v5905
    %v6522 = vpack.c.b16 %v5914, %v5906
    %v6523 = vpack.c.b16 %v5923, %v5915
    %v6524 = vpack.c.b16 %v5924, %v5916
    %v6525 = vpack.c.b16 %v5925, %v5917
    %v6526 = vpack.c.b16 %v5926, %v5918
    %v6527 = vpack.c.b16 %v5927, %v5919
    %v6528 = vpack.c.b16 %v5928, %v5920
    %v6529 = vpack.c.b16 %v5929, %v5921
    %v6530 = vpack.c.b16 %v5930, %v5922
    %v6531 = vpack.c.b16 %v5939, %v5931
    %v6532 = vpack.c.b16 %v5940, %v5932
    %v6533 = vpack.c.b16 %v5941, %v5933
    %v6534 = vpack.c.b16 %v5942, %v5934
    %v6535 = vpack.c.b16 %v5943, %v5935
    %v6536 = vpack.c.b16 %v5944, %v5936
    %v6537 = vpack.c.b16 %v5945, %v5937
    %v6538 = vpack.c.b16 %v5946, %v5938
    %v6539 = vpack.c.b16 %v5955, %v5947
    %v6540 = vpack.c.b16 %v5956, %v5948
    %v6541 = vpack.c.b16 %v5957, %v5949
    %v6542 = vpack.c.b16 %v5958, %v5950
    %v6543 = vpack.c.b16 %v5959, %v5951
    %v6544 = vpack.c.b16 %v5960, %v5952
    %v6545 = vpack.c.b16 %v5961, %v5953
    %v6546 = vpack.c.b16 %v5962, %v5954
    %v6547 = vpack.c.b16 %v5971, %v5963
    %v6548 = vpack.c.b16 %v5972, %v5964
    %v6549 = vpack.c.b16 %v5973, %v5965
    %v6550 = vpack.c.b16 %v5974, %v5966
    %v6551 = vpack.c.b16 %v5975, %v5967
    %v6552 = vpack.c.b16 %v5976, %v5968
    %v6553 = vpack.c.b16 %v5977, %v5969
    %v6554 = vpack.c.b16 %v5978, %v5970
    %v6555 = vpack.c.b16 %v5987, %v5979
    %v6556 = vpack.c.b16 %v5988, %v5980
    %v6557 = vpack.c.b16 %v5989, %v5981
    %v6558 = vpack.c.b16 %v5990, %v5982
    %v6559 = vpack.c.b16 %v5991, %v5983
    %v6560 = vpack.c.b16 %v5992, %v5984
    %v6561 = vpack.c.b16 %v5993, %v5985
    %v6562 = vpack.c.b16 %v5994, %v5986
    %v6563 = vpack.c.b16 %v6003, %v5995
    %v6564 = vpack.c.b16 %v6004, %v5996
    %v6565 = vpack.c.b16 %v6005, %v5997
    %v6566 = vpack.c.b16 %v6006, %v5998
    %v6567 = vpack.c.b16 %v6007, %v5999
    %v6568 = vpack.c.b16 %v6008, %v6000
    %v6569 = vpack.c.b16 %v6009, %v6001
    %v6570 = vpack.c.b16 %v6010, %v6002
    %v6571 = vpack.c.b16 %v6019, %v6011
    %v6572 = vpack.c.b16 %v6020, %v6012
    %v6573 = vpack.c.b16 %v6021, %v6013
    %v6574 = vpack.c.b16 %v6022, %v6014
    %v6575 = vpack.c.b16 %v6023, %v6015
    %v6576 = vpack.c.b16 %v6024, %v6016
    %v6577 = vpack.c.b16 %v6025, %v6017
    %v6578 = vpack.c.b16 %v6026, %v6018
    %v6579 = vpack.c.b16 %v6035, %v6027
    %v6580 = vpack.c.b16 %v6036, %v6028
    %v6581 = vpack.c.b16 %v6037, %v6029
    %v6582 = vpack.c.b16 %v6038, %v6030
    %v6583 = vpack.c.b16 %v6039, %v6031
    %v6584 = vpack.c.b16 %v6040, %v6032
    %v6585 = vpack.c.b16 %v6041, %v6033
    %v6586 = vpack.c.b16 %v6042, %v6034
    %v6587 = vpack.c.b16 %v6051, %v6043
    %v6588 = vpack.c.b16 %v6052, %v6044
    %v6589 = vpack.c.b16 %v6053, %v6045
    %v6590 = vpack.c.b16 %v6054, %v6046
    %v6591 = vpack.c.b16 %v6055, %v6047
    %v6592 = vpack.c.b16 %v6056, %v6048
    %v6593 = vpack.c.b16 %v6057, %v6049
    %v6594 = vpack.c.b16 %v6058, %v6050
    %v6595 = vpack.c.b16 %v6067, %v6059
    %v6596 = vpack.c.b16 %v6068, %v6060
    %v6597 = vpack.c.b16 %v6069, %v6061
    %v6598 = vpack.c.b16 %v6070, %v6062
    %v6599 = vpack.c.b16 %v6071, %v6063
    %v6600 = vpack.c.b16 %v6072, %v6064
    %v6601 = vpack.c.b16 %v6073, %v6065
    %v6602 = vpack.c.b16 %v6074, %v6066
    %v6603 = vpack.c.b16 %v6083, %v6075
    %v6604 = vpack.c.b16 %v6084, %v6076
    %v6605 = vpack.c.b16 %v6085, %v6077
    %v6606 = vpack.c.b16 %v6086, %v6078
    %v6607 = vpack.c.b16 %v6087, %v6079
    %v6608 = vpack.c.b16 %v6088, %v6080
    %v6609 = vpack.c.b16 %v6089, %v6081
    %v6610 = vpack.c.b16 %v6090, %v6082
    %v6611 = vpack.c.b16 %v6099, %v6091
    %v6612 = vpack.c.b16 %v6100, %v6092
    %v6613 = vpack.c.b16 %v6101, %v6093
    %v6614 = vpack.c.b16 %v6102, %v6094
    %v6615 = vpack.c.b16 %v6103, %v6095
    %v6616 = vpack.c.b16 %v6104, %v6096
    %v6617 = vpack.c.b16 %v6105, %v6097
    %v6618 = vpack.c.b16 %v6106, %v6098
    %7131 = vmatprep.subr.bf16.mxu0 %v6164
    %7132 = vmatpush1.bf16.msra.mxu0 %v6163
    %7133 = vmatprep.subr.bf16.mxu0 %v6156
    %7134 = vmatpush1.bf16.msra.mxu0 %v6155
    %7135 = vmatprep.subr.bf16.mxu0 %v6148
    %7136 = vmatpush1.bf16.msra.mxu0 %v6147
    %7137 = vmatprep.subr.bf16.mxu0 %v6140
    %7138 = vmatpush1.bf16.msra.mxu0 %v6139
    %7139 = vmatprep.subr.bf16.mxu0 %v6132
    %7140 = vmatpush1.bf16.msra.mxu0 %v6131
    %7141 = vmatprep.subr.bf16.mxu0 %v6124
    %7142 = vmatpush1.bf16.msra.mxu0 %v6123
    %7143 = vmatprep.subr.bf16.mxu0 %v6116
    %7144 = vmatpush1.bf16.msra.mxu0 %v6115
    %7145 = vmatprep.subr.bf16.mxu0 %v6108
    %7146 = vmatpush1.bf16.msra.mxu0 %v6107
    %7147 = vmatprep.subr.bf16.mxu0 %v6228
    %7148 = vmatpush2.bf16.msra.mxu0 %v6227
    %7149 = vmatprep.subr.bf16.mxu0 %v6220
    %7150 = vmatpush2.bf16.msra.mxu0 %v6219
    %7151 = vmatprep.subr.bf16.mxu0 %v6212
    %7152 = vmatpush2.bf16.msra.mxu0 %v6211
    %7153 = vmatprep.subr.bf16.mxu0 %v6204
    %7154 = vmatpush2.bf16.msra.mxu0 %v6203
    %7155 = vmatprep.subr.bf16.mxu0 %v6196
    %7156 = vmatpush2.bf16.msra.mxu0 %v6195
    %7157 = vmatprep.subr.bf16.mxu0 %v6188
    %7158 = vmatpush2.bf16.msra.mxu0 %v6187
    %7159 = vmatprep.subr.bf16.mxu0 %v6180
    %7160 = vmatpush2.bf16.msra.mxu0 %v6179
    %7161 = vmatprep.subr.bf16.mxu0 %v6172
    %7162 = vmatpush2.bf16.msra.mxu0 %v6171
    %7163 = vmatprep.mubr.bf16.mxu0 %v4010
    %7164 = vmatmul.mubr.bf16.gmra.mxu0 %v4009
    %v7165 = vpop.f32.mrf.mxu0
    %v7166 = vadd.f32 %v4534, %v7165
    %v7167 = vpop.f32.mrf.mxu0
    %v7168 = vadd.f32 %v4538, %v7167
    %v7169 = vpop.f32.mrf.mxu0
    %v7170 = vpop.f32.mrf.mxu0
    %7171 = vdwg.mxu0
    %7172 = vmatprep.subr.bf16.mxu0 %v6292
    %7173 = vmatpush1.bf16.msra.mxu0 %v6291
    %7174 = vmatprep.subr.bf16.mxu0 %v6284
    %7175 = vmatpush1.bf16.msra.mxu0 %v6283
    %7176 = vmatprep.subr.bf16.mxu0 %v6276
    %7177 = vmatpush1.bf16.msra.mxu0 %v6275
    %7178 = vmatprep.subr.bf16.mxu0 %v6268
    %7179 = vmatpush1.bf16.msra.mxu0 %v6267
    %7180 = vmatprep.subr.bf16.mxu0 %v6260
    %7181 = vmatpush1.bf16.msra.mxu0 %v6259
    %7182 = vmatprep.subr.bf16.mxu0 %v6252
    %7183 = vmatpush1.bf16.msra.mxu0 %v6251
    %7184 = vmatprep.subr.bf16.mxu0 %v6244
    %7185 = vmatpush1.bf16.msra.mxu0 %v6243
    %7186 = vmatprep.subr.bf16.mxu0 %v6236
    %7187 = vmatpush1.bf16.msra.mxu0 %v6235
    %7188 = vmatprep.subr.bf16.mxu0 %v6356
    %7189 = vmatpush2.bf16.msra.mxu0 %v6355
    %7190 = vmatprep.subr.bf16.mxu0 %v6348
    %7191 = vmatpush2.bf16.msra.mxu0 %v6347
    %7192 = vmatprep.subr.bf16.mxu0 %v6340
    %7193 = vmatpush2.bf16.msra.mxu0 %v6339
    %7194 = vmatprep.subr.bf16.mxu0 %v6332
    %7195 = vmatpush2.bf16.msra.mxu0 %v6331
    %7196 = vmatprep.subr.bf16.mxu0 %v6324
    %7197 = vmatpush2.bf16.msra.mxu0 %v6323
    %7198 = vmatprep.subr.bf16.mxu0 %v6316
    %7199 = vmatpush2.bf16.msra.mxu0 %v6315
    %7200 = vmatprep.subr.bf16.mxu0 %v6308
    %7201 = vmatpush2.bf16.msra.mxu0 %v6307
    %7202 = vmatprep.subr.bf16.mxu0 %v6300
    %7203 = vmatpush2.bf16.msra.mxu0 %v6299
    %7204 = vmatprep.mubr.bf16.mxu0 %v4012
    %7205 = vmatmul.mubr.bf16.gmra.mxu0 %v4011
    %v7206 = vpop.f32.mrf.mxu0
    %v7207 = vadd.f32 %v7166, %v7206
    %v7208 = vpop.f32.mrf.mxu0
    %v7209 = vadd.f32 %v7168, %v7208
    %v7210 = vpop.f32.mrf.mxu0
    %v7211 = vpop.f32.mrf.mxu0
    %7212 = vdwg.mxu0
    %7213 = vmatprep.subr.bf16.mxu0 %v6420
    %7214 = vmatpush1.bf16.msra.mxu0 %v6419
    %7215 = vmatprep.subr.bf16.mxu0 %v6412
    %7216 = vmatpush1.bf16.msra.mxu0 %v6411
    %7217 = vmatprep.subr.bf16.mxu0 %v6404
    %7218 = vmatpush1.bf16.msra.mxu0 %v6403
    %7219 = vmatprep.subr.bf16.mxu0 %v6396
    %7220 = vmatpush1.bf16.msra.mxu0 %v6395
    %7221 = vmatprep.subr.bf16.mxu0 %v6388
    %7222 = vmatpush1.bf16.msra.mxu0 %v6387
    %7223 = vmatprep.subr.bf16.mxu0 %v6380
    %7224 = vmatpush1.bf16.msra.mxu0 %v6379
    %7225 = vmatprep.subr.bf16.mxu0 %v6372
    %7226 = vmatpush1.bf16.msra.mxu0 %v6371
    %7227 = vmatprep.subr.bf16.mxu0 %v6364
    %7228 = vmatpush1.bf16.msra.mxu0 %v6363
    %7229 = vmatprep.subr.bf16.mxu0 %v6484
    %7230 = vmatpush2.bf16.msra.mxu0 %v6483
    %7231 = vmatprep.subr.bf16.mxu0 %v6476
    %7232 = vmatpush2.bf16.msra.mxu0 %v6475
    %7233 = vmatprep.subr.bf16.mxu0 %v6468
    %7234 = vmatpush2.bf16.msra.mxu0 %v6467
    %7235 = vmatprep.subr.bf16.mxu0 %v6460
    %7236 = vmatpush2.bf16.msra.mxu0 %v6459
    %7237 = vmatprep.subr.bf16.mxu0 %v6452
    %7238 = vmatpush2.bf16.msra.mxu0 %v6451
    %7239 = vmatprep.subr.bf16.mxu0 %v6444
    %7240 = vmatpush2.bf16.msra.mxu0 %v6443
    %7241 = vmatprep.subr.bf16.mxu0 %v6436
    %7242 = vmatpush2.bf16.msra.mxu0 %v6435
    %7243 = vmatprep.subr.bf16.mxu0 %v6428
    %7244 = vmatpush2.bf16.msra.mxu0 %v6427
    %7245 = vmatprep.mubr.bf16.mxu0 %v4014
    %7246 = vmatmul.mubr.bf16.gmra.mxu0 %v4013
    %v7247 = vpop.f32.mrf.mxu0
    %v7248 = vadd.f32 %v7207, %v7247
    %v7249 = vpop.f32.mrf.mxu0
    %v7250 = vadd.f32 %v7209, %v7249
    %v7251 = vpop.f32.mrf.mxu0
    %v7252 = vpop.f32.mrf.mxu0
    %7253 = vdwg.mxu0
    %7254 = vmatprep.subr.bf16.mxu0 %v6548
    %7255 = vmatpush1.bf16.msra.mxu0 %v6547
    %7256 = vmatprep.subr.bf16.mxu0 %v6540
    %7257 = vmatpush1.bf16.msra.mxu0 %v6539
    %7258 = vmatprep.subr.bf16.mxu0 %v6532
    %7259 = vmatpush1.bf16.msra.mxu0 %v6531
    %7260 = vmatprep.subr.bf16.mxu0 %v6524
    %7261 = vmatpush1.bf16.msra.mxu0 %v6523
    %7262 = vmatprep.subr.bf16.mxu0 %v6516
    %7263 = vmatpush1.bf16.msra.mxu0 %v6515
    %7264 = vmatprep.subr.bf16.mxu0 %v6508
    %7265 = vmatpush1.bf16.msra.mxu0 %v6507
    %7266 = vmatprep.subr.bf16.mxu0 %v6500
    %7267 = vmatpush1.bf16.msra.mxu0 %v6499
    %7268 = vmatprep.subr.bf16.mxu0 %v6492
    %7269 = vmatpush1.bf16.msra.mxu0 %v6491
    %7270 = vmatprep.subr.bf16.mxu0 %v6612
    %7271 = vmatpush2.bf16.msra.mxu0 %v6611
    %7272 = vmatprep.subr.bf16.mxu0 %v6604
    %7273 = vmatpush2.bf16.msra.mxu0 %v6603
    %7274 = vmatprep.subr.bf16.mxu0 %v6596
    %7275 = vmatpush2.bf16.msra.mxu0 %v6595
    %7276 = vmatprep.subr.bf16.mxu0 %v6588
    %7277 = vmatpush2.bf16.msra.mxu0 %v6587
    %7278 = vmatprep.subr.bf16.mxu0 %v6580
    %7279 = vmatpush2.bf16.msra.mxu0 %v6579
    %7280 = vmatprep.subr.bf16.mxu0 %v6572
    %7281 = vmatpush2.bf16.msra.mxu0 %v6571
    %7282 = vmatprep.subr.bf16.mxu0 %v6564
    %7283 = vmatpush2.bf16.msra.mxu0 %v6563
    %7284 = vmatprep.subr.bf16.mxu0 %v6556
    %7285 = vmatpush2.bf16.msra.mxu0 %v6555
    %7286 = vmatprep.mubr.bf16.mxu0 %v4016
    %7287 = vmatmul.mubr.bf16.gmra.mxu0 %v4015
    %v7288 = vpop.f32.mrf.mxu0
    %v7289 = vadd.f32 %v7248, %v7288
    %v7290 = vpop.f32.mrf.mxu0
    %v7291 = vadd.f32 %v7250, %v7290
    %v7292 = vpop.f32.mrf.mxu0
    %v7293 = vpop.f32.mrf.mxu0
    %7294 = vdwg.mxu0
    %7295 = vmatprep.subr.bf16.mxu0 %v6166
    %7296 = vmatpush1.bf16.msra.mxu0 %v6165
    %7297 = vmatprep.subr.bf16.mxu0 %v6158
    %7298 = vmatpush1.bf16.msra.mxu0 %v6157
    %7299 = vmatprep.subr.bf16.mxu0 %v6150
    %7300 = vmatpush1.bf16.msra.mxu0 %v6149
    %7301 = vmatprep.subr.bf16.mxu0 %v6142
    %7302 = vmatpush1.bf16.msra.mxu0 %v6141
    %7303 = vmatprep.subr.bf16.mxu0 %v6134
    %7304 = vmatpush1.bf16.msra.mxu0 %v6133
    %7305 = vmatprep.subr.bf16.mxu0 %v6126
    %7306 = vmatpush1.bf16.msra.mxu0 %v6125
    %7307 = vmatprep.subr.bf16.mxu0 %v6118
    %7308 = vmatpush1.bf16.msra.mxu0 %v6117
    %7309 = vmatprep.subr.bf16.mxu0 %v6110
    %7310 = vmatpush1.bf16.msra.mxu0 %v6109
    %7311 = vmatprep.subr.bf16.mxu0 %v6230
    %7312 = vmatpush2.bf16.msra.mxu0 %v6229
    %7313 = vmatprep.subr.bf16.mxu0 %v6222
    %7314 = vmatpush2.bf16.msra.mxu0 %v6221
    %7315 = vmatprep.subr.bf16.mxu0 %v6214
    %7316 = vmatpush2.bf16.msra.mxu0 %v6213
    %7317 = vmatprep.subr.bf16.mxu0 %v6206
    %7318 = vmatpush2.bf16.msra.mxu0 %v6205
    %7319 = vmatprep.subr.bf16.mxu0 %v6198
    %7320 = vmatpush2.bf16.msra.mxu0 %v6197
    %7321 = vmatprep.subr.bf16.mxu0 %v6190
    %7322 = vmatpush2.bf16.msra.mxu0 %v6189
    %7323 = vmatprep.subr.bf16.mxu0 %v6182
    %7324 = vmatpush2.bf16.msra.mxu0 %v6181
    %7325 = vmatprep.subr.bf16.mxu0 %v6174
    %7326 = vmatpush2.bf16.msra.mxu0 %v6173
    %7327 = vmatprep.mubr.bf16.mxu0 %v4010
    %7328 = vmatmul.mubr.bf16.gmra.mxu0 %v4009
    %v7329 = vpop.f32.mrf.mxu0
    %v7330 = vadd.f32 %v4542, %v7329
    %v7331 = vpop.f32.mrf.mxu0
    %v7332 = vadd.f32 %v4546, %v7331
    %v7333 = vpop.f32.mrf.mxu0
    %v7334 = vpop.f32.mrf.mxu0
    %7335 = vdwg.mxu0
    %7336 = vmatprep.subr.bf16.mxu0 %v6294
    %7337 = vmatpush1.bf16.msra.mxu0 %v6293
    %7338 = vmatprep.subr.bf16.mxu0 %v6286
    %7339 = vmatpush1.bf16.msra.mxu0 %v6285
    %7340 = vmatprep.subr.bf16.mxu0 %v6278
    %7341 = vmatpush1.bf16.msra.mxu0 %v6277
    %7342 = vmatprep.subr.bf16.mxu0 %v6270
    %7343 = vmatpush1.bf16.msra.mxu0 %v6269
    %7344 = vmatprep.subr.bf16.mxu0 %v6262
    %7345 = vmatpush1.bf16.msra.mxu0 %v6261
    %7346 = vmatprep.subr.bf16.mxu0 %v6254
    %7347 = vmatpush1.bf16.msra.mxu0 %v6253
    %7348 = vmatprep.subr.bf16.mxu0 %v6246
    %7349 = vmatpush1.bf16.msra.mxu0 %v6245
    %7350 = vmatprep.subr.bf16.mxu0 %v6238
    %7351 = vmatpush1.bf16.msra.mxu0 %v6237
    %7352 = vmatprep.subr.bf16.mxu0 %v6358
    %7353 = vmatpush2.bf16.msra.mxu0 %v6357
    %7354 = vmatprep.subr.bf16.mxu0 %v6350
    %7355 = vmatpush2.bf16.msra.mxu0 %v6349
    %7356 = vmatprep.subr.bf16.mxu0 %v6342
    %7357 = vmatpush2.bf16.msra.mxu0 %v6341
    %7358 = vmatprep.subr.bf16.mxu0 %v6334
    %7359 = vmatpush2.bf16.msra.mxu0 %v6333
    %7360 = vmatprep.subr.bf16.mxu0 %v6326
    %7361 = vmatpush2.bf16.msra.mxu0 %v6325
    %7362 = vmatprep.subr.bf16.mxu0 %v6318
    %7363 = vmatpush2.bf16.msra.mxu0 %v6317
    %7364 = vmatprep.subr.bf16.mxu0 %v6310
    %7365 = vmatpush2.bf16.msra.mxu0 %v6309
    %7366 = vmatprep.subr.bf16.mxu0 %v6302
    %7367 = vmatpush2.bf16.msra.mxu0 %v6301
    %7368 = vmatprep.mubr.bf16.mxu0 %v4012
    %7369 = vmatmul.mubr.bf16.gmra.mxu0 %v4011
    %v7370 = vpop.f32.mrf.mxu0
    %v7371 = vadd.f32 %v7330, %v7370
    %v7372 = vpop.f32.mrf.mxu0
    %v7373 = vadd.f32 %v7332, %v7372
    %v7374 = vpop.f32.mrf.mxu0
    %v7375 = vpop.f32.mrf.mxu0
    %7376 = vdwg.mxu0
    %7377 = vmatprep.subr.bf16.mxu0 %v6422
    %7378 = vmatpush1.bf16.msra.mxu0 %v6421
    %7379 = vmatprep.subr.bf16.mxu0 %v6414
    %7380 = vmatpush1.bf16.msra.mxu0 %v6413
    %7381 = vmatprep.subr.bf16.mxu0 %v6406
    %7382 = vmatpush1.bf16.msra.mxu0 %v6405
    %7383 = vmatprep.subr.bf16.mxu0 %v6398
    %7384 = vmatpush1.bf16.msra.mxu0 %v6397
    %7385 = vmatprep.subr.bf16.mxu0 %v6390
    %7386 = vmatpush1.bf16.msra.mxu0 %v6389
    %7387 = vmatprep.subr.bf16.mxu0 %v6382
    %7388 = vmatpush1.bf16.msra.mxu0 %v6381
    %7389 = vmatprep.subr.bf16.mxu0 %v6374
    %7390 = vmatpush1.bf16.msra.mxu0 %v6373
    %7391 = vmatprep.subr.bf16.mxu0 %v6366
    %7392 = vmatpush1.bf16.msra.mxu0 %v6365
    %7393 = vmatprep.subr.bf16.mxu0 %v6486
    %7394 = vmatpush2.bf16.msra.mxu0 %v6485
    %7395 = vmatprep.subr.bf16.mxu0 %v6478
    %7396 = vmatpush2.bf16.msra.mxu0 %v6477
    %7397 = vmatprep.subr.bf16.mxu0 %v6470
    %7398 = vmatpush2.bf16.msra.mxu0 %v6469
    %7399 = vmatprep.subr.bf16.mxu0 %v6462
    %7400 = vmatpush2.bf16.msra.mxu0 %v6461
    %7401 = vmatprep.subr.bf16.mxu0 %v6454
    %7402 = vmatpush2.bf16.msra.mxu0 %v6453
    %7403 = vmatprep.subr.bf16.mxu0 %v6446
    %7404 = vmatpush2.bf16.msra.mxu0 %v6445
    %7405 = vmatprep.subr.bf16.mxu0 %v6438
    %7406 = vmatpush2.bf16.msra.mxu0 %v6437
    %7407 = vmatprep.subr.bf16.mxu0 %v6430
    %7408 = vmatpush2.bf16.msra.mxu0 %v6429
    %7409 = vmatprep.mubr.bf16.mxu0 %v4014
    %7410 = vmatmul.mubr.bf16.gmra.mxu0 %v4013
    %v7411 = vpop.f32.mrf.mxu0
    %v7412 = vadd.f32 %v7371, %v7411
    %v7413 = vpop.f32.mrf.mxu0
    %v7414 = vadd.f32 %v7373, %v7413
    %v7415 = vpop.f32.mrf.mxu0
    %v7416 = vpop.f32.mrf.mxu0
    %7417 = vdwg.mxu0
    %7418 = vmatprep.subr.bf16.mxu0 %v6550
    %7419 = vmatpush1.bf16.msra.mxu0 %v6549
    %7420 = vmatprep.subr.bf16.mxu0 %v6542
    %7421 = vmatpush1.bf16.msra.mxu0 %v6541
    %7422 = vmatprep.subr.bf16.mxu0 %v6534
    %7423 = vmatpush1.bf16.msra.mxu0 %v6533
    %7424 = vmatprep.subr.bf16.mxu0 %v6526
    %7425 = vmatpush1.bf16.msra.mxu0 %v6525
    %7426 = vmatprep.subr.bf16.mxu0 %v6518
    %7427 = vmatpush1.bf16.msra.mxu0 %v6517
    %7428 = vmatprep.subr.bf16.mxu0 %v6510
    %7429 = vmatpush1.bf16.msra.mxu0 %v6509
    %7430 = vmatprep.subr.bf16.mxu0 %v6502
    %7431 = vmatpush1.bf16.msra.mxu0 %v6501
    %7432 = vmatprep.subr.bf16.mxu0 %v6494
    %7433 = vmatpush1.bf16.msra.mxu0 %v6493
    %7434 = vmatprep.subr.bf16.mxu0 %v6614
    %7435 = vmatpush2.bf16.msra.mxu0 %v6613
    %7436 = vmatprep.subr.bf16.mxu0 %v6606
    %7437 = vmatpush2.bf16.msra.mxu0 %v6605
    %7438 = vmatprep.subr.bf16.mxu0 %v6598
    %7439 = vmatpush2.bf16.msra.mxu0 %v6597
    %7440 = vmatprep.subr.bf16.mxu0 %v6590
    %7441 = vmatpush2.bf16.msra.mxu0 %v6589
    %7442 = vmatprep.subr.bf16.mxu0 %v6582
    %7443 = vmatpush2.bf16.msra.mxu0 %v6581
    %7444 = vmatprep.subr.bf16.mxu0 %v6574
    %7445 = vmatpush2.bf16.msra.mxu0 %v6573
    %7446 = vmatprep.subr.bf16.mxu0 %v6566
    %7447 = vmatpush2.bf16.msra.mxu0 %v6565
    %7448 = vmatprep.subr.bf16.mxu0 %v6558
    %7449 = vmatpush2.bf16.msra.mxu0 %v6557
    %7450 = vmatprep.mubr.bf16.mxu0 %v4016
    %7451 = vmatmul.mubr.bf16.gmra.mxu0 %v4015
    %v7452 = vpop.f32.mrf.mxu0
    %v7453 = vadd.f32 %v7412, %v7452
    %v7454 = vpop.f32.mrf.mxu0
    %v7455 = vadd.f32 %v7414, %v7454
    %v7456 = vpop.f32.mrf.mxu0
    %v7457 = vpop.f32.mrf.mxu0
    %7458 = vdwg.mxu0
    %7459 = vmatprep.subr.bf16.mxu0 %v6168
    %7460 = vmatpush1.bf16.msra.mxu0 %v6167
    %7461 = vmatprep.subr.bf16.mxu0 %v6160
    %7462 = vmatpush1.bf16.msra.mxu0 %v6159
    %7463 = vmatprep.subr.bf16.mxu0 %v6152
    %7464 = vmatpush1.bf16.msra.mxu0 %v6151
    %7465 = vmatprep.subr.bf16.mxu0 %v6144
    %7466 = vmatpush1.bf16.msra.mxu0 %v6143
    %7467 = vmatprep.subr.bf16.mxu0 %v6136
    %7468 = vmatpush1.bf16.msra.mxu0 %v6135
    %7469 = vmatprep.subr.bf16.mxu0 %v6128
    %7470 = vmatpush1.bf16.msra.mxu0 %v6127
    %7471 = vmatprep.subr.bf16.mxu0 %v6120
    %7472 = vmatpush1.bf16.msra.mxu0 %v6119
    %7473 = vmatprep.subr.bf16.mxu0 %v6112
    %7474 = vmatpush1.bf16.msra.mxu0 %v6111
    %7475 = vmatprep.subr.bf16.mxu0 %v6232
    %7476 = vmatpush2.bf16.msra.mxu0 %v6231
    %7477 = vmatprep.subr.bf16.mxu0 %v6224
    %7478 = vmatpush2.bf16.msra.mxu0 %v6223
    %7479 = vmatprep.subr.bf16.mxu0 %v6216
    %7480 = vmatpush2.bf16.msra.mxu0 %v6215
    %7481 = vmatprep.subr.bf16.mxu0 %v6208
    %7482 = vmatpush2.bf16.msra.mxu0 %v6207
    %7483 = vmatprep.subr.bf16.mxu0 %v6200
    %7484 = vmatpush2.bf16.msra.mxu0 %v6199
    %7485 = vmatprep.subr.bf16.mxu0 %v6192
    %7486 = vmatpush2.bf16.msra.mxu0 %v6191
    %7487 = vmatprep.subr.bf16.mxu0 %v6184
    %7488 = vmatpush2.bf16.msra.mxu0 %v6183
    %7489 = vmatprep.subr.bf16.mxu0 %v6176
    %7490 = vmatpush2.bf16.msra.mxu0 %v6175
    %7491 = vmatprep.mubr.bf16.mxu0 %v4010
    %7492 = vmatmul.mubr.bf16.gmra.mxu0 %v4009
    %v7493 = vpop.f32.mrf.mxu0
    %v7494 = vadd.f32 %v4550, %v7493
    %v7495 = vpop.f32.mrf.mxu0
    %v7496 = vadd.f32 %v4554, %v7495
    %v7497 = vpop.f32.mrf.mxu0
    %v7498 = vpop.f32.mrf.mxu0
    %7499 = vdwg.mxu0
    %7500 = vmatprep.subr.bf16.mxu0 %v6296
    %7501 = vmatpush1.bf16.msra.mxu0 %v6295
    %7502 = vmatprep.subr.bf16.mxu0 %v6288
    %7503 = vmatpush1.bf16.msra.mxu0 %v6287
    %7504 = vmatprep.subr.bf16.mxu0 %v6280
    %7505 = vmatpush1.bf16.msra.mxu0 %v6279
    %7506 = vmatprep.subr.bf16.mxu0 %v6272
    %7507 = vmatpush1.bf16.msra.mxu0 %v6271
    %7508 = vmatprep.subr.bf16.mxu0 %v6264
    %7509 = vmatpush1.bf16.msra.mxu0 %v6263
    %7510 = vmatprep.subr.bf16.mxu0 %v6256
    %7511 = vmatpush1.bf16.msra.mxu0 %v6255
    %7512 = vmatprep.subr.bf16.mxu0 %v6248
    %7513 = vmatpush1.bf16.msra.mxu0 %v6247
    %7514 = vmatprep.subr.bf16.mxu0 %v6240
    %7515 = vmatpush1.bf16.msra.mxu0 %v6239
    %7516 = vmatprep.subr.bf16.mxu0 %v6360
    %7517 = vmatpush2.bf16.msra.mxu0 %v6359
    %7518 = vmatprep.subr.bf16.mxu0 %v6352
    %7519 = vmatpush2.bf16.msra.mxu0 %v6351
    %7520 = vmatprep.subr.bf16.mxu0 %v6344
    %7521 = vmatpush2.bf16.msra.mxu0 %v6343
    %7522 = vmatprep.subr.bf16.mxu0 %v6336
    %7523 = vmatpush2.bf16.msra.mxu0 %v6335
    %7524 = vmatprep.subr.bf16.mxu0 %v6328
    %7525 = vmatpush2.bf16.msra.mxu0 %v6327
    %7526 = vmatprep.subr.bf16.mxu0 %v6320
    %7527 = vmatpush2.bf16.msra.mxu0 %v6319
    %7528 = vmatprep.subr.bf16.mxu0 %v6312
    %7529 = vmatpush2.bf16.msra.mxu0 %v6311
    %7530 = vmatprep.subr.bf16.mxu0 %v6304
    %7531 = vmatpush2.bf16.msra.mxu0 %v6303
    %7532 = vmatprep.mubr.bf16.mxu0 %v4012
    %7533 = vmatmul.mubr.bf16.gmra.mxu0 %v4011
    %v7534 = vpop.f32.mrf.mxu0
    %v7535 = vadd.f32 %v7494, %v7534
    %v7536 = vpop.f32.mrf.mxu0
    %v7537 = vadd.f32 %v7496, %v7536
    %v7538 = vpop.f32.mrf.mxu0
    %v7539 = vpop.f32.mrf.mxu0
    %7540 = vdwg.mxu0
    %7541 = vmatprep.subr.bf16.mxu0 %v6424
    %7542 = vmatpush1.bf16.msra.mxu0 %v6423
    %7543 = vmatprep.subr.bf16.mxu0 %v6416
    %7544 = vmatpush1.bf16.msra.mxu0 %v6415
    %7545 = vmatprep.subr.bf16.mxu0 %v6408
    %7546 = vmatpush1.bf16.msra.mxu0 %v6407
    %7547 = vmatprep.subr.bf16.mxu0 %v6400
    %7548 = vmatpush1.bf16.msra.mxu0 %v6399
    %7549 = vmatprep.subr.bf16.mxu0 %v6392
    %7550 = vmatpush1.bf16.msra.mxu0 %v6391
    %7551 = vmatprep.subr.bf16.mxu0 %v6384
    %7552 = vmatpush1.bf16.msra.mxu0 %v6383
    %7553 = vmatprep.subr.bf16.mxu0 %v6376
    %7554 = vmatpush1.bf16.msra.mxu0 %v6375
    %7555 = vmatprep.subr.bf16.mxu0 %v6368
    %7556 = vmatpush1.bf16.msra.mxu0 %v6367
    %7557 = vmatprep.subr.bf16.mxu0 %v6488
    %7558 = vmatpush2.bf16.msra.mxu0 %v6487
    %7559 = vmatprep.subr.bf16.mxu0 %v6480
    %7560 = vmatpush2.bf16.msra.mxu0 %v6479
    %7561 = vmatprep.subr.bf16.mxu0 %v6472
    %7562 = vmatpush2.bf16.msra.mxu0 %v6471
    %7563 = vmatprep.subr.bf16.mxu0 %v6464
    %7564 = vmatpush2.bf16.msra.mxu0 %v6463
    %7565 = vmatprep.subr.bf16.mxu0 %v6456
    %7566 = vmatpush2.bf16.msra.mxu0 %v6455
    %7567 = vmatprep.subr.bf16.mxu0 %v6448
    %7568 = vmatpush2.bf16.msra.mxu0 %v6447
    %7569 = vmatprep.subr.bf16.mxu0 %v6440
    %7570 = vmatpush2.bf16.msra.mxu0 %v6439
    %7571 = vmatprep.subr.bf16.mxu0 %v6432
    %7572 = vmatpush2.bf16.msra.mxu0 %v6431
    %7573 = vmatprep.mubr.bf16.mxu0 %v4014
    %7574 = vmatmul.mubr.bf16.gmra.mxu0 %v4013
    %v7575 = vpop.f32.mrf.mxu0
    %v7576 = vadd.f32 %v7535, %v7575
    %v7577 = vpop.f32.mrf.mxu0
    %v7578 = vadd.f32 %v7537, %v7577
    %v7579 = vpop.f32.mrf.mxu0
    %v7580 = vpop.f32.mrf.mxu0
    %7581 = vdwg.mxu0
    %7582 = vmatprep.subr.bf16.mxu0 %v6552
    %7583 = vmatpush1.bf16.msra.mxu0 %v6551
    %7584 = vmatprep.subr.bf16.mxu0 %v6544
    %7585 = vmatpush1.bf16.msra.mxu0 %v6543
    %7586 = vmatprep.subr.bf16.mxu0 %v6536
    %7587 = vmatpush1.bf16.msra.mxu0 %v6535
    %7588 = vmatprep.subr.bf16.mxu0 %v6528
    %7589 = vmatpush1.bf16.msra.mxu0 %v6527
    %7590 = vmatprep.subr.bf16.mxu0 %v6520
    %7591 = vmatpush1.bf16.msra.mxu0 %v6519
    %7592 = vmatprep.subr.bf16.mxu0 %v6512
    %7593 = vmatpush1.bf16.msra.mxu0 %v6511
    %7594 = vmatprep.subr.bf16.mxu0 %v6504
    %7595 = vmatpush1.bf16.msra.mxu0 %v6503
    %7596 = vmatprep.subr.bf16.mxu0 %v6496
    %7597 = vmatpush1.bf16.msra.mxu0 %v6495
    %7598 = vmatprep.subr.bf16.mxu0 %v6616
    %7599 = vmatpush2.bf16.msra.mxu0 %v6615
    %7600 = vmatprep.subr.bf16.mxu0 %v6608
    %7601 = vmatpush2.bf16.msra.mxu0 %v6607
    %7602 = vmatprep.subr.bf16.mxu0 %v6600
    %7603 = vmatpush2.bf16.msra.mxu0 %v6599
    %7604 = vmatprep.subr.bf16.mxu0 %v6592
    %7605 = vmatpush2.bf16.msra.mxu0 %v6591
    %7606 = vmatprep.subr.bf16.mxu0 %v6584
    %7607 = vmatpush2.bf16.msra.mxu0 %v6583
    %7608 = vmatprep.subr.bf16.mxu0 %v6576
    %7609 = vmatpush2.bf16.msra.mxu0 %v6575
    %7610 = vmatprep.subr.bf16.mxu0 %v6568
    %7611 = vmatpush2.bf16.msra.mxu0 %v6567
    %7612 = vmatprep.subr.bf16.mxu0 %v6560
    %7613 = vmatpush2.bf16.msra.mxu0 %v6559
    %7614 = vmatprep.mubr.bf16.mxu0 %v4016
    %7615 = vmatmul.mubr.bf16.gmra.mxu0 %v4015
    %v7616 = vpop.f32.mrf.mxu0
    %v7617 = vadd.f32 %v7576, %v7616
    %v7618 = vpop.f32.mrf.mxu0
    %v7619 = vadd.f32 %v7578, %v7618
    %v7620 = vpop.f32.mrf.mxu0
    %v7621 = vpop.f32.mrf.mxu0
    %7622 = vdwg.mxu0
    %7623 = vmatprep.subr.bf16.mxu0 %v6170
    %7624 = vmatpush1.bf16.msra.mxu0 %v6169
    %7625 = vmatprep.subr.bf16.mxu0 %v6162
    %7626 = vmatpush1.bf16.msra.mxu0 %v6161
    %7627 = vmatprep.subr.bf16.mxu0 %v6154
    %7628 = vmatpush1.bf16.msra.mxu0 %v6153
    %7629 = vmatprep.subr.bf16.mxu0 %v6146
    %7630 = vmatpush1.bf16.msra.mxu0 %v6145
    %7631 = vmatprep.subr.bf16.mxu0 %v6138
    %7632 = vmatpush1.bf16.msra.mxu0 %v6137
    %7633 = vmatprep.subr.bf16.mxu0 %v6130
    %7634 = vmatpush1.bf16.msra.mxu0 %v6129
    %7635 = vmatprep.subr.bf16.mxu0 %v6122
    %7636 = vmatpush1.bf16.msra.mxu0 %v6121
    %7637 = vmatprep.subr.bf16.mxu0 %v6114
    %7638 = vmatpush1.bf16.msra.mxu0 %v6113
    %7639 = vmatprep.subr.bf16.mxu0 %v6234
    %7640 = vmatpush2.bf16.msra.mxu0 %v6233
    %7641 = vmatprep.subr.bf16.mxu0 %v6226
    %7642 = vmatpush2.bf16.msra.mxu0 %v6225
    %7643 = vmatprep.subr.bf16.mxu0 %v6218
    %7644 = vmatpush2.bf16.msra.mxu0 %v6217
    %7645 = vmatprep.subr.bf16.mxu0 %v6210
    %7646 = vmatpush2.bf16.msra.mxu0 %v6209
    %7647 = vmatprep.subr.bf16.mxu0 %v6202
    %7648 = vmatpush2.bf16.msra.mxu0 %v6201
    %7649 = vmatprep.subr.bf16.mxu0 %v6194
    %7650 = vmatpush2.bf16.msra.mxu0 %v6193
    %7651 = vmatprep.subr.bf16.mxu0 %v6186
    %7652 = vmatpush2.bf16.msra.mxu0 %v6185
    %7653 = vmatprep.subr.bf16.mxu0 %v6178
    %7654 = vmatpush2.bf16.msra.mxu0 %v6177
    %7655 = vmatprep.mubr.bf16.mxu0 %v4010
    %7656 = vmatmul.mubr.bf16.gmra.mxu0 %v4009
    %v7657 = vpop.f32.mrf.mxu0
    %v7658 = vadd.f32 %v4558, %v7657
    %v7659 = vpop.f32.mrf.mxu0
    %v7660 = vadd.f32 %v4562, %v7659
    %v7661 = vpop.f32.mrf.mxu0
    %v7662 = vpop.f32.mrf.mxu0
    %7663 = vdwg.mxu0
    %7664 = vmatprep.subr.bf16.mxu0 %v6298
    %7665 = vmatpush1.bf16.msra.mxu0 %v6297
    %7666 = vmatprep.subr.bf16.mxu0 %v6290
    %7667 = vmatpush1.bf16.msra.mxu0 %v6289
    %7668 = vmatprep.subr.bf16.mxu0 %v6282
    %7669 = vmatpush1.bf16.msra.mxu0 %v6281
    %7670 = vmatprep.subr.bf16.mxu0 %v6274
    %7671 = vmatpush1.bf16.msra.mxu0 %v6273
    %7672 = vmatprep.subr.bf16.mxu0 %v6266
    %7673 = vmatpush1.bf16.msra.mxu0 %v6265
    %7674 = vmatprep.subr.bf16.mxu0 %v6258
    %7675 = vmatpush1.bf16.msra.mxu0 %v6257
    %7676 = vmatprep.subr.bf16.mxu0 %v6250
    %7677 = vmatpush1.bf16.msra.mxu0 %v6249
    %7678 = vmatprep.subr.bf16.mxu0 %v6242
    %7679 = vmatpush1.bf16.msra.mxu0 %v6241
    %7680 = vmatprep.subr.bf16.mxu0 %v6362
    %7681 = vmatpush2.bf16.msra.mxu0 %v6361
    %7682 = vmatprep.subr.bf16.mxu0 %v6354
    %7683 = vmatpush2.bf16.msra.mxu0 %v6353
    %7684 = vmatprep.subr.bf16.mxu0 %v6346
    %7685 = vmatpush2.bf16.msra.mxu0 %v6345
    %7686 = vmatprep.subr.bf16.mxu0 %v6338
    %7687 = vmatpush2.bf16.msra.mxu0 %v6337
    %7688 = vmatprep.subr.bf16.mxu0 %v6330
    %7689 = vmatpush2.bf16.msra.mxu0 %v6329
    %7690 = vmatprep.subr.bf16.mxu0 %v6322
    %7691 = vmatpush2.bf16.msra.mxu0 %v6321
    %7692 = vmatprep.subr.bf16.mxu0 %v6314
    %7693 = vmatpush2.bf16.msra.mxu0 %v6313
    %7694 = vmatprep.subr.bf16.mxu0 %v6306
    %7695 = vmatpush2.bf16.msra.mxu0 %v6305
    %7696 = vmatprep.mubr.bf16.mxu0 %v4012
    %7697 = vmatmul.mubr.bf16.gmra.mxu0 %v4011
    %v7698 = vpop.f32.mrf.mxu0
    %v7699 = vadd.f32 %v7658, %v7698
    %v7700 = vpop.f32.mrf.mxu0
    %v7701 = vadd.f32 %v7660, %v7700
    %v7702 = vpop.f32.mrf.mxu0
    %v7703 = vpop.f32.mrf.mxu0
    %7704 = vdwg.mxu0
    %7705 = vmatprep.subr.bf16.mxu0 %v6426
    %7706 = vmatpush1.bf16.msra.mxu0 %v6425
    %7707 = vmatprep.subr.bf16.mxu0 %v6418
    %7708 = vmatpush1.bf16.msra.mxu0 %v6417
    %7709 = vmatprep.subr.bf16.mxu0 %v6410
    %7710 = vmatpush1.bf16.msra.mxu0 %v6409
    %7711 = vmatprep.subr.bf16.mxu0 %v6402
    %7712 = vmatpush1.bf16.msra.mxu0 %v6401
    %7713 = vmatprep.subr.bf16.mxu0 %v6394
    %7714 = vmatpush1.bf16.msra.mxu0 %v6393
    %7715 = vmatprep.subr.bf16.mxu0 %v6386
    %7716 = vmatpush1.bf16.msra.mxu0 %v6385
    %7717 = vmatprep.subr.bf16.mxu0 %v6378
    %7718 = vmatpush1.bf16.msra.mxu0 %v6377
    %7719 = vmatprep.subr.bf16.mxu0 %v6370
    %7720 = vmatpush1.bf16.msra.mxu0 %v6369
    %7721 = vmatprep.subr.bf16.mxu0 %v6490
    %7722 = vmatpush2.bf16.msra.mxu0 %v6489
    %7723 = vmatprep.subr.bf16.mxu0 %v6482
    %7724 = vmatpush2.bf16.msra.mxu0 %v6481
    %7725 = vmatprep.subr.bf16.mxu0 %v6474
    %7726 = vmatpush2.bf16.msra.mxu0 %v6473
    %7727 = vmatprep.subr.bf16.mxu0 %v6466
    %7728 = vmatpush2.bf16.msra.mxu0 %v6465
    %7729 = vmatprep.subr.bf16.mxu0 %v6458
    %7730 = vmatpush2.bf16.msra.mxu0 %v6457
    %7731 = vmatprep.subr.bf16.mxu0 %v6450
    %7732 = vmatpush2.bf16.msra.mxu0 %v6449
    %7733 = vmatprep.subr.bf16.mxu0 %v6442
    %7734 = vmatpush2.bf16.msra.mxu0 %v6441
    %7735 = vmatprep.subr.bf16.mxu0 %v6434
    %7736 = vmatpush2.bf16.msra.mxu0 %v6433
    %7737 = vmatprep.mubr.bf16.mxu0 %v4014
    %7738 = vmatmul.mubr.bf16.gmra.mxu0 %v4013
    %v7739 = vpop.f32.mrf.mxu0
    %v7740 = vadd.f32 %v7699, %v7739
    %v7741 = vpop.f32.mrf.mxu0
    %v7742 = vadd.f32 %v7701, %v7741
    %v7743 = vpop.f32.mrf.mxu0
    %v7744 = vpop.f32.mrf.mxu0
    %7745 = vdwg.mxu0
    %7746 = vmatprep.subr.bf16.mxu0 %v6554
    %7747 = vmatpush1.bf16.msra.mxu0 %v6553
    %7748 = vmatprep.subr.bf16.mxu0 %v6546
    %7749 = vmatpush1.bf16.msra.mxu0 %v6545
    %7750 = vmatprep.subr.bf16.mxu0 %v6538
    %7751 = vmatpush1.bf16.msra.mxu0 %v6537
    %7752 = vmatprep.subr.bf16.mxu0 %v6530
    %7753 = vmatpush1.bf16.msra.mxu0 %v6529
    %7754 = vmatprep.subr.bf16.mxu0 %v6522
    %7755 = vmatpush1.bf16.msra.mxu0 %v6521
    %7756 = vmatprep.subr.bf16.mxu0 %v6514
    %7757 = vmatpush1.bf16.msra.mxu0 %v6513
    %7758 = vmatprep.subr.bf16.mxu0 %v6506
    %7759 = vmatpush1.bf16.msra.mxu0 %v6505
    %7760 = vmatprep.subr.bf16.mxu0 %v6498
    %7761 = vmatpush1.bf16.msra.mxu0 %v6497
    %7762 = vmatprep.subr.bf16.mxu0 %v6618
    %7763 = vmatpush2.bf16.msra.mxu0 %v6617
    %7764 = vmatprep.subr.bf16.mxu0 %v6610
    %7765 = vmatpush2.bf16.msra.mxu0 %v6609
    %7766 = vmatprep.subr.bf16.mxu0 %v6602
    %7767 = vmatpush2.bf16.msra.mxu0 %v6601
    %7768 = vmatprep.subr.bf16.mxu0 %v6594
    %7769 = vmatpush2.bf16.msra.mxu0 %v6593
    %7770 = vmatprep.subr.bf16.mxu0 %v6586
    %7771 = vmatpush2.bf16.msra.mxu0 %v6585
    %7772 = vmatprep.subr.bf16.mxu0 %v6578
    %7773 = vmatpush2.bf16.msra.mxu0 %v6577
    %7774 = vmatprep.subr.bf16.mxu0 %v6570
    %7775 = vmatpush2.bf16.msra.mxu0 %v6569
    %7776 = vmatprep.subr.bf16.mxu0 %v6562
    %7777 = vmatpush2.bf16.msra.mxu0 %v6561
    %7778 = vmatprep.mubr.bf16.mxu0 %v4016
    %7779 = vmatmul.mubr.bf16.gmra.mxu0 %v4015
    %v7780 = vpop.f32.mrf.mxu0
    %v7781 = vadd.f32 %v7740, %v7780
    %v7782 = vpop.f32.mrf.mxu0
    %v7783 = vadd.f32 %v7742, %v7782
    %v7784 = vpop.f32.mrf.mxu0
    %v7785 = vpop.f32.mrf.mxu0
    %7786 = vdwg.mxu0
    %v7787 = vmax.f32 %v7289, 0.0
    %v7788 = vmax.f32 %v7291, 0.0
    %v7789 = vmax.f32 %v7453, 0.0
    %v7790 = vmax.f32 %v7455, 0.0
    %v7791 = vmax.f32 %v7617, 0.0
    %v7792 = vmax.f32 %v7619, 0.0
    %v7793 = vmax.f32 %v7781, 0.0
    %v7794 = vmax.f32 %v7783, 0.0
    %v7795 = vpack.c.bf16 %v7787, %v7787
    %v7796 = vpack.c.bf16 %v7788, %v7788
    %v7797 = vpack.c.bf16 %v7789, %v7789
    %v7798 = vpack.c.bf16 %v7790, %v7790
    %v7799 = vpack.c.bf16 %v7791, %v7791
    %v7800 = vpack.c.bf16 %v7792, %v7792
    %v7801 = vpack.c.bf16 %v7793, %v7793
    %v7802 = vpack.c.bf16 %v7794, %v7794
    %v7803 = vld [vmem:[#allocation11] sm:$0xff]
    %v7804 = vld [vmem:[#allocation11 + $0x8] sm:$0xff]
    %v7805 = vld [vmem:[#allocation11 + $0x10] sm:$0xff]
    %v7806 = vld [vmem:[#allocation11 + $0x18] sm:$0xff]
    %v7807 = vld [vmem:[#allocation11 + $0x20] sm:$0xff]
    %v7808 = vld [vmem:[#allocation11 + $0x28] sm:$0xff]
    %v7809 = vld [vmem:[#allocation11 + $0x30] sm:$0xff]
    %v7810 = vld [vmem:[#allocation11 + $0x38] sm:$0xff]
    %v7811 = vld [vmem:[#allocation11 + $0x40] sm:$0xff]
    %v7812 = vld [vmem:[#allocation11 + $0x48] sm:$0xff]
    %v7813 = vld [vmem:[#allocation11 + $0x50] sm:$0xff]
    %v7814 = vld [vmem:[#allocation11 + $0x58] sm:$0xff]
    %v7815 = vld [vmem:[#allocation11 + $0x60] sm:$0xff]
    %v7816 = vld [vmem:[#allocation11 + $0x68] sm:$0xff]
    %v7817 = vld [vmem:[#allocation11 + $0x70] sm:$0xff]
    %v7818 = vld [vmem:[#allocation11 + $0x78] sm:$0xff]
    %v7819 = vld [vmem:[#allocation11 + $0x80] sm:$0xff]
    %v7820 = vld [vmem:[#allocation11 + $0x88] sm:$0xff]
    %v7821 = vld [vmem:[#allocation11 + $0x90] sm:$0xff]
    %v7822 = vld [vmem:[#allocation11 + $0x98] sm:$0xff]
    %v7823 = vld [vmem:[#allocation11 + $0xa0] sm:$0xff]
    %v7824 = vld [vmem:[#allocation11 + $0xa8] sm:$0xff]
    %v7825 = vld [vmem:[#allocation11 + $0xb0] sm:$0xff]
    %v7826 = vld [vmem:[#allocation11 + $0xb8] sm:$0xff]
    %v7827 = vld [vmem:[#allocation11 + $0xc0] sm:$0xff]
    %v7828 = vld [vmem:[#allocation11 + $0xc8] sm:$0xff]
    %v7829 = vld [vmem:[#allocation11 + $0xd0] sm:$0xff]
    %v7830 = vld [vmem:[#allocation11 + $0xd8] sm:$0xff]
    %v7831 = vld [vmem:[#allocation11 + $0xe0] sm:$0xff]
    %v7832 = vld [vmem:[#allocation11 + $0xe8] sm:$0xff]
    %v7833 = vld [vmem:[#allocation11 + $0xf0] sm:$0xff]
    %v7834 = vld [vmem:[#allocation11 + $0xf8] sm:$0xff]
    %v7835 = vld [vmem:[#allocation11 + $0x100] sm:$0xff]
    %v7836 = vld [vmem:[#allocation11 + $0x108] sm:$0xff]
    %v7837 = vld [vmem:[#allocation11 + $0x110] sm:$0xff]
    %v7838 = vld [vmem:[#allocation11 + $0x118] sm:$0xff]
    %v7839 = vld [vmem:[#allocation11 + $0x120] sm:$0xff]
    %v7840 = vld [vmem:[#allocation11 + $0x128] sm:$0xff]
    %v7841 = vld [vmem:[#allocation11 + $0x130] sm:$0xff]
    %v7842 = vld [vmem:[#allocation11 + $0x138] sm:$0xff]
    %v7843 = vld [vmem:[#allocation11 + $0x140] sm:$0xff]
    %v7844 = vld [vmem:[#allocation11 + $0x148] sm:$0xff]
    %v7845 = vld [vmem:[#allocation11 + $0x150] sm:$0xff]
    %v7846 = vld [vmem:[#allocation11 + $0x158] sm:$0xff]
    %v7847 = vld [vmem:[#allocation11 + $0x160] sm:$0xff]
    %v7848 = vld [vmem:[#allocation11 + $0x168] sm:$0xff]
    %v7849 = vld [vmem:[#allocation11 + $0x170] sm:$0xff]
    %v7850 = vld [vmem:[#allocation11 + $0x178] sm:$0xff]
    %v7851 = vld [vmem:[#allocation11 + $0x180] sm:$0xff]
    %v7852 = vld [vmem:[#allocation11 + $0x188] sm:$0xff]
    %v7853 = vld [vmem:[#allocation11 + $0x190] sm:$0xff]
    %v7854 = vld [vmem:[#allocation11 + $0x198] sm:$0xff]
    %v7855 = vld [vmem:[#allocation11 + $0x1a0] sm:$0xff]
    %v7856 = vld [vmem:[#allocation11 + $0x1a8] sm:$0xff]
    %v7857 = vld [vmem:[#allocation11 + $0x1b0] sm:$0xff]
    %v7858 = vld [vmem:[#allocation11 + $0x1b8] sm:$0xff]
    %v7859 = vld [vmem:[#allocation11 + $0x1c0] sm:$0xff]
    %v7860 = vld [vmem:[#allocation11 + $0x1c8] sm:$0xff]
    %v7861 = vld [vmem:[#allocation11 + $0x1d0] sm:$0xff]
    %v7862 = vld [vmem:[#allocation11 + $0x1d8] sm:$0xff]
    %v7863 = vld [vmem:[#allocation11 + $0x1e0] sm:$0xff]
    %v7864 = vld [vmem:[#allocation11 + $0x1e8] sm:$0xff]
    %v7865 = vld [vmem:[#allocation11 + $0x1f0] sm:$0xff]
    %v7866 = vld [vmem:[#allocation11 + $0x1f8] sm:$0xff]
    %v7867 = vld [vmem:[#allocation11 + $0x200] sm:$0xff]
    %v7868 = vld [vmem:[#allocation11 + $0x208] sm:$0xff]
    %v7869 = vld [vmem:[#allocation11 + $0x210] sm:$0xff]
    %v7870 = vld [vmem:[#allocation11 + $0x218] sm:$0xff]
    %v7871 = vld [vmem:[#allocation11 + $0x220] sm:$0xff]
    %v7872 = vld [vmem:[#allocation11 + $0x228] sm:$0xff]
    %v7873 = vld [vmem:[#allocation11 + $0x230] sm:$0xff]
    %v7874 = vld [vmem:[#allocation11 + $0x238] sm:$0xff]
    %v7875 = vld [vmem:[#allocation11 + $0x240] sm:$0xff]
    %v7876 = vld [vmem:[#allocation11 + $0x248] sm:$0xff]
    %v7877 = vld [vmem:[#allocation11 + $0x250] sm:$0xff]
    %v7878 = vld [vmem:[#allocation11 + $0x258] sm:$0xff]
    %v7879 = vld [vmem:[#allocation11 + $0x260] sm:$0xff]
    %v7880 = vld [vmem:[#allocation11 + $0x268] sm:$0xff]
    %v7881 = vld [vmem:[#allocation11 + $0x270] sm:$0xff]
    %v7882 = vld [vmem:[#allocation11 + $0x278] sm:$0xff]
    %v7883 = vld [vmem:[#allocation11 + $0x280] sm:$0xff]
    %v7884 = vld [vmem:[#allocation11 + $0x288] sm:$0xff]
    %v7885 = vld [vmem:[#allocation11 + $0x290] sm:$0xff]
    %v7886 = vld [vmem:[#allocation11 + $0x298] sm:$0xff]
    %v7887 = vld [vmem:[#allocation11 + $0x2a0] sm:$0xff]
    %v7888 = vld [vmem:[#allocation11 + $0x2a8] sm:$0xff]
    %v7889 = vld [vmem:[#allocation11 + $0x2b0] sm:$0xff]
    %v7890 = vld [vmem:[#allocation11 + $0x2b8] sm:$0xff]
    %v7891 = vld [vmem:[#allocation11 + $0x2c0] sm:$0xff]
    %v7892 = vld [vmem:[#allocation11 + $0x2c8] sm:$0xff]
    %v7893 = vld [vmem:[#allocation11 + $0x2d0] sm:$0xff]
    %v7894 = vld [vmem:[#allocation11 + $0x2d8] sm:$0xff]
    %v7895 = vld [vmem:[#allocation11 + $0x2e0] sm:$0xff]
    %v7896 = vld [vmem:[#allocation11 + $0x2e8] sm:$0xff]
    %v7897 = vld [vmem:[#allocation11 + $0x2f0] sm:$0xff]
    %v7898 = vld [vmem:[#allocation11 + $0x2f8] sm:$0xff]
    %v7899 = vld [vmem:[#allocation11 + $0x300] sm:$0xff]
    %v7900 = vld [vmem:[#allocation11 + $0x308] sm:$0xff]
    %v7901 = vld [vmem:[#allocation11 + $0x310] sm:$0xff]
    %v7902 = vld [vmem:[#allocation11 + $0x318] sm:$0xff]
    %v7903 = vld [vmem:[#allocation11 + $0x320] sm:$0xff]
    %v7904 = vld [vmem:[#allocation11 + $0x328] sm:$0xff]
    %v7905 = vld [vmem:[#allocation11 + $0x330] sm:$0xff]
    %v7906 = vld [vmem:[#allocation11 + $0x338] sm:$0xff]
    %v7907 = vld [vmem:[#allocation11 + $0x340] sm:$0xff]
    %v7908 = vld [vmem:[#allocation11 + $0x348] sm:$0xff]
    %v7909 = vld [vmem:[#allocation11 + $0x350] sm:$0xff]
    %v7910 = vld [vmem:[#allocation11 + $0x358] sm:$0xff]
    %v7911 = vld [vmem:[#allocation11 + $0x360] sm:$0xff]
    %v7912 = vld [vmem:[#allocation11 + $0x368] sm:$0xff]
    %v7913 = vld [vmem:[#allocation11 + $0x370] sm:$0xff]
    %v7914 = vld [vmem:[#allocation11 + $0x378] sm:$0xff]
    %v7915 = vld [vmem:[#allocation11 + $0x380] sm:$0xff]
    %v7916 = vld [vmem:[#allocation11 + $0x388] sm:$0xff]
    %v7917 = vld [vmem:[#allocation11 + $0x390] sm:$0xff]
    %v7918 = vld [vmem:[#allocation11 + $0x398] sm:$0xff]
    %v7919 = vld [vmem:[#allocation11 + $0x3a0] sm:$0xff]
    %v7920 = vld [vmem:[#allocation11 + $0x3a8] sm:$0xff]
    %v7921 = vld [vmem:[#allocation11 + $0x3b0] sm:$0xff]
    %v7922 = vld [vmem:[#allocation11 + $0x3b8] sm:$0xff]
    %v7923 = vld [vmem:[#allocation11 + $0x3c0] sm:$0xff]
    %v7924 = vld [vmem:[#allocation11 + $0x3c8] sm:$0xff]
    %v7925 = vld [vmem:[#allocation11 + $0x3d0] sm:$0xff]
    %v7926 = vld [vmem:[#allocation11 + $0x3d8] sm:$0xff]
    %v7927 = vld [vmem:[#allocation11 + $0x3e0] sm:$0xff]
    %v7928 = vld [vmem:[#allocation11 + $0x3e8] sm:$0xff]
    %v7929 = vld [vmem:[#allocation11 + $0x3f0] sm:$0xff]
    %v7930 = vld [vmem:[#allocation11 + $0x3f8] sm:$0xff]
    %v7931 = vld [vmem:[#allocation11 + $0x400] sm:$0xff]
    %v7932 = vld [vmem:[#allocation11 + $0x408] sm:$0xff]
    %v7933 = vld [vmem:[#allocation11 + $0x410] sm:$0xff]
    %v7934 = vld [vmem:[#allocation11 + $0x418] sm:$0xff]
    %v7935 = vld [vmem:[#allocation11 + $0x420] sm:$0xff]
    %v7936 = vld [vmem:[#allocation11 + $0x428] sm:$0xff]
    %v7937 = vld [vmem:[#allocation11 + $0x430] sm:$0xff]
    %v7938 = vld [vmem:[#allocation11 + $0x438] sm:$0xff]
    %v7939 = vld [vmem:[#allocation11 + $0x440] sm:$0xff]
    %v7940 = vld [vmem:[#allocation11 + $0x448] sm:$0xff]
    %v7941 = vld [vmem:[#allocation11 + $0x450] sm:$0xff]
    %v7942 = vld [vmem:[#allocation11 + $0x458] sm:$0xff]
    %v7943 = vld [vmem:[#allocation11 + $0x460] sm:$0xff]
    %v7944 = vld [vmem:[#allocation11 + $0x468] sm:$0xff]
    %v7945 = vld [vmem:[#allocation11 + $0x470] sm:$0xff]
    %v7946 = vld [vmem:[#allocation11 + $0x478] sm:$0xff]
    %v7947 = vld [vmem:[#allocation11 + $0x480] sm:$0xff]
    %v7948 = vld [vmem:[#allocation11 + $0x488] sm:$0xff]
    %v7949 = vld [vmem:[#allocation11 + $0x490] sm:$0xff]
    %v7950 = vld [vmem:[#allocation11 + $0x498] sm:$0xff]
    %v7951 = vld [vmem:[#allocation11 + $0x4a0] sm:$0xff]
    %v7952 = vld [vmem:[#allocation11 + $0x4a8] sm:$0xff]
    %v7953 = vld [vmem:[#allocation11 + $0x4b0] sm:$0xff]
    %v7954 = vld [vmem:[#allocation11 + $0x4b8] sm:$0xff]
    %v7955 = vld [vmem:[#allocation11 + $0x4c0] sm:$0xff]
    %v7956 = vld [vmem:[#allocation11 + $0x4c8] sm:$0xff]
    %v7957 = vld [vmem:[#allocation11 + $0x4d0] sm:$0xff]
    %v7958 = vld [vmem:[#allocation11 + $0x4d8] sm:$0xff]
    %v7959 = vld [vmem:[#allocation11 + $0x4e0] sm:$0xff]
    %v7960 = vld [vmem:[#allocation11 + $0x4e8] sm:$0xff]
    %v7961 = vld [vmem:[#allocation11 + $0x4f0] sm:$0xff]
    %v7962 = vld [vmem:[#allocation11 + $0x4f8] sm:$0xff]
    %v7963 = vld [vmem:[#allocation11 + $0x500] sm:$0xff]
    %v7964 = vld [vmem:[#allocation11 + $0x508] sm:$0xff]
    %v7965 = vld [vmem:[#allocation11 + $0x510] sm:$0xff]
    %v7966 = vld [vmem:[#allocation11 + $0x518] sm:$0xff]
    %v7967 = vld [vmem:[#allocation11 + $0x520] sm:$0xff]
    %v7968 = vld [vmem:[#allocation11 + $0x528] sm:$0xff]
    %v7969 = vld [vmem:[#allocation11 + $0x530] sm:$0xff]
    %v7970 = vld [vmem:[#allocation11 + $0x538] sm:$0xff]
    %v7971 = vld [vmem:[#allocation11 + $0x540] sm:$0xff]
    %v7972 = vld [vmem:[#allocation11 + $0x548] sm:$0xff]
    %v7973 = vld [vmem:[#allocation11 + $0x550] sm:$0xff]
    %v7974 = vld [vmem:[#allocation11 + $0x558] sm:$0xff]
    %v7975 = vld [vmem:[#allocation11 + $0x560] sm:$0xff]
    %v7976 = vld [vmem:[#allocation11 + $0x568] sm:$0xff]
    %v7977 = vld [vmem:[#allocation11 + $0x570] sm:$0xff]
    %v7978 = vld [vmem:[#allocation11 + $0x578] sm:$0xff]
    %v7979 = vld [vmem:[#allocation11 + $0x580] sm:$0xff]
    %v7980 = vld [vmem:[#allocation11 + $0x588] sm:$0xff]
    %v7981 = vld [vmem:[#allocation11 + $0x590] sm:$0xff]
    %v7982 = vld [vmem:[#allocation11 + $0x598] sm:$0xff]
    %v7983 = vld [vmem:[#allocation11 + $0x5a0] sm:$0xff]
    %v7984 = vld [vmem:[#allocation11 + $0x5a8] sm:$0xff]
    %v7985 = vld [vmem:[#allocation11 + $0x5b0] sm:$0xff]
    %v7986 = vld [vmem:[#allocation11 + $0x5b8] sm:$0xff]
    %v7987 = vld [vmem:[#allocation11 + $0x5c0] sm:$0xff]
    %v7988 = vld [vmem:[#allocation11 + $0x5c8] sm:$0xff]
    %v7989 = vld [vmem:[#allocation11 + $0x5d0] sm:$0xff]
    %v7990 = vld [vmem:[#allocation11 + $0x5d8] sm:$0xff]
    %v7991 = vld [vmem:[#allocation11 + $0x5e0] sm:$0xff]
    %v7992 = vld [vmem:[#allocation11 + $0x5e8] sm:$0xff]
    %v7993 = vld [vmem:[#allocation11 + $0x5f0] sm:$0xff]
    %v7994 = vld [vmem:[#allocation11 + $0x5f8] sm:$0xff]
    %v7995 = vld [vmem:[#allocation11 + $0x600] sm:$0xff]
    %v7996 = vld [vmem:[#allocation11 + $0x608] sm:$0xff]
    %v7997 = vld [vmem:[#allocation11 + $0x610] sm:$0xff]
    %v7998 = vld [vmem:[#allocation11 + $0x618] sm:$0xff]
    %v7999 = vld [vmem:[#allocation11 + $0x620] sm:$0xff]
    %v8000 = vld [vmem:[#allocation11 + $0x628] sm:$0xff]
    %v8001 = vld [vmem:[#allocation11 + $0x630] sm:$0xff]
    %v8002 = vld [vmem:[#allocation11 + $0x638] sm:$0xff]
    %v8003 = vld [vmem:[#allocation11 + $0x640] sm:$0xff]
    %v8004 = vld [vmem:[#allocation11 + $0x648] sm:$0xff]
    %v8005 = vld [vmem:[#allocation11 + $0x650] sm:$0xff]
    %v8006 = vld [vmem:[#allocation11 + $0x658] sm:$0xff]
    %v8007 = vld [vmem:[#allocation11 + $0x660] sm:$0xff]
    %v8008 = vld [vmem:[#allocation11 + $0x668] sm:$0xff]
    %v8009 = vld [vmem:[#allocation11 + $0x670] sm:$0xff]
    %v8010 = vld [vmem:[#allocation11 + $0x678] sm:$0xff]
    %v8011 = vld [vmem:[#allocation11 + $0x680] sm:$0xff]
    %v8012 = vld [vmem:[#allocation11 + $0x688] sm:$0xff]
    %v8013 = vld [vmem:[#allocation11 + $0x690] sm:$0xff]
    %v8014 = vld [vmem:[#allocation11 + $0x698] sm:$0xff]
    %v8015 = vld [vmem:[#allocation11 + $0x6a0] sm:$0xff]
    %v8016 = vld [vmem:[#allocation11 + $0x6a8] sm:$0xff]
    %v8017 = vld [vmem:[#allocation11 + $0x6b0] sm:$0xff]
    %v8018 = vld [vmem:[#allocation11 + $0x6b8] sm:$0xff]
    %v8019 = vld [vmem:[#allocation11 + $0x6c0] sm:$0xff]
    %v8020 = vld [vmem:[#allocation11 + $0x6c8] sm:$0xff]
    %v8021 = vld [vmem:[#allocation11 + $0x6d0] sm:$0xff]
    %v8022 = vld [vmem:[#allocation11 + $0x6d8] sm:$0xff]
    %v8023 = vld [vmem:[#allocation11 + $0x6e0] sm:$0xff]
    %v8024 = vld [vmem:[#allocation11 + $0x6e8] sm:$0xff]
    %v8025 = vld [vmem:[#allocation11 + $0x6f0] sm:$0xff]
    %v8026 = vld [vmem:[#allocation11 + $0x6f8] sm:$0xff]
    %v8027 = vld [vmem:[#allocation11 + $0x700] sm:$0xff]
    %v8028 = vld [vmem:[#allocation11 + $0x708] sm:$0xff]
    %v8029 = vld [vmem:[#allocation11 + $0x710] sm:$0xff]
    %v8030 = vld [vmem:[#allocation11 + $0x718] sm:$0xff]
    %v8031 = vld [vmem:[#allocation11 + $0x720] sm:$0xff]
    %v8032 = vld [vmem:[#allocation11 + $0x728] sm:$0xff]
    %v8033 = vld [vmem:[#allocation11 + $0x730] sm:$0xff]
    %v8034 = vld [vmem:[#allocation11 + $0x738] sm:$0xff]
    %v8035 = vld [vmem:[#allocation11 + $0x740] sm:$0xff]
    %v8036 = vld [vmem:[#allocation11 + $0x748] sm:$0xff]
    %v8037 = vld [vmem:[#allocation11 + $0x750] sm:$0xff]
    %v8038 = vld [vmem:[#allocation11 + $0x758] sm:$0xff]
    %v8039 = vld [vmem:[#allocation11 + $0x760] sm:$0xff]
    %v8040 = vld [vmem:[#allocation11 + $0x768] sm:$0xff]
    %v8041 = vld [vmem:[#allocation11 + $0x770] sm:$0xff]
    %v8042 = vld [vmem:[#allocation11 + $0x778] sm:$0xff]
    %v8043 = vld [vmem:[#allocation11 + $0x780] sm:$0xff]
    %v8044 = vld [vmem:[#allocation11 + $0x788] sm:$0xff]
    %v8045 = vld [vmem:[#allocation11 + $0x790] sm:$0xff]
    %v8046 = vld [vmem:[#allocation11 + $0x798] sm:$0xff]
    %v8047 = vld [vmem:[#allocation11 + $0x7a0] sm:$0xff]
    %v8048 = vld [vmem:[#allocation11 + $0x7a8] sm:$0xff]
    %v8049 = vld [vmem:[#allocation11 + $0x7b0] sm:$0xff]
    %v8050 = vld [vmem:[#allocation11 + $0x7b8] sm:$0xff]
    %v8051 = vld [vmem:[#allocation11 + $0x7c0] sm:$0xff]
    %v8052 = vld [vmem:[#allocation11 + $0x7c8] sm:$0xff]
    %v8053 = vld [vmem:[#allocation11 + $0x7d0] sm:$0xff]
    %v8054 = vld [vmem:[#allocation11 + $0x7d8] sm:$0xff]
    %v8055 = vld [vmem:[#allocation11 + $0x7e0] sm:$0xff]
    %v8056 = vld [vmem:[#allocation11 + $0x7e8] sm:$0xff]
    %v8057 = vld [vmem:[#allocation11 + $0x7f0] sm:$0xff]
    %v8058 = vld [vmem:[#allocation11 + $0x7f8] sm:$0xff]
    %v8059 = vld [vmem:[#allocation13] sm:$0xf]
    %v8061 = vlaneseq
    %v8062 = vshrl.u32 %v8061, 7
    %v8063 = vsub.s32 0, %v8062
    %v8064 = vrot.slane %v8059, %v8063
    %v8065 = vlaneseq
    %v8066 = vshrl.u32 %v8065, 7
    %v8067 = vsub.s32 1, %v8066
    %v8068 = vrot.slane %v8059, %v8067
    %v8069 = vlaneseq
    %v8070 = vshrl.u32 %v8069, 7
    %v8071 = vsub.s32 2, %v8070
    %v8072 = vrot.slane %v8059, %v8071
    %v8073 = vlaneseq
    %v8074 = vshrl.u32 %v8073, 7
    %v8075 = vsub.s32 3, %v8074
    %v8076 = vrot.slane %v8059, %v8075
    %v8337 = vunpack.c.l.b16 %v7803
    %v8338 = vunpack.c.h.b16 %v7803
    %v8339 = vunpack.c.l.b16 %v7804
    %v8340 = vunpack.c.h.b16 %v7804
    %v8341 = vunpack.c.l.b16 %v7805
    %v8342 = vunpack.c.h.b16 %v7805
    %v8343 = vunpack.c.l.b16 %v7806
    %v8344 = vunpack.c.h.b16 %v7806
    %v8345 = vunpack.c.l.b16 %v7807
    %v8346 = vunpack.c.h.b16 %v7807
    %v8347 = vunpack.c.l.b16 %v7808
    %v8348 = vunpack.c.h.b16 %v7808
    %v8349 = vunpack.c.l.b16 %v7809
    %v8350 = vunpack.c.h.b16 %v7809
    %v8351 = vunpack.c.l.b16 %v7810
    %v8352 = vunpack.c.h.b16 %v7810
    %v8353 = vunpack.c.l.b16 %v7811
    %v8354 = vunpack.c.h.b16 %v7811
    %v8355 = vunpack.c.l.b16 %v7812
    %v8356 = vunpack.c.h.b16 %v7812
    %v8357 = vunpack.c.l.b16 %v7813
    %v8358 = vunpack.c.h.b16 %v7813
    %v8359 = vunpack.c.l.b16 %v7814
    %v8360 = vunpack.c.h.b16 %v7814
    %v8361 = vunpack.c.l.b16 %v7815
    %v8362 = vunpack.c.h.b16 %v7815
    %v8363 = vunpack.c.l.b16 %v7816
    %v8364 = vunpack.c.h.b16 %v7816
    %v8365 = vunpack.c.l.b16 %v7817
    %v8366 = vunpack.c.h.b16 %v7817
    %v8367 = vunpack.c.l.b16 %v7818
    %v8368 = vunpack.c.h.b16 %v7818
    %v8369 = vunpack.c.l.b16 %v7819
    %v8370 = vunpack.c.h.b16 %v7819
    %v8371 = vunpack.c.l.b16 %v7820
    %v8372 = vunpack.c.h.b16 %v7820
    %v8373 = vunpack.c.l.b16 %v7821
    %v8374 = vunpack.c.h.b16 %v7821
    %v8375 = vunpack.c.l.b16 %v7822
    %v8376 = vunpack.c.h.b16 %v7822
    %v8377 = vunpack.c.l.b16 %v7823
    %v8378 = vunpack.c.h.b16 %v7823
    %v8379 = vunpack.c.l.b16 %v7824
    %v8380 = vunpack.c.h.b16 %v7824
    %v8381 = vunpack.c.l.b16 %v7825
    %v8382 = vunpack.c.h.b16 %v7825
    %v8383 = vunpack.c.l.b16 %v7826
    %v8384 = vunpack.c.h.b16 %v7826
    %v8385 = vunpack.c.l.b16 %v7827
    %v8386 = vunpack.c.h.b16 %v7827
    %v8387 = vunpack.c.l.b16 %v7828
    %v8388 = vunpack.c.h.b16 %v7828
    %v8389 = vunpack.c.l.b16 %v7829
    %v8390 = vunpack.c.h.b16 %v7829
    %v8391 = vunpack.c.l.b16 %v7830
    %v8392 = vunpack.c.h.b16 %v7830
    %v8393 = vunpack.c.l.b16 %v7831
    %v8394 = vunpack.c.h.b16 %v7831
    %v8395 = vunpack.c.l.b16 %v7832
    %v8396 = vunpack.c.h.b16 %v7832
    %v8397 = vunpack.c.l.b16 %v7833
    %v8398 = vunpack.c.h.b16 %v7833
    %v8399 = vunpack.c.l.b16 %v7834
    %v8400 = vunpack.c.h.b16 %v7834
    %v8401 = vunpack.c.l.b16 %v7835
    %v8402 = vunpack.c.h.b16 %v7835
    %v8403 = vunpack.c.l.b16 %v7836
    %v8404 = vunpack.c.h.b16 %v7836
    %v8405 = vunpack.c.l.b16 %v7837
    %v8406 = vunpack.c.h.b16 %v7837
    %v8407 = vunpack.c.l.b16 %v7838
    %v8408 = vunpack.c.h.b16 %v7838
    %v8409 = vunpack.c.l.b16 %v7839
    %v8410 = vunpack.c.h.b16 %v7839
    %v8411 = vunpack.c.l.b16 %v7840
    %v8412 = vunpack.c.h.b16 %v7840
    %v8413 = vunpack.c.l.b16 %v7841
    %v8414 = vunpack.c.h.b16 %v7841
    %v8415 = vunpack.c.l.b16 %v7842
    %v8416 = vunpack.c.h.b16 %v7842
    %v8417 = vunpack.c.l.b16 %v7843
    %v8418 = vunpack.c.h.b16 %v7843
    %v8419 = vunpack.c.l.b16 %v7844
    %v8420 = vunpack.c.h.b16 %v7844
    %v8421 = vunpack.c.l.b16 %v7845
    %v8422 = vunpack.c.h.b16 %v7845
    %v8423 = vunpack.c.l.b16 %v7846
    %v8424 = vunpack.c.h.b16 %v7846
    %v8425 = vunpack.c.l.b16 %v7847
    %v8426 = vunpack.c.h.b16 %v7847
    %v8427 = vunpack.c.l.b16 %v7848
    %v8428 = vunpack.c.h.b16 %v7848
    %v8429 = vunpack.c.l.b16 %v7849
    %v8430 = vunpack.c.h.b16 %v7849
    %v8431 = vunpack.c.l.b16 %v7850
    %v8432 = vunpack.c.h.b16 %v7850
    %v8433 = vunpack.c.l.b16 %v7851
    %v8434 = vunpack.c.h.b16 %v7851
    %v8435 = vunpack.c.l.b16 %v7852
    %v8436 = vunpack.c.h.b16 %v7852
    %v8437 = vunpack.c.l.b16 %v7853
    %v8438 = vunpack.c.h.b16 %v7853
    %v8439 = vunpack.c.l.b16 %v7854
    %v8440 = vunpack.c.h.b16 %v7854
    %v8441 = vunpack.c.l.b16 %v7855
    %v8442 = vunpack.c.h.b16 %v7855
    %v8443 = vunpack.c.l.b16 %v7856
    %v8444 = vunpack.c.h.b16 %v7856
    %v8445 = vunpack.c.l.b16 %v7857
    %v8446 = vunpack.c.h.b16 %v7857
    %v8447 = vunpack.c.l.b16 %v7858
    %v8448 = vunpack.c.h.b16 %v7858
    %v8449 = vunpack.c.l.b16 %v7859
    %v8450 = vunpack.c.h.b16 %v7859
    %v8451 = vunpack.c.l.b16 %v7860
    %v8452 = vunpack.c.h.b16 %v7860
    %v8453 = vunpack.c.l.b16 %v7861
    %v8454 = vunpack.c.h.b16 %v7861
    %v8455 = vunpack.c.l.b16 %v7862
    %v8456 = vunpack.c.h.b16 %v7862
    %v8457 = vunpack.c.l.b16 %v7863
    %v8458 = vunpack.c.h.b16 %v7863
    %v8459 = vunpack.c.l.b16 %v7864
    %v8460 = vunpack.c.h.b16 %v7864
    %v8461 = vunpack.c.l.b16 %v7865
    %v8462 = vunpack.c.h.b16 %v7865
    %v8463 = vunpack.c.l.b16 %v7866
    %v8464 = vunpack.c.h.b16 %v7866
    %v8465 = vunpack.c.l.b16 %v7867
    %v8466 = vunpack.c.h.b16 %v7867
    %v8467 = vunpack.c.l.b16 %v7868
    %v8468 = vunpack.c.h.b16 %v7868
    %v8469 = vunpack.c.l.b16 %v7869
    %v8470 = vunpack.c.h.b16 %v7869
    %v8471 = vunpack.c.l.b16 %v7870
    %v8472 = vunpack.c.h.b16 %v7870
    %v8473 = vunpack.c.l.b16 %v7871
    %v8474 = vunpack.c.h.b16 %v7871
    %v8475 = vunpack.c.l.b16 %v7872
    %v8476 = vunpack.c.h.b16 %v7872
    %v8477 = vunpack.c.l.b16 %v7873
    %v8478 = vunpack.c.h.b16 %v7873
    %v8479 = vunpack.c.l.b16 %v7874
    %v8480 = vunpack.c.h.b16 %v7874
    %v8481 = vunpack.c.l.b16 %v7875
    %v8482 = vunpack.c.h.b16 %v7875
    %v8483 = vunpack.c.l.b16 %v7876
    %v8484 = vunpack.c.h.b16 %v7876
    %v8485 = vunpack.c.l.b16 %v7877
    %v8486 = vunpack.c.h.b16 %v7877
    %v8487 = vunpack.c.l.b16 %v7878
    %v8488 = vunpack.c.h.b16 %v7878
    %v8489 = vunpack.c.l.b16 %v7879
    %v8490 = vunpack.c.h.b16 %v7879
    %v8491 = vunpack.c.l.b16 %v7880
    %v8492 = vunpack.c.h.b16 %v7880
    %v8493 = vunpack.c.l.b16 %v7881
    %v8494 = vunpack.c.h.b16 %v7881
    %v8495 = vunpack.c.l.b16 %v7882
    %v8496 = vunpack.c.h.b16 %v7882
    %v8497 = vunpack.c.l.b16 %v7883
    %v8498 = vunpack.c.h.b16 %v7883
    %v8499 = vunpack.c.l.b16 %v7884
    %v8500 = vunpack.c.h.b16 %v7884
    %v8501 = vunpack.c.l.b16 %v7885
    %v8502 = vunpack.c.h.b16 %v7885
    %v8503 = vunpack.c.l.b16 %v7886
    %v8504 = vunpack.c.h.b16 %v7886
    %v8505 = vunpack.c.l.b16 %v7887
    %v8506 = vunpack.c.h.b16 %v7887
    %v8507 = vunpack.c.l.b16 %v7888
    %v8508 = vunpack.c.h.b16 %v7888
    %v8509 = vunpack.c.l.b16 %v7889
    %v8510 = vunpack.c.h.b16 %v7889
    %v8511 = vunpack.c.l.b16 %v7890
    %v8512 = vunpack.c.h.b16 %v7890
    %v8513 = vunpack.c.l.b16 %v7891
    %v8514 = vunpack.c.h.b16 %v7891
    %v8515 = vunpack.c.l.b16 %v7892
    %v8516 = vunpack.c.h.b16 %v7892
    %v8517 = vunpack.c.l.b16 %v7893
    %v8518 = vunpack.c.h.b16 %v7893
    %v8519 = vunpack.c.l.b16 %v7894
    %v8520 = vunpack.c.h.b16 %v7894
    %v8521 = vunpack.c.l.b16 %v7895
    %v8522 = vunpack.c.h.b16 %v7895
    %v8523 = vunpack.c.l.b16 %v7896
    %v8524 = vunpack.c.h.b16 %v7896
    %v8525 = vunpack.c.l.b16 %v7897
    %v8526 = vunpack.c.h.b16 %v7897
    %v8527 = vunpack.c.l.b16 %v7898
    %v8528 = vunpack.c.h.b16 %v7898
    %v8529 = vunpack.c.l.b16 %v7899
    %v8530 = vunpack.c.h.b16 %v7899
    %v8531 = vunpack.c.l.b16 %v7900
    %v8532 = vunpack.c.h.b16 %v7900
    %v8533 = vunpack.c.l.b16 %v7901
    %v8534 = vunpack.c.h.b16 %v7901
    %v8535 = vunpack.c.l.b16 %v7902
    %v8536 = vunpack.c.h.b16 %v7902
    %v8537 = vunpack.c.l.b16 %v7903
    %v8538 = vunpack.c.h.b16 %v7903
    %v8539 = vunpack.c.l.b16 %v7904
    %v8540 = vunpack.c.h.b16 %v7904
    %v8541 = vunpack.c.l.b16 %v7905
    %v8542 = vunpack.c.h.b16 %v7905
    %v8543 = vunpack.c.l.b16 %v7906
    %v8544 = vunpack.c.h.b16 %v7906
    %v8545 = vunpack.c.l.b16 %v7907
    %v8546 = vunpack.c.h.b16 %v7907
    %v8547 = vunpack.c.l.b16 %v7908
    %v8548 = vunpack.c.h.b16 %v7908
    %v8549 = vunpack.c.l.b16 %v7909
    %v8550 = vunpack.c.h.b16 %v7909
    %v8551 = vunpack.c.l.b16 %v7910
    %v8552 = vunpack.c.h.b16 %v7910
    %v8553 = vunpack.c.l.b16 %v7911
    %v8554 = vunpack.c.h.b16 %v7911
    %v8555 = vunpack.c.l.b16 %v7912
    %v8556 = vunpack.c.h.b16 %v7912
    %v8557 = vunpack.c.l.b16 %v7913
    %v8558 = vunpack.c.h.b16 %v7913
    %v8559 = vunpack.c.l.b16 %v7914
    %v8560 = vunpack.c.h.b16 %v7914
    %v8561 = vunpack.c.l.b16 %v7915
    %v8562 = vunpack.c.h.b16 %v7915
    %v8563 = vunpack.c.l.b16 %v7916
    %v8564 = vunpack.c.h.b16 %v7916
    %v8565 = vunpack.c.l.b16 %v7917
    %v8566 = vunpack.c.h.b16 %v7917
    %v8567 = vunpack.c.l.b16 %v7918
    %v8568 = vunpack.c.h.b16 %v7918
    %v8569 = vunpack.c.l.b16 %v7919
    %v8570 = vunpack.c.h.b16 %v7919
    %v8571 = vunpack.c.l.b16 %v7920
    %v8572 = vunpack.c.h.b16 %v7920
    %v8573 = vunpack.c.l.b16 %v7921
    %v8574 = vunpack.c.h.b16 %v7921
    %v8575 = vunpack.c.l.b16 %v7922
    %v8576 = vunpack.c.h.b16 %v7922
    %v8577 = vunpack.c.l.b16 %v7923
    %v8578 = vunpack.c.h.b16 %v7923
    %v8579 = vunpack.c.l.b16 %v7924
    %v8580 = vunpack.c.h.b16 %v7924
    %v8581 = vunpack.c.l.b16 %v7925
    %v8582 = vunpack.c.h.b16 %v7925
    %v8583 = vunpack.c.l.b16 %v7926
    %v8584 = vunpack.c.h.b16 %v7926
    %v8585 = vunpack.c.l.b16 %v7927
    %v8586 = vunpack.c.h.b16 %v7927
    %v8587 = vunpack.c.l.b16 %v7928
    %v8588 = vunpack.c.h.b16 %v7928
    %v8589 = vunpack.c.l.b16 %v7929
    %v8590 = vunpack.c.h.b16 %v7929
    %v8591 = vunpack.c.l.b16 %v7930
    %v8592 = vunpack.c.h.b16 %v7930
    %v8593 = vunpack.c.l.b16 %v7931
    %v8594 = vunpack.c.h.b16 %v7931
    %v8595 = vunpack.c.l.b16 %v7932
    %v8596 = vunpack.c.h.b16 %v7932
    %v8597 = vunpack.c.l.b16 %v7933
    %v8598 = vunpack.c.h.b16 %v7933
    %v8599 = vunpack.c.l.b16 %v7934
    %v8600 = vunpack.c.h.b16 %v7934
    %v8601 = vunpack.c.l.b16 %v7935
    %v8602 = vunpack.c.h.b16 %v7935
    %v8603 = vunpack.c.l.b16 %v7936
    %v8604 = vunpack.c.h.b16 %v7936
    %v8605 = vunpack.c.l.b16 %v7937
    %v8606 = vunpack.c.h.b16 %v7937
    %v8607 = vunpack.c.l.b16 %v7938
    %v8608 = vunpack.c.h.b16 %v7938
    %v8609 = vunpack.c.l.b16 %v7939
    %v8610 = vunpack.c.h.b16 %v7939
    %v8611 = vunpack.c.l.b16 %v7940
    %v8612 = vunpack.c.h.b16 %v7940
    %v8613 = vunpack.c.l.b16 %v7941
    %v8614 = vunpack.c.h.b16 %v7941
    %v8615 = vunpack.c.l.b16 %v7942
    %v8616 = vunpack.c.h.b16 %v7942
    %v8617 = vunpack.c.l.b16 %v7943
    %v8618 = vunpack.c.h.b16 %v7943
    %v8619 = vunpack.c.l.b16 %v7944
    %v8620 = vunpack.c.h.b16 %v7944
    %v8621 = vunpack.c.l.b16 %v7945
    %v8622 = vunpack.c.h.b16 %v7945
    %v8623 = vunpack.c.l.b16 %v7946
    %v8624 = vunpack.c.h.b16 %v7946
    %v8625 = vunpack.c.l.b16 %v7947
    %v8626 = vunpack.c.h.b16 %v7947
    %v8627 = vunpack.c.l.b16 %v7948
    %v8628 = vunpack.c.h.b16 %v7948
    %v8629 = vunpack.c.l.b16 %v7949
    %v8630 = vunpack.c.h.b16 %v7949
    %v8631 = vunpack.c.l.b16 %v7950
    %v8632 = vunpack.c.h.b16 %v7950
    %v8633 = vunpack.c.l.b16 %v7951
    %v8634 = vunpack.c.h.b16 %v7951
    %v8635 = vunpack.c.l.b16 %v7952
    %v8636 = vunpack.c.h.b16 %v7952
    %v8637 = vunpack.c.l.b16 %v7953
    %v8638 = vunpack.c.h.b16 %v7953
    %v8639 = vunpack.c.l.b16 %v7954
    %v8640 = vunpack.c.h.b16 %v7954
    %v8641 = vunpack.c.l.b16 %v7955
    %v8642 = vunpack.c.h.b16 %v7955
    %v8643 = vunpack.c.l.b16 %v7956
    %v8644 = vunpack.c.h.b16 %v7956
    %v8645 = vunpack.c.l.b16 %v7957
    %v8646 = vunpack.c.h.b16 %v7957
    %v8647 = vunpack.c.l.b16 %v7958
    %v8648 = vunpack.c.h.b16 %v7958
    %v8649 = vunpack.c.l.b16 %v7959
    %v8650 = vunpack.c.h.b16 %v7959
    %v8651 = vunpack.c.l.b16 %v7960
    %v8652 = vunpack.c.h.b16 %v7960
    %v8653 = vunpack.c.l.b16 %v7961
    %v8654 = vunpack.c.h.b16 %v7961
    %v8655 = vunpack.c.l.b16 %v7962
    %v8656 = vunpack.c.h.b16 %v7962
    %v8657 = vunpack.c.l.b16 %v7963
    %v8658 = vunpack.c.h.b16 %v7963
    %v8659 = vunpack.c.l.b16 %v7964
    %v8660 = vunpack.c.h.b16 %v7964
    %v8661 = vunpack.c.l.b16 %v7965
    %v8662 = vunpack.c.h.b16 %v7965
    %v8663 = vunpack.c.l.b16 %v7966
    %v8664 = vunpack.c.h.b16 %v7966
    %v8665 = vunpack.c.l.b16 %v7967
    %v8666 = vunpack.c.h.b16 %v7967
    %v8667 = vunpack.c.l.b16 %v7968
    %v8668 = vunpack.c.h.b16 %v7968
    %v8669 = vunpack.c.l.b16 %v7969
    %v8670 = vunpack.c.h.b16 %v7969
    %v8671 = vunpack.c.l.b16 %v7970
    %v8672 = vunpack.c.h.b16 %v7970
    %v8673 = vunpack.c.l.b16 %v7971
    %v8674 = vunpack.c.h.b16 %v7971
    %v8675 = vunpack.c.l.b16 %v7972
    %v8676 = vunpack.c.h.b16 %v7972
    %v8677 = vunpack.c.l.b16 %v7973
    %v8678 = vunpack.c.h.b16 %v7973
    %v8679 = vunpack.c.l.b16 %v7974
    %v8680 = vunpack.c.h.b16 %v7974
    %v8681 = vunpack.c.l.b16 %v7975
    %v8682 = vunpack.c.h.b16 %v7975
    %v8683 = vunpack.c.l.b16 %v7976
    %v8684 = vunpack.c.h.b16 %v7976
    %v8685 = vunpack.c.l.b16 %v7977
    %v8686 = vunpack.c.h.b16 %v7977
    %v8687 = vunpack.c.l.b16 %v7978
    %v8688 = vunpack.c.h.b16 %v7978
    %v8689 = vunpack.c.l.b16 %v7979
    %v8690 = vunpack.c.h.b16 %v7979
    %v8691 = vunpack.c.l.b16 %v7980
    %v8692 = vunpack.c.h.b16 %v7980
    %v8693 = vunpack.c.l.b16 %v7981
    %v8694 = vunpack.c.h.b16 %v7981
    %v8695 = vunpack.c.l.b16 %v7982
    %v8696 = vunpack.c.h.b16 %v7982
    %v8697 = vunpack.c.l.b16 %v7983
    %v8698 = vunpack.c.h.b16 %v7983
    %v8699 = vunpack.c.l.b16 %v7984
    %v8700 = vunpack.c.h.b16 %v7984
    %v8701 = vunpack.c.l.b16 %v7985
    %v8702 = vunpack.c.h.b16 %v7985
    %v8703 = vunpack.c.l.b16 %v7986
    %v8704 = vunpack.c.h.b16 %v7986
    %v8705 = vunpack.c.l.b16 %v7987
    %v8706 = vunpack.c.h.b16 %v7987
    %v8707 = vunpack.c.l.b16 %v7988
    %v8708 = vunpack.c.h.b16 %v7988
    %v8709 = vunpack.c.l.b16 %v7989
    %v8710 = vunpack.c.h.b16 %v7989
    %v8711 = vunpack.c.l.b16 %v7990
    %v8712 = vunpack.c.h.b16 %v7990
    %v8713 = vunpack.c.l.b16 %v7991
    %v8714 = vunpack.c.h.b16 %v7991
    %v8715 = vunpack.c.l.b16 %v7992
    %v8716 = vunpack.c.h.b16 %v7992
    %v8717 = vunpack.c.l.b16 %v7993
    %v8718 = vunpack.c.h.b16 %v7993
    %v8719 = vunpack.c.l.b16 %v7994
    %v8720 = vunpack.c.h.b16 %v7994
    %v8721 = vunpack.c.l.b16 %v7995
    %v8722 = vunpack.c.h.b16 %v7995
    %v8723 = vunpack.c.l.b16 %v7996
    %v8724 = vunpack.c.h.b16 %v7996
    %v8725 = vunpack.c.l.b16 %v7997
    %v8726 = vunpack.c.h.b16 %v7997
    %v8727 = vunpack.c.l.b16 %v7998
    %v8728 = vunpack.c.h.b16 %v7998
    %v8729 = vunpack.c.l.b16 %v7999
    %v8730 = vunpack.c.h.b16 %v7999
    %v8731 = vunpack.c.l.b16 %v8000
    %v8732 = vunpack.c.h.b16 %v8000
    %v8733 = vunpack.c.l.b16 %v8001
    %v8734 = vunpack.c.h.b16 %v8001
    %v8735 = vunpack.c.l.b16 %v8002
    %v8736 = vunpack.c.h.b16 %v8002
    %v8737 = vunpack.c.l.b16 %v8003
    %v8738 = vunpack.c.h.b16 %v8003
    %v8739 = vunpack.c.l.b16 %v8004
    %v8740 = vunpack.c.h.b16 %v8004
    %v8741 = vunpack.c.l.b16 %v8005
    %v8742 = vunpack.c.h.b16 %v8005
    %v8743 = vunpack.c.l.b16 %v8006
    %v8744 = vunpack.c.h.b16 %v8006
    %v8745 = vunpack.c.l.b16 %v8007
    %v8746 = vunpack.c.h.b16 %v8007
    %v8747 = vunpack.c.l.b16 %v8008
    %v8748 = vunpack.c.h.b16 %v8008
    %v8749 = vunpack.c.l.b16 %v8009
    %v8750 = vunpack.c.h.b16 %v8009
    %v8751 = vunpack.c.l.b16 %v8010
    %v8752 = vunpack.c.h.b16 %v8010
    %v8753 = vunpack.c.l.b16 %v8011
    %v8754 = vunpack.c.h.b16 %v8011
    %v8755 = vunpack.c.l.b16 %v8012
    %v8756 = vunpack.c.h.b16 %v8012
    %v8757 = vunpack.c.l.b16 %v8013
    %v8758 = vunpack.c.h.b16 %v8013
    %v8759 = vunpack.c.l.b16 %v8014
    %v8760 = vunpack.c.h.b16 %v8014
    %v8761 = vunpack.c.l.b16 %v8015
    %v8762 = vunpack.c.h.b16 %v8015
    %v8763 = vunpack.c.l.b16 %v8016
    %v8764 = vunpack.c.h.b16 %v8016
    %v8765 = vunpack.c.l.b16 %v8017
    %v8766 = vunpack.c.h.b16 %v8017
    %v8767 = vunpack.c.l.b16 %v8018
    %v8768 = vunpack.c.h.b16 %v8018
    %v8769 = vunpack.c.l.b16 %v8019
    %v8770 = vunpack.c.h.b16 %v8019
    %v8771 = vunpack.c.l.b16 %v8020
    %v8772 = vunpack.c.h.b16 %v8020
    %v8773 = vunpack.c.l.b16 %v8021
    %v8774 = vunpack.c.h.b16 %v8021
    %v8775 = vunpack.c.l.b16 %v8022
    %v8776 = vunpack.c.h.b16 %v8022
    %v8777 = vunpack.c.l.b16 %v8023
    %v8778 = vunpack.c.h.b16 %v8023
    %v8779 = vunpack.c.l.b16 %v8024
    %v8780 = vunpack.c.h.b16 %v8024
    %v8781 = vunpack.c.l.b16 %v8025
    %v8782 = vunpack.c.h.b16 %v8025
    %v8783 = vunpack.c.l.b16 %v8026
    %v8784 = vunpack.c.h.b16 %v8026
    %v8785 = vunpack.c.l.b16 %v8027
    %v8786 = vunpack.c.h.b16 %v8027
    %v8787 = vunpack.c.l.b16 %v8028
    %v8788 = vunpack.c.h.b16 %v8028
    %v8789 = vunpack.c.l.b16 %v8029
    %v8790 = vunpack.c.h.b16 %v8029
    %v8791 = vunpack.c.l.b16 %v8030
    %v8792 = vunpack.c.h.b16 %v8030
    %v8793 = vunpack.c.l.b16 %v8031
    %v8794 = vunpack.c.h.b16 %v8031
    %v8795 = vunpack.c.l.b16 %v8032
    %v8796 = vunpack.c.h.b16 %v8032
    %v8797 = vunpack.c.l.b16 %v8033
    %v8798 = vunpack.c.h.b16 %v8033
    %v8799 = vunpack.c.l.b16 %v8034
    %v8800 = vunpack.c.h.b16 %v8034
    %v8801 = vunpack.c.l.b16 %v8035
    %v8802 = vunpack.c.h.b16 %v8035
    %v8803 = vunpack.c.l.b16 %v8036
    %v8804 = vunpack.c.h.b16 %v8036
    %v8805 = vunpack.c.l.b16 %v8037
    %v8806 = vunpack.c.h.b16 %v8037
    %v8807 = vunpack.c.l.b16 %v8038
    %v8808 = vunpack.c.h.b16 %v8038
    %v8809 = vunpack.c.l.b16 %v8039
    %v8810 = vunpack.c.h.b16 %v8039
    %v8811 = vunpack.c.l.b16 %v8040
    %v8812 = vunpack.c.h.b16 %v8040
    %v8813 = vunpack.c.l.b16 %v8041
    %v8814 = vunpack.c.h.b16 %v8041
    %v8815 = vunpack.c.l.b16 %v8042
    %v8816 = vunpack.c.h.b16 %v8042
    %v8817 = vunpack.c.l.b16 %v8043
    %v8818 = vunpack.c.h.b16 %v8043
    %v8819 = vunpack.c.l.b16 %v8044
    %v8820 = vunpack.c.h.b16 %v8044
    %v8821 = vunpack.c.l.b16 %v8045
    %v8822 = vunpack.c.h.b16 %v8045
    %v8823 = vunpack.c.l.b16 %v8046
    %v8824 = vunpack.c.h.b16 %v8046
    %v8825 = vunpack.c.l.b16 %v8047
    %v8826 = vunpack.c.h.b16 %v8047
    %v8827 = vunpack.c.l.b16 %v8048
    %v8828 = vunpack.c.h.b16 %v8048
    %v8829 = vunpack.c.l.b16 %v8049
    %v8830 = vunpack.c.h.b16 %v8049
    %v8831 = vunpack.c.l.b16 %v8050
    %v8832 = vunpack.c.h.b16 %v8050
    %v8833 = vunpack.c.l.b16 %v8051
    %v8834 = vunpack.c.h.b16 %v8051
    %v8835 = vunpack.c.l.b16 %v8052
    %v8836 = vunpack.c.h.b16 %v8052
    %v8837 = vunpack.c.l.b16 %v8053
    %v8838 = vunpack.c.h.b16 %v8053
    %v8839 = vunpack.c.l.b16 %v8054
    %v8840 = vunpack.c.h.b16 %v8054
    %v8841 = vunpack.c.l.b16 %v8055
    %v8842 = vunpack.c.h.b16 %v8055
    %v8843 = vunpack.c.l.b16 %v8056
    %v8844 = vunpack.c.h.b16 %v8056
    %v8845 = vunpack.c.l.b16 %v8057
    %v8846 = vunpack.c.h.b16 %v8057
    %v8847 = vunpack.c.l.b16 %v8058
    %v8848 = vunpack.c.h.b16 %v8058
    %v8849 = vpack.c.b16 %v8341, %v8337
    %v8850 = vpack.c.b16 %v8342, %v8338
    %v8851 = vpack.c.b16 %v8343, %v8339
    %v8852 = vpack.c.b16 %v8344, %v8340
    %v8853 = vpack.c.b16 %v8349, %v8345
    %v8854 = vpack.c.b16 %v8350, %v8346
    %v8855 = vpack.c.b16 %v8351, %v8347
    %v8856 = vpack.c.b16 %v8352, %v8348
    %v8857 = vpack.c.b16 %v8357, %v8353
    %v8858 = vpack.c.b16 %v8358, %v8354
    %v8859 = vpack.c.b16 %v8359, %v8355
    %v8860 = vpack.c.b16 %v8360, %v8356
    %v8861 = vpack.c.b16 %v8365, %v8361
    %v8862 = vpack.c.b16 %v8366, %v8362
    %v8863 = vpack.c.b16 %v8367, %v8363
    %v8864 = vpack.c.b16 %v8368, %v8364
    %v8865 = vpack.c.b16 %v8373, %v8369
    %v8866 = vpack.c.b16 %v8374, %v8370
    %v8867 = vpack.c.b16 %v8375, %v8371
    %v8868 = vpack.c.b16 %v8376, %v8372
    %v8869 = vpack.c.b16 %v8381, %v8377
    %v8870 = vpack.c.b16 %v8382, %v8378
    %v8871 = vpack.c.b16 %v8383, %v8379
    %v8872 = vpack.c.b16 %v8384, %v8380
    %v8873 = vpack.c.b16 %v8389, %v8385
    %v8874 = vpack.c.b16 %v8390, %v8386
    %v8875 = vpack.c.b16 %v8391, %v8387
    %v8876 = vpack.c.b16 %v8392, %v8388
    %v8877 = vpack.c.b16 %v8397, %v8393
    %v8878 = vpack.c.b16 %v8398, %v8394
    %v8879 = vpack.c.b16 %v8399, %v8395
    %v8880 = vpack.c.b16 %v8400, %v8396
    %v8881 = vpack.c.b16 %v8405, %v8401
    %v8882 = vpack.c.b16 %v8406, %v8402
    %v8883 = vpack.c.b16 %v8407, %v8403
    %v8884 = vpack.c.b16 %v8408, %v8404
    %v8885 = vpack.c.b16 %v8413, %v8409
    %v8886 = vpack.c.b16 %v8414, %v8410
    %v8887 = vpack.c.b16 %v8415, %v8411
    %v8888 = vpack.c.b16 %v8416, %v8412
    %v8889 = vpack.c.b16 %v8421, %v8417
    %v8890 = vpack.c.b16 %v8422, %v8418
    %v8891 = vpack.c.b16 %v8423, %v8419
    %v8892 = vpack.c.b16 %v8424, %v8420
    %v8893 = vpack.c.b16 %v8429, %v8425
    %v8894 = vpack.c.b16 %v8430, %v8426
    %v8895 = vpack.c.b16 %v8431, %v8427
    %v8896 = vpack.c.b16 %v8432, %v8428
    %v8897 = vpack.c.b16 %v8437, %v8433
    %v8898 = vpack.c.b16 %v8438, %v8434
    %v8899 = vpack.c.b16 %v8439, %v8435
    %v8900 = vpack.c.b16 %v8440, %v8436
    %v8901 = vpack.c.b16 %v8445, %v8441
    %v8902 = vpack.c.b16 %v8446, %v8442
    %v8903 = vpack.c.b16 %v8447, %v8443
    %v8904 = vpack.c.b16 %v8448, %v8444
    %v8905 = vpack.c.b16 %v8453, %v8449
    %v8906 = vpack.c.b16 %v8454, %v8450
    %v8907 = vpack.c.b16 %v8455, %v8451
    %v8908 = vpack.c.b16 %v8456, %v8452
    %v8909 = vpack.c.b16 %v8461, %v8457
    %v8910 = vpack.c.b16 %v8462, %v8458
    %v8911 = vpack.c.b16 %v8463, %v8459
    %v8912 = vpack.c.b16 %v8464, %v8460
    %v8913 = vpack.c.b16 %v8469, %v8465
    %v8914 = vpack.c.b16 %v8470, %v8466
    %v8915 = vpack.c.b16 %v8471, %v8467
    %v8916 = vpack.c.b16 %v8472, %v8468
    %v8917 = vpack.c.b16 %v8477, %v8473
    %v8918 = vpack.c.b16 %v8478, %v8474
    %v8919 = vpack.c.b16 %v8479, %v8475
    %v8920 = vpack.c.b16 %v8480, %v8476
    %v8921 = vpack.c.b16 %v8485, %v8481
    %v8922 = vpack.c.b16 %v8486, %v8482
    %v8923 = vpack.c.b16 %v8487, %v8483
    %v8924 = vpack.c.b16 %v8488, %v8484
    %v8925 = vpack.c.b16 %v8493, %v8489
    %v8926 = vpack.c.b16 %v8494, %v8490
    %v8927 = vpack.c.b16 %v8495, %v8491
    %v8928 = vpack.c.b16 %v8496, %v8492
    %v8929 = vpack.c.b16 %v8501, %v8497
    %v8930 = vpack.c.b16 %v8502, %v8498
    %v8931 = vpack.c.b16 %v8503, %v8499
    %v8932 = vpack.c.b16 %v8504, %v8500
    %v8933 = vpack.c.b16 %v8509, %v8505
    %v8934 = vpack.c.b16 %v8510, %v8506
    %v8935 = vpack.c.b16 %v8511, %v8507
    %v8936 = vpack.c.b16 %v8512, %v8508
    %v8937 = vpack.c.b16 %v8517, %v8513
    %v8938 = vpack.c.b16 %v8518, %v8514
    %v8939 = vpack.c.b16 %v8519, %v8515
    %v8940 = vpack.c.b16 %v8520, %v8516
    %v8941 = vpack.c.b16 %v8525, %v8521
    %v8942 = vpack.c.b16 %v8526, %v8522
    %v8943 = vpack.c.b16 %v8527, %v8523
    %v8944 = vpack.c.b16 %v8528, %v8524
    %v8945 = vpack.c.b16 %v8533, %v8529
    %v8946 = vpack.c.b16 %v8534, %v8530
    %v8947 = vpack.c.b16 %v8535, %v8531
    %v8948 = vpack.c.b16 %v8536, %v8532
    %v8949 = vpack.c.b16 %v8541, %v8537
    %v8950 = vpack.c.b16 %v8542, %v8538
    %v8951 = vpack.c.b16 %v8543, %v8539
    %v8952 = vpack.c.b16 %v8544, %v8540
    %v8953 = vpack.c.b16 %v8549, %v8545
    %v8954 = vpack.c.b16 %v8550, %v8546
    %v8955 = vpack.c.b16 %v8551, %v8547
    %v8956 = vpack.c.b16 %v8552, %v8548
    %v8957 = vpack.c.b16 %v8557, %v8553
    %v8958 = vpack.c.b16 %v8558, %v8554
    %v8959 = vpack.c.b16 %v8559, %v8555
    %v8960 = vpack.c.b16 %v8560, %v8556
    %v8961 = vpack.c.b16 %v8565, %v8561
    %v8962 = vpack.c.b16 %v8566, %v8562
    %v8963 = vpack.c.b16 %v8567, %v8563
    %v8964 = vpack.c.b16 %v8568, %v8564
    %v8965 = vpack.c.b16 %v8573, %v8569
    %v8966 = vpack.c.b16 %v8574, %v8570
    %v8967 = vpack.c.b16 %v8575, %v8571
    %v8968 = vpack.c.b16 %v8576, %v8572
    %v8969 = vpack.c.b16 %v8581, %v8577
    %v8970 = vpack.c.b16 %v8582, %v8578
    %v8971 = vpack.c.b16 %v8583, %v8579
    %v8972 = vpack.c.b16 %v8584, %v8580
    %v8973 = vpack.c.b16 %v8589, %v8585
    %v8974 = vpack.c.b16 %v8590, %v8586
    %v8975 = vpack.c.b16 %v8591, %v8587
    %v8976 = vpack.c.b16 %v8592, %v8588
    %v8977 = vpack.c.b16 %v8597, %v8593
    %v8978 = vpack.c.b16 %v8598, %v8594
    %v8979 = vpack.c.b16 %v8599, %v8595
    %v8980 = vpack.c.b16 %v8600, %v8596
    %v8981 = vpack.c.b16 %v8605, %v8601
    %v8982 = vpack.c.b16 %v8606, %v8602
    %v8983 = vpack.c.b16 %v8607, %v8603
    %v8984 = vpack.c.b16 %v8608, %v8604
    %v8985 = vpack.c.b16 %v8613, %v8609
    %v8986 = vpack.c.b16 %v8614, %v8610
    %v8987 = vpack.c.b16 %v8615, %v8611
    %v8988 = vpack.c.b16 %v8616, %v8612
    %v8989 = vpack.c.b16 %v8621, %v8617
    %v8990 = vpack.c.b16 %v8622, %v8618
    %v8991 = vpack.c.b16 %v8623, %v8619
    %v8992 = vpack.c.b16 %v8624, %v8620
    %v8993 = vpack.c.b16 %v8629, %v8625
    %v8994 = vpack.c.b16 %v8630, %v8626
    %v8995 = vpack.c.b16 %v8631, %v8627
    %v8996 = vpack.c.b16 %v8632, %v8628
    %v8997 = vpack.c.b16 %v8637, %v8633
    %v8998 = vpack.c.b16 %v8638, %v8634
    %v8999 = vpack.c.b16 %v8639, %v8635
    %v9000 = vpack.c.b16 %v8640, %v8636
    %v9001 = vpack.c.b16 %v8645, %v8641
    %v9002 = vpack.c.b16 %v8646, %v8642
    %v9003 = vpack.c.b16 %v8647, %v8643
    %v9004 = vpack.c.b16 %v8648, %v8644
    %v9005 = vpack.c.b16 %v8653, %v8649
    %v9006 = vpack.c.b16 %v8654, %v8650
    %v9007 = vpack.c.b16 %v8655, %v8651
    %v9008 = vpack.c.b16 %v8656, %v8652
    %v9009 = vpack.c.b16 %v8661, %v8657
    %v9010 = vpack.c.b16 %v8662, %v8658
    %v9011 = vpack.c.b16 %v8663, %v8659
    %v9012 = vpack.c.b16 %v8664, %v8660
    %v9013 = vpack.c.b16 %v8669, %v8665
    %v9014 = vpack.c.b16 %v8670, %v8666
    %v9015 = vpack.c.b16 %v8671, %v8667
    %v9016 = vpack.c.b16 %v8672, %v8668
    %v9017 = vpack.c.b16 %v8677, %v8673
    %v9018 = vpack.c.b16 %v8678, %v8674
    %v9019 = vpack.c.b16 %v8679, %v8675
    %v9020 = vpack.c.b16 %v8680, %v8676
    %v9021 = vpack.c.b16 %v8685, %v8681
    %v9022 = vpack.c.b16 %v8686, %v8682
    %v9023 = vpack.c.b16 %v8687, %v8683
    %v9024 = vpack.c.b16 %v8688, %v8684
    %v9025 = vpack.c.b16 %v8693, %v8689
    %v9026 = vpack.c.b16 %v8694, %v8690
    %v9027 = vpack.c.b16 %v8695, %v8691
    %v9028 = vpack.c.b16 %v8696, %v8692
    %v9029 = vpack.c.b16 %v8701, %v8697
    %v9030 = vpack.c.b16 %v8702, %v8698
    %v9031 = vpack.c.b16 %v8703, %v8699
    %v9032 = vpack.c.b16 %v8704, %v8700
    %v9033 = vpack.c.b16 %v8709, %v8705
    %v9034 = vpack.c.b16 %v8710, %v8706
    %v9035 = vpack.c.b16 %v8711, %v8707
    %v9036 = vpack.c.b16 %v8712, %v8708
    %v9037 = vpack.c.b16 %v8717, %v8713
    %v9038 = vpack.c.b16 %v8718, %v8714
    %v9039 = vpack.c.b16 %v8719, %v8715
    %v9040 = vpack.c.b16 %v8720, %v8716
    %v9041 = vpack.c.b16 %v8725, %v8721
    %v9042 = vpack.c.b16 %v8726, %v8722
    %v9043 = vpack.c.b16 %v8727, %v8723
    %v9044 = vpack.c.b16 %v8728, %v8724
    %v9045 = vpack.c.b16 %v8733, %v8729
    %v9046 = vpack.c.b16 %v8734, %v8730
    %v9047 = vpack.c.b16 %v8735, %v8731
    %v9048 = vpack.c.b16 %v8736, %v8732
    %v9049 = vpack.c.b16 %v8741, %v8737
    %v9050 = vpack.c.b16 %v8742, %v8738
    %v9051 = vpack.c.b16 %v8743, %v8739
    %v9052 = vpack.c.b16 %v8744, %v8740
    %v9053 = vpack.c.b16 %v8749, %v8745
    %v9054 = vpack.c.b16 %v8750, %v8746
    %v9055 = vpack.c.b16 %v8751, %v8747
    %v9056 = vpack.c.b16 %v8752, %v8748
    %v9057 = vpack.c.b16 %v8757, %v8753
    %v9058 = vpack.c.b16 %v8758, %v8754
    %v9059 = vpack.c.b16 %v8759, %v8755
    %v9060 = vpack.c.b16 %v8760, %v8756
    %v9061 = vpack.c.b16 %v8765, %v8761
    %v9062 = vpack.c.b16 %v8766, %v8762
    %v9063 = vpack.c.b16 %v8767, %v8763
    %v9064 = vpack.c.b16 %v8768, %v8764
    %v9065 = vpack.c.b16 %v8773, %v8769
    %v9066 = vpack.c.b16 %v8774, %v8770
    %v9067 = vpack.c.b16 %v8775, %v8771
    %v9068 = vpack.c.b16 %v8776, %v8772
    %v9069 = vpack.c.b16 %v8781, %v8777
    %v9070 = vpack.c.b16 %v8782, %v8778
    %v9071 = vpack.c.b16 %v8783, %v8779
    %v9072 = vpack.c.b16 %v8784, %v8780
    %v9073 = vpack.c.b16 %v8789, %v8785
    %v9074 = vpack.c.b16 %v8790, %v8786
    %v9075 = vpack.c.b16 %v8791, %v8787
    %v9076 = vpack.c.b16 %v8792, %v8788
    %v9077 = vpack.c.b16 %v8797, %v8793
    %v9078 = vpack.c.b16 %v8798, %v8794
    %v9079 = vpack.c.b16 %v8799, %v8795
    %v9080 = vpack.c.b16 %v8800, %v8796
    %v9081 = vpack.c.b16 %v8805, %v8801
    %v9082 = vpack.c.b16 %v8806, %v8802
    %v9083 = vpack.c.b16 %v8807, %v8803
    %v9084 = vpack.c.b16 %v8808, %v8804
    %v9085 = vpack.c.b16 %v8813, %v8809
    %v9086 = vpack.c.b16 %v8814, %v8810
    %v9087 = vpack.c.b16 %v8815, %v8811
    %v9088 = vpack.c.b16 %v8816, %v8812
    %v9089 = vpack.c.b16 %v8821, %v8817
    %v9090 = vpack.c.b16 %v8822, %v8818
    %v9091 = vpack.c.b16 %v8823, %v8819
    %v9092 = vpack.c.b16 %v8824, %v8820
    %v9093 = vpack.c.b16 %v8829, %v8825
    %v9094 = vpack.c.b16 %v8830, %v8826
    %v9095 = vpack.c.b16 %v8831, %v8827
    %v9096 = vpack.c.b16 %v8832, %v8828
    %v9097 = vpack.c.b16 %v8837, %v8833
    %v9098 = vpack.c.b16 %v8838, %v8834
    %v9099 = vpack.c.b16 %v8839, %v8835
    %v9100 = vpack.c.b16 %v8840, %v8836
    %v9101 = vpack.c.b16 %v8845, %v8841
    %v9102 = vpack.c.b16 %v8846, %v8842
    %v9103 = vpack.c.b16 %v8847, %v8843
    %v9104 = vpack.c.b16 %v8848, %v8844
    %9361 = vmatprep.subr.bf16.mxu0 %v8878
    %9362 = vmatpush1.bf16.msra.mxu0 %v8877
    %9363 = vmatprep.subr.bf16.mxu0 %v8874
    %9364 = vmatpush1.bf16.msra.mxu0 %v8873
    %9365 = vmatprep.subr.bf16.mxu0 %v8870
    %9366 = vmatpush1.bf16.msra.mxu0 %v8869
    %9367 = vmatprep.subr.bf16.mxu0 %v8866
    %9368 = vmatpush1.bf16.msra.mxu0 %v8865
    %9369 = vmatprep.subr.bf16.mxu0 %v8862
    %9370 = vmatpush1.bf16.msra.mxu0 %v8861
    %9371 = vmatprep.subr.bf16.mxu0 %v8858
    %9372 = vmatpush1.bf16.msra.mxu0 %v8857
    %9373 = vmatprep.subr.bf16.mxu0 %v8854
    %9374 = vmatpush1.bf16.msra.mxu0 %v8853
    %9375 = vmatprep.subr.bf16.mxu0 %v8850
    %9376 = vmatpush1.bf16.msra.mxu0 %v8849
    %9377 = vmatprep.subr.bf16.mxu0 %v8910
    %9378 = vmatpush2.bf16.msra.mxu0 %v8909
    %9379 = vmatprep.subr.bf16.mxu0 %v8906
    %9380 = vmatpush2.bf16.msra.mxu0 %v8905
    %9381 = vmatprep.subr.bf16.mxu0 %v8902
    %9382 = vmatpush2.bf16.msra.mxu0 %v8901
    %9383 = vmatprep.subr.bf16.mxu0 %v8898
    %9384 = vmatpush2.bf16.msra.mxu0 %v8897
    %9385 = vmatprep.subr.bf16.mxu0 %v8894
    %9386 = vmatpush2.bf16.msra.mxu0 %v8893
    %9387 = vmatprep.subr.bf16.mxu0 %v8890
    %9388 = vmatpush2.bf16.msra.mxu0 %v8889
    %9389 = vmatprep.subr.bf16.mxu0 %v8886
    %9390 = vmatpush2.bf16.msra.mxu0 %v8885
    %9391 = vmatprep.subr.bf16.mxu0 %v8882
    %9392 = vmatpush2.bf16.msra.mxu0 %v8881
    %9393 = vmatprep.mubr.bf16.mxu0 %v7796
    %9394 = vmatmul.mubr.bf16.gmra.mxu0 %v7795
    %v9395 = vpop.f32.mrf.mxu0
    %v9396 = vadd.f32 %v8064, %v9395
    %v9397 = vpop.f32.mrf.mxu0
    %v9398 = vadd.f32 %v8068, %v9397
    %v9399 = vpop.f32.mrf.mxu0
    %v9400 = vpop.f32.mrf.mxu0
    %9401 = vdwg.mxu0
    %9402 = vmatprep.subr.bf16.mxu0 %v8942
    %9403 = vmatpush1.bf16.msra.mxu0 %v8941
    %9404 = vmatprep.subr.bf16.mxu0 %v8938
    %9405 = vmatpush1.bf16.msra.mxu0 %v8937
    %9406 = vmatprep.subr.bf16.mxu0 %v8934
    %9407 = vmatpush1.bf16.msra.mxu0 %v8933
    %9408 = vmatprep.subr.bf16.mxu0 %v8930
    %9409 = vmatpush1.bf16.msra.mxu0 %v8929
    %9410 = vmatprep.subr.bf16.mxu0 %v8926
    %9411 = vmatpush1.bf16.msra.mxu0 %v8925
    %9412 = vmatprep.subr.bf16.mxu0 %v8922
    %9413 = vmatpush1.bf16.msra.mxu0 %v8921
    %9414 = vmatprep.subr.bf16.mxu0 %v8918
    %9415 = vmatpush1.bf16.msra.mxu0 %v8917
    %9416 = vmatprep.subr.bf16.mxu0 %v8914
    %9417 = vmatpush1.bf16.msra.mxu0 %v8913
    %9418 = vmatprep.subr.bf16.mxu0 %v8974
    %9419 = vmatpush2.bf16.msra.mxu0 %v8973
    %9420 = vmatprep.subr.bf16.mxu0 %v8970
    %9421 = vmatpush2.bf16.msra.mxu0 %v8969
    %9422 = vmatprep.subr.bf16.mxu0 %v8966
    %9423 = vmatpush2.bf16.msra.mxu0 %v8965
    %9424 = vmatprep.subr.bf16.mxu0 %v8962
    %9425 = vmatpush2.bf16.msra.mxu0 %v8961
    %9426 = vmatprep.subr.bf16.mxu0 %v8958
    %9427 = vmatpush2.bf16.msra.mxu0 %v8957
    %9428 = vmatprep.subr.bf16.mxu0 %v8954
    %9429 = vmatpush2.bf16.msra.mxu0 %v8953
    %9430 = vmatprep.subr.bf16.mxu0 %v8950
    %9431 = vmatpush2.bf16.msra.mxu0 %v8949
    %9432 = vmatprep.subr.bf16.mxu0 %v8946
    %9433 = vmatpush2.bf16.msra.mxu0 %v8945
    %9434 = vmatprep.mubr.bf16.mxu0 %v7798
    %9435 = vmatmul.mubr.bf16.gmra.mxu0 %v7797
    %v9436 = vpop.f32.mrf.mxu0
    %v9437 = vadd.f32 %v9396, %v9436
    %v9438 = vpop.f32.mrf.mxu0
    %v9439 = vadd.f32 %v9398, %v9438
    %v9440 = vpop.f32.mrf.mxu0
    %v9441 = vpop.f32.mrf.mxu0
    %9442 = vdwg.mxu0
    %9443 = vmatprep.subr.bf16.mxu0 %v9006
    %9444 = vmatpush1.bf16.msra.mxu0 %v9005
    %9445 = vmatprep.subr.bf16.mxu0 %v9002
    %9446 = vmatpush1.bf16.msra.mxu0 %v9001
    %9447 = vmatprep.subr.bf16.mxu0 %v8998
    %9448 = vmatpush1.bf16.msra.mxu0 %v8997
    %9449 = vmatprep.subr.bf16.mxu0 %v8994
    %9450 = vmatpush1.bf16.msra.mxu0 %v8993
    %9451 = vmatprep.subr.bf16.mxu0 %v8990
    %9452 = vmatpush1.bf16.msra.mxu0 %v8989
    %9453 = vmatprep.subr.bf16.mxu0 %v8986
    %9454 = vmatpush1.bf16.msra.mxu0 %v8985
    %9455 = vmatprep.subr.bf16.mxu0 %v8982
    %9456 = vmatpush1.bf16.msra.mxu0 %v8981
    %9457 = vmatprep.subr.bf16.mxu0 %v8978
    %9458 = vmatpush1.bf16.msra.mxu0 %v8977
    %9459 = vmatprep.subr.bf16.mxu0 %v9038
    %9460 = vmatpush2.bf16.msra.mxu0 %v9037
    %9461 = vmatprep.subr.bf16.mxu0 %v9034
    %9462 = vmatpush2.bf16.msra.mxu0 %v9033
    %9463 = vmatprep.subr.bf16.mxu0 %v9030
    %9464 = vmatpush2.bf16.msra.mxu0 %v9029
    %9465 = vmatprep.subr.bf16.mxu0 %v9026
    %9466 = vmatpush2.bf16.msra.mxu0 %v9025
    %9467 = vmatprep.subr.bf16.mxu0 %v9022
    %9468 = vmatpush2.bf16.msra.mxu0 %v9021
    %9469 = vmatprep.subr.bf16.mxu0 %v9018
    %9470 = vmatpush2.bf16.msra.mxu0 %v9017
    %9471 = vmatprep.subr.bf16.mxu0 %v9014
    %9472 = vmatpush2.bf16.msra.mxu0 %v9013
    %9473 = vmatprep.subr.bf16.mxu0 %v9010
    %9474 = vmatpush2.bf16.msra.mxu0 %v9009
    %9475 = vmatprep.mubr.bf16.mxu0 %v7800
    %9476 = vmatmul.mubr.bf16.gmra.mxu0 %v7799
    %v9477 = vpop.f32.mrf.mxu0
    %v9478 = vadd.f32 %v9437, %v9477
    %v9479 = vpop.f32.mrf.mxu0
    %v9480 = vadd.f32 %v9439, %v9479
    %v9481 = vpop.f32.mrf.mxu0
    %v9482 = vpop.f32.mrf.mxu0
    %9483 = vdwg.mxu0
    %9484 = vmatprep.subr.bf16.mxu0 %v9070
    %9485 = vmatpush1.bf16.msra.mxu0 %v9069
    %9486 = vmatprep.subr.bf16.mxu0 %v9066
    %9487 = vmatpush1.bf16.msra.mxu0 %v9065
    %9488 = vmatprep.subr.bf16.mxu0 %v9062
    %9489 = vmatpush1.bf16.msra.mxu0 %v9061
    %9490 = vmatprep.subr.bf16.mxu0 %v9058
    %9491 = vmatpush1.bf16.msra.mxu0 %v9057
    %9492 = vmatprep.subr.bf16.mxu0 %v9054
    %9493 = vmatpush1.bf16.msra.mxu0 %v9053
    %9494 = vmatprep.subr.bf16.mxu0 %v9050
    %9495 = vmatpush1.bf16.msra.mxu0 %v9049
    %9496 = vmatprep.subr.bf16.mxu0 %v9046
    %9497 = vmatpush1.bf16.msra.mxu0 %v9045
    %9498 = vmatprep.subr.bf16.mxu0 %v9042
    %9499 = vmatpush1.bf16.msra.mxu0 %v9041
    %9500 = vmatprep.subr.bf16.mxu0 %v9102
    %9501 = vmatpush2.bf16.msra.mxu0 %v9101
    %9502 = vmatprep.subr.bf16.mxu0 %v9098
    %9503 = vmatpush2.bf16.msra.mxu0 %v9097
    %9504 = vmatprep.subr.bf16.mxu0 %v9094
    %9505 = vmatpush2.bf16.msra.mxu0 %v9093
    %9506 = vmatprep.subr.bf16.mxu0 %v9090
    %9507 = vmatpush2.bf16.msra.mxu0 %v9089
    %9508 = vmatprep.subr.bf16.mxu0 %v9086
    %9509 = vmatpush2.bf16.msra.mxu0 %v9085
    %9510 = vmatprep.subr.bf16.mxu0 %v9082
    %9511 = vmatpush2.bf16.msra.mxu0 %v9081
    %9512 = vmatprep.subr.bf16.mxu0 %v9078
    %9513 = vmatpush2.bf16.msra.mxu0 %v9077
    %9514 = vmatprep.subr.bf16.mxu0 %v9074
    %9515 = vmatpush2.bf16.msra.mxu0 %v9073
    %9516 = vmatprep.mubr.bf16.mxu0 %v7802
    %9517 = vmatmul.mubr.bf16.gmra.mxu0 %v7801
    %v9518 = vpop.f32.mrf.mxu0
    %v9519 = vadd.f32 %v9478, %v9518
    %v9520 = vpop.f32.mrf.mxu0
    %v9521 = vadd.f32 %v9480, %v9520
    %v9522 = vpop.f32.mrf.mxu0
    %v9523 = vpop.f32.mrf.mxu0
    %9524 = vdwg.mxu0
    %9525 = vmatprep.subr.bf16.mxu0 %v8880
    %9526 = vmatpush1.bf16.msra.mxu0 %v8879
    %9527 = vmatprep.subr.bf16.mxu0 %v8876
    %9528 = vmatpush1.bf16.msra.mxu0 %v8875
    %9529 = vmatprep.subr.bf16.mxu0 %v8872
    %9530 = vmatpush1.bf16.msra.mxu0 %v8871
    %9531 = vmatprep.subr.bf16.mxu0 %v8868
    %9532 = vmatpush1.bf16.msra.mxu0 %v8867
    %9533 = vmatprep.subr.bf16.mxu0 %v8864
    %9534 = vmatpush1.bf16.msra.mxu0 %v8863
    %9535 = vmatprep.subr.bf16.mxu0 %v8860
    %9536 = vmatpush1.bf16.msra.mxu0 %v8859
    %9537 = vmatprep.subr.bf16.mxu0 %v8856
    %9538 = vmatpush1.bf16.msra.mxu0 %v8855
    %9539 = vmatprep.subr.bf16.mxu0 %v8852
    %9540 = vmatpush1.bf16.msra.mxu0 %v8851
    %9541 = vmatprep.subr.bf16.mxu0 %v8912
    %9542 = vmatpush2.bf16.msra.mxu0 %v8911
    %9543 = vmatprep.subr.bf16.mxu0 %v8908
    %9544 = vmatpush2.bf16.msra.mxu0 %v8907
    %9545 = vmatprep.subr.bf16.mxu0 %v8904
    %9546 = vmatpush2.bf16.msra.mxu0 %v8903
    %9547 = vmatprep.subr.bf16.mxu0 %v8900
    %9548 = vmatpush2.bf16.msra.mxu0 %v8899
    %9549 = vmatprep.subr.bf16.mxu0 %v8896
    %9550 = vmatpush2.bf16.msra.mxu0 %v8895
    %9551 = vmatprep.subr.bf16.mxu0 %v8892
    %9552 = vmatpush2.bf16.msra.mxu0 %v8891
    %9553 = vmatprep.subr.bf16.mxu0 %v8888
    %9554 = vmatpush2.bf16.msra.mxu0 %v8887
    %9555 = vmatprep.subr.bf16.mxu0 %v8884
    %9556 = vmatpush2.bf16.msra.mxu0 %v8883
    %9557 = vmatprep.mubr.bf16.mxu0 %v7796
    %9558 = vmatmul.mubr.bf16.gmra.mxu0 %v7795
    %v9559 = vpop.f32.mrf.mxu0
    %v9560 = vadd.f32 %v8072, %v9559
    %v9561 = vpop.f32.mrf.mxu0
    %v9562 = vadd.f32 %v8076, %v9561
    %v9563 = vpop.f32.mrf.mxu0
    %v9564 = vpop.f32.mrf.mxu0
    %9565 = vdwg.mxu0
    %9566 = vmatprep.subr.bf16.mxu0 %v8944
    %9567 = vmatpush1.bf16.msra.mxu0 %v8943
    %9568 = vmatprep.subr.bf16.mxu0 %v8940
    %9569 = vmatpush1.bf16.msra.mxu0 %v8939
    %9570 = vmatprep.subr.bf16.mxu0 %v8936
    %9571 = vmatpush1.bf16.msra.mxu0 %v8935
    %9572 = vmatprep.subr.bf16.mxu0 %v8932
    %9573 = vmatpush1.bf16.msra.mxu0 %v8931
    %9574 = vmatprep.subr.bf16.mxu0 %v8928
    %9575 = vmatpush1.bf16.msra.mxu0 %v8927
    %9576 = vmatprep.subr.bf16.mxu0 %v8924
    %9577 = vmatpush1.bf16.msra.mxu0 %v8923
    %9578 = vmatprep.subr.bf16.mxu0 %v8920
    %9579 = vmatpush1.bf16.msra.mxu0 %v8919
    %9580 = vmatprep.subr.bf16.mxu0 %v8916
    %9581 = vmatpush1.bf16.msra.mxu0 %v8915
    %9582 = vmatprep.subr.bf16.mxu0 %v8976
    %9583 = vmatpush2.bf16.msra.mxu0 %v8975
    %9584 = vmatprep.subr.bf16.mxu0 %v8972
    %9585 = vmatpush2.bf16.msra.mxu0 %v8971
    %9586 = vmatprep.subr.bf16.mxu0 %v8968
    %9587 = vmatpush2.bf16.msra.mxu0 %v8967
    %9588 = vmatprep.subr.bf16.mxu0 %v8964
    %9589 = vmatpush2.bf16.msra.mxu0 %v8963
    %9590 = vmatprep.subr.bf16.mxu0 %v8960
    %9591 = vmatpush2.bf16.msra.mxu0 %v8959
    %9592 = vmatprep.subr.bf16.mxu0 %v8956
    %9593 = vmatpush2.bf16.msra.mxu0 %v8955
    %9594 = vmatprep.subr.bf16.mxu0 %v8952
    %9595 = vmatpush2.bf16.msra.mxu0 %v8951
    %9596 = vmatprep.subr.bf16.mxu0 %v8948
    %9597 = vmatpush2.bf16.msra.mxu0 %v8947
    %9598 = vmatprep.mubr.bf16.mxu0 %v7798
    %9599 = vmatmul.mubr.bf16.gmra.mxu0 %v7797
    %v9600 = vpop.f32.mrf.mxu0
    %v9601 = vadd.f32 %v9560, %v9600
    %v9602 = vpop.f32.mrf.mxu0
    %v9603 = vadd.f32 %v9562, %v9602
    %v9604 = vpop.f32.mrf.mxu0
    %v9605 = vpop.f32.mrf.mxu0
    %9606 = vdwg.mxu0
    %9607 = vmatprep.subr.bf16.mxu0 %v9008
    %9608 = vmatpush1.bf16.msra.mxu0 %v9007
    %9609 = vmatprep.subr.bf16.mxu0 %v9004
    %9610 = vmatpush1.bf16.msra.mxu0 %v9003
    %9611 = vmatprep.subr.bf16.mxu0 %v9000
    %9612 = vmatpush1.bf16.msra.mxu0 %v8999
    %9613 = vmatprep.subr.bf16.mxu0 %v8996
    %9614 = vmatpush1.bf16.msra.mxu0 %v8995
    %9615 = vmatprep.subr.bf16.mxu0 %v8992
    %9616 = vmatpush1.bf16.msra.mxu0 %v8991
    %9617 = vmatprep.subr.bf16.mxu0 %v8988
    %9618 = vmatpush1.bf16.msra.mxu0 %v8987
    %9619 = vmatprep.subr.bf16.mxu0 %v8984
    %9620 = vmatpush1.bf16.msra.mxu0 %v8983
    %9621 = vmatprep.subr.bf16.mxu0 %v8980
    %9622 = vmatpush1.bf16.msra.mxu0 %v8979
    %9623 = vmatprep.subr.bf16.mxu0 %v9040
    %9624 = vmatpush2.bf16.msra.mxu0 %v9039
    %9625 = vmatprep.subr.bf16.mxu0 %v9036
    %9626 = vmatpush2.bf16.msra.mxu0 %v9035
    %9627 = vmatprep.subr.bf16.mxu0 %v9032
    %9628 = vmatpush2.bf16.msra.mxu0 %v9031
    %9629 = vmatprep.subr.bf16.mxu0 %v9028
    %9630 = vmatpush2.bf16.msra.mxu0 %v9027
    %9631 = vmatprep.subr.bf16.mxu0 %v9024
    %9632 = vmatpush2.bf16.msra.mxu0 %v9023
    %9633 = vmatprep.subr.bf16.mxu0 %v9020
    %9634 = vmatpush2.bf16.msra.mxu0 %v9019
    %9635 = vmatprep.subr.bf16.mxu0 %v9016
    %9636 = vmatpush2.bf16.msra.mxu0 %v9015
    %9637 = vmatprep.subr.bf16.mxu0 %v9012
    %9638 = vmatpush2.bf16.msra.mxu0 %v9011
    %9639 = vmatprep.mubr.bf16.mxu0 %v7800
    %9640 = vmatmul.mubr.bf16.gmra.mxu0 %v7799
    %v9641 = vpop.f32.mrf.mxu0
    %v9642 = vadd.f32 %v9601, %v9641
    %v9643 = vpop.f32.mrf.mxu0
    %v9644 = vadd.f32 %v9603, %v9643
    %v9645 = vpop.f32.mrf.mxu0
    %v9646 = vpop.f32.mrf.mxu0
    %9647 = vdwg.mxu0
    %9648 = vmatprep.subr.bf16.mxu0 %v9072
    %9649 = vmatpush1.bf16.msra.mxu0 %v9071
    %9650 = vmatprep.subr.bf16.mxu0 %v9068
    %9651 = vmatpush1.bf16.msra.mxu0 %v9067
    %9652 = vmatprep.subr.bf16.mxu0 %v9064
    %9653 = vmatpush1.bf16.msra.mxu0 %v9063
    %9654 = vmatprep.subr.bf16.mxu0 %v9060
    %9655 = vmatpush1.bf16.msra.mxu0 %v9059
    %9656 = vmatprep.subr.bf16.mxu0 %v9056
    %9657 = vmatpush1.bf16.msra.mxu0 %v9055
    %9658 = vmatprep.subr.bf16.mxu0 %v9052
    %9659 = vmatpush1.bf16.msra.mxu0 %v9051
    %9660 = vmatprep.subr.bf16.mxu0 %v9048
    %9661 = vmatpush1.bf16.msra.mxu0 %v9047
    %9662 = vmatprep.subr.bf16.mxu0 %v9044
    %9663 = vmatpush1.bf16.msra.mxu0 %v9043
    %9664 = vmatprep.subr.bf16.mxu0 %v9104
    %9665 = vmatpush2.bf16.msra.mxu0 %v9103
    %9666 = vmatprep.subr.bf16.mxu0 %v9100
    %9667 = vmatpush2.bf16.msra.mxu0 %v9099
    %9668 = vmatprep.subr.bf16.mxu0 %v9096
    %9669 = vmatpush2.bf16.msra.mxu0 %v9095
    %9670 = vmatprep.subr.bf16.mxu0 %v9092
    %9671 = vmatpush2.bf16.msra.mxu0 %v9091
    %9672 = vmatprep.subr.bf16.mxu0 %v9088
    %9673 = vmatpush2.bf16.msra.mxu0 %v9087
    %9674 = vmatprep.subr.bf16.mxu0 %v9084
    %9675 = vmatpush2.bf16.msra.mxu0 %v9083
    %9676 = vmatprep.subr.bf16.mxu0 %v9080
    %9677 = vmatpush2.bf16.msra.mxu0 %v9079
    %9678 = vmatprep.subr.bf16.mxu0 %v9076
    %9679 = vmatpush2.bf16.msra.mxu0 %v9075
    %9680 = vmatprep.mubr.bf16.mxu0 %v7802
    %9681 = vmatmul.mubr.bf16.gmra.mxu0 %v7801
    %v9682 = vpop.f32.mrf.mxu0
    %v9683 = vadd.f32 %v9642, %v9682
    %v9684 = vpop.f32.mrf.mxu0
    %v9685 = vadd.f32 %v9644, %v9684
    %v9686 = vpop.f32.mrf.mxu0
    %v9687 = vpop.f32.mrf.mxu0
    %9688 = vdwg.mxu0
    %v9689 = vmax.f32 %v9519, 0.0
    %v9690 = vmax.f32 %v9521, 0.0
    %v9691 = vmax.f32 %v9683, 0.0
    %v9692 = vmax.f32 %v9685, 0.0
    %v9693 = vpack.c.bf16 %v9689, %v9689
    %v9694 = vpack.c.bf16 %v9690, %v9690
    %v9695 = vpack.c.bf16 %v9691, %v9691
    %v9696 = vpack.c.bf16 %v9692, %v9692
    %v9697 = vld [vmem:[#allocation14] sm:$0xff]
    %v9698 = vld [vmem:[#allocation14 + $0x8] sm:$0xff]
    %v9699 = vld [vmem:[#allocation14 + $0x10] sm:$0xff]
    %v9700 = vld [vmem:[#allocation14 + $0x18] sm:$0xff]
    %v9701 = vld [vmem:[#allocation14 + $0x20] sm:$0xff]
    %v9702 = vld [vmem:[#allocation14 + $0x28] sm:$0xff]
    %v9703 = vld [vmem:[#allocation14 + $0x30] sm:$0xff]
    %v9704 = vld [vmem:[#allocation14 + $0x38] sm:$0xff]
    %v9705 = vld [vmem:[#allocation14 + $0x40] sm:$0xff]
    %v9706 = vld [vmem:[#allocation14 + $0x48] sm:$0xff]
    %v9707 = vld [vmem:[#allocation14 + $0x50] sm:$0xff]
    %v9708 = vld [vmem:[#allocation14 + $0x58] sm:$0xff]
    %v9709 = vld [vmem:[#allocation14 + $0x60] sm:$0xff]
    %v9710 = vld [vmem:[#allocation14 + $0x68] sm:$0xff]
    %v9711 = vld [vmem:[#allocation14 + $0x70] sm:$0xff]
    %v9712 = vld [vmem:[#allocation14 + $0x78] sm:$0xff]
    %v9713 = vld [vmem:[#allocation14 + $0x80] sm:$0xff]
    %v9714 = vld [vmem:[#allocation14 + $0x88] sm:$0xff]
    %v9715 = vld [vmem:[#allocation14 + $0x90] sm:$0xff]
    %v9716 = vld [vmem:[#allocation14 + $0x98] sm:$0xff]
    %v9717 = vld [vmem:[#allocation14 + $0xa0] sm:$0xff]
    %v9718 = vld [vmem:[#allocation14 + $0xa8] sm:$0xff]
    %v9719 = vld [vmem:[#allocation14 + $0xb0] sm:$0xff]
    %v9720 = vld [vmem:[#allocation14 + $0xb8] sm:$0xff]
    %v9721 = vld [vmem:[#allocation14 + $0xc0] sm:$0xff]
    %v9722 = vld [vmem:[#allocation14 + $0xc8] sm:$0xff]
    %v9723 = vld [vmem:[#allocation14 + $0xd0] sm:$0xff]
    %v9724 = vld [vmem:[#allocation14 + $0xd8] sm:$0xff]
    %v9725 = vld [vmem:[#allocation14 + $0xe0] sm:$0xff]
    %v9726 = vld [vmem:[#allocation14 + $0xe8] sm:$0xff]
    %v9727 = vld [vmem:[#allocation14 + $0xf0] sm:$0xff]
    %v9728 = vld [vmem:[#allocation14 + $0xf8] sm:$0xff]
    %v9729 = vld [vmem:[#allocation14 + $0x100] sm:$0xff]
    %v9730 = vld [vmem:[#allocation14 + $0x108] sm:$0xff]
    %v9731 = vld [vmem:[#allocation14 + $0x110] sm:$0xff]
    %v9732 = vld [vmem:[#allocation14 + $0x118] sm:$0xff]
    %v9733 = vld [vmem:[#allocation14 + $0x120] sm:$0xff]
    %v9734 = vld [vmem:[#allocation14 + $0x128] sm:$0xff]
    %v9735 = vld [vmem:[#allocation14 + $0x130] sm:$0xff]
    %v9736 = vld [vmem:[#allocation14 + $0x138] sm:$0xff]
    %v9737 = vld [vmem:[#allocation14 + $0x140] sm:$0xff]
    %v9738 = vld [vmem:[#allocation14 + $0x148] sm:$0xff]
    %v9739 = vld [vmem:[#allocation14 + $0x150] sm:$0xff]
    %v9740 = vld [vmem:[#allocation14 + $0x158] sm:$0xff]
    %v9741 = vld [vmem:[#allocation14 + $0x160] sm:$0xff]
    %v9742 = vld [vmem:[#allocation14 + $0x168] sm:$0xff]
    %v9743 = vld [vmem:[#allocation14 + $0x170] sm:$0xff]
    %v9744 = vld [vmem:[#allocation14 + $0x178] sm:$0xff]
    %v9745 = vld [vmem:[#allocation14 + $0x180] sm:$0xff]
    %v9746 = vld [vmem:[#allocation14 + $0x188] sm:$0xff]
    %v9747 = vld [vmem:[#allocation14 + $0x190] sm:$0xff]
    %v9748 = vld [vmem:[#allocation14 + $0x198] sm:$0xff]
    %v9749 = vld [vmem:[#allocation14 + $0x1a0] sm:$0xff]
    %v9750 = vld [vmem:[#allocation14 + $0x1a8] sm:$0xff]
    %v9751 = vld [vmem:[#allocation14 + $0x1b0] sm:$0xff]
    %v9752 = vld [vmem:[#allocation14 + $0x1b8] sm:$0xff]
    %v9753 = vld [vmem:[#allocation14 + $0x1c0] sm:$0xff]
    %v9754 = vld [vmem:[#allocation14 + $0x1c8] sm:$0xff]
    %v9755 = vld [vmem:[#allocation14 + $0x1d0] sm:$0xff]
    %v9756 = vld [vmem:[#allocation14 + $0x1d8] sm:$0xff]
    %v9757 = vld [vmem:[#allocation14 + $0x1e0] sm:$0xff]
    %v9758 = vld [vmem:[#allocation14 + $0x1e8] sm:$0xff]
    %v9759 = vld [vmem:[#allocation14 + $0x1f0] sm:$0xff]
    %v9760 = vld [vmem:[#allocation14 + $0x1f8] sm:$0xff]
    %v9761 = vld [vmem:[#allocation14 + $0x200] sm:$0xff]
    %v9762 = vld [vmem:[#allocation14 + $0x208] sm:$0xff]
    %v9763 = vld [vmem:[#allocation14 + $0x210] sm:$0xff]
    %v9764 = vld [vmem:[#allocation14 + $0x218] sm:$0xff]
    %v9765 = vld [vmem:[#allocation14 + $0x220] sm:$0xff]
    %v9766 = vld [vmem:[#allocation14 + $0x228] sm:$0xff]
    %v9767 = vld [vmem:[#allocation14 + $0x230] sm:$0xff]
    %v9768 = vld [vmem:[#allocation14 + $0x238] sm:$0xff]
    %v9769 = vld [vmem:[#allocation14 + $0x240] sm:$0xff]
    %v9770 = vld [vmem:[#allocation14 + $0x248] sm:$0xff]
    %v9771 = vld [vmem:[#allocation14 + $0x250] sm:$0xff]
    %v9772 = vld [vmem:[#allocation14 + $0x258] sm:$0xff]
    %v9773 = vld [vmem:[#allocation14 + $0x260] sm:$0xff]
    %v9774 = vld [vmem:[#allocation14 + $0x268] sm:$0xff]
    %v9775 = vld [vmem:[#allocation14 + $0x270] sm:$0xff]
    %v9776 = vld [vmem:[#allocation14 + $0x278] sm:$0xff]
    %v9777 = vld [vmem:[#allocation14 + $0x280] sm:$0xff]
    %v9778 = vld [vmem:[#allocation14 + $0x288] sm:$0xff]
    %v9779 = vld [vmem:[#allocation14 + $0x290] sm:$0xff]
    %v9780 = vld [vmem:[#allocation14 + $0x298] sm:$0xff]
    %v9781 = vld [vmem:[#allocation14 + $0x2a0] sm:$0xff]
    %v9782 = vld [vmem:[#allocation14 + $0x2a8] sm:$0xff]
    %v9783 = vld [vmem:[#allocation14 + $0x2b0] sm:$0xff]
    %v9784 = vld [vmem:[#allocation14 + $0x2b8] sm:$0xff]
    %v9785 = vld [vmem:[#allocation14 + $0x2c0] sm:$0xff]
    %v9786 = vld [vmem:[#allocation14 + $0x2c8] sm:$0xff]
    %v9787 = vld [vmem:[#allocation14 + $0x2d0] sm:$0xff]
    %v9788 = vld [vmem:[#allocation14 + $0x2d8] sm:$0xff]
    %v9789 = vld [vmem:[#allocation14 + $0x2e0] sm:$0xff]
    %v9790 = vld [vmem:[#allocation14 + $0x2e8] sm:$0xff]
    %v9791 = vld [vmem:[#allocation14 + $0x2f0] sm:$0xff]
    %v9792 = vld [vmem:[#allocation14 + $0x2f8] sm:$0xff]
    %v9793 = vld [vmem:[#allocation14 + $0x300] sm:$0xff]
    %v9794 = vld [vmem:[#allocation14 + $0x308] sm:$0xff]
    %v9795 = vld [vmem:[#allocation14 + $0x310] sm:$0xff]
    %v9796 = vld [vmem:[#allocation14 + $0x318] sm:$0xff]
    %v9797 = vld [vmem:[#allocation14 + $0x320] sm:$0xff]
    %v9798 = vld [vmem:[#allocation14 + $0x328] sm:$0xff]
    %v9799 = vld [vmem:[#allocation14 + $0x330] sm:$0xff]
    %v9800 = vld [vmem:[#allocation14 + $0x338] sm:$0xff]
    %v9801 = vld [vmem:[#allocation14 + $0x340] sm:$0xff]
    %v9802 = vld [vmem:[#allocation14 + $0x348] sm:$0xff]
    %v9803 = vld [vmem:[#allocation14 + $0x350] sm:$0xff]
    %v9804 = vld [vmem:[#allocation14 + $0x358] sm:$0xff]
    %v9805 = vld [vmem:[#allocation14 + $0x360] sm:$0xff]
    %v9806 = vld [vmem:[#allocation14 + $0x368] sm:$0xff]
    %v9807 = vld [vmem:[#allocation14 + $0x370] sm:$0xff]
    %v9808 = vld [vmem:[#allocation14 + $0x378] sm:$0xff]
    %v9809 = vld [vmem:[#allocation14 + $0x380] sm:$0xff]
    %v9810 = vld [vmem:[#allocation14 + $0x388] sm:$0xff]
    %v9811 = vld [vmem:[#allocation14 + $0x390] sm:$0xff]
    %v9812 = vld [vmem:[#allocation14 + $0x398] sm:$0xff]
    %v9813 = vld [vmem:[#allocation14 + $0x3a0] sm:$0xff]
    %v9814 = vld [vmem:[#allocation14 + $0x3a8] sm:$0xff]
    %v9815 = vld [vmem:[#allocation14 + $0x3b0] sm:$0xff]
    %v9816 = vld [vmem:[#allocation14 + $0x3b8] sm:$0xff]
    %v9817 = vld [vmem:[#allocation14 + $0x3c0] sm:$0xff]
    %v9818 = vld [vmem:[#allocation14 + $0x3c8] sm:$0xff]
    %v9819 = vld [vmem:[#allocation14 + $0x3d0] sm:$0xff]
    %v9820 = vld [vmem:[#allocation14 + $0x3d8] sm:$0xff]
    %v9821 = vld [vmem:[#allocation14 + $0x3e0] sm:$0xff]
    %v9822 = vld [vmem:[#allocation14 + $0x3e8] sm:$0xff]
    %v9823 = vld [vmem:[#allocation14 + $0x3f0] sm:$0xff]
    %v9824 = vld [vmem:[#allocation14 + $0x3f8] sm:$0xff]
    %v9825 = vld [vmem:[#allocation16] sm:$0xf]
    %v9827 = vlaneseq
    %v9828 = vshrl.u32 %v9827, 7
    %v9829 = vsub.s32 0, %v9828
    %v9830 = vrot.slane %v9825, %v9829
    %v9831 = vlaneseq
    %v9832 = vshrl.u32 %v9831, 7
    %v9833 = vsub.s32 1, %v9832
    %v9834 = vrot.slane %v9825, %v9833
    %v9835 = vlaneseq
    %v9836 = vshrl.u32 %v9835, 7
    %v9837 = vsub.s32 2, %v9836
    %v9838 = vrot.slane %v9825, %v9837
    %v9839 = vlaneseq
    %v9840 = vshrl.u32 %v9839, 7
    %v9841 = vsub.s32 3, %v9840
    %v9842 = vrot.slane %v9825, %v9841
    %v9975 = vunpack.c.l.b16 %v9697
    %v9976 = vunpack.c.h.b16 %v9697
    %v9977 = vunpack.c.l.b16 %v9698
    %v9978 = vunpack.c.h.b16 %v9698
    %v9979 = vunpack.c.l.b16 %v9699
    %v9980 = vunpack.c.h.b16 %v9699
    %v9981 = vunpack.c.l.b16 %v9700
    %v9982 = vunpack.c.h.b16 %v9700
    %v9983 = vunpack.c.l.b16 %v9701
    %v9984 = vunpack.c.h.b16 %v9701
    %v9985 = vunpack.c.l.b16 %v9702
    %v9986 = vunpack.c.h.b16 %v9702
    %v9987 = vunpack.c.l.b16 %v9703
    %v9988 = vunpack.c.h.b16 %v9703
    %v9989 = vunpack.c.l.b16 %v9704
    %v9990 = vunpack.c.h.b16 %v9704
    %v9991 = vunpack.c.l.b16 %v9705
    %v9992 = vunpack.c.h.b16 %v9705
    %v9993 = vunpack.c.l.b16 %v9706
    %v9994 = vunpack.c.h.b16 %v9706
    %v9995 = vunpack.c.l.b16 %v9707
    %v9996 = vunpack.c.h.b16 %v9707
    %v9997 = vunpack.c.l.b16 %v9708
    %v9998 = vunpack.c.h.b16 %v9708
    %v9999 = vunpack.c.l.b16 %v9709
    %v10000 = vunpack.c.h.b16 %v9709
    %v10001 = vunpack.c.l.b16 %v9710
    %v10002 = vunpack.c.h.b16 %v9710
    %v10003 = vunpack.c.l.b16 %v9711
    %v10004 = vunpack.c.h.b16 %v9711
    %v10005 = vunpack.c.l.b16 %v9712
    %v10006 = vunpack.c.h.b16 %v9712
    %v10007 = vunpack.c.l.b16 %v9713
    %v10008 = vunpack.c.h.b16 %v9713
    %v10009 = vunpack.c.l.b16 %v9714
    %v10010 = vunpack.c.h.b16 %v9714
    %v10011 = vunpack.c.l.b16 %v9715
    %v10012 = vunpack.c.h.b16 %v9715
    %v10013 = vunpack.c.l.b16 %v9716
    %v10014 = vunpack.c.h.b16 %v9716
    %v10015 = vunpack.c.l.b16 %v9717
    %v10016 = vunpack.c.h.b16 %v9717
    %v10017 = vunpack.c.l.b16 %v9718
    %v10018 = vunpack.c.h.b16 %v9718
    %v10019 = vunpack.c.l.b16 %v9719
    %v10020 = vunpack.c.h.b16 %v9719
    %v10021 = vunpack.c.l.b16 %v9720
    %v10022 = vunpack.c.h.b16 %v9720
    %v10023 = vunpack.c.l.b16 %v9721
    %v10024 = vunpack.c.h.b16 %v9721
    %v10025 = vunpack.c.l.b16 %v9722
    %v10026 = vunpack.c.h.b16 %v9722
    %v10027 = vunpack.c.l.b16 %v9723
    %v10028 = vunpack.c.h.b16 %v9723
    %v10029 = vunpack.c.l.b16 %v9724
    %v10030 = vunpack.c.h.b16 %v9724
    %v10031 = vunpack.c.l.b16 %v9725
    %v10032 = vunpack.c.h.b16 %v9725
    %v10033 = vunpack.c.l.b16 %v9726
    %v10034 = vunpack.c.h.b16 %v9726
    %v10035 = vunpack.c.l.b16 %v9727
    %v10036 = vunpack.c.h.b16 %v9727
    %v10037 = vunpack.c.l.b16 %v9728
    %v10038 = vunpack.c.h.b16 %v9728
    %v10039 = vunpack.c.l.b16 %v9729
    %v10040 = vunpack.c.h.b16 %v9729
    %v10041 = vunpack.c.l.b16 %v9730
    %v10042 = vunpack.c.h.b16 %v9730
    %v10043 = vunpack.c.l.b16 %v9731
    %v10044 = vunpack.c.h.b16 %v9731
    %v10045 = vunpack.c.l.b16 %v9732
    %v10046 = vunpack.c.h.b16 %v9732
    %v10047 = vunpack.c.l.b16 %v9733
    %v10048 = vunpack.c.h.b16 %v9733
    %v10049 = vunpack.c.l.b16 %v9734
    %v10050 = vunpack.c.h.b16 %v9734
    %v10051 = vunpack.c.l.b16 %v9735
    %v10052 = vunpack.c.h.b16 %v9735
    %v10053 = vunpack.c.l.b16 %v9736
    %v10054 = vunpack.c.h.b16 %v9736
    %v10055 = vunpack.c.l.b16 %v9737
    %v10056 = vunpack.c.h.b16 %v9737
    %v10057 = vunpack.c.l.b16 %v9738
    %v10058 = vunpack.c.h.b16 %v9738
    %v10059 = vunpack.c.l.b16 %v9739
    %v10060 = vunpack.c.h.b16 %v9739
    %v10061 = vunpack.c.l.b16 %v9740
    %v10062 = vunpack.c.h.b16 %v9740
    %v10063 = vunpack.c.l.b16 %v9741
    %v10064 = vunpack.c.h.b16 %v9741
    %v10065 = vunpack.c.l.b16 %v9742
    %v10066 = vunpack.c.h.b16 %v9742
    %v10067 = vunpack.c.l.b16 %v9743
    %v10068 = vunpack.c.h.b16 %v9743
    %v10069 = vunpack.c.l.b16 %v9744
    %v10070 = vunpack.c.h.b16 %v9744
    %v10071 = vunpack.c.l.b16 %v9745
    %v10072 = vunpack.c.h.b16 %v9745
    %v10073 = vunpack.c.l.b16 %v9746
    %v10074 = vunpack.c.h.b16 %v9746
    %v10075 = vunpack.c.l.b16 %v9747
    %v10076 = vunpack.c.h.b16 %v9747
    %v10077 = vunpack.c.l.b16 %v9748
    %v10078 = vunpack.c.h.b16 %v9748
    %v10079 = vunpack.c.l.b16 %v9749
    %v10080 = vunpack.c.h.b16 %v9749
    %v10081 = vunpack.c.l.b16 %v9750
    %v10082 = vunpack.c.h.b16 %v9750
    %v10083 = vunpack.c.l.b16 %v9751
    %v10084 = vunpack.c.h.b16 %v9751
    %v10085 = vunpack.c.l.b16 %v9752
    %v10086 = vunpack.c.h.b16 %v9752
    %v10087 = vunpack.c.l.b16 %v9753
    %v10088 = vunpack.c.h.b16 %v9753
    %v10089 = vunpack.c.l.b16 %v9754
    %v10090 = vunpack.c.h.b16 %v9754
    %v10091 = vunpack.c.l.b16 %v9755
    %v10092 = vunpack.c.h.b16 %v9755
    %v10093 = vunpack.c.l.b16 %v9756
    %v10094 = vunpack.c.h.b16 %v9756
    %v10095 = vunpack.c.l.b16 %v9757
    %v10096 = vunpack.c.h.b16 %v9757
    %v10097 = vunpack.c.l.b16 %v9758
    %v10098 = vunpack.c.h.b16 %v9758
    %v10099 = vunpack.c.l.b16 %v9759
    %v10100 = vunpack.c.h.b16 %v9759
    %v10101 = vunpack.c.l.b16 %v9760
    %v10102 = vunpack.c.h.b16 %v9760
    %v10103 = vunpack.c.l.b16 %v9761
    %v10104 = vunpack.c.h.b16 %v9761
    %v10105 = vunpack.c.l.b16 %v9762
    %v10106 = vunpack.c.h.b16 %v9762
    %v10107 = vunpack.c.l.b16 %v9763
    %v10108 = vunpack.c.h.b16 %v9763
    %v10109 = vunpack.c.l.b16 %v9764
    %v10110 = vunpack.c.h.b16 %v9764
    %v10111 = vunpack.c.l.b16 %v9765
    %v10112 = vunpack.c.h.b16 %v9765
    %v10113 = vunpack.c.l.b16 %v9766
    %v10114 = vunpack.c.h.b16 %v9766
    %v10115 = vunpack.c.l.b16 %v9767
    %v10116 = vunpack.c.h.b16 %v9767
    %v10117 = vunpack.c.l.b16 %v9768
    %v10118 = vunpack.c.h.b16 %v9768
    %v10119 = vunpack.c.l.b16 %v9769
    %v10120 = vunpack.c.h.b16 %v9769
    %v10121 = vunpack.c.l.b16 %v9770
    %v10122 = vunpack.c.h.b16 %v9770
    %v10123 = vunpack.c.l.b16 %v9771
    %v10124 = vunpack.c.h.b16 %v9771
    %v10125 = vunpack.c.l.b16 %v9772
    %v10126 = vunpack.c.h.b16 %v9772
    %v10127 = vunpack.c.l.b16 %v9773
    %v10128 = vunpack.c.h.b16 %v9773
    %v10129 = vunpack.c.l.b16 %v9774
    %v10130 = vunpack.c.h.b16 %v9774
    %v10131 = vunpack.c.l.b16 %v9775
    %v10132 = vunpack.c.h.b16 %v9775
    %v10133 = vunpack.c.l.b16 %v9776
    %v10134 = vunpack.c.h.b16 %v9776
    %v10135 = vunpack.c.l.b16 %v9777
    %v10136 = vunpack.c.h.b16 %v9777
    %v10137 = vunpack.c.l.b16 %v9778
    %v10138 = vunpack.c.h.b16 %v9778
    %v10139 = vunpack.c.l.b16 %v9779
    %v10140 = vunpack.c.h.b16 %v9779
    %v10141 = vunpack.c.l.b16 %v9780
    %v10142 = vunpack.c.h.b16 %v9780
    %v10143 = vunpack.c.l.b16 %v9781
    %v10144 = vunpack.c.h.b16 %v9781
    %v10145 = vunpack.c.l.b16 %v9782
    %v10146 = vunpack.c.h.b16 %v9782
    %v10147 = vunpack.c.l.b16 %v9783
    %v10148 = vunpack.c.h.b16 %v9783
    %v10149 = vunpack.c.l.b16 %v9784
    %v10150 = vunpack.c.h.b16 %v9784
    %v10151 = vunpack.c.l.b16 %v9785
    %v10152 = vunpack.c.h.b16 %v9785
    %v10153 = vunpack.c.l.b16 %v9786
    %v10154 = vunpack.c.h.b16 %v9786
    %v10155 = vunpack.c.l.b16 %v9787
    %v10156 = vunpack.c.h.b16 %v9787
    %v10157 = vunpack.c.l.b16 %v9788
    %v10158 = vunpack.c.h.b16 %v9788
    %v10159 = vunpack.c.l.b16 %v9789
    %v10160 = vunpack.c.h.b16 %v9789
    %v10161 = vunpack.c.l.b16 %v9790
    %v10162 = vunpack.c.h.b16 %v9790
    %v10163 = vunpack.c.l.b16 %v9791
    %v10164 = vunpack.c.h.b16 %v9791
    %v10165 = vunpack.c.l.b16 %v9792
    %v10166 = vunpack.c.h.b16 %v9792
    %v10167 = vunpack.c.l.b16 %v9793
    %v10168 = vunpack.c.h.b16 %v9793
    %v10169 = vunpack.c.l.b16 %v9794
    %v10170 = vunpack.c.h.b16 %v9794
    %v10171 = vunpack.c.l.b16 %v9795
    %v10172 = vunpack.c.h.b16 %v9795
    %v10173 = vunpack.c.l.b16 %v9796
    %v10174 = vunpack.c.h.b16 %v9796
    %v10175 = vunpack.c.l.b16 %v9797
    %v10176 = vunpack.c.h.b16 %v9797
    %v10177 = vunpack.c.l.b16 %v9798
    %v10178 = vunpack.c.h.b16 %v9798
    %v10179 = vunpack.c.l.b16 %v9799
    %v10180 = vunpack.c.h.b16 %v9799
    %v10181 = vunpack.c.l.b16 %v9800
    %v10182 = vunpack.c.h.b16 %v9800
    %v10183 = vunpack.c.l.b16 %v9801
    %v10184 = vunpack.c.h.b16 %v9801
    %v10185 = vunpack.c.l.b16 %v9802
    %v10186 = vunpack.c.h.b16 %v9802
    %v10187 = vunpack.c.l.b16 %v9803
    %v10188 = vunpack.c.h.b16 %v9803
    %v10189 = vunpack.c.l.b16 %v9804
    %v10190 = vunpack.c.h.b16 %v9804
    %v10191 = vunpack.c.l.b16 %v9805
    %v10192 = vunpack.c.h.b16 %v9805
    %v10193 = vunpack.c.l.b16 %v9806
    %v10194 = vunpack.c.h.b16 %v9806
    %v10195 = vunpack.c.l.b16 %v9807
    %v10196 = vunpack.c.h.b16 %v9807
    %v10197 = vunpack.c.l.b16 %v9808
    %v10198 = vunpack.c.h.b16 %v9808
    %v10199 = vunpack.c.l.b16 %v9809
    %v10200 = vunpack.c.h.b16 %v9809
    %v10201 = vunpack.c.l.b16 %v9810
    %v10202 = vunpack.c.h.b16 %v9810
    %v10203 = vunpack.c.l.b16 %v9811
    %v10204 = vunpack.c.h.b16 %v9811
    %v10205 = vunpack.c.l.b16 %v9812
    %v10206 = vunpack.c.h.b16 %v9812
    %v10207 = vunpack.c.l.b16 %v9813
    %v10208 = vunpack.c.h.b16 %v9813
    %v10209 = vunpack.c.l.b16 %v9814
    %v10210 = vunpack.c.h.b16 %v9814
    %v10211 = vunpack.c.l.b16 %v9815
    %v10212 = vunpack.c.h.b16 %v9815
    %v10213 = vunpack.c.l.b16 %v9816
    %v10214 = vunpack.c.h.b16 %v9816
    %v10215 = vunpack.c.l.b16 %v9817
    %v10216 = vunpack.c.h.b16 %v9817
    %v10217 = vunpack.c.l.b16 %v9818
    %v10218 = vunpack.c.h.b16 %v9818
    %v10219 = vunpack.c.l.b16 %v9819
    %v10220 = vunpack.c.h.b16 %v9819
    %v10221 = vunpack.c.l.b16 %v9820
    %v10222 = vunpack.c.h.b16 %v9820
    %v10223 = vunpack.c.l.b16 %v9821
    %v10224 = vunpack.c.h.b16 %v9821
    %v10225 = vunpack.c.l.b16 %v9822
    %v10226 = vunpack.c.h.b16 %v9822
    %v10227 = vunpack.c.l.b16 %v9823
    %v10228 = vunpack.c.h.b16 %v9823
    %v10229 = vunpack.c.l.b16 %v9824
    %v10230 = vunpack.c.h.b16 %v9824
    %v10231 = vpack.c.b16 %v9979, %v9975
    %v10232 = vpack.c.b16 %v9980, %v9976
    %v10233 = vpack.c.b16 %v9981, %v9977
    %v10234 = vpack.c.b16 %v9982, %v9978
    %v10235 = vpack.c.b16 %v9987, %v9983
    %v10236 = vpack.c.b16 %v9988, %v9984
    %v10237 = vpack.c.b16 %v9989, %v9985
    %v10238 = vpack.c.b16 %v9990, %v9986
    %v10239 = vpack.c.b16 %v9995, %v9991
    %v10240 = vpack.c.b16 %v9996, %v9992
    %v10241 = vpack.c.b16 %v9997, %v9993
    %v10242 = vpack.c.b16 %v9998, %v9994
    %v10243 = vpack.c.b16 %v10003, %v9999
    %v10244 = vpack.c.b16 %v10004, %v10000
    %v10245 = vpack.c.b16 %v10005, %v10001
    %v10246 = vpack.c.b16 %v10006, %v10002
    %v10247 = vpack.c.b16 %v10011, %v10007
    %v10248 = vpack.c.b16 %v10012, %v10008
    %v10249 = vpack.c.b16 %v10013, %v10009
    %v10250 = vpack.c.b16 %v10014, %v10010
    %v10251 = vpack.c.b16 %v10019, %v10015
    %v10252 = vpack.c.b16 %v10020, %v10016
    %v10253 = vpack.c.b16 %v10021, %v10017
    %v10254 = vpack.c.b16 %v10022, %v10018
    %v10255 = vpack.c.b16 %v10027, %v10023
    %v10256 = vpack.c.b16 %v10028, %v10024
    %v10257 = vpack.c.b16 %v10029, %v10025
    %v10258 = vpack.c.b16 %v10030, %v10026
    %v10259 = vpack.c.b16 %v10035, %v10031
    %v10260 = vpack.c.b16 %v10036, %v10032
    %v10261 = vpack.c.b16 %v10037, %v10033
    %v10262 = vpack.c.b16 %v10038, %v10034
    %v10263 = vpack.c.b16 %v10043, %v10039
    %v10264 = vpack.c.b16 %v10044, %v10040
    %v10265 = vpack.c.b16 %v10045, %v10041
    %v10266 = vpack.c.b16 %v10046, %v10042
    %v10267 = vpack.c.b16 %v10051, %v10047
    %v10268 = vpack.c.b16 %v10052, %v10048
    %v10269 = vpack.c.b16 %v10053, %v10049
    %v10270 = vpack.c.b16 %v10054, %v10050
    %v10271 = vpack.c.b16 %v10059, %v10055
    %v10272 = vpack.c.b16 %v10060, %v10056
    %v10273 = vpack.c.b16 %v10061, %v10057
    %v10274 = vpack.c.b16 %v10062, %v10058
    %v10275 = vpack.c.b16 %v10067, %v10063
    %v10276 = vpack.c.b16 %v10068, %v10064
    %v10277 = vpack.c.b16 %v10069, %v10065
    %v10278 = vpack.c.b16 %v10070, %v10066
    %v10279 = vpack.c.b16 %v10075, %v10071
    %v10280 = vpack.c.b16 %v10076, %v10072
    %v10281 = vpack.c.b16 %v10077, %v10073
    %v10282 = vpack.c.b16 %v10078, %v10074
    %v10283 = vpack.c.b16 %v10083, %v10079
    %v10284 = vpack.c.b16 %v10084, %v10080
    %v10285 = vpack.c.b16 %v10085, %v10081
    %v10286 = vpack.c.b16 %v10086, %v10082
    %v10287 = vpack.c.b16 %v10091, %v10087
    %v10288 = vpack.c.b16 %v10092, %v10088
    %v10289 = vpack.c.b16 %v10093, %v10089
    %v10290 = vpack.c.b16 %v10094, %v10090
    %v10291 = vpack.c.b16 %v10099, %v10095
    %v10292 = vpack.c.b16 %v10100, %v10096
    %v10293 = vpack.c.b16 %v10101, %v10097
    %v10294 = vpack.c.b16 %v10102, %v10098
    %v10295 = vpack.c.b16 %v10107, %v10103
    %v10296 = vpack.c.b16 %v10108, %v10104
    %v10297 = vpack.c.b16 %v10109, %v10105
    %v10298 = vpack.c.b16 %v10110, %v10106
    %v10299 = vpack.c.b16 %v10115, %v10111
    %v10300 = vpack.c.b16 %v10116, %v10112
    %v10301 = vpack.c.b16 %v10117, %v10113
    %v10302 = vpack.c.b16 %v10118, %v10114
    %v10303 = vpack.c.b16 %v10123, %v10119
    %v10304 = vpack.c.b16 %v10124, %v10120
    %v10305 = vpack.c.b16 %v10125, %v10121
    %v10306 = vpack.c.b16 %v10126, %v10122
    %v10307 = vpack.c.b16 %v10131, %v10127
    %v10308 = vpack.c.b16 %v10132, %v10128
    %v10309 = vpack.c.b16 %v10133, %v10129
    %v10310 = vpack.c.b16 %v10134, %v10130
    %v10311 = vpack.c.b16 %v10139, %v10135
    %v10312 = vpack.c.b16 %v10140, %v10136
    %v10313 = vpack.c.b16 %v10141, %v10137
    %v10314 = vpack.c.b16 %v10142, %v10138
    %v10315 = vpack.c.b16 %v10147, %v10143
    %v10316 = vpack.c.b16 %v10148, %v10144
    %v10317 = vpack.c.b16 %v10149, %v10145
    %v10318 = vpack.c.b16 %v10150, %v10146
    %v10319 = vpack.c.b16 %v10155, %v10151
    %v10320 = vpack.c.b16 %v10156, %v10152
    %v10321 = vpack.c.b16 %v10157, %v10153
    %v10322 = vpack.c.b16 %v10158, %v10154
    %v10323 = vpack.c.b16 %v10163, %v10159
    %v10324 = vpack.c.b16 %v10164, %v10160
    %v10325 = vpack.c.b16 %v10165, %v10161
    %v10326 = vpack.c.b16 %v10166, %v10162
    %v10327 = vpack.c.b16 %v10171, %v10167
    %v10328 = vpack.c.b16 %v10172, %v10168
    %v10329 = vpack.c.b16 %v10173, %v10169
    %v10330 = vpack.c.b16 %v10174, %v10170
    %v10331 = vpack.c.b16 %v10179, %v10175
    %v10332 = vpack.c.b16 %v10180, %v10176
    %v10333 = vpack.c.b16 %v10181, %v10177
    %v10334 = vpack.c.b16 %v10182, %v10178
    %v10335 = vpack.c.b16 %v10187, %v10183
    %v10336 = vpack.c.b16 %v10188, %v10184
    %v10337 = vpack.c.b16 %v10189, %v10185
    %v10338 = vpack.c.b16 %v10190, %v10186
    %v10339 = vpack.c.b16 %v10195, %v10191
    %v10340 = vpack.c.b16 %v10196, %v10192
    %v10341 = vpack.c.b16 %v10197, %v10193
    %v10342 = vpack.c.b16 %v10198, %v10194
    %v10343 = vpack.c.b16 %v10203, %v10199
    %v10344 = vpack.c.b16 %v10204, %v10200
    %v10345 = vpack.c.b16 %v10205, %v10201
    %v10346 = vpack.c.b16 %v10206, %v10202
    %v10347 = vpack.c.b16 %v10211, %v10207
    %v10348 = vpack.c.b16 %v10212, %v10208
    %v10349 = vpack.c.b16 %v10213, %v10209
    %v10350 = vpack.c.b16 %v10214, %v10210
    %v10351 = vpack.c.b16 %v10219, %v10215
    %v10352 = vpack.c.b16 %v10220, %v10216
    %v10353 = vpack.c.b16 %v10221, %v10217
    %v10354 = vpack.c.b16 %v10222, %v10218
    %v10355 = vpack.c.b16 %v10227, %v10223
    %v10356 = vpack.c.b16 %v10228, %v10224
    %v10357 = vpack.c.b16 %v10229, %v10225
    %v10358 = vpack.c.b16 %v10230, %v10226
    %10487 = vmatprep.subr.bf16.mxu0 %v10260
    %10488 = vmatpush1.bf16.msra.mxu0 %v10259
    %10489 = vmatprep.subr.bf16.mxu0 %v10256
    %10490 = vmatpush1.bf16.msra.mxu0 %v10255
    %10491 = vmatprep.subr.bf16.mxu0 %v10252
    %10492 = vmatpush1.bf16.msra.mxu0 %v10251
    %10493 = vmatprep.subr.bf16.mxu0 %v10248
    %10494 = vmatpush1.bf16.msra.mxu0 %v10247
    %10495 = vmatprep.subr.bf16.mxu0 %v10244
    %10496 = vmatpush1.bf16.msra.mxu0 %v10243
    %10497 = vmatprep.subr.bf16.mxu0 %v10240
    %10498 = vmatpush1.bf16.msra.mxu0 %v10239
    %10499 = vmatprep.subr.bf16.mxu0 %v10236
    %10500 = vmatpush1.bf16.msra.mxu0 %v10235
    %10501 = vmatprep.subr.bf16.mxu0 %v10232
    %10502 = vmatpush1.bf16.msra.mxu0 %v10231
    %10503 = vmatprep.subr.bf16.mxu0 %v10292
    %10504 = vmatpush2.bf16.msra.mxu0 %v10291
    %10505 = vmatprep.subr.bf16.mxu0 %v10288
    %10506 = vmatpush2.bf16.msra.mxu0 %v10287
    %10507 = vmatprep.subr.bf16.mxu0 %v10284
    %10508 = vmatpush2.bf16.msra.mxu0 %v10283
    %10509 = vmatprep.subr.bf16.mxu0 %v10280
    %10510 = vmatpush2.bf16.msra.mxu0 %v10279
    %10511 = vmatprep.subr.bf16.mxu0 %v10276
    %10512 = vmatpush2.bf16.msra.mxu0 %v10275
    %10513 = vmatprep.subr.bf16.mxu0 %v10272
    %10514 = vmatpush2.bf16.msra.mxu0 %v10271
    %10515 = vmatprep.subr.bf16.mxu0 %v10268
    %10516 = vmatpush2.bf16.msra.mxu0 %v10267
    %10517 = vmatprep.subr.bf16.mxu0 %v10264
    %10518 = vmatpush2.bf16.msra.mxu0 %v10263
    %10519 = vmatprep.mubr.bf16.mxu0 %v9694
    %10520 = vmatmul.mubr.bf16.gmra.mxu0 %v9693
    %v10521 = vpop.f32.mrf.mxu0
    %v10522 = vadd.f32 %v9830, %v10521
    %v10523 = vpop.f32.mrf.mxu0
    %v10524 = vadd.f32 %v9834, %v10523
    %v10525 = vpop.f32.mrf.mxu0
    %v10526 = vpop.f32.mrf.mxu0
    %10527 = vdwg.mxu0
    %10528 = vmatprep.subr.bf16.mxu0 %v10324
    %10529 = vmatpush1.bf16.msra.mxu0 %v10323
    %10530 = vmatprep.subr.bf16.mxu0 %v10320
    %10531 = vmatpush1.bf16.msra.mxu0 %v10319
    %10532 = vmatprep.subr.bf16.mxu0 %v10316
    %10533 = vmatpush1.bf16.msra.mxu0 %v10315
    %10534 = vmatprep.subr.bf16.mxu0 %v10312
    %10535 = vmatpush1.bf16.msra.mxu0 %v10311
    %10536 = vmatprep.subr.bf16.mxu0 %v10308
    %10537 = vmatpush1.bf16.msra.mxu0 %v10307
    %10538 = vmatprep.subr.bf16.mxu0 %v10304
    %10539 = vmatpush1.bf16.msra.mxu0 %v10303
    %10540 = vmatprep.subr.bf16.mxu0 %v10300
    %10541 = vmatpush1.bf16.msra.mxu0 %v10299
    %10542 = vmatprep.subr.bf16.mxu0 %v10296
    %10543 = vmatpush1.bf16.msra.mxu0 %v10295
    %10544 = vmatprep.subr.bf16.mxu0 %v10356
    %10545 = vmatpush2.bf16.msra.mxu0 %v10355
    %10546 = vmatprep.subr.bf16.mxu0 %v10352
    %10547 = vmatpush2.bf16.msra.mxu0 %v10351
    %10548 = vmatprep.subr.bf16.mxu0 %v10348
    %10549 = vmatpush2.bf16.msra.mxu0 %v10347
    %10550 = vmatprep.subr.bf16.mxu0 %v10344
    %10551 = vmatpush2.bf16.msra.mxu0 %v10343
    %10552 = vmatprep.subr.bf16.mxu0 %v10340
    %10553 = vmatpush2.bf16.msra.mxu0 %v10339
    %10554 = vmatprep.subr.bf16.mxu0 %v10336
    %10555 = vmatpush2.bf16.msra.mxu0 %v10335
    %10556 = vmatprep.subr.bf16.mxu0 %v10332
    %10557 = vmatpush2.bf16.msra.mxu0 %v10331
    %10558 = vmatprep.subr.bf16.mxu0 %v10328
    %10559 = vmatpush2.bf16.msra.mxu0 %v10327
    %10560 = vmatprep.mubr.bf16.mxu0 %v9696
    %10561 = vmatmul.mubr.bf16.gmra.mxu0 %v9695
    %v10562 = vpop.f32.mrf.mxu0
    %v10563 = vadd.f32 %v10522, %v10562
    %v10564 = vpop.f32.mrf.mxu0
    %v10565 = vadd.f32 %v10524, %v10564
    %v10566 = vpop.f32.mrf.mxu0
    %v10567 = vpop.f32.mrf.mxu0
    %10568 = vdwg.mxu0
    %10569 = vmatprep.subr.bf16.mxu0 %v10262
    %10570 = vmatpush1.bf16.msra.mxu0 %v10261
    %10571 = vmatprep.subr.bf16.mxu0 %v10258
    %10572 = vmatpush1.bf16.msra.mxu0 %v10257
    %10573 = vmatprep.subr.bf16.mxu0 %v10254
    %10574 = vmatpush1.bf16.msra.mxu0 %v10253
    %10575 = vmatprep.subr.bf16.mxu0 %v10250
    %10576 = vmatpush1.bf16.msra.mxu0 %v10249
    %10577 = vmatprep.subr.bf16.mxu0 %v10246
    %10578 = vmatpush1.bf16.msra.mxu0 %v10245
    %10579 = vmatprep.subr.bf16.mxu0 %v10242
    %10580 = vmatpush1.bf16.msra.mxu0 %v10241
    %10581 = vmatprep.subr.bf16.mxu0 %v10238
    %10582 = vmatpush1.bf16.msra.mxu0 %v10237
    %10583 = vmatprep.subr.bf16.mxu0 %v10234
    %10584 = vmatpush1.bf16.msra.mxu0 %v10233
    %10585 = vmatprep.subr.bf16.mxu0 %v10294
    %10586 = vmatpush2.bf16.msra.mxu0 %v10293
    %10587 = vmatprep.subr.bf16.mxu0 %v10290
    %10588 = vmatpush2.bf16.msra.mxu0 %v10289
    %10589 = vmatprep.subr.bf16.mxu0 %v10286
    %10590 = vmatpush2.bf16.msra.mxu0 %v10285
    %10591 = vmatprep.subr.bf16.mxu0 %v10282
    %10592 = vmatpush2.bf16.msra.mxu0 %v10281
    %10593 = vmatprep.subr.bf16.mxu0 %v10278
    %10594 = vmatpush2.bf16.msra.mxu0 %v10277
    %10595 = vmatprep.subr.bf16.mxu0 %v10274
    %10596 = vmatpush2.bf16.msra.mxu0 %v10273
    %10597 = vmatprep.subr.bf16.mxu0 %v10270
    %10598 = vmatpush2.bf16.msra.mxu0 %v10269
    %10599 = vmatprep.subr.bf16.mxu0 %v10266
    %10600 = vmatpush2.bf16.msra.mxu0 %v10265
    %10601 = vmatprep.mubr.bf16.mxu0 %v9694
    %10602 = vmatmul.mubr.bf16.gmra.mxu0 %v9693
    %v10603 = vpop.f32.mrf.mxu0
    %v10604 = vadd.f32 %v9838, %v10603
    %v10605 = vpop.f32.mrf.mxu0
    %v10606 = vadd.f32 %v9842, %v10605
    %v10607 = vpop.f32.mrf.mxu0
    %v10608 = vpop.f32.mrf.mxu0
    %10609 = vdwg.mxu0
    %10610 = vmatprep.subr.bf16.mxu0 %v10326
    %10611 = vmatpush1.bf16.msra.mxu0 %v10325
    %10612 = vmatprep.subr.bf16.mxu0 %v10322
    %10613 = vmatpush1.bf16.msra.mxu0 %v10321
    %10614 = vmatprep.subr.bf16.mxu0 %v10318
    %10615 = vmatpush1.bf16.msra.mxu0 %v10317
    %10616 = vmatprep.subr.bf16.mxu0 %v10314
    %10617 = vmatpush1.bf16.msra.mxu0 %v10313
    %10618 = vmatprep.subr.bf16.mxu0 %v10310
    %10619 = vmatpush1.bf16.msra.mxu0 %v10309
    %10620 = vmatprep.subr.bf16.mxu0 %v10306
    %10621 = vmatpush1.bf16.msra.mxu0 %v10305
    %10622 = vmatprep.subr.bf16.mxu0 %v10302
    %10623 = vmatpush1.bf16.msra.mxu0 %v10301
    %10624 = vmatprep.subr.bf16.mxu0 %v10298
    %10625 = vmatpush1.bf16.msra.mxu0 %v10297
    %10626 = vmatprep.subr.bf16.mxu0 %v10358
    %10627 = vmatpush2.bf16.msra.mxu0 %v10357
    %10628 = vmatprep.subr.bf16.mxu0 %v10354
    %10629 = vmatpush2.bf16.msra.mxu0 %v10353
    %10630 = vmatprep.subr.bf16.mxu0 %v10350
    %10631 = vmatpush2.bf16.msra.mxu0 %v10349
    %10632 = vmatprep.subr.bf16.mxu0 %v10346
    %10633 = vmatpush2.bf16.msra.mxu0 %v10345
    %10634 = vmatprep.subr.bf16.mxu0 %v10342
    %10635 = vmatpush2.bf16.msra.mxu0 %v10341
    %10636 = vmatprep.subr.bf16.mxu0 %v10338
    %10637 = vmatpush2.bf16.msra.mxu0 %v10337
    %10638 = vmatprep.subr.bf16.mxu0 %v10334
    %10639 = vmatpush2.bf16.msra.mxu0 %v10333
    %10640 = vmatprep.subr.bf16.mxu0 %v10330
    %10641 = vmatpush2.bf16.msra.mxu0 %v10329
    %10642 = vmatprep.mubr.bf16.mxu0 %v9696
    %10643 = vmatmul.mubr.bf16.gmra.mxu0 %v9695
    %v10644 = vpop.f32.mrf.mxu0
    %v10645 = vadd.f32 %v10604, %v10644
    %v10646 = vpop.f32.mrf.mxu0
    %v10647 = vadd.f32 %v10606, %v10646
    %v10648 = vpop.f32.mrf.mxu0
    %v10649 = vpop.f32.mrf.mxu0
    %10650 = vdwg.mxu0
    %v10651 = vpack.c.bf16 %v10563, %v10563
    %v10652 = vpack.c.bf16 %v10565, %v10565
    %v10653 = vpack.c.bf16 %v10645, %v10645
    %v10654 = vpack.c.bf16 %v10647, %v10647
    %v10655 = vld [vmem:[#allocation17] sm:$0xf]
    %v10656 = vld [vmem:[#allocation17 + $0x4] sm:$0xf]
    %v10657 = vld [vmem:[#allocation17 + $0x8] sm:$0xf]
    %v10658 = vld [vmem:[#allocation17 + $0xc] sm:$0xf]
    %v10659 = vld [vmem:[#allocation17 + $0x10] sm:$0xf]
    %v10660 = vld [vmem:[#allocation17 + $0x14] sm:$0xf]
    %v10661 = vld [vmem:[#allocation17 + $0x18] sm:$0xf]
    %v10662 = vld [vmem:[#allocation17 + $0x1c] sm:$0xf]
    %v10663 = vld [vmem:[#allocation17 + $0x20] sm:$0xf]
    %v10664 = vld [vmem:[#allocation17 + $0x24] sm:$0xf]
    %v10665 = vld [vmem:[#allocation17 + $0x28] sm:$0xf]
    %v10666 = vld [vmem:[#allocation17 + $0x2c] sm:$0xf]
    %v10667 = vld [vmem:[#allocation17 + $0x30] sm:$0xf]
    %v10668 = vld [vmem:[#allocation17 + $0x34] sm:$0xf]
    %v10669 = vld [vmem:[#allocation17 + $0x38] sm:$0xf]
    %v10670 = vld [vmem:[#allocation17 + $0x3c] sm:$0xf]
    %v10671 = vld [vmem:[#allocation17 + $0x40] sm:$0xf]
    %v10672 = vld [vmem:[#allocation17 + $0x44] sm:$0xf]
    %v10673 = vld [vmem:[#allocation17 + $0x48] sm:$0xf]
    %v10674 = vld [vmem:[#allocation17 + $0x4c] sm:$0xf]
    %v10675 = vld [vmem:[#allocation17 + $0x50] sm:$0xf]
    %v10676 = vld [vmem:[#allocation17 + $0x54] sm:$0xf]
    %v10677 = vld [vmem:[#allocation17 + $0x58] sm:$0xf]
    %v10678 = vld [vmem:[#allocation17 + $0x5c] sm:$0xf]
    %v10679 = vld [vmem:[#allocation17 + $0x60] sm:$0xf]
    %v10680 = vld [vmem:[#allocation17 + $0x64] sm:$0xf]
    %v10681 = vld [vmem:[#allocation17 + $0x68] sm:$0xf]
    %v10682 = vld [vmem:[#allocation17 + $0x6c] sm:$0xf]
    %v10683 = vld [vmem:[#allocation17 + $0x70] sm:$0xf]
    %v10684 = vld [vmem:[#allocation17 + $0x74] sm:$0xf]
    %v10685 = vld [vmem:[#allocation17 + $0x78] sm:$0xf]
    %v10686 = vld [vmem:[#allocation17 + $0x7c] sm:$0xf]
    %v10687 = vld [vmem:[#allocation17 + $0x80] sm:$0xf]
    %v10688 = vld [vmem:[#allocation17 + $0x84] sm:$0xf]
    %v10689 = vld [vmem:[#allocation17 + $0x88] sm:$0xf]
    %v10690 = vld [vmem:[#allocation17 + $0x8c] sm:$0xf]
    %v10691 = vld [vmem:[#allocation17 + $0x90] sm:$0xf]
    %v10692 = vld [vmem:[#allocation17 + $0x94] sm:$0xf]
    %v10693 = vld [vmem:[#allocation17 + $0x98] sm:$0xf]
    %v10694 = vld [vmem:[#allocation17 + $0x9c] sm:$0xf]
    %v10695 = vld [vmem:[#allocation17 + $0xa0] sm:$0xf]
    %v10696 = vld [vmem:[#allocation17 + $0xa4] sm:$0xf]
    %v10697 = vld [vmem:[#allocation17 + $0xa8] sm:$0xf]
    %v10698 = vld [vmem:[#allocation17 + $0xac] sm:$0xf]
    %v10699 = vld [vmem:[#allocation17 + $0xb0] sm:$0xf]
    %v10700 = vld [vmem:[#allocation17 + $0xb4] sm:$0xf]
    %v10701 = vld [vmem:[#allocation17 + $0xb8] sm:$0xf]
    %v10702 = vld [vmem:[#allocation17 + $0xbc] sm:$0xf]
    %v10703 = vld [vmem:[#allocation17 + $0xc0] sm:$0xf]
    %v10704 = vld [vmem:[#allocation17 + $0xc4] sm:$0xf]
    %v10705 = vld [vmem:[#allocation17 + $0xc8] sm:$0xf]
    %v10706 = vld [vmem:[#allocation17 + $0xcc] sm:$0xf]
    %v10707 = vld [vmem:[#allocation17 + $0xd0] sm:$0xf]
    %v10708 = vld [vmem:[#allocation17 + $0xd4] sm:$0xf]
    %v10709 = vld [vmem:[#allocation17 + $0xd8] sm:$0xf]
    %v10710 = vld [vmem:[#allocation17 + $0xdc] sm:$0xf]
    %v10711 = vld [vmem:[#allocation17 + $0xe0] sm:$0xf]
    %v10712 = vld [vmem:[#allocation17 + $0xe4] sm:$0xf]
    %v10713 = vld [vmem:[#allocation17 + $0xe8] sm:$0xf]
    %v10714 = vld [vmem:[#allocation17 + $0xec] sm:$0xf]
    %v10715 = vld [vmem:[#allocation17 + $0xf0] sm:$0xf]
    %v10716 = vld [vmem:[#allocation17 + $0xf4] sm:$0xf]
    %v10717 = vld [vmem:[#allocation17 + $0xf8] sm:$0xf]
    %v10718 = vld [vmem:[#allocation17 + $0xfc] sm:$0xf]
    %v10719 = vld [vmem:[#allocation19] sm:$0x1]
    %v10721 = vlaneseq
    %v10722 = vshrl.u32 %v10721, 7
    %v10723 = vsub.s32 0, %v10722
    %v10724 = vrot.slane %v10719, %v10723
    %v10790 = vunpack.c.l.b16 %v10655
    %v10791 = vunpack.c.l.b16 %v10656
    %v10792 = vunpack.c.l.b16 %v10657
    %v10793 = vunpack.c.l.b16 %v10658
    %v10794 = vunpack.c.l.b16 %v10659
    %v10795 = vunpack.c.l.b16 %v10660
    %v10796 = vunpack.c.l.b16 %v10661
    %v10797 = vunpack.c.l.b16 %v10662
    %v10798 = vunpack.c.l.b16 %v10663
    %v10799 = vunpack.c.l.b16 %v10664
    %v10800 = vunpack.c.l.b16 %v10665
    %v10801 = vunpack.c.l.b16 %v10666
    %v10802 = vunpack.c.l.b16 %v10667
    %v10803 = vunpack.c.l.b16 %v10668
    %v10804 = vunpack.c.l.b16 %v10669
    %v10805 = vunpack.c.l.b16 %v10670
    %v10806 = vunpack.c.l.b16 %v10671
    %v10807 = vunpack.c.l.b16 %v10672
    %v10808 = vunpack.c.l.b16 %v10673
    %v10809 = vunpack.c.l.b16 %v10674
    %v10810 = vunpack.c.l.b16 %v10675
    %v10811 = vunpack.c.l.b16 %v10676
    %v10812 = vunpack.c.l.b16 %v10677
    %v10813 = vunpack.c.l.b16 %v10678
    %v10814 = vunpack.c.l.b16 %v10679
    %v10815 = vunpack.c.l.b16 %v10680
    %v10816 = vunpack.c.l.b16 %v10681
    %v10817 = vunpack.c.l.b16 %v10682
    %v10818 = vunpack.c.l.b16 %v10683
    %v10819 = vunpack.c.l.b16 %v10684
    %v10820 = vunpack.c.l.b16 %v10685
    %v10821 = vunpack.c.l.b16 %v10686
    %v10822 = vunpack.c.l.b16 %v10687
    %v10823 = vunpack.c.l.b16 %v10688
    %v10824 = vunpack.c.l.b16 %v10689
    %v10825 = vunpack.c.l.b16 %v10690
    %v10826 = vunpack.c.l.b16 %v10691
    %v10827 = vunpack.c.l.b16 %v10692
    %v10828 = vunpack.c.l.b16 %v10693
    %v10829 = vunpack.c.l.b16 %v10694
    %v10830 = vunpack.c.l.b16 %v10695
    %v10831 = vunpack.c.l.b16 %v10696
    %v10832 = vunpack.c.l.b16 %v10697
    %v10833 = vunpack.c.l.b16 %v10698
    %v10834 = vunpack.c.l.b16 %v10699
    %v10835 = vunpack.c.l.b16 %v10700
    %v10836 = vunpack.c.l.b16 %v10701
    %v10837 = vunpack.c.l.b16 %v10702
    %v10838 = vunpack.c.l.b16 %v10703
    %v10839 = vunpack.c.l.b16 %v10704
    %v10840 = vunpack.c.l.b16 %v10705
    %v10841 = vunpack.c.l.b16 %v10706
    %v10842 = vunpack.c.l.b16 %v10707
    %v10843 = vunpack.c.l.b16 %v10708
    %v10844 = vunpack.c.l.b16 %v10709
    %v10845 = vunpack.c.l.b16 %v10710
    %v10846 = vunpack.c.l.b16 %v10711
    %v10847 = vunpack.c.l.b16 %v10712
    %v10848 = vunpack.c.l.b16 %v10713
    %v10849 = vunpack.c.l.b16 %v10714
    %v10850 = vunpack.c.l.b16 %v10715
    %v10851 = vunpack.c.l.b16 %v10716
    %v10852 = vunpack.c.l.b16 %v10717
    %v10853 = vunpack.c.l.b16 %v10718
    %v10854 = vpack.c.b16 %v10791, %v10790
    %v10855 = vpack.c.b16 %v10793, %v10792
    %v10856 = vpack.c.b16 %v10795, %v10794
    %v10857 = vpack.c.b16 %v10797, %v10796
    %v10858 = vpack.c.b16 %v10799, %v10798
    %v10859 = vpack.c.b16 %v10801, %v10800
    %v10860 = vpack.c.b16 %v10803, %v10802
    %v10861 = vpack.c.b16 %v10805, %v10804
    %v10862 = vpack.c.b16 %v10807, %v10806
    %v10863 = vpack.c.b16 %v10809, %v10808
    %v10864 = vpack.c.b16 %v10811, %v10810
    %v10865 = vpack.c.b16 %v10813, %v10812
    %v10866 = vpack.c.b16 %v10815, %v10814
    %v10867 = vpack.c.b16 %v10817, %v10816
    %v10868 = vpack.c.b16 %v10819, %v10818
    %v10869 = vpack.c.b16 %v10821, %v10820
    %v10870 = vpack.c.b16 %v10823, %v10822
    %v10871 = vpack.c.b16 %v10825, %v10824
    %v10872 = vpack.c.b16 %v10827, %v10826
    %v10873 = vpack.c.b16 %v10829, %v10828
    %v10874 = vpack.c.b16 %v10831, %v10830
    %v10875 = vpack.c.b16 %v10833, %v10832
    %v10876 = vpack.c.b16 %v10835, %v10834
    %v10877 = vpack.c.b16 %v10837, %v10836
    %v10878 = vpack.c.b16 %v10839, %v10838
    %v10879 = vpack.c.b16 %v10841, %v10840
    %v10880 = vpack.c.b16 %v10843, %v10842
    %v10881 = vpack.c.b16 %v10845, %v10844
    %v10882 = vpack.c.b16 %v10847, %v10846
    %v10883 = vpack.c.b16 %v10849, %v10848
    %v10884 = vpack.c.b16 %v10851, %v10850
    %v10885 = vpack.c.b16 %v10853, %v10852
    %10918 = vmatprep.subr.bf16.mxu0 0
    %10919 = vmatpush1.bf16.msra.mxu0 %v10861
    %10920 = vmatprep.subr.bf16.mxu0 0
    %10921 = vmatpush1.bf16.msra.mxu0 %v10860
    %10922 = vmatprep.subr.bf16.mxu0 0
    %10923 = vmatpush1.bf16.msra.mxu0 %v10859
    %10924 = vmatprep.subr.bf16.mxu0 0
    %10925 = vmatpush1.bf16.msra.mxu0 %v10858
    %10926 = vmatprep.subr.bf16.mxu0 0
    %10927 = vmatpush1.bf16.msra.mxu0 %v10857
    %10928 = vmatprep.subr.bf16.mxu0 0
    %10929 = vmatpush1.bf16.msra.mxu0 %v10856
    %10930 = vmatprep.subr.bf16.mxu0 0
    %10931 = vmatpush1.bf16.msra.mxu0 %v10855
    %10932 = vmatprep.subr.bf16.mxu0 0
    %10933 = vmatpush1.bf16.msra.mxu0 %v10854
    %10934 = vmatprep.subr.bf16.mxu0 0
    %10935 = vmatpush2.bf16.msra.mxu0 %v10869
    %10936 = vmatprep.subr.bf16.mxu0 0
    %10937 = vmatpush2.bf16.msra.mxu0 %v10868
    %10938 = vmatprep.subr.bf16.mxu0 0
    %10939 = vmatpush2.bf16.msra.mxu0 %v10867
    %10940 = vmatprep.subr.bf16.mxu0 0
    %10941 = vmatpush2.bf16.msra.mxu0 %v10866
    %10942 = vmatprep.subr.bf16.mxu0 0
    %10943 = vmatpush2.bf16.msra.mxu0 %v10865
    %10944 = vmatprep.subr.bf16.mxu0 0
    %10945 = vmatpush2.bf16.msra.mxu0 %v10864
    %10946 = vmatprep.subr.bf16.mxu0 0
    %10947 = vmatpush2.bf16.msra.mxu0 %v10863
    %10948 = vmatprep.subr.bf16.mxu0 0
    %10949 = vmatpush2.bf16.msra.mxu0 %v10862
    %10950 = vmatprep.mubr.bf16.mxu0 %v10652
    %10951 = vmatmul.mubr.bf16.gmra.mxu0 %v10651
    %v10952 = vpop.f32.mrf.mxu0
    %v10953 = vadd.f32 %v10724, %v10952
    %v10954 = vpop.f32.mrf.mxu0
    %v10955 = vpop.f32.mrf.mxu0
    %v10956 = vpop.f32.mrf.mxu0
    %10957 = vdwg.mxu0
    %10958 = vmatprep.subr.bf16.mxu0 0
    %10959 = vmatpush1.bf16.msra.mxu0 %v10877
    %10960 = vmatprep.subr.bf16.mxu0 0
    %10961 = vmatpush1.bf16.msra.mxu0 %v10876
    %10962 = vmatprep.subr.bf16.mxu0 0
    %10963 = vmatpush1.bf16.msra.mxu0 %v10875
    %10964 = vmatprep.subr.bf16.mxu0 0
    %10965 = vmatpush1.bf16.msra.mxu0 %v10874
    %10966 = vmatprep.subr.bf16.mxu0 0
    %10967 = vmatpush1.bf16.msra.mxu0 %v10873
    %10968 = vmatprep.subr.bf16.mxu0 0
    %10969 = vmatpush1.bf16.msra.mxu0 %v10872
    %10970 = vmatprep.subr.bf16.mxu0 0
    %10971 = vmatpush1.bf16.msra.mxu0 %v10871
    %10972 = vmatprep.subr.bf16.mxu0 0
    %10973 = vmatpush1.bf16.msra.mxu0 %v10870
    %10974 = vmatprep.subr.bf16.mxu0 0
    %10975 = vmatpush2.bf16.msra.mxu0 %v10885
    %10976 = vmatprep.subr.bf16.mxu0 0
    %10977 = vmatpush2.bf16.msra.mxu0 %v10884
    %10978 = vmatprep.subr.bf16.mxu0 0
    %10979 = vmatpush2.bf16.msra.mxu0 %v10883
    %10980 = vmatprep.subr.bf16.mxu0 0
    %10981 = vmatpush2.bf16.msra.mxu0 %v10882
    %10982 = vmatprep.subr.bf16.mxu0 0
    %10983 = vmatpush2.bf16.msra.mxu0 %v10881
    %10984 = vmatprep.subr.bf16.mxu0 0
    %10985 = vmatpush2.bf16.msra.mxu0 %v10880
    %10986 = vmatprep.subr.bf16.mxu0 0
    %10987 = vmatpush2.bf16.msra.mxu0 %v10879
    %10988 = vmatprep.subr.bf16.mxu0 0
    %10989 = vmatpush2.bf16.msra.mxu0 %v10878
    %10990 = vmatprep.mubr.bf16.mxu0 %v10654
    %10991 = vmatmul.mubr.bf16.gmra.mxu0 %v10653
    %v10992 = vpop.f32.mrf.mxu0
    %v10993 = vadd.f32 %v10953, %v10992
    %v10994 = vpop.f32.mrf.mxu0
    %v10995 = vpop.f32.mrf.mxu0
    %v10996 = vpop.f32.mrf.mxu0
    %10997 = vdwg.mxu0
    %10998 = vst [vmem:[#allocation20] sm:$0x3] %v10993
    // Predicated region
    $region90: #{tpu_custom_call.1} parent=1 // pred_check
      _
    $region91: #{tpu_custom_call.1} parent=1 // pred_check_branch
      %11000 = sbr.rel (0) target = $region93
    $region92: #{tpu_custom_call.1} parent=1 // pred_region
      %s11002 = ssub.s32 32, 32
      %11003 = vsyncadd [#allocation4], %s11002
      %s11005 = sshll.u32 [#allocation20], 4
      %s11006 = int_to_ptr.vmem [resolvable:$true] %s11005
      %11008 = dma.vmem_to_hbm [thread:$0]  %s11006, 32, %s11, [#allocation4]
    $region93: #{tpu_custom_call.1} parent=1 // pred_fallthru
      _
    // Predicated region
    $region94: #{tpu_custom_call.1} parent=1 // pred_check
      _
    $region95: #{tpu_custom_call.1} parent=1 // pred_check_branch
      %11010 = sbr.rel (0) target = $region97
    $region96: #{tpu_custom_call.1} parent=1 // pred_region
      %11011 = dma.done [#allocation4], 32
    $region97: #{tpu_custom_call.1} parent=1 // pred_fallthru
      _
    %11012 = vsyncpa [#allocation3], 1
    %11013 = vsyncpa [#allocation6], 1
    %11014 = vsyncpa [#allocation9], 1
    %11015 = vsyncpa [#allocation12], 1
    %11016 = vsyncpa [#allocation15], 1
    %11017 = vsyncpa [#allocation18], 1
    %11018 = vsyncpa [#allocation4], 1

</llo_original>
